<compile_context>
chip_gen: v7x
topology: tpu7x:2x2x1
jax: 0.10.0
libtpu: 0.0.40
codegen_flags: <defaults>
</compile_context>

<pallas_src>
import numpy as np
import jax
import jax.numpy as jnp
from jax.experimental import pallas as pl
from jax.experimental.pallas import tpu as pltpu


# ----------------------------------------------------------------------------
# Deterministic "parameter" construction (the gaussian window from __init__).
# ----------------------------------------------------------------------------
def _fspecial_gauss_1d(size: int, sigma: float) -> np.ndarray:
    """1-D gauss kernel, same math as the PyTorch helper. Returns shape (size,)."""
    coords = np.arange(size, dtype=np.float32) - (size // 2)
    g = np.exp(-coords ** 2 / (2.0 * sigma ** 2))
    g /= g.sum()
    return g.astype(np.float32)


# ----------------------------------------------------------------------------
# Pallas kernel
# ----------------------------------------------------------------------------
def _make_ssim_kernel(Cb: int, H: int, W: int, K: int, win_taps, c1: float,
                      c2: float, precision):
    Hv, Wv = H - K + 1, W - K + 1
    inv_area = 1.0 / float(Hv * Wv)
    Q = Cb * Wv          # lanes per quantity slab in the epilogue
    P = 5 * Cb           # number of blurred planes per grid step

    def band(rows, cols, transpose):
        # Banded matrix implementing the valid separable blur as a matmul,
        # built in-kernel (iota + K selects) -> no HBM operand / double-buffer.
        #   transpose=False: band[r, c] = win[r - c]   ((img @ band) blurs W)
        #   transpose=True : band[r, c] = win[c - r]   ((band @ img) blurs H)
        r = jax.lax.broadcasted_iota(jnp.int32, (rows, cols), 0)
        c = jax.lax.broadcasted_iota(jnp.int32, (rows, cols), 1)
        d = (c - r) if transpose else (r - c)
        out = jnp.zeros((rows, cols), jnp.float32)
        for t in range(K):
            out = jnp.where(d == t, jnp.float32(win_taps[t]), out)
        return out

    def kernel(x_ref, y_ref, out_ref):
        # (Cb, H, W) -> (Cb*H, W): leading-dim merge, layout preserving.
        x = x_ref[...].astype(jnp.float32).reshape(Cb * H, W)
        y = y_ref[...].astype(jnp.float32).reshape(Cb * H, W)

        a_w = band(W, Wv, transpose=False)   # (W, Wv)
        a_h = band(Hv, H, transpose=True)    # (Hv, H)

        # Stack all five blur inputs for all channels along sublanes and do a
        # single width-pass matmul on the MXU.
        s = jnp.concatenate([x, y, x * x, y * y, x * y], axis=0)   # (5*Cb*H, W)
        t = jnp.dot(s, a_w, precision=precision,
                    preferred_element_type=jnp.float32)            # (5*Cb*H, Wv)

        # Lay the 5*Cb blurred planes side by side along lanes (== the
        # (P, H, Wv) -> (H, P*Wv) transpose, expressed with plain row slices
        # and a lane concatenate), then a single height-pass matmul.
        tt = jnp.concatenate([t[p * H:(p + 1) * H, :] for p in range(P)],
                             axis=1)                                # (H, 5*Q)
        u = jnp.dot(a_h, tt, precision=precision,
                    preferred_element_type=jnp.float32)             # (Hv, 5*Q)

        # Lane-dense elementwise epilogue on (Hv, Cb*Wv) slabs; within a slab
        # channel c occupies lanes [c*Wv, (c+1)*Wv).
        mu1 = u[:, 0 * Q:1 * Q]
        mu2 = u[:, 1 * Q:2 * Q]
        exx = u[:, 2 * Q:3 * Q]
        eyy = u[:, 3 * Q:4 * Q]
        exy = u[:, 4 * Q:5 * Q]

        mu1_sq = mu1 * mu1
        mu2_sq = mu2 * mu2
        mu1_mu2 = mu1 * mu2
        sigma1_sq = exx - mu1_sq          # compensation == 1.0
        sigma2_sq = eyy - mu2_sq
        sigma12 = exy - mu1_mu2

        # Single fused divide: luminance * cs in one ratio.
        num = (2.0 * mu1_mu2 + c1) * (2.0 * sigma12 + c2)
        den = (mu1_sq + mu2_sq + c1) * (sigma1_sq + sigma2_sq + c2)
        ssim_map = num / den                                        # (Hv, Cb*Wv)

        # Per-channel spatial mean (== torch.flatten(ssim_map, 2).mean(-1)).
        col = jnp.sum(ssim_map, axis=0, keepdims=True)              # (1, Cb*Wv)
        per_c = jnp.concatenate(
            [jnp.sum(col[:, c * Wv:(c + 1) * Wv], axis=1, keepdims=True)
             for c in range(Cb)], axis=1)                           # (1, Cb)
        out_ref[...] = per_c * inv_area

    return kernel


def _ssim_per_channel_pallas(x, y, *, data_range, win_size, win_sigma, k,
                             precision):
    """Returns ssim_per_channel of shape (N, C), float32."""
    N, C, H, W = x.shape
    K = int(win_size)
    if H < K or W < K:
        raise ValueError(
            f"Image size ({H}, {W}) must be >= win_size ({K}) for the "
            "valid-padding gaussian filter.")
    Hv, Wv = H - K + 1, W - K + 1
    win = _fspecial_gauss_1d(K, win_sigma)
    c1 = float((k[0] * data_range) ** 2)
    c2 = float((k[1] * data_range) ** 2)

    # v7x has 2 TensorCores: if there is only one image, split the channels
    # into two parallel grid steps so both cores get work.
    if N >= 2 or C < 2 or C % 2 != 0:
        CG = 1
    else:
        CG = 2
    Cb = C // CG

    kernel = _make_ssim_kernel(Cb, H, W, K, [float(v) for v in win], c1, c2,
                               precision)

    # Per-step VMEM footprint: double-buffered x/y blocks + live f32
    # intermediates (stacked slab, both matmul outputs, epilogue temporaries,
    # in-kernel band matrices). Raise the scoped limit only when needed.
    est_bytes = (4 * Cb * H * W * x.dtype.itemsize
                 + 4 * (5 * Cb * H * (W + 2 * Wv)
                        + 13 * Cb * Hv * Wv
                        + W * Wv + Hv * H))
    vmem_limit = None
    if est_bytes > 12 * 1024 * 1024:
        vmem_limit = min(2 * est_bytes, 48 * 1024 * 1024)
    # TODO(synk): H-tiling with a (K-1)-row halo for very large images (see top).

    out = pl.pallas_call(
        kernel,
        out_shape=jax.ShapeDtypeStruct((N, CG, 1, Cb), jnp.float32),
        grid=(N, CG),
        in_specs=[
            pl.BlockSpec((pl.Squeezed(), Cb, H, W), lambda n, g: (n, g, 0, 0)),
            pl.BlockSpec((pl.Squeezed(), Cb, H, W), lambda n, g: (n, g, 0, 0)),
        ],
        out_specs=pl.BlockSpec((pl.Squeezed(), pl.Squeezed(), 1, Cb),
                               lambda n, g: (n, g, 0, 0)),
        compiler_params=pltpu.CompilerParams(
            dimension_semantics=("parallel", "parallel"),
            vmem_limit_bytes=vmem_limit),
    )(x, y)
    return out.reshape(N, C)


# ----------------------------------------------------------------------------
# Module-equivalent wrapper (mirrors SSIM.forward / ssim())
# ----------------------------------------------------------------------------
class SSIM:
    def __init__(self, data_range=255.0, reduction=True, win_size=11,
                 win_sigma=1.5, channel=3, k=(0.01, 0.03),
                 nonnegative_ssim=False, precision=jax.lax.Precision.HIGH):
        if win_size % 2 != 1:
            raise ValueError("Window size should be odd.")
        self.data_range = float(data_range)
        self.reduction = reduction
        self.win_size = win_size
        self.win_sigma = float(win_sigma)
        self.channel = channel
        self.k = tuple(float(v) for v in k)
        self.nonnegative_ssim = nonnegative_ssim
        # MXU pass count for the f32 blur matmuls: HIGH (3-pass) is ~2x faster
        # than HIGHEST (6-pass); switch to HIGHEST if a tighter bar is needed.
        self.precision = precision

    def __call__(self, x, y):
        if x.ndim != 4:
            raise ValueError("Input images should be 4-d tensors.")
        if x.shape != y.shape:
            raise ValueError("Input images should have the same shape.")
        per_channel = _ssim_per_channel_pallas(
            x, y, data_range=self.data_range, win_size=self.win_size,
            win_sigma=self.win_sigma, k=self.k, precision=self.precision)
        if self.nonnegative_ssim:
            per_channel = jax.nn.relu(per_channel)
        if self.reduction == "mean":
            return per_channel.mean()
        elif self.reduction == "none":
            return per_channel.mean(axis=1)
        # Faithful to the reference: any other `reduction` value (including
        # the default bool True) falls through and returns None.
        return None


# ----------------------------------------------------------------------------
# Pure-JAX reference (for correctness check only)
# ----------------------------------------------------------------------------
def _reference_ssim_mean(x, y, data_range, win_size, win_sigma, k):
    g = jnp.asarray(_fspecial_gauss_1d(win_size, win_sigma))
    K = win_size

    def gfilt(img):
        Wv = img.shape[-1] - K + 1
        Hv = img.shape[-2] - K + 1
        tmp = sum(g[t] * img[..., :, t:t + Wv] for t in range(K))
        return sum(g[t] * tmp[..., t:t + Hv, :] for t in range(K))

    c1 = (k[0] * data_range) ** 2
    c2 = (k[1] * data_range) ** 2
    mu1, mu2 = gfilt(x), gfilt(y)
    s1 = gfilt(x * x) - mu1 ** 2
    s2 = gfilt(y * y) - mu2 ** 2
    s12 = gfilt(x * y) - mu1 * mu2
    cs_map = (2 * s12 + c2) / (s1 + s2 + c2)
    ssim_map = (2 * mu1 * mu2 + c1) / (mu1 ** 2 + mu2 ** 2 + c1) * cs_map
    return ssim_map.reshape(x.shape[0], x.shape[1], -1).mean(-1).mean()


if __name__ == "__main__":
    key = jax.random.PRNGKey(0)
    kx, ky = jax.random.split(key)
    N, C, H, W = 2, 4, 32, 32
    x = jax.random.uniform(kx, (N, C, H, W), jnp.float32) * 255.0
    y = jax.random.uniform(ky, (N, C, H, W), jnp.float32) * 255.0
    ref = _reference_ssim_mean(x, y, 255.0, 11, 1.5, (0.01, 0.03))

    def run(precision):
        # reduction='mean' gives the scalar-averaged SSIM (the bool default of
        # the reference module falls through and returns None).
        model = SSIM(data_range=255.0, reduction="mean", channel=C,
                     win_size=11, win_sigma=1.5, k=(0.01, 0.03),
                     precision=precision)
        return model, jax.block_until_ready(model(x, y))

    # Re-validate Precision.HIGH (3-pass bf16 MXU) against the f32 reference;
    # fall back to HIGHEST if accuracy (or this jax version's lowering) fails.
    try:
        model, out = run(jax.lax.Precision.HIGH)
        ok = np.allclose(np.asarray(out), np.asarray(ref), rtol=1e-4, atol=1e-4)
    except Exception:
        ok = False
    if not ok:
        model, out = run(jax.lax.Precision.HIGHEST)
    assert np.allclose(np.asarray(out), np.asarray(ref), rtol=1e-4, atol=1e-4), (
        float(out), float(ref))

    # Also exercise the N == 1 path (second parallel grid axis over channel
    # groups so both v7x TensorCores get work).
    out1 = jax.block_until_ready(model(x[:1], y[:1]))
    ref1 = _reference_ssim_mean(x[:1], y[:1], 255.0, 11, 1.5, (0.01, 0.03))
    assert np.allclose(np.asarray(out1), np.asarray(ref1), rtol=1e-4, atol=1e-4), (
        float(out1), float(ref1))

    print("KERNEL_OK")
</pallas_src>

<mosaic_0001>
module attributes {stable_mosaic.version = 11 : i64} {
  func.func @kernel(%arg0: i32, %arg1: i32, %arg2: memref<1x4x32x32xf32, #tpu.memory_space<vmem>>, %arg3: memref<1x4x32x32xf32, #tpu.memory_space<vmem>>, %arg4: memref<1x1x1x4xf32, #tpu.memory_space<vmem>>) attributes {dimension_semantics = [#tpu.dimension_semantics<parallel>, #tpu.dimension_semantics<parallel>], iteration_bounds = array<i64: 2, 1>, scalar_prefetch = 0 : i64, scratch_operands = 0 : i64, tpu.core_type = #tpu.core_type<tc>, window_params = [{transform_indices = @transform_0, window_bounds = array<i64: 1, 4, 32, 32>}, {transform_indices = @transform_1, window_bounds = array<i64: 1, 4, 32, 32>}, {transform_indices = @transform_2, window_bounds = array<i64: 1, 1, 1, 4>}]} {
    %c0 = arith.constant 0 : index
    %c0_0 = arith.constant 0 : index
    %c0_1 = arith.constant 0 : index
    %c0_2 = arith.constant 0 : index
    %0 = vector.load %arg2[%c0, %c0_0, %c0_1, %c0_2] : memref<1x4x32x32xf32, #tpu.memory_space<vmem>>, vector<1x4x32x32xf32>
    %1 = vector.shape_cast %0 : vector<1x4x32x32xf32> to vector<4x32x32xf32>
    %2 = vector.shape_cast %1 : vector<4x32x32xf32> to vector<128x32xf32>
    %c0_3 = arith.constant 0 : index
    %c0_4 = arith.constant 0 : index
    %c0_5 = arith.constant 0 : index
    %c0_6 = arith.constant 0 : index
    %3 = vector.load %arg3[%c0_3, %c0_4, %c0_5, %c0_6] : memref<1x4x32x32xf32, #tpu.memory_space<vmem>>, vector<1x4x32x32xf32>
    %4 = vector.shape_cast %3 : vector<1x4x32x32xf32> to vector<4x32x32xf32>
    %5 = vector.shape_cast %4 : vector<4x32x32xf32> to vector<128x32xf32>
    %6 = tpu.iota {dimensions = array<i32: 0>} : vector<32x22xi32>
    %7 = tpu.iota {dimensions = array<i32: 1>} : vector<32x22xi32>
    %8 = arith.subi %6, %7 : vector<32x22xi32>
    %cst = arith.constant 0.000000e+00 : f32
    %9 = vector.broadcast %cst : f32 to vector<32x22xf32>
    %c0_i32 = arith.constant 0 : i32
    %10 = vector.broadcast %c0_i32 : i32 to vector<32x22xi32>
    %11 = arith.cmpi eq, %8, %10 : vector<32x22xi32>
    %cst_7 = arith.constant 0.00102838036 : f32
    %12 = vector.broadcast %cst_7 : f32 to vector<32x22xf32>
    %13 = arith.select %11, %12, %9 : vector<32x22xi1>, vector<32x22xf32>
    %c1_i32 = arith.constant 1 : i32
    %14 = vector.broadcast %c1_i32 : i32 to vector<32x22xi32>
    %15 = arith.cmpi eq, %8, %14 : vector<32x22xi32>
    %cst_8 = arith.constant 0.00759875868 : f32
    %16 = vector.broadcast %cst_8 : f32 to vector<32x22xf32>
    %17 = arith.select %15, %16, %13 : vector<32x22xi1>, vector<32x22xf32>
    %c2_i32 = arith.constant 2 : i32
    %18 = vector.broadcast %c2_i32 : i32 to vector<32x22xi32>
    %19 = arith.cmpi eq, %8, %18 : vector<32x22xi32>
    %cst_9 = arith.constant 0.0360007733 : f32
    %20 = vector.broadcast %cst_9 : f32 to vector<32x22xf32>
    %21 = arith.select %19, %20, %17 : vector<32x22xi1>, vector<32x22xf32>
    %c3_i32 = arith.constant 3 : i32
    %22 = vector.broadcast %c3_i32 : i32 to vector<32x22xi32>
    %23 = arith.cmpi eq, %8, %22 : vector<32x22xi32>
    %cst_10 = arith.constant 0.109360702 : f32
    %24 = vector.broadcast %cst_10 : f32 to vector<32x22xf32>
    %25 = arith.select %23, %24, %21 : vector<32x22xi1>, vector<32x22xf32>
    %c4_i32 = arith.constant 4 : i32
    %26 = vector.broadcast %c4_i32 : i32 to vector<32x22xi32>
    %27 = arith.cmpi eq, %8, %26 : vector<32x22xi32>
    %cst_11 = arith.constant 0.213005543 : f32
    %28 = vector.broadcast %cst_11 : f32 to vector<32x22xf32>
    %29 = arith.select %27, %28, %25 : vector<32x22xi1>, vector<32x22xf32>
    %c5_i32 = arith.constant 5 : i32
    %30 = vector.broadcast %c5_i32 : i32 to vector<32x22xi32>
    %31 = arith.cmpi eq, %8, %30 : vector<32x22xi32>
    %cst_12 = arith.constant 0.266011745 : f32
    %32 = vector.broadcast %cst_12 : f32 to vector<32x22xf32>
    %33 = arith.select %31, %32, %29 : vector<32x22xi1>, vector<32x22xf32>
    %c6_i32 = arith.constant 6 : i32
    %34 = vector.broadcast %c6_i32 : i32 to vector<32x22xi32>
    %35 = arith.cmpi eq, %8, %34 : vector<32x22xi32>
    %cst_13 = arith.constant 0.213005543 : f32
    %36 = vector.broadcast %cst_13 : f32 to vector<32x22xf32>
    %37 = arith.select %35, %36, %33 : vector<32x22xi1>, vector<32x22xf32>
    %c7_i32 = arith.constant 7 : i32
    %38 = vector.broadcast %c7_i32 : i32 to vector<32x22xi32>
    %39 = arith.cmpi eq, %8, %38 : vector<32x22xi32>
    %cst_14 = arith.constant 0.109360702 : f32
    %40 = vector.broadcast %cst_14 : f32 to vector<32x22xf32>
    %41 = arith.select %39, %40, %37 : vector<32x22xi1>, vector<32x22xf32>
    %c8_i32 = arith.constant 8 : i32
    %42 = vector.broadcast %c8_i32 : i32 to vector<32x22xi32>
    %43 = arith.cmpi eq, %8, %42 : vector<32x22xi32>
    %cst_15 = arith.constant 0.0360007733 : f32
    %44 = vector.broadcast %cst_15 : f32 to vector<32x22xf32>
    %45 = arith.select %43, %44, %41 : vector<32x22xi1>, vector<32x22xf32>
    %c9_i32 = arith.constant 9 : i32
    %46 = vector.broadcast %c9_i32 : i32 to vector<32x22xi32>
    %47 = arith.cmpi eq, %8, %46 : vector<32x22xi32>
    %cst_16 = arith.constant 0.00759875868 : f32
    %48 = vector.broadcast %cst_16 : f32 to vector<32x22xf32>
    %49 = arith.select %47, %48, %45 : vector<32x22xi1>, vector<32x22xf32>
    %c10_i32 = arith.constant 10 : i32
    %50 = vector.broadcast %c10_i32 : i32 to vector<32x22xi32>
    %51 = arith.cmpi eq, %8, %50 : vector<32x22xi32>
    %cst_17 = arith.constant 0.00102838036 : f32
    %52 = vector.broadcast %cst_17 : f32 to vector<32x22xf32>
    %53 = arith.select %51, %52, %49 : vector<32x22xi1>, vector<32x22xf32>
    %54 = tpu.iota {dimensions = array<i32: 0>} : vector<22x32xi32>
    %55 = tpu.iota {dimensions = array<i32: 1>} : vector<22x32xi32>
    %56 = arith.subi %55, %54 : vector<22x32xi32>
    %cst_18 = arith.constant 0.000000e+00 : f32
    %57 = vector.broadcast %cst_18 : f32 to vector<22x32xf32>
    %c0_i32_19 = arith.constant 0 : i32
    %58 = vector.broadcast %c0_i32_19 : i32 to vector<22x32xi32>
    %59 = arith.cmpi eq, %56, %58 : vector<22x32xi32>
    %cst_20 = arith.constant 0.00102838036 : f32
    %60 = vector.broadcast %cst_20 : f32 to vector<22x32xf32>
    %61 = arith.select %59, %60, %57 : vector<22x32xi1>, vector<22x32xf32>
    %c1_i32_21 = arith.constant 1 : i32
    %62 = vector.broadcast %c1_i32_21 : i32 to vector<22x32xi32>
    %63 = arith.cmpi eq, %56, %62 : vector<22x32xi32>
    %cst_22 = arith.constant 0.00759875868 : f32
    %64 = vector.broadcast %cst_22 : f32 to vector<22x32xf32>
    %65 = arith.select %63, %64, %61 : vector<22x32xi1>, vector<22x32xf32>
    %c2_i32_23 = arith.constant 2 : i32
    %66 = vector.broadcast %c2_i32_23 : i32 to vector<22x32xi32>
    %67 = arith.cmpi eq, %56, %66 : vector<22x32xi32>
    %cst_24 = arith.constant 0.0360007733 : f32
    %68 = vector.broadcast %cst_24 : f32 to vector<22x32xf32>
    %69 = arith.select %67, %68, %65 : vector<22x32xi1>, vector<22x32xf32>
    %c3_i32_25 = arith.constant 3 : i32
    %70 = vector.broadcast %c3_i32_25 : i32 to vector<22x32xi32>
    %71 = arith.cmpi eq, %56, %70 : vector<22x32xi32>
    %cst_26 = arith.constant 0.109360702 : f32
    %72 = vector.broadcast %cst_26 : f32 to vector<22x32xf32>
    %73 = arith.select %71, %72, %69 : vector<22x32xi1>, vector<22x32xf32>
    %c4_i32_27 = arith.constant 4 : i32
    %74 = vector.broadcast %c4_i32_27 : i32 to vector<22x32xi32>
    %75 = arith.cmpi eq, %56, %74 : vector<22x32xi32>
    %cst_28 = arith.constant 0.213005543 : f32
    %76 = vector.broadcast %cst_28 : f32 to vector<22x32xf32>
    %77 = arith.select %75, %76, %73 : vector<22x32xi1>, vector<22x32xf32>
    %c5_i32_29 = arith.constant 5 : i32
    %78 = vector.broadcast %c5_i32_29 : i32 to vector<22x32xi32>
    %79 = arith.cmpi eq, %56, %78 : vector<22x32xi32>
    %cst_30 = arith.constant 0.266011745 : f32
    %80 = vector.broadcast %cst_30 : f32 to vector<22x32xf32>
    %81 = arith.select %79, %80, %77 : vector<22x32xi1>, vector<22x32xf32>
    %c6_i32_31 = arith.constant 6 : i32
    %82 = vector.broadcast %c6_i32_31 : i32 to vector<22x32xi32>
    %83 = arith.cmpi eq, %56, %82 : vector<22x32xi32>
    %cst_32 = arith.constant 0.213005543 : f32
    %84 = vector.broadcast %cst_32 : f32 to vector<22x32xf32>
    %85 = arith.select %83, %84, %81 : vector<22x32xi1>, vector<22x32xf32>
    %c7_i32_33 = arith.constant 7 : i32
    %86 = vector.broadcast %c7_i32_33 : i32 to vector<22x32xi32>
    %87 = arith.cmpi eq, %56, %86 : vector<22x32xi32>
    %cst_34 = arith.constant 0.109360702 : f32
    %88 = vector.broadcast %cst_34 : f32 to vector<22x32xf32>
    %89 = arith.select %87, %88, %85 : vector<22x32xi1>, vector<22x32xf32>
    %c8_i32_35 = arith.constant 8 : i32
    %90 = vector.broadcast %c8_i32_35 : i32 to vector<22x32xi32>
    %91 = arith.cmpi eq, %56, %90 : vector<22x32xi32>
    %cst_36 = arith.constant 0.0360007733 : f32
    %92 = vector.broadcast %cst_36 : f32 to vector<22x32xf32>
    %93 = arith.select %91, %92, %89 : vector<22x32xi1>, vector<22x32xf32>
    %c9_i32_37 = arith.constant 9 : i32
    %94 = vector.broadcast %c9_i32_37 : i32 to vector<22x32xi32>
    %95 = arith.cmpi eq, %56, %94 : vector<22x32xi32>
    %cst_38 = arith.constant 0.00759875868 : f32
    %96 = vector.broadcast %cst_38 : f32 to vector<22x32xf32>
    %97 = arith.select %95, %96, %93 : vector<22x32xi1>, vector<22x32xf32>
    %c10_i32_39 = arith.constant 10 : i32
    %98 = vector.broadcast %c10_i32_39 : i32 to vector<22x32xi32>
    %99 = arith.cmpi eq, %56, %98 : vector<22x32xi32>
    %cst_40 = arith.constant 0.00102838036 : f32
    %100 = vector.broadcast %cst_40 : f32 to vector<22x32xf32>
    %101 = arith.select %99, %100, %97 : vector<22x32xi1>, vector<22x32xf32>
    %102 = arith.mulf %2, %2 : vector<128x32xf32>
    %103 = arith.mulf %5, %5 : vector<128x32xf32>
    %104 = arith.mulf %2, %5 : vector<128x32xf32>
    %105 = tpu.concatenate %2, %5, %102, %103, %104 in 0 : vector<128x32xf32>, vector<128x32xf32>, vector<128x32xf32>, vector<128x32xf32>, vector<128x32xf32> -> vector<640x32xf32>
    %cst_41 = arith.constant dense<0.000000e+00> : vector<640x22xf32>
    %106 = tpu.matmul %105, %53, %cst_41 {dimension_numbers = #tpu.dot_dimension_numbers<[1], [0], [0], [1], [0, 0, 1, 1], [], []>, precision = #tpu.contract_precision<fp32>} : vector<640x32xf32>, vector<32x22xf32>, vector<640x22xf32> -> vector<640x22xf32>
    %107 = vector.extract_strided_slice %106 {offsets = [0, 0], sizes = [32, 22], strides = [1, 1]} : vector<640x22xf32> to vector<32x22xf32>
    %108 = vector.extract_strided_slice %106 {offsets = [32, 0], sizes = [32, 22], strides = [1, 1]} : vector<640x22xf32> to vector<32x22xf32>
    %109 = vector.extract_strided_slice %106 {offsets = [64, 0], sizes = [32, 22], strides = [1, 1]} : vector<640x22xf32> to vector<32x22xf32>
    %110 = vector.extract_strided_slice %106 {offsets = [96, 0], sizes = [32, 22], strides = [1, 1]} : vector<640x22xf32> to vector<32x22xf32>
    %111 = vector.extract_strided_slice %106 {offsets = [128, 0], sizes = [32, 22], strides = [1, 1]} : vector<640x22xf32> to vector<32x22xf32>
    %112 = vector.extract_strided_slice %106 {offsets = [160, 0], sizes = [32, 22], strides = [1, 1]} : vector<640x22xf32> to vector<32x22xf32>
    %113 = vector.extract_strided_slice %106 {offsets = [192, 0], sizes = [32, 22], strides = [1, 1]} : vector<640x22xf32> to vector<32x22xf32>
    %114 = vector.extract_strided_slice %106 {offsets = [224, 0], sizes = [32, 22], strides = [1, 1]} : vector<640x22xf32> to vector<32x22xf32>
    %115 = vector.extract_strided_slice %106 {offsets = [256, 0], sizes = [32, 22], strides = [1, 1]} : vector<640x22xf32> to vector<32x22xf32>
    %116 = vector.extract_strided_slice %106 {offsets = [288, 0], sizes = [32, 22], strides = [1, 1]} : vector<640x22xf32> to vector<32x22xf32>
    %117 = vector.extract_strided_slice %106 {offsets = [320, 0], sizes = [32, 22], strides = [1, 1]} : vector<640x22xf32> to vector<32x22xf32>
    %118 = vector.extract_strided_slice %106 {offsets = [352, 0], sizes = [32, 22], strides = [1, 1]} : vector<640x22xf32> to vector<32x22xf32>
    %119 = vector.extract_strided_slice %106 {offsets = [384, 0], sizes = [32, 22], strides = [1, 1]} : vector<640x22xf32> to vector<32x22xf32>
    %120 = vector.extract_strided_slice %106 {offsets = [416, 0], sizes = [32, 22], strides = [1, 1]} : vector<640x22xf32> to vector<32x22xf32>
    %121 = vector.extract_strided_slice %106 {offsets = [448, 0], sizes = [32, 22], strides = [1, 1]} : vector<640x22xf32> to vector<32x22xf32>
    %122 = vector.extract_strided_slice %106 {offsets = [480, 0], sizes = [32, 22], strides = [1, 1]} : vector<640x22xf32> to vector<32x22xf32>
    %123 = vector.extract_strided_slice %106 {offsets = [512, 0], sizes = [32, 22], strides = [1, 1]} : vector<640x22xf32> to vector<32x22xf32>
    %124 = vector.extract_strided_slice %106 {offsets = [544, 0], sizes = [32, 22], strides = [1, 1]} : vector<640x22xf32> to vector<32x22xf32>
    %125 = vector.extract_strided_slice %106 {offsets = [576, 0], sizes = [32, 22], strides = [1, 1]} : vector<640x22xf32> to vector<32x22xf32>
    %126 = vector.extract_strided_slice %106 {offsets = [608, 0], sizes = [32, 22], strides = [1, 1]} : vector<640x22xf32> to vector<32x22xf32>
    %127 = tpu.concatenate %107, %108, %109, %110, %111, %112, %113, %114, %115, %116, %117, %118, %119, %120, %121, %122 in 1 : vector<32x22xf32>, vector<32x22xf32>, vector<32x22xf32>, vector<32x22xf32>, vector<32x22xf32>, vector<32x22xf32>, vector<32x22xf32>, vector<32x22xf32>, vector<32x22xf32>, vector<32x22xf32>, vector<32x22xf32>, vector<32x22xf32>, vector<32x22xf32>, vector<32x22xf32>, vector<32x22xf32>, vector<32x22xf32> -> vector<32x352xf32>
    %128 = tpu.concatenate %123, %124, %125, %126 in 1 : vector<32x22xf32>, vector<32x22xf32>, vector<32x22xf32>, vector<32x22xf32> -> vector<32x88xf32>
    %129 = tpu.concatenate %127, %128 in 1 : vector<32x352xf32>, vector<32x88xf32> -> vector<32x440xf32>
    %cst_42 = arith.constant dense<0.000000e+00> : vector<22x440xf32>
    %130 = tpu.matmul %101, %129, %cst_42 {dimension_numbers = #tpu.dot_dimension_numbers<[1], [0], [0], [1], [0, 0, 1, 1], [], []>, precision = #tpu.contract_precision<fp32>} : vector<22x32xf32>, vector<32x440xf32>, vector<22x440xf32> -> vector<22x440xf32>
    %131 = vector.extract_strided_slice %130 {offsets = [0, 0], sizes = [22, 88], strides = [1, 1]} : vector<22x440xf32> to vector<22x88xf32>
    %132 = vector.extract_strided_slice %130 {offsets = [0, 88], sizes = [22, 88], strides = [1, 1]} : vector<22x440xf32> to vector<22x88xf32>
    %133 = vector.extract_strided_slice %130 {offsets = [0, 176], sizes = [22, 88], strides = [1, 1]} : vector<22x440xf32> to vector<22x88xf32>
    %134 = vector.extract_strided_slice %130 {offsets = [0, 264], sizes = [22, 88], strides = [1, 1]} : vector<22x440xf32> to vector<22x88xf32>
    %135 = vector.extract_strided_slice %130 {offsets = [0, 352], sizes = [22, 88], strides = [1, 1]} : vector<22x440xf32> to vector<22x88xf32>
    %136 = arith.mulf %131, %131 : vector<22x88xf32>
    %137 = arith.mulf %132, %132 : vector<22x88xf32>
    %138 = arith.mulf %131, %132 : vector<22x88xf32>
    %139 = arith.subf %133, %136 : vector<22x88xf32>
    %140 = arith.subf %134, %137 : vector<22x88xf32>
    %141 = arith.subf %135, %138 : vector<22x88xf32>
    %cst_43 = arith.constant 2.000000e+00 : f32
    %142 = vector.broadcast %cst_43 : f32 to vector<22x88xf32>
    %143 = arith.mulf %142, %138 : vector<22x88xf32>
    %cst_44 = arith.constant 6.502500e+00 : f32
    %144 = vector.broadcast %cst_44 : f32 to vector<22x88xf32>
    %145 = arith.addf %143, %144 : vector<22x88xf32>
    %cst_45 = arith.constant 2.000000e+00 : f32
    %146 = vector.broadcast %cst_45 : f32 to vector<22x88xf32>
    %147 = arith.mulf %146, %141 : vector<22x88xf32>
    %cst_46 = arith.constant 5.852250e+01 : f32
    %148 = vector.broadcast %cst_46 : f32 to vector<22x88xf32>
    %149 = arith.addf %147, %148 : vector<22x88xf32>
    %150 = arith.mulf %145, %149 : vector<22x88xf32>
    %151 = arith.addf %136, %137 : vector<22x88xf32>
    %cst_47 = arith.constant 6.502500e+00 : f32
    %152 = vector.broadcast %cst_47 : f32 to vector<22x88xf32>
    %153 = arith.addf %151, %152 : vector<22x88xf32>
    %154 = arith.addf %139, %140 : vector<22x88xf32>
    %cst_48 = arith.constant 5.852250e+01 : f32
    %155 = vector.broadcast %cst_48 : f32 to vector<22x88xf32>
    %156 = arith.addf %154, %155 : vector<22x88xf32>
    %157 = arith.mulf %153, %156 : vector<22x88xf32>
    %158 = arith.divf %150, %157 : vector<22x88xf32>
    %cst_49 = arith.constant dense<0.000000e+00> : vector<88xf32>
    %159 = vector.multi_reduction <add>, %158, %cst_49 [0] : vector<22x88xf32> to vector<88xf32>
    %160 = vector.shape_cast %159 : vector<88xf32> to vector<1x88xf32>
    %161 = vector.extract_strided_slice %160 {offsets = [0, 0], sizes = [1, 22], strides = [1, 1]} : vector<1x88xf32> to vector<1x22xf32>
    %cst_50 = arith.constant dense<0.000000e+00> : vector<1xf32>
    %162 = vector.multi_reduction <add>, %161, %cst_50 [1] : vector<1x22xf32> to vector<1xf32>
    %163 = vector.shape_cast %162 : vector<1xf32> to vector<1x1xf32>
    %164 = vector.extract_strided_slice %160 {offsets = [0, 22], sizes = [1, 22], strides = [1, 1]} : vector<1x88xf32> to vector<1x22xf32>
    %cst_51 = arith.constant dense<0.000000e+00> : vector<1xf32>
    %165 = vector.multi_reduction <add>, %164, %cst_51 [1] : vector<1x22xf32> to vector<1xf32>
    %166 = vector.shape_cast %165 : vector<1xf32> to vector<1x1xf32>
    %167 = vector.extract_strided_slice %160 {offsets = [0, 44], sizes = [1, 22], strides = [1, 1]} : vector<1x88xf32> to vector<1x22xf32>
    %cst_52 = arith.constant dense<0.000000e+00> : vector<1xf32>
    %168 = vector.multi_reduction <add>, %167, %cst_52 [1] : vector<1x22xf32> to vector<1xf32>
    %169 = vector.shape_cast %168 : vector<1xf32> to vector<1x1xf32>
    %170 = vector.extract_strided_slice %160 {offsets = [0, 66], sizes = [1, 22], strides = [1, 1]} : vector<1x88xf32> to vector<1x22xf32>
    %cst_53 = arith.constant dense<0.000000e+00> : vector<1xf32>
    %171 = vector.multi_reduction <add>, %170, %cst_53 [1] : vector<1x22xf32> to vector<1xf32>
    %172 = vector.shape_cast %171 : vector<1xf32> to vector<1x1xf32>
    %173 = tpu.concatenate %163, %166, %169, %172 in 1 : vector<1x1xf32>, vector<1x1xf32>, vector<1x1xf32>, vector<1x1xf32> -> vector<1x4xf32>
    %cst_54 = arith.constant 0.00206611562 : f32
    %174 = vector.broadcast %cst_54 : f32 to vector<1x4xf32>
    %175 = arith.mulf %173, %174 : vector<1x4xf32>
    %c0_55 = arith.constant 0 : index
    %c0_56 = arith.constant 0 : index
    %c0_57 = arith.constant 0 : index
    %c0_58 = arith.constant 0 : index
    %176 = vector.load %arg4[%c0_55, %c0_56, %c0_57, %c0_58] : memref<1x1x1x4xf32, #tpu.memory_space<vmem>>, vector<1x1x1x4xf32>
    %177 = vector.shape_cast %176 : vector<1x1x1x4xf32> to vector<1x4xf32>
    %178 = vector.shape_cast %175 : vector<1x4xf32> to vector<1x1x1x4xf32>
    tpu.vector_store %arg4[%c0_55, %c0_56, %c0_57, %c0_58], %178 {strides = array<i32>} : memref<1x1x1x4xf32, #tpu.memory_space<vmem>>, vector<1x1x1x4xf32>,
    return
  }
  func.func @transform_0(%arg0: i32, %arg1: i32) -> (i32, i32, i32, i32) {
    %c0_i32 = arith.constant 0 : i32
    %c0_i32_0 = arith.constant 0 : i32
    %c0_i32_1 = arith.constant 0 : i32
    return %arg0, %arg1, %c0_i32, %c0_i32_0 : i32, i32, i32, i32
  }
  func.func @transform_1(%arg0: i32, %arg1: i32) -> (i32, i32, i32, i32) {
    %c0_i32 = arith.constant 0 : i32
    %c0_i32_0 = arith.constant 0 : i32
    %c0_i32_1 = arith.constant 0 : i32
    return %arg0, %arg1, %c0_i32, %c0_i32_0 : i32, i32, i32, i32
  }
  func.func @transform_2(%arg0: i32, %arg1: i32) -> (i32, i32, i32, i32) {
    %c0_i32 = arith.constant 0 : i32
    %c0_i32_0 = arith.constant 0 : i32
    %c0_i32_1 = arith.constant 0 : i32
    return %arg0, %arg1, %c0_i32, %c0_i32_0 : i32, i32, i32, i32
  }
}

</mosaic_0001>

<llo_original>
// kernel: tpu_custom_call.1
$region0: #{tpu_custom_call.1}
  #allocation0 [shape = 'u32[]', space=smem, size = 0x4, offset = 0x4, fixed_abs, tag = 'smem constant byte address 0x4 - core index']
  #allocation1 [shape = 'u32[144,128]{1,0:T(1,128)}', space=vmem, size = 0x12000, scoped, tag = 'internal scratch']
  %s0 = inlined_call_operand.hbm [shape: f32[2,4,32,32], index: 0, kind: input, shape index: {}]
  %s1 = inlined_call_operand.hbm [shape: f32[2,4,32,32], index: 1, kind: input, shape index: {}]
  %s2 = inlined_call_operand.hbm [shape: f32[2,1,1,4], index: 2, kind: output, shape index: {}]
  %s3 = sld [smem:[#allocation0]]
  $region49: #{tpu_custom_call.1} parent=0
    _
  %s5 = ssub.s32 1, %s3
  %s6 = scalar_select 0, %s5, %s3
  $region1: #{tpu_custom_call.1} parent=0
    #allocation2 [shape = 'u8[131072]{0}', space=vmem, size = 0x20000, scoped, tag = 'input window, operand 0']
    #allocation3 [shape = 's32[2]{0}', space=sflag, size = 0x8, scoped, tag = 'scoped memory for tpu_custom_call.1']
    #allocation4 [shape = 's32[2]{0}', space=sflag, size = 0x8, scoped, tag = 'scoped memory for tpu_custom_call.1']
    #allocation5 [shape = 'u8[131072]{0}', space=vmem, size = 0x20000, scoped, tag = 'input window, operand 1']
    #allocation6 [shape = 's32[2]{0}', space=sflag, size = 0x8, scoped, tag = 'scoped memory for tpu_custom_call.1']
    #allocation7 [shape = 'u8[1024]{0}', space=vmem, size = 0x400, scoped, tag = 'output window, operand 0']
    %7 = vsyncpa [#allocation3], 0
    %s8 = scalar_lea.sflag [#allocation3], 1
    %9 = vsyncpa %s8, 0
    %10 = vsyncpa [#allocation6], 0
    %s11 = scalar_lea.sflag [#allocation6], 1
    %12 = vsyncpa %s11, 0
    %13 = vsyncpa [#allocation4], 0
    %s14 = scalar_lea.sflag [#allocation4], 1
    %15 = vsyncpa %s14, 0
    loop: start=0, step=1, limit=4
    $region2: #{tpu_custom_call.1} parent=1 // loop_pre_header
      _
    $region3: #{tpu_custom_call.1} parent=1 // loop_header
      %s17 = sphi 0, %s21
      %p18 = scmp.ge.s32.totalorder %s17, 4
      %s24 = sphi 0, %s36
      %s25 = sphi 0, %s32
      %s26 = sphi 0, %s24
      %s27 = sphi 0, %s25
      %s28 = sphi 0, %s26
      %s29 = sphi 0, %s27
      %s41 = sphi 0, %s43
      %s44 = sphi 0, %s41
      %s45 = sphi 0, %s44
      %s61 = sphi 0, %s45
      %s69 = sphi 0, %s71
      %s72 = sphi 0, %s69
      %s73 = sphi 0, %s72
      %s89 = sphi 0, %s73
      %s97 = sphi 0, %s99
      %s100 = sphi 0, %s97
      %s101 = sphi 0, %s100
      %s117 = sphi 0, %s101
    $region4: #{tpu_custom_call.1} parent=1 // loop_header_branch
      %20 = sbr.rel (%p18) target = $region8
    $region5: #{tpu_custom_call.1} parent=1 // loop_body
      %s22 = ssub.s32 %s17, 1
      %s23 = ssub.s32 %s17, 2
      %s30 = sadd.s32 1, %s25
      %p31 = scmp.ge.s32.totalorder %s30, 1
      %s32 = scalar_select %p31, 0, %s30
      %s33 = sadd.s32 1, %s24
      %s34 = scalar_select %p31, %s33, %s24
      %p35 = scmp.ge.s32.totalorder %s34, 2
      %s36 = scalar_select %p35, 0, %s34
      %s37 = ssub.s32 %s24, %s36
      %s38 = ssub.s32 %s25, %s32
      %s39 = sor.u32 %s37, %s38
      %p40 = scmp.eq.s32.totalorder %s39, 0
      %s42 = sadd.s32 %s41, 1
      %s43 = scalar_select %p40, %s41, %s42
      %p46 = pneg %p40
      %p47 = scmp.eq.s32.totalorder %s17, 1
      %p48 = por %p46, %p47
      %p49 = scmp.ne.s32.totalorder %s41, %s44
      %p50 = scmp.eq.s32.totalorder %s17, 0
      %p51 = por %p49, %p50
      %p52 = scmp.ne.s32.totalorder %s41, %s44
      %p53 = scmp.eq.s32.totalorder %s22, 1
      %p54 = por %p52, %p53
      %p55 = scmp.ne.s32.totalorder %s44, %s45
      %p56 = scmp.eq.s32.totalorder %s22, 0
      %p57 = por %p55, %p56
      %p58 = scmp.ne.s32.totalorder %s44, %s45
      %p59 = scmp.eq.s32.totalorder %s23, 1
      %p60 = por %p58, %p59
      %p62 = scmp.ne.s32.totalorder %s45, %s61
      %p63 = scmp.eq.s32.totalorder %s23, 0
      %p64 = por %p62, %p63
      %s65 = ssub.s32 %s24, %s36
      %s66 = ssub.s32 %s25, %s32
      %s67 = sor.u32 %s65, %s66
      %p68 = scmp.eq.s32.totalorder %s67, 0
      %s70 = sadd.s32 %s69, 1
      %s71 = scalar_select %p68, %s69, %s70
      %p74 = pneg %p68
      %p75 = scmp.eq.s32.totalorder %s17, 1
      %p76 = por %p74, %p75
      %p77 = scmp.ne.s32.totalorder %s69, %s72
      %p78 = scmp.eq.s32.totalorder %s17, 0
      %p79 = por %p77, %p78
      %p80 = scmp.ne.s32.totalorder %s69, %s72
      %p81 = scmp.eq.s32.totalorder %s22, 1
      %p82 = por %p80, %p81
      %p83 = scmp.ne.s32.totalorder %s72, %s73
      %p84 = scmp.eq.s32.totalorder %s22, 0
      %p85 = por %p83, %p84
      %p86 = scmp.ne.s32.totalorder %s72, %s73
      %p87 = scmp.eq.s32.totalorder %s23, 1
      %p88 = por %p86, %p87
      %p90 = scmp.ne.s32.totalorder %s73, %s89
      %p91 = scmp.eq.s32.totalorder %s23, 0
      %p92 = por %p90, %p91
      %s93 = ssub.s32 %s24, %s36
      %s94 = ssub.s32 %s25, %s32
      %s95 = sor.u32 %s93, %s94
      %p96 = scmp.eq.s32.totalorder %s95, 0
      %s98 = sadd.s32 %s97, 1
      %s99 = scalar_select %p96, %s97, %s98
      %p102 = pneg %p96
      %p103 = scmp.eq.s32.totalorder %s17, 1
      %p104 = por %p102, %p103
      %p105 = scmp.ne.s32.totalorder %s97, %s100
      %p106 = scmp.eq.s32.totalorder %s17, 0
      %p107 = por %p105, %p106
      %p108 = scmp.ne.s32.totalorder %s97, %s100
      %p109 = scmp.eq.s32.totalorder %s22, 1
      %p110 = por %p108, %p109
      %p111 = scmp.ne.s32.totalorder %s100, %s101
      %p112 = scmp.eq.s32.totalorder %s22, 0
      %p113 = por %p111, %p112
      %p114 = scmp.ne.s32.totalorder %s100, %s101
      %p115 = scmp.eq.s32.totalorder %s23, 1
      %p116 = por %p114, %p115
      %p118 = scmp.ne.s32.totalorder %s101, %s117
      %p119 = scmp.eq.s32.totalorder %s23, 0
      %p120 = por %p118, %p119
      %p121 = scmp.le.s32.totalorder 1, %s17
      %p122 = scmp.lt.s32.totalorder %s17, 3
      %p123 = pnand %p121, %p122
      %p124 = pneg %p123
      // Predicated region
      $region9: #{tpu_custom_call.1} parent=5 // pred_check
        _
      $region10: #{tpu_custom_call.1} parent=5 // pred_check_branch
        %126 = sbr.rel (%p123) target = $region12
      $region11: #{tpu_custom_call.1} parent=5 // pred_region
        %s127 = ssub.s32 %s17, 1
      $region12: #{tpu_custom_call.1} parent=5 // pred_fallthru
        _
      %p128 = scmp.lt.s32.totalorder %s17, 2
      // Predicated region
      $region13: #{tpu_custom_call.1} parent=5 // pred_check
        %p129 = pneg %p128
      $region14: #{tpu_custom_call.1} parent=5 // pred_check_branch
        %131 = sbr.rel (%p129) target = $region16
      $region15: #{tpu_custom_call.1} parent=5 // pred_region
        // Predicated region
        $region17: #{tpu_custom_call.1} parent=15 // pred_check
          %p132 = pneg %p51
        $region18: #{tpu_custom_call.1} parent=15 // pred_check_branch
          %134 = sbr.rel (%p132) target = $region20
        $region19: #{tpu_custom_call.1} parent=15 // pred_region
          %s135 = sand.u32 %s41, 1
          %s136 = scalar_lea.sflag [#allocation3], %s135
          %s137 = sand.u32 %s41, 1
          %s138 = smul.addr %s137, 128
          %s139 = scalar_lea.vmem [#allocation2], %s138
          %s140 = smul.u32 4, %s25
          %s142 = ssub.s32 2048, 2048
          %143 = vsyncadd %s136, %s142
          %s144 = smul.addr %s140, 4
          %s145 = smul.addr %s24, 16
          %s146 = sadd.s32 %s144, %s145
          %s147 = smul.addr %s146, 128
          %s148 = scalar_lea.hbm %s0, %s147
          %s149 = sshll.u32 %s139, 4
          %s150 = int_to_ptr.vmem [resolvable:$true] %s149
          %155 = dma.hbm_to_vmem [thread:$0]  %s148, 2048, %s150, %s136, 128, 128, 8
        $region20: #{tpu_custom_call.1} parent=15 // pred_fallthru
          _
        // Predicated region
        $region21: #{tpu_custom_call.1} parent=15 // pred_check
          %p156 = pneg %p79
        $region22: #{tpu_custom_call.1} parent=15 // pred_check_branch
          %158 = sbr.rel (%p156) target = $region24
        $region23: #{tpu_custom_call.1} parent=15 // pred_region
          %s159 = sand.u32 %s69, 1
          %s160 = scalar_lea.sflag [#allocation6], %s159
          %s161 = sand.u32 %s69, 1
          %s162 = smul.addr %s161, 128
          %s163 = scalar_lea.vmem [#allocation5], %s162
          %s164 = smul.u32 4, %s25
          %s166 = ssub.s32 2048, 2048
          %167 = vsyncadd %s160, %s166
          %s168 = smul.addr %s164, 4
          %s169 = smul.addr %s24, 16
          %s170 = sadd.s32 %s168, %s169
          %s171 = smul.addr %s170, 128
          %s172 = scalar_lea.hbm %s1, %s171
          %s173 = sshll.u32 %s163, 4
          %s174 = int_to_ptr.vmem [resolvable:$true] %s173
          %179 = dma.hbm_to_vmem [thread:$0]  %s172, 2048, %s174, %s160, 128, 128, 8
        $region24: #{tpu_custom_call.1} parent=15 // pred_fallthru
          _
      $region16: #{tpu_custom_call.1} parent=5 // pred_fallthru
        _
      %p180 = scmp.le.s32.totalorder 1, %s17
      %p181 = scmp.lt.s32.totalorder %s17, 3
      %p182 = pnand %p180, %p181
      %p183 = pneg %p182
      // Predicated region
      $region25: #{tpu_custom_call.1} parent=5 // pred_check
        _
      $region26: #{tpu_custom_call.1} parent=5 // pred_check_branch
        %185 = sbr.rel (%p182) target = $region28
      $region27: #{tpu_custom_call.1} parent=5 // pred_region
        %s186 = ssub.s32 %s17, 1
        %s187 = sand.u32 %s44, 1
        %s188 = scalar_lea.sflag [#allocation3], %s187
        %s189 = sand.u32 %s44, 1
        %s190 = smul.addr %s189, 128
        %s191 = scalar_lea.vmem [#allocation2], %s190
        // Predicated region
        $region29: #{tpu_custom_call.1} parent=27 // pred_check
          %p192 = pneg %p57
        $region30: #{tpu_custom_call.1} parent=27 // pred_check_branch
          %194 = sbr.rel (%p192) target = $region32
        $region31: #{tpu_custom_call.1} parent=27 // pred_region
          %195 = dma.done %s188, 2048
        $region32: #{tpu_custom_call.1} parent=27 // pred_fallthru
          _
        %s196 = sand.u32 %s72, 1
        %s197 = scalar_lea.sflag [#allocation6], %s196
        %s198 = sand.u32 %s72, 1
        %s199 = smul.addr %s198, 128
        %s200 = scalar_lea.vmem [#allocation5], %s199
        // Predicated region
        $region33: #{tpu_custom_call.1} parent=27 // pred_check
          %p201 = pneg %p85
        $region34: #{tpu_custom_call.1} parent=27 // pred_check_branch
          %203 = sbr.rel (%p201) target = $region36
        $region35: #{tpu_custom_call.1} parent=27 // pred_region
          %204 = dma.done %s197, 2048
        $region36: #{tpu_custom_call.1} parent=27 // pred_fallthru
          _
        %s205 = sand.u32 %s44, 1
        %s206 = scalar_lea.sflag [#allocation3], %s205
        %s207 = sand.u32 %s44, 1
        %s208 = smul.addr %s207, 128
        %s209 = scalar_lea.vmem [#allocation2], %s208
        %p210 = pneg %p57
        %p211 = pneg %p54
        %s212 = sand.u32 %s72, 1
        %s213 = scalar_lea.sflag [#allocation6], %s212
        %s214 = sand.u32 %s72, 1
        %s215 = smul.addr %s214, 128
        %s216 = scalar_lea.vmem [#allocation5], %s215
        %p217 = pneg %p85
        %p218 = pneg %p82
        %p219 = pneg %p113
        %p220 = pneg %p110
        %s221 = sand.u32 %s100, 1
        %s222 = scalar_lea.sflag [#allocation4], %s221
        %s223 = sand.u32 %s100, 1
        %s224 = scalar_lea.vmem [#allocation7], %s223
        %s225 = smul.u32 4, %s27
        %s226 = smul.u32 4, %s27
        %v227 = vld [vmem:[%s191] sm:$0xff]
        %v228 = vld [vmem:[%s191 + $0x8] sm:$0xff]
        %v229 = vld [vmem:[%s191 + $0x10] sm:$0xff]
        %v230 = vld [vmem:[%s191 + $0x18] sm:$0xff]
        %v231 = vld [vmem:[%s191 + $0x20] sm:$0xff]
        %v232 = vld [vmem:[%s191 + $0x28] sm:$0xff]
        %v233 = vld [vmem:[%s191 + $0x30] sm:$0xff]
        %v234 = vld [vmem:[%s191 + $0x38] sm:$0xff]
        %v235 = vld [vmem:[%s191 + $0x40] sm:$0xff]
        %v236 = vld [vmem:[%s191 + $0x48] sm:$0xff]
        %v237 = vld [vmem:[%s191 + $0x50] sm:$0xff]
        %v238 = vld [vmem:[%s191 + $0x58] sm:$0xff]
        %v239 = vld [vmem:[%s191 + $0x60] sm:$0xff]
        %v240 = vld [vmem:[%s191 + $0x68] sm:$0xff]
        %v241 = vld [vmem:[%s191 + $0x70] sm:$0xff]
        %v242 = vld [vmem:[%s191 + $0x78] sm:$0xff]
        %v243 = vld [vmem:[%s200] sm:$0xff]
        %v244 = vld [vmem:[%s200 + $0x8] sm:$0xff]
        %v245 = vld [vmem:[%s200 + $0x10] sm:$0xff]
        %v246 = vld [vmem:[%s200 + $0x18] sm:$0xff]
        %v247 = vld [vmem:[%s200 + $0x20] sm:$0xff]
        %v248 = vld [vmem:[%s200 + $0x28] sm:$0xff]
        %v249 = vld [vmem:[%s200 + $0x30] sm:$0xff]
        %v250 = vld [vmem:[%s200 + $0x38] sm:$0xff]
        %v251 = vld [vmem:[%s200 + $0x40] sm:$0xff]
        %v252 = vld [vmem:[%s200 + $0x48] sm:$0xff]
        %v253 = vld [vmem:[%s200 + $0x50] sm:$0xff]
        %v254 = vld [vmem:[%s200 + $0x58] sm:$0xff]
        %v255 = vld [vmem:[%s200 + $0x60] sm:$0xff]
        %v256 = vld [vmem:[%s200 + $0x68] sm:$0xff]
        %v257 = vld [vmem:[%s200 + $0x70] sm:$0xff]
        %v258 = vld [vmem:[%s200 + $0x78] sm:$0xff]
        %v259 = vlaneseq
        %v260 = vshrl.u32 %v259, 7
        %v261 = vadd.s32 %v260, 8
        %v262 = vadd.s32 %v260, 16
        %v263 = vadd.s32 %v260, 24
        %v264 = vlaneseq
        %v265 = vand.u32 %v264, 127
        %v266 = vsub.s32 %v260, %v265
        %v267 = vsub.s32 %v261, %v265
        %v268 = vsub.s32 %v262, %v265
        %v269 = vsub.s32 %v263, %v265
        %vm270 = vcmp.eq.s32.totalorder %v266, 0
        %vm271 = vcmp.eq.s32.totalorder %v267, 0
        %vm272 = vcmp.eq.s32.totalorder %v268, 0
        %vm273 = vcmp.eq.s32.totalorder %v269, 0
        %v274 = vsel %vm270, 0.0010283804, 0.0
        %v275 = vsel %vm271, 0.0010283804, 0.0
        %v276 = vsel %vm272, 0.0010283804, 0.0
        %v277 = vsel %vm273, 0.0010283804, 0.0
        %vm278 = vcmp.eq.s32.totalorder %v266, 1
        %vm279 = vcmp.eq.s32.totalorder %v267, 1
        %vm280 = vcmp.eq.s32.totalorder %v268, 1
        %vm281 = vcmp.eq.s32.totalorder %v269, 1
        %v282 = vsel %vm278, 0.0075987587, %v274
        %v283 = vsel %vm279, 0.0075987587, %v275
        %v284 = vsel %vm280, 0.0075987587, %v276
        %v285 = vsel %vm281, 0.0075987587, %v277
        %vm286 = vcmp.eq.s32.totalorder %v266, 2
        %vm287 = vcmp.eq.s32.totalorder %v267, 2
        %vm288 = vcmp.eq.s32.totalorder %v268, 2
        %vm289 = vcmp.eq.s32.totalorder %v269, 2
        %v290 = vsel %vm286, 0.036000773, %v282
        %v291 = vsel %vm287, 0.036000773, %v283
        %v292 = vsel %vm288, 0.036000773, %v284
        %v293 = vsel %vm289, 0.036000773, %v285
        %vm294 = vcmp.eq.s32.totalorder %v266, 3
        %vm295 = vcmp.eq.s32.totalorder %v267, 3
        %vm296 = vcmp.eq.s32.totalorder %v268, 3
        %vm297 = vcmp.eq.s32.totalorder %v269, 3
        %v298 = vsel %vm294, 0.1093607, %v290
        %v299 = vsel %vm295, 0.1093607, %v291
        %v300 = vsel %vm296, 0.1093607, %v292
        %v301 = vsel %vm297, 0.1093607, %v293
        %vm302 = vcmp.eq.s32.totalorder %v266, 4
        %vm303 = vcmp.eq.s32.totalorder %v267, 4
        %vm304 = vcmp.eq.s32.totalorder %v268, 4
        %vm305 = vcmp.eq.s32.totalorder %v269, 4
        %v306 = vsel %vm302, 0.21300554, %v298
        %v307 = vsel %vm303, 0.21300554, %v299
        %v308 = vsel %vm304, 0.21300554, %v300
        %v309 = vsel %vm305, 0.21300554, %v301
        %vm310 = vcmp.eq.s32.totalorder %v266, 5
        %vm311 = vcmp.eq.s32.totalorder %v267, 5
        %vm312 = vcmp.eq.s32.totalorder %v268, 5
        %vm313 = vcmp.eq.s32.totalorder %v269, 5
        %v314 = vsel %vm310, 0.26601174, %v306
        %v315 = vsel %vm311, 0.26601174, %v307
        %v316 = vsel %vm312, 0.26601174, %v308
        %v317 = vsel %vm313, 0.26601174, %v309
        %vm318 = vcmp.eq.s32.totalorder %v266, 6
        %vm319 = vcmp.eq.s32.totalorder %v267, 6
        %vm320 = vcmp.eq.s32.totalorder %v268, 6
        %vm321 = vcmp.eq.s32.totalorder %v269, 6
        %v322 = vsel %vm318, 0.21300554, %v314
        %v323 = vsel %vm319, 0.21300554, %v315
        %v324 = vsel %vm320, 0.21300554, %v316
        %v325 = vsel %vm321, 0.21300554, %v317
        %vm326 = vcmp.eq.s32.totalorder %v266, 7
        %vm327 = vcmp.eq.s32.totalorder %v267, 7
        %vm328 = vcmp.eq.s32.totalorder %v268, 7
        %vm329 = vcmp.eq.s32.totalorder %v269, 7
        %v330 = vsel %vm326, 0.1093607, %v322
        %v331 = vsel %vm327, 0.1093607, %v323
        %v332 = vsel %vm328, 0.1093607, %v324
        %v333 = vsel %vm329, 0.1093607, %v325
        %vm334 = vcmp.eq.s32.totalorder %v266, 8
        %vm335 = vcmp.eq.s32.totalorder %v267, 8
        %vm336 = vcmp.eq.s32.totalorder %v268, 8
        %vm337 = vcmp.eq.s32.totalorder %v269, 8
        %v338 = vsel %vm334, 0.036000773, %v330
        %v339 = vsel %vm335, 0.036000773, %v331
        %v340 = vsel %vm336, 0.036000773, %v332
        %v341 = vsel %vm337, 0.036000773, %v333
        %vm342 = vcmp.eq.s32.totalorder %v266, 9
        %vm343 = vcmp.eq.s32.totalorder %v267, 9
        %vm344 = vcmp.eq.s32.totalorder %v268, 9
        %vm345 = vcmp.eq.s32.totalorder %v269, 9
        %v346 = vsel %vm342, 0.0075987587, %v338
        %v347 = vsel %vm343, 0.0075987587, %v339
        %v348 = vsel %vm344, 0.0075987587, %v340
        %v349 = vsel %vm345, 0.0075987587, %v341
        %vm350 = vcmp.eq.s32.totalorder %v266, 10
        %vm351 = vcmp.eq.s32.totalorder %v267, 10
        %vm352 = vcmp.eq.s32.totalorder %v268, 10
        %vm353 = vcmp.eq.s32.totalorder %v269, 10
        %v354 = vsel %vm350, 0.0010283804, %v346
        %v355 = vsel %vm351, 0.0010283804, %v347
        %v356 = vsel %vm352, 0.0010283804, %v348
        %v357 = vsel %vm353, 0.0010283804, %v349
        %v358 = vsub.s32 %v265, %v260
        %v359 = vsub.s32 %v265, %v261
        %v360 = vsub.s32 %v265, %v262
        %vm361 = vcmp.eq.s32.totalorder %v358, 0
        %vm362 = vcmp.eq.s32.totalorder %v359, 0
        %vm363 = vcmp.eq.s32.totalorder %v360, 0
        %v364 = vsel %vm361, 0.0010283804, 0.0
        %v365 = vsel %vm362, 0.0010283804, 0.0
        %v366 = vsel %vm363, 0.0010283804, 0.0
        %vm367 = vcmp.eq.s32.totalorder %v358, 1
        %vm368 = vcmp.eq.s32.totalorder %v359, 1
        %vm369 = vcmp.eq.s32.totalorder %v360, 1
        %v370 = vsel %vm367, 0.0075987587, %v364
        %v371 = vsel %vm368, 0.0075987587, %v365
        %v372 = vsel %vm369, 0.0075987587, %v366
        %vm373 = vcmp.eq.s32.totalorder %v358, 2
        %vm374 = vcmp.eq.s32.totalorder %v359, 2
        %vm375 = vcmp.eq.s32.totalorder %v360, 2
        %v376 = vsel %vm373, 0.036000773, %v370
        %v377 = vsel %vm374, 0.036000773, %v371
        %v378 = vsel %vm375, 0.036000773, %v372
        %vm379 = vcmp.eq.s32.totalorder %v358, 3
        %vm380 = vcmp.eq.s32.totalorder %v359, 3
        %vm381 = vcmp.eq.s32.totalorder %v360, 3
        %v382 = vsel %vm379, 0.1093607, %v376
        %v383 = vsel %vm380, 0.1093607, %v377
        %v384 = vsel %vm381, 0.1093607, %v378
        %vm385 = vcmp.eq.s32.totalorder %v358, 4
        %vm386 = vcmp.eq.s32.totalorder %v359, 4
        %vm387 = vcmp.eq.s32.totalorder %v360, 4
        %v388 = vsel %vm385, 0.21300554, %v382
        %v389 = vsel %vm386, 0.21300554, %v383
        %v390 = vsel %vm387, 0.21300554, %v384
        %vm391 = vcmp.eq.s32.totalorder %v358, 5
        %vm392 = vcmp.eq.s32.totalorder %v359, 5
        %vm393 = vcmp.eq.s32.totalorder %v360, 5
        %v394 = vsel %vm391, 0.26601174, %v388
        %v395 = vsel %vm392, 0.26601174, %v389
        %v396 = vsel %vm393, 0.26601174, %v390
        %vm397 = vcmp.eq.s32.totalorder %v358, 6
        %vm398 = vcmp.eq.s32.totalorder %v359, 6
        %vm399 = vcmp.eq.s32.totalorder %v360, 6
        %v400 = vsel %vm397, 0.21300554, %v394
        %v401 = vsel %vm398, 0.21300554, %v395
        %v402 = vsel %vm399, 0.21300554, %v396
        %vm403 = vcmp.eq.s32.totalorder %v358, 7
        %vm404 = vcmp.eq.s32.totalorder %v359, 7
        %vm405 = vcmp.eq.s32.totalorder %v360, 7
        %v406 = vsel %vm403, 0.1093607, %v400
        %v407 = vsel %vm404, 0.1093607, %v401
        %v408 = vsel %vm405, 0.1093607, %v402
        %vm409 = vcmp.eq.s32.totalorder %v358, 8
        %vm410 = vcmp.eq.s32.totalorder %v359, 8
        %vm411 = vcmp.eq.s32.totalorder %v360, 8
        %v412 = vsel %vm409, 0.036000773, %v406
        %v413 = vsel %vm410, 0.036000773, %v407
        %v414 = vsel %vm411, 0.036000773, %v408
        %vm415 = vcmp.eq.s32.totalorder %v358, 9
        %vm416 = vcmp.eq.s32.totalorder %v359, 9
        %vm417 = vcmp.eq.s32.totalorder %v360, 9
        %v418 = vsel %vm415, 0.0075987587, %v412
        %v419 = vsel %vm416, 0.0075987587, %v413
        %v420 = vsel %vm417, 0.0075987587, %v414
        %vm421 = vcmp.eq.s32.totalorder %v358, 10
        %vm422 = vcmp.eq.s32.totalorder %v359, 10
        %vm423 = vcmp.eq.s32.totalorder %v360, 10
        %v424 = vsel %vm421, 0.0010283804, %v418
        %v425 = vsel %vm422, 0.0010283804, %v419
        %v426 = vsel %vm423, 0.0010283804, %v420
        %v427 = vmul.f32 %v227, %v227
        %v428 = vmul.f32 %v228, %v228
        %v429 = vmul.f32 %v229, %v229
        %v430 = vmul.f32 %v230, %v230
        %v431 = vmul.f32 %v231, %v231
        %v432 = vmul.f32 %v232, %v232
        %v433 = vmul.f32 %v233, %v233
        %v434 = vmul.f32 %v234, %v234
        %v435 = vmul.f32 %v235, %v235
        %v436 = vmul.f32 %v236, %v236
        %v437 = vmul.f32 %v237, %v237
        %v438 = vmul.f32 %v238, %v238
        %v439 = vmul.f32 %v239, %v239
        %v440 = vmul.f32 %v240, %v240
        %v441 = vmul.f32 %v241, %v241
        %v442 = vmul.f32 %v242, %v242
        %v443 = vmul.f32 %v243, %v243
        %v444 = vmul.f32 %v244, %v244
        %v445 = vmul.f32 %v245, %v245
        %v446 = vmul.f32 %v246, %v246
        %v447 = vmul.f32 %v247, %v247
        %v448 = vmul.f32 %v248, %v248
        %v449 = vmul.f32 %v249, %v249
        %v450 = vmul.f32 %v250, %v250
        %v451 = vmul.f32 %v251, %v251
        %v452 = vmul.f32 %v252, %v252
        %v453 = vmul.f32 %v253, %v253
        %v454 = vmul.f32 %v254, %v254
        %v455 = vmul.f32 %v255, %v255
        %v456 = vmul.f32 %v256, %v256
        %v457 = vmul.f32 %v257, %v257
        %v458 = vmul.f32 %v258, %v258
        %v459 = vmul.f32 %v227, %v243
        %v460 = vmul.f32 %v228, %v244
        %v461 = vmul.f32 %v229, %v245
        %v462 = vmul.f32 %v230, %v246
        %v463 = vmul.f32 %v231, %v247
        %v464 = vmul.f32 %v232, %v248
        %v465 = vmul.f32 %v233, %v249
        %v466 = vmul.f32 %v234, %v250
        %v467 = vmul.f32 %v235, %v251
        %v468 = vmul.f32 %v236, %v252
        %v469 = vmul.f32 %v237, %v253
        %v470 = vmul.f32 %v238, %v254
        %v471 = vmul.f32 %v239, %v255
        %v472 = vmul.f32 %v240, %v256
        %v473 = vmul.f32 %v241, %v257
        %v474 = vmul.f32 %v242, %v258
        %vm475 = vcmask 261120
        %v477 = vsel %vm475, %v227, 0
        %v480 = vsel %vm475, %v228, 0
        %v483 = vsel %vm475, %v229, 0
        %v486 = vsel %vm475, %v230, 0
        %v489 = vsel %vm475, %v231, 0
        %v492 = vsel %vm475, %v232, 0
        %v495 = vsel %vm475, %v233, 0
        %v498 = vsel %vm475, %v234, 0
        %v501 = vsel %vm475, %v235, 0
        %v504 = vsel %vm475, %v236, 0
        %v507 = vsel %vm475, %v237, 0
        %v510 = vsel %vm475, %v238, 0
        %v513 = vsel %vm475, %v239, 0
        %v516 = vsel %vm475, %v240, 0
        %v519 = vsel %vm475, %v241, 0
        %v522 = vsel %vm475, %v242, 0
        %v525 = vsel %vm475, %v243, 0
        %v528 = vsel %vm475, %v244, 0
        %v531 = vsel %vm475, %v245, 0
        %v534 = vsel %vm475, %v246, 0
        %v537 = vsel %vm475, %v247, 0
        %v540 = vsel %vm475, %v248, 0
        %v543 = vsel %vm475, %v249, 0
        %v546 = vsel %vm475, %v250, 0
        %v549 = vsel %vm475, %v251, 0
        %v552 = vsel %vm475, %v252, 0
        %v555 = vsel %vm475, %v253, 0
        %v558 = vsel %vm475, %v254, 0
        %v561 = vsel %vm475, %v255, 0
        %v564 = vsel %vm475, %v256, 0
        %v567 = vsel %vm475, %v257, 0
        %v570 = vsel %vm475, %v258, 0
        %v573 = vsel %vm475, %v427, 0
        %v576 = vsel %vm475, %v428, 0
        %v579 = vsel %vm475, %v429, 0
        %v582 = vsel %vm475, %v430, 0
        %v585 = vsel %vm475, %v431, 0
        %v588 = vsel %vm475, %v432, 0
        %v591 = vsel %vm475, %v433, 0
        %v594 = vsel %vm475, %v434, 0
        %v597 = vsel %vm475, %v435, 0
        %v600 = vsel %vm475, %v436, 0
        %v603 = vsel %vm475, %v437, 0
        %v606 = vsel %vm475, %v438, 0
        %v609 = vsel %vm475, %v439, 0
        %v612 = vsel %vm475, %v440, 0
        %v615 = vsel %vm475, %v441, 0
        %v618 = vsel %vm475, %v442, 0
        %v621 = vsel %vm475, %v443, 0
        %v624 = vsel %vm475, %v444, 0
        %v627 = vsel %vm475, %v445, 0
        %v630 = vsel %vm475, %v446, 0
        %v633 = vsel %vm475, %v447, 0
        %v636 = vsel %vm475, %v448, 0
        %v639 = vsel %vm475, %v449, 0
        %v642 = vsel %vm475, %v450, 0
        %v645 = vsel %vm475, %v451, 0
        %v648 = vsel %vm475, %v452, 0
        %v651 = vsel %vm475, %v453, 0
        %v654 = vsel %vm475, %v454, 0
        %v657 = vsel %vm475, %v455, 0
        %v660 = vsel %vm475, %v456, 0
        %v663 = vsel %vm475, %v457, 0
        %v666 = vsel %vm475, %v458, 0
        %v669 = vsel %vm475, %v459, 0
        %v672 = vsel %vm475, %v460, 0
        %v675 = vsel %vm475, %v461, 0
        %v678 = vsel %vm475, %v462, 0
        %v681 = vsel %vm475, %v463, 0
        %v684 = vsel %vm475, %v464, 0
        %v687 = vsel %vm475, %v465, 0
        %v690 = vsel %vm475, %v466, 0
        %v693 = vsel %vm475, %v467, 0
        %v696 = vsel %vm475, %v468, 0
        %v699 = vsel %vm475, %v469, 0
        %v702 = vsel %vm475, %v470, 0
        %v705 = vsel %vm475, %v471, 0
        %v708 = vsel %vm475, %v472, 0
        %v711 = vsel %vm475, %v473, 0
        %v714 = vsel %vm475, %v474, 0
        %716 = vmatprep.subr.mxu0 0.0
        %v717 = vand.u32 %v354, 4294901760
        %718 = vmatpush1.msra.mxu0 %v717
        %719 = vmatprep.subr.mxu0 0.0
        %v720 = vand.u32 %v355, 4294901760
        %721 = vmatpush1.msra.mxu0 %v720
        %722 = vmatprep.subr.mxu0 0.0
        %v723 = vand.u32 %v356, 4294901760
        %724 = vmatpush1.msra.mxu0 %v723
        %725 = vmatprep.subr.mxu0 0.0
        %v726 = vand.u32 %v357, 4294901760
        %727 = vmatpush1.msra.mxu0 %v726
        %728 = vmatprep.subr.mxu0 0.0
        %729 = vmatpush1.msra.mxu0 0.0
        %730 = vmatprep.subr.mxu0 0.0
        %731 = vmatpush1.msra.mxu0 0.0
        %732 = vmatprep.subr.mxu0 0.0
        %733 = vmatpush1.msra.mxu0 0.0
        %734 = vmatprep.subr.mxu0 0.0
        %735 = vmatpush1.msra.mxu0 0.0
        %736 = vmatprep.subr.mxu0 0.0
        %737 = vmatpush1.msra.mxu0 0.0
        %738 = vmatprep.subr.mxu0 0.0
        %739 = vmatpush1.msra.mxu0 0.0
        %740 = vmatprep.subr.mxu0 0.0
        %741 = vmatpush1.msra.mxu0 0.0
        %742 = vmatprep.subr.mxu0 0.0
        %743 = vmatpush1.msra.mxu0 0.0
        %744 = vmatprep.subr.mxu0 0.0
        %745 = vmatpush1.msra.mxu0 0.0
        %746 = vmatprep.subr.mxu0 0.0
        %747 = vmatpush1.msra.mxu0 0.0
        %748 = vmatprep.subr.mxu0 0.0
        %749 = vmatpush1.msra.mxu0 0.0
        %750 = vmatprep.subr.mxu0 0.0
        %751 = vmatpush1.msra.mxu0 0.0
        %752 = vmatprep.subr.mxu0 0.0
        %753 = vmatpush1.msra.mxu0 0.0
        %754 = vmatprep.subr.mxu0 0.0
        %755 = vmatpush1.msra.mxu0 0.0
        %756 = vmatprep.subr.mxu0 0.0
        %757 = vmatpush1.msra.mxu0 0.0
        %758 = vmatprep.subr.mxu0 0.0
        %759 = vmatpush1.msra.mxu0 0.0
        %760 = vmatprep.subr.mxu0 0.0
        %761 = vmatpush1.msra.mxu0 0.0
        %762 = vmatprep.subr.mxu0 0.0
        %763 = vmatpush1.msra.mxu0 0.0
        %764 = vmatprep.subr.mxu0 0.0
        %765 = vmatpush1.msra.mxu0 0.0
        %766 = vmatprep.subr.mxu0 0.0
        %767 = vmatpush1.msra.mxu0 0.0
        %768 = vmatprep.subr.mxu0 0.0
        %769 = vmatpush1.msra.mxu0 0.0
        %770 = vmatprep.subr.mxu0 0.0
        %771 = vmatpush1.msra.mxu0 0.0
        %772 = vmatprep.subr.mxu0 0.0
        %773 = vmatpush1.msra.mxu0 0.0
        %774 = vmatprep.subr.mxu0 0.0
        %775 = vmatpush1.msra.mxu0 0.0
        %776 = vmatprep.subr.mxu0 0.0
        %777 = vmatpush1.msra.mxu0 0.0
        %778 = vmatprep.subr.mxu0 0.0
        %779 = vmatpush1.msra.mxu0 0.0
        %780 = vmatprep.subr.mxu0 0.0
        %781 = vmatpush1.msra.mxu0 0.0
        %782 = vmatprep.subr.mxu0 0.0
        %783 = vmatpush1.msra.mxu0 0.0
        %784 = vmatprep.mubr.f32.mxu0 0.0
        %v785 = vand.u32 %v477, 4294901760
        %v786 = vsub.f32 %v477, %v785
        %v787 = vand.u32 %v786, 4294901760
        %v788 = vsub.f32 %v786, %v787
        %v789 = vand.u32 %v788, 4294901760
        %790 = vmatmul.mubr.f32.gmra.mrb[0].mxu0 %v789
        %v791 = vpop.f32.mrb[0].mxu0
        %v792 = vadd.f32 0.0, %v791
        %v793 = vpop.f32.mrb[0].mxu0
        %794 = vmatprep.mubr.f32.mxu0 0.0
        %v795 = vand.u32 %v480, 4294901760
        %v796 = vsub.f32 %v480, %v795
        %v797 = vand.u32 %v796, 4294901760
        %v798 = vsub.f32 %v796, %v797
        %v799 = vand.u32 %v798, 4294901760
        %800 = vmatmul.mubr.f32.gmra.mrb[0].mxu0 %v799
        %v801 = vpop.f32.mrb[0].mxu0
        %v802 = vadd.f32 0.0, %v801
        %v803 = vpop.f32.mrb[0].mxu0
        %804 = vmatprep.mubr.f32.mxu0 0.0
        %v805 = vand.u32 %v483, 4294901760
        %v806 = vsub.f32 %v483, %v805
        %v807 = vand.u32 %v806, 4294901760
        %v808 = vsub.f32 %v806, %v807
        %v809 = vand.u32 %v808, 4294901760
        %810 = vmatmul.mubr.f32.gmra.mrb[0].mxu0 %v809
        %v811 = vpop.f32.mrb[0].mxu0
        %v812 = vadd.f32 0.0, %v811
        %v813 = vpop.f32.mrb[0].mxu0
        %814 = vmatprep.mubr.f32.mxu0 0.0
        %v815 = vand.u32 %v486, 4294901760
        %v816 = vsub.f32 %v486, %v815
        %v817 = vand.u32 %v816, 4294901760
        %v818 = vsub.f32 %v816, %v817
        %v819 = vand.u32 %v818, 4294901760
        %820 = vmatmul.mubr.f32.gmra.mrb[0].mxu0 %v819
        %v821 = vpop.f32.mrb[0].mxu0
        %v822 = vadd.f32 0.0, %v821
        %v823 = vpop.f32.mrb[0].mxu0
        %824 = vmatprep.mubr.f32.mxu0 0.0
        %v825 = vand.u32 %v489, 4294901760
        %v826 = vsub.f32 %v489, %v825
        %v827 = vand.u32 %v826, 4294901760
        %v828 = vsub.f32 %v826, %v827
        %v829 = vand.u32 %v828, 4294901760
        %830 = vmatmul.mubr.f32.gmra.mrb[0].mxu0 %v829
        %v831 = vpop.f32.mrb[0].mxu0
        %v832 = vadd.f32 0.0, %v831
        %v833 = vpop.f32.mrb[0].mxu0
        %834 = vmatprep.mubr.f32.mxu0 0.0
        %v835 = vand.u32 %v492, 4294901760
        %v836 = vsub.f32 %v492, %v835
        %v837 = vand.u32 %v836, 4294901760
        %v838 = vsub.f32 %v836, %v837
        %v839 = vand.u32 %v838, 4294901760
        %840 = vmatmul.mubr.f32.gmra.mrb[0].mxu0 %v839
        %v841 = vpop.f32.mrb[0].mxu0
        %v842 = vadd.f32 0.0, %v841
        %v843 = vpop.f32.mrb[0].mxu0
        %844 = vmatprep.mubr.f32.mxu0 0.0
        %v845 = vand.u32 %v495, 4294901760
        %v846 = vsub.f32 %v495, %v845
        %v847 = vand.u32 %v846, 4294901760
        %v848 = vsub.f32 %v846, %v847
        %v849 = vand.u32 %v848, 4294901760
        %850 = vmatmul.mubr.f32.gmra.mrb[0].mxu0 %v849
        %v851 = vpop.f32.mrb[0].mxu0
        %v852 = vadd.f32 0.0, %v851
        %v853 = vpop.f32.mrb[0].mxu0
        %854 = vmatprep.mubr.f32.mxu0 0.0
        %v855 = vand.u32 %v498, 4294901760
        %v856 = vsub.f32 %v498, %v855
        %v857 = vand.u32 %v856, 4294901760
        %v858 = vsub.f32 %v856, %v857
        %v859 = vand.u32 %v858, 4294901760
        %860 = vmatmul.mubr.f32.gmra.mrb[0].mxu0 %v859
        %v861 = vpop.f32.mrb[0].mxu0
        %v862 = vadd.f32 0.0, %v861
        %v863 = vpop.f32.mrb[0].mxu0
        %864 = vmatprep.mubr.f32.mxu0 0.0
        %v865 = vand.u32 %v501, 4294901760
        %v866 = vsub.f32 %v501, %v865
        %v867 = vand.u32 %v866, 4294901760
        %v868 = vsub.f32 %v866, %v867
        %v869 = vand.u32 %v868, 4294901760
        %870 = vmatmul.mubr.f32.gmra.mrb[0].mxu0 %v869
        %v871 = vpop.f32.mrb[0].mxu0
        %v872 = vadd.f32 0.0, %v871
        %v873 = vpop.f32.mrb[0].mxu0
        %874 = vmatprep.mubr.f32.mxu0 0.0
        %v875 = vand.u32 %v504, 4294901760
        %v876 = vsub.f32 %v504, %v875
        %v877 = vand.u32 %v876, 4294901760
        %v878 = vsub.f32 %v876, %v877
        %v879 = vand.u32 %v878, 4294901760
        %880 = vmatmul.mubr.f32.gmra.mrb[0].mxu0 %v879
        %v881 = vpop.f32.mrb[0].mxu0
        %v882 = vadd.f32 0.0, %v881
        %v883 = vpop.f32.mrb[0].mxu0
        %884 = vmatprep.mubr.f32.mxu0 0.0
        %v885 = vand.u32 %v507, 4294901760
        %v886 = vsub.f32 %v507, %v885
        %v887 = vand.u32 %v886, 4294901760
        %v888 = vsub.f32 %v886, %v887
        %v889 = vand.u32 %v888, 4294901760
        %890 = vmatmul.mubr.f32.gmra.mrb[0].mxu0 %v889
        %v891 = vpop.f32.mrb[0].mxu0
        %v892 = vadd.f32 0.0, %v891
        %v893 = vpop.f32.mrb[0].mxu0
        %894 = vmatprep.mubr.f32.mxu0 0.0
        %v895 = vand.u32 %v510, 4294901760
        %v896 = vsub.f32 %v510, %v895
        %v897 = vand.u32 %v896, 4294901760
        %v898 = vsub.f32 %v896, %v897
        %v899 = vand.u32 %v898, 4294901760
        %900 = vmatmul.mubr.f32.gmra.mrb[0].mxu0 %v899
        %v901 = vpop.f32.mrb[0].mxu0
        %v902 = vadd.f32 0.0, %v901
        %v903 = vpop.f32.mrb[0].mxu0
        %904 = vmatprep.mubr.f32.mxu0 0.0
        %v905 = vand.u32 %v513, 4294901760
        %v906 = vsub.f32 %v513, %v905
        %v907 = vand.u32 %v906, 4294901760
        %v908 = vsub.f32 %v906, %v907
        %v909 = vand.u32 %v908, 4294901760
        %910 = vmatmul.mubr.f32.gmra.mrb[0].mxu0 %v909
        %v911 = vpop.f32.mrb[0].mxu0
        %v912 = vadd.f32 0.0, %v911
        %v913 = vpop.f32.mrb[0].mxu0
        %914 = vmatprep.mubr.f32.mxu0 0.0
        %v915 = vand.u32 %v516, 4294901760
        %v916 = vsub.f32 %v516, %v915
        %v917 = vand.u32 %v916, 4294901760
        %v918 = vsub.f32 %v916, %v917
        %v919 = vand.u32 %v918, 4294901760
        %920 = vmatmul.mubr.f32.gmra.mrb[0].mxu0 %v919
        %v921 = vpop.f32.mrb[0].mxu0
        %v922 = vadd.f32 0.0, %v921
        %v923 = vpop.f32.mrb[0].mxu0
        %924 = vmatprep.mubr.f32.mxu0 0.0
        %v925 = vand.u32 %v519, 4294901760
        %v926 = vsub.f32 %v519, %v925
        %v927 = vand.u32 %v926, 4294901760
        %v928 = vsub.f32 %v926, %v927
        %v929 = vand.u32 %v928, 4294901760
        %930 = vmatmul.mubr.f32.gmra.mrb[0].mxu0 %v929
        %v931 = vpop.f32.mrb[0].mxu0
        %v932 = vadd.f32 0.0, %v931
        %v933 = vpop.f32.mrb[0].mxu0
        %934 = vmatprep.mubr.f32.mxu0 0.0
        %v935 = vand.u32 %v522, 4294901760
        %v936 = vsub.f32 %v522, %v935
        %v937 = vand.u32 %v936, 4294901760
        %v938 = vsub.f32 %v936, %v937
        %v939 = vand.u32 %v938, 4294901760
        %940 = vmatmul.mubr.f32.gmra.mrb[0].mxu0 %v939
        %v941 = vpop.f32.mrb[0].mxu0
        %v942 = vadd.f32 0.0, %v941
        %v943 = vpop.f32.mrb[0].mxu0
        %944 = vmatprep.mubr.f32.mxu0 0.0
        %v945 = vand.u32 %v525, 4294901760
        %v946 = vsub.f32 %v525, %v945
        %v947 = vand.u32 %v946, 4294901760
        %v948 = vsub.f32 %v946, %v947
        %v949 = vand.u32 %v948, 4294901760
        %950 = vmatmul.mubr.f32.gmra.mrb[0].mxu0 %v949
        %v951 = vpop.f32.mrb[0].mxu0
        %v952 = vadd.f32 0.0, %v951
        %v953 = vpop.f32.mrb[0].mxu0
        %954 = vmatprep.mubr.f32.mxu0 0.0
        %v955 = vand.u32 %v528, 4294901760
        %v956 = vsub.f32 %v528, %v955
        %v957 = vand.u32 %v956, 4294901760
        %v958 = vsub.f32 %v956, %v957
        %v959 = vand.u32 %v958, 4294901760
        %960 = vmatmul.mubr.f32.gmra.mrb[0].mxu0 %v959
        %v961 = vpop.f32.mrb[0].mxu0
        %v962 = vadd.f32 0.0, %v961
        %v963 = vpop.f32.mrb[0].mxu0
        %964 = vmatprep.mubr.f32.mxu0 0.0
        %v965 = vand.u32 %v531, 4294901760
        %v966 = vsub.f32 %v531, %v965
        %v967 = vand.u32 %v966, 4294901760
        %v968 = vsub.f32 %v966, %v967
        %v969 = vand.u32 %v968, 4294901760
        %970 = vmatmul.mubr.f32.gmra.mrb[0].mxu0 %v969
        %v971 = vpop.f32.mrb[0].mxu0
        %v972 = vadd.f32 0.0, %v971
        %v973 = vpop.f32.mrb[0].mxu0
        %974 = vmatprep.mubr.f32.mxu0 0.0
        %v975 = vand.u32 %v534, 4294901760
        %v976 = vsub.f32 %v534, %v975
        %v977 = vand.u32 %v976, 4294901760
        %v978 = vsub.f32 %v976, %v977
        %v979 = vand.u32 %v978, 4294901760
        %980 = vmatmul.mubr.f32.gmra.mrb[0].mxu0 %v979
        %v981 = vpop.f32.mrb[0].mxu0
        %v982 = vadd.f32 0.0, %v981
        %v983 = vpop.f32.mrb[0].mxu0
        %984 = vmatprep.mubr.f32.mxu0 0.0
        %v985 = vand.u32 %v537, 4294901760
        %v986 = vsub.f32 %v537, %v985
        %v987 = vand.u32 %v986, 4294901760
        %v988 = vsub.f32 %v986, %v987
        %v989 = vand.u32 %v988, 4294901760
        %990 = vmatmul.mubr.f32.gmra.mrb[0].mxu0 %v989
        %v991 = vpop.f32.mrb[0].mxu0
        %v992 = vadd.f32 0.0, %v991
        %v993 = vpop.f32.mrb[0].mxu0
        %994 = vmatprep.mubr.f32.mxu0 0.0
        %v995 = vand.u32 %v540, 4294901760
        %v996 = vsub.f32 %v540, %v995
        %v997 = vand.u32 %v996, 4294901760
        %v998 = vsub.f32 %v996, %v997
        %v999 = vand.u32 %v998, 4294901760
        %1000 = vmatmul.mubr.f32.gmra.mrb[0].mxu0 %v999
        %v1001 = vpop.f32.mrb[0].mxu0
        %v1002 = vadd.f32 0.0, %v1001
        %v1003 = vpop.f32.mrb[0].mxu0
        %1004 = vmatprep.mubr.f32.mxu0 0.0
        %v1005 = vand.u32 %v543, 4294901760
        %v1006 = vsub.f32 %v543, %v1005
        %v1007 = vand.u32 %v1006, 4294901760
        %v1008 = vsub.f32 %v1006, %v1007
        %v1009 = vand.u32 %v1008, 4294901760
        %1010 = vmatmul.mubr.f32.gmra.mrb[0].mxu0 %v1009
        %v1011 = vpop.f32.mrb[0].mxu0
        %v1012 = vadd.f32 0.0, %v1011
        %v1013 = vpop.f32.mrb[0].mxu0
        %1014 = vmatprep.mubr.f32.mxu0 0.0
        %v1015 = vand.u32 %v546, 4294901760
        %v1016 = vsub.f32 %v546, %v1015
        %v1017 = vand.u32 %v1016, 4294901760
        %v1018 = vsub.f32 %v1016, %v1017
        %v1019 = vand.u32 %v1018, 4294901760
        %1020 = vmatmul.mubr.f32.gmra.mrb[0].mxu0 %v1019
        %v1021 = vpop.f32.mrb[0].mxu0
        %v1022 = vadd.f32 0.0, %v1021
        %v1023 = vpop.f32.mrb[0].mxu0
        %1024 = vmatprep.mubr.f32.mxu0 0.0
        %v1025 = vand.u32 %v549, 4294901760
        %v1026 = vsub.f32 %v549, %v1025
        %v1027 = vand.u32 %v1026, 4294901760
        %v1028 = vsub.f32 %v1026, %v1027
        %v1029 = vand.u32 %v1028, 4294901760
        %1030 = vmatmul.mubr.f32.gmra.mrb[0].mxu0 %v1029
        %v1031 = vpop.f32.mrb[0].mxu0
        %v1032 = vadd.f32 0.0, %v1031
        %v1033 = vpop.f32.mrb[0].mxu0
        %1034 = vmatprep.mubr.f32.mxu0 0.0
        %v1035 = vand.u32 %v552, 4294901760
        %v1036 = vsub.f32 %v552, %v1035
        %v1037 = vand.u32 %v1036, 4294901760
        %v1038 = vsub.f32 %v1036, %v1037
        %v1039 = vand.u32 %v1038, 4294901760
        %1040 = vmatmul.mubr.f32.gmra.mrb[0].mxu0 %v1039
        %v1041 = vpop.f32.mrb[0].mxu0
        %v1042 = vadd.f32 0.0, %v1041
        %v1043 = vpop.f32.mrb[0].mxu0
        %1044 = vmatprep.mubr.f32.mxu0 0.0
        %v1045 = vand.u32 %v555, 4294901760
        %v1046 = vsub.f32 %v555, %v1045
        %v1047 = vand.u32 %v1046, 4294901760
        %v1048 = vsub.f32 %v1046, %v1047
        %v1049 = vand.u32 %v1048, 4294901760
        %1050 = vmatmul.mubr.f32.gmra.mrb[0].mxu0 %v1049
        %v1051 = vpop.f32.mrb[0].mxu0
        %v1052 = vadd.f32 0.0, %v1051
        %v1053 = vpop.f32.mrb[0].mxu0
        %1054 = vmatprep.mubr.f32.mxu0 0.0
        %v1055 = vand.u32 %v558, 4294901760
        %v1056 = vsub.f32 %v558, %v1055
        %v1057 = vand.u32 %v1056, 4294901760
        %v1058 = vsub.f32 %v1056, %v1057
        %v1059 = vand.u32 %v1058, 4294901760
        %1060 = vmatmul.mubr.f32.gmra.mrb[0].mxu0 %v1059
        %v1061 = vpop.f32.mrb[0].mxu0
        %v1062 = vadd.f32 0.0, %v1061
        %v1063 = vpop.f32.mrb[0].mxu0
        %1064 = vmatprep.mubr.f32.mxu0 0.0
        %v1065 = vand.u32 %v561, 4294901760
        %v1066 = vsub.f32 %v561, %v1065
        %v1067 = vand.u32 %v1066, 4294901760
        %v1068 = vsub.f32 %v1066, %v1067
        %v1069 = vand.u32 %v1068, 4294901760
        %1070 = vmatmul.mubr.f32.gmra.mrb[0].mxu0 %v1069
        %v1071 = vpop.f32.mrb[0].mxu0
        %v1072 = vadd.f32 0.0, %v1071
        %v1073 = vpop.f32.mrb[0].mxu0
        %1074 = vmatprep.mubr.f32.mxu0 0.0
        %v1075 = vand.u32 %v564, 4294901760
        %v1076 = vsub.f32 %v564, %v1075
        %v1077 = vand.u32 %v1076, 4294901760
        %v1078 = vsub.f32 %v1076, %v1077
        %v1079 = vand.u32 %v1078, 4294901760
        %1080 = vmatmul.mubr.f32.gmra.mrb[0].mxu0 %v1079
        %v1081 = vpop.f32.mrb[0].mxu0
        %v1082 = vadd.f32 0.0, %v1081
        %v1083 = vpop.f32.mrb[0].mxu0
        %1084 = vmatprep.mubr.f32.mxu0 0.0
        %v1085 = vand.u32 %v567, 4294901760
        %v1086 = vsub.f32 %v567, %v1085
        %v1087 = vand.u32 %v1086, 4294901760
        %v1088 = vsub.f32 %v1086, %v1087
        %v1089 = vand.u32 %v1088, 4294901760
        %1090 = vmatmul.mubr.f32.gmra.mrb[0].mxu0 %v1089
        %v1091 = vpop.f32.mrb[0].mxu0
        %v1092 = vadd.f32 0.0, %v1091
        %v1093 = vpop.f32.mrb[0].mxu0
        %1094 = vmatprep.mubr.f32.mxu0 0.0
        %v1095 = vand.u32 %v570, 4294901760
        %v1096 = vsub.f32 %v570, %v1095
        %v1097 = vand.u32 %v1096, 4294901760
        %v1098 = vsub.f32 %v1096, %v1097
        %v1099 = vand.u32 %v1098, 4294901760
        %1100 = vmatmul.mubr.f32.gmra.mrb[0].mxu0 %v1099
        %v1101 = vpop.f32.mrb[0].mxu0
        %v1102 = vadd.f32 0.0, %v1101
        %v1103 = vpop.f32.mrb[0].mxu0
        %1104 = vmatprep.mubr.f32.mxu0 0.0
        %v1105 = vand.u32 %v573, 4294901760
        %v1106 = vsub.f32 %v573, %v1105
        %v1107 = vand.u32 %v1106, 4294901760
        %v1108 = vsub.f32 %v1106, %v1107
        %v1109 = vand.u32 %v1108, 4294901760
        %1110 = vmatmul.mubr.f32.gmra.mrb[0].mxu0 %v1109
        %v1111 = vpop.f32.mrb[0].mxu0
        %v1112 = vadd.f32 0.0, %v1111
        %v1113 = vpop.f32.mrb[0].mxu0
        %1114 = vmatprep.mubr.f32.mxu0 0.0
        %v1115 = vand.u32 %v576, 4294901760
        %v1116 = vsub.f32 %v576, %v1115
        %v1117 = vand.u32 %v1116, 4294901760
        %v1118 = vsub.f32 %v1116, %v1117
        %v1119 = vand.u32 %v1118, 4294901760
        %1120 = vmatmul.mubr.f32.gmra.mrb[0].mxu0 %v1119
        %v1121 = vpop.f32.mrb[0].mxu0
        %v1122 = vadd.f32 0.0, %v1121
        %v1123 = vpop.f32.mrb[0].mxu0
        %1124 = vmatprep.mubr.f32.mxu0 0.0
        %v1125 = vand.u32 %v579, 4294901760
        %v1126 = vsub.f32 %v579, %v1125
        %v1127 = vand.u32 %v1126, 4294901760
        %v1128 = vsub.f32 %v1126, %v1127
        %v1129 = vand.u32 %v1128, 4294901760
        %1130 = vmatmul.mubr.f32.gmra.mrb[0].mxu0 %v1129
        %v1131 = vpop.f32.mrb[0].mxu0
        %v1132 = vadd.f32 0.0, %v1131
        %v1133 = vpop.f32.mrb[0].mxu0
        %1134 = vmatprep.mubr.f32.mxu0 0.0
        %v1135 = vand.u32 %v582, 4294901760
        %v1136 = vsub.f32 %v582, %v1135
        %v1137 = vand.u32 %v1136, 4294901760
        %v1138 = vsub.f32 %v1136, %v1137
        %v1139 = vand.u32 %v1138, 4294901760
        %1140 = vmatmul.mubr.f32.gmra.mrb[0].mxu0 %v1139
        %v1141 = vpop.f32.mrb[0].mxu0
        %v1142 = vadd.f32 0.0, %v1141
        %v1143 = vpop.f32.mrb[0].mxu0
        %1144 = vmatprep.mubr.f32.mxu0 0.0
        %v1145 = vand.u32 %v585, 4294901760
        %v1146 = vsub.f32 %v585, %v1145
        %v1147 = vand.u32 %v1146, 4294901760
        %v1148 = vsub.f32 %v1146, %v1147
        %v1149 = vand.u32 %v1148, 4294901760
        %1150 = vmatmul.mubr.f32.gmra.mrb[0].mxu0 %v1149
        %v1151 = vpop.f32.mrb[0].mxu0
        %v1152 = vadd.f32 0.0, %v1151
        %v1153 = vpop.f32.mrb[0].mxu0
        %1154 = vmatprep.mubr.f32.mxu0 0.0
        %v1155 = vand.u32 %v588, 4294901760
        %v1156 = vsub.f32 %v588, %v1155
        %v1157 = vand.u32 %v1156, 4294901760
        %v1158 = vsub.f32 %v1156, %v1157
        %v1159 = vand.u32 %v1158, 4294901760
        %1160 = vmatmul.mubr.f32.gmra.mrb[0].mxu0 %v1159
        %v1161 = vpop.f32.mrb[0].mxu0
        %v1162 = vadd.f32 0.0, %v1161
        %v1163 = vpop.f32.mrb[0].mxu0
        %1164 = vmatprep.mubr.f32.mxu0 0.0
        %v1165 = vand.u32 %v591, 4294901760
        %v1166 = vsub.f32 %v591, %v1165
        %v1167 = vand.u32 %v1166, 4294901760
        %v1168 = vsub.f32 %v1166, %v1167
        %v1169 = vand.u32 %v1168, 4294901760
        %1170 = vmatmul.mubr.f32.gmra.mrb[0].mxu0 %v1169
        %v1171 = vpop.f32.mrb[0].mxu0
        %v1172 = vadd.f32 0.0, %v1171
        %v1173 = vpop.f32.mrb[0].mxu0
        %1174 = vmatprep.mubr.f32.mxu0 0.0
        %v1175 = vand.u32 %v594, 4294901760
        %v1176 = vsub.f32 %v594, %v1175
        %v1177 = vand.u32 %v1176, 4294901760
        %v1178 = vsub.f32 %v1176, %v1177
        %v1179 = vand.u32 %v1178, 4294901760
        %1180 = vmatmul.mubr.f32.gmra.mrb[0].mxu0 %v1179
        %v1181 = vpop.f32.mrb[0].mxu0
        %v1182 = vadd.f32 0.0, %v1181
        %v1183 = vpop.f32.mrb[0].mxu0
        %1184 = vmatprep.mubr.f32.mxu0 0.0
        %v1185 = vand.u32 %v597, 4294901760
        %v1186 = vsub.f32 %v597, %v1185
        %v1187 = vand.u32 %v1186, 4294901760
        %v1188 = vsub.f32 %v1186, %v1187
        %v1189 = vand.u32 %v1188, 4294901760
        %1190 = vmatmul.mubr.f32.gmra.mrb[0].mxu0 %v1189
        %v1191 = vpop.f32.mrb[0].mxu0
        %v1192 = vadd.f32 0.0, %v1191
        %v1193 = vpop.f32.mrb[0].mxu0
        %1194 = vmatprep.mubr.f32.mxu0 0.0
        %v1195 = vand.u32 %v600, 4294901760
        %v1196 = vsub.f32 %v600, %v1195
        %v1197 = vand.u32 %v1196, 4294901760
        %v1198 = vsub.f32 %v1196, %v1197
        %v1199 = vand.u32 %v1198, 4294901760
        %1200 = vmatmul.mubr.f32.gmra.mrb[0].mxu0 %v1199
        %v1201 = vpop.f32.mrb[0].mxu0
        %v1202 = vadd.f32 0.0, %v1201
        %v1203 = vpop.f32.mrb[0].mxu0
        %1204 = vmatprep.mubr.f32.mxu0 0.0
        %v1205 = vand.u32 %v603, 4294901760
        %v1206 = vsub.f32 %v603, %v1205
        %v1207 = vand.u32 %v1206, 4294901760
        %v1208 = vsub.f32 %v1206, %v1207
        %v1209 = vand.u32 %v1208, 4294901760
        %1210 = vmatmul.mubr.f32.gmra.mrb[0].mxu0 %v1209
        %v1211 = vpop.f32.mrb[0].mxu0
        %v1212 = vadd.f32 0.0, %v1211
        %v1213 = vpop.f32.mrb[0].mxu0
        %1214 = vmatprep.mubr.f32.mxu0 0.0
        %v1215 = vand.u32 %v606, 4294901760
        %v1216 = vsub.f32 %v606, %v1215
        %v1217 = vand.u32 %v1216, 4294901760
        %v1218 = vsub.f32 %v1216, %v1217
        %v1219 = vand.u32 %v1218, 4294901760
        %1220 = vmatmul.mubr.f32.gmra.mrb[0].mxu0 %v1219
        %v1221 = vpop.f32.mrb[0].mxu0
        %v1222 = vadd.f32 0.0, %v1221
        %v1223 = vpop.f32.mrb[0].mxu0
        %1224 = vmatprep.mubr.f32.mxu0 0.0
        %v1225 = vand.u32 %v609, 4294901760
        %v1226 = vsub.f32 %v609, %v1225
        %v1227 = vand.u32 %v1226, 4294901760
        %v1228 = vsub.f32 %v1226, %v1227
        %v1229 = vand.u32 %v1228, 4294901760
        %1230 = vmatmul.mubr.f32.gmra.mrb[0].mxu0 %v1229
        %v1231 = vpop.f32.mrb[0].mxu0
        %v1232 = vadd.f32 0.0, %v1231
        %v1233 = vpop.f32.mrb[0].mxu0
        %1234 = vmatprep.mubr.f32.mxu0 0.0
        %v1235 = vand.u32 %v612, 4294901760
        %v1236 = vsub.f32 %v612, %v1235
        %v1237 = vand.u32 %v1236, 4294901760
        %v1238 = vsub.f32 %v1236, %v1237
        %v1239 = vand.u32 %v1238, 4294901760
        %1240 = vmatmul.mubr.f32.gmra.mrb[0].mxu0 %v1239
        %v1241 = vpop.f32.mrb[0].mxu0
        %v1242 = vadd.f32 0.0, %v1241
        %v1243 = vpop.f32.mrb[0].mxu0
        %1244 = vmatprep.mubr.f32.mxu0 0.0
        %v1245 = vand.u32 %v615, 4294901760
        %v1246 = vsub.f32 %v615, %v1245
        %v1247 = vand.u32 %v1246, 4294901760
        %v1248 = vsub.f32 %v1246, %v1247
        %v1249 = vand.u32 %v1248, 4294901760
        %1250 = vmatmul.mubr.f32.gmra.mrb[0].mxu0 %v1249
        %v1251 = vpop.f32.mrb[0].mxu0
        %v1252 = vadd.f32 0.0, %v1251
        %v1253 = vpop.f32.mrb[0].mxu0
        %1254 = vmatprep.mubr.f32.mxu0 0.0
        %v1255 = vand.u32 %v618, 4294901760
        %v1256 = vsub.f32 %v618, %v1255
        %v1257 = vand.u32 %v1256, 4294901760
        %v1258 = vsub.f32 %v1256, %v1257
        %v1259 = vand.u32 %v1258, 4294901760
        %1260 = vmatmul.mubr.f32.gmra.mrb[0].mxu0 %v1259
        %v1261 = vpop.f32.mrb[0].mxu0
        %v1262 = vadd.f32 0.0, %v1261
        %v1263 = vpop.f32.mrb[0].mxu0
        %1264 = vmatprep.mubr.f32.mxu0 0.0
        %v1265 = vand.u32 %v621, 4294901760
        %v1266 = vsub.f32 %v621, %v1265
        %v1267 = vand.u32 %v1266, 4294901760
        %v1268 = vsub.f32 %v1266, %v1267
        %v1269 = vand.u32 %v1268, 4294901760
        %1270 = vmatmul.mubr.f32.gmra.mrb[0].mxu0 %v1269
        %v1271 = vpop.f32.mrb[0].mxu0
        %v1272 = vadd.f32 0.0, %v1271
        %v1273 = vpop.f32.mrb[0].mxu0
        %1274 = vmatprep.mubr.f32.mxu0 0.0
        %v1275 = vand.u32 %v624, 4294901760
        %v1276 = vsub.f32 %v624, %v1275
        %v1277 = vand.u32 %v1276, 4294901760
        %v1278 = vsub.f32 %v1276, %v1277
        %v1279 = vand.u32 %v1278, 4294901760
        %1280 = vmatmul.mubr.f32.gmra.mrb[0].mxu0 %v1279
        %v1281 = vpop.f32.mrb[0].mxu0
        %v1282 = vadd.f32 0.0, %v1281
        %v1283 = vpop.f32.mrb[0].mxu0
        %1284 = vmatprep.mubr.f32.mxu0 0.0
        %v1285 = vand.u32 %v627, 4294901760
        %v1286 = vsub.f32 %v627, %v1285
        %v1287 = vand.u32 %v1286, 4294901760
        %v1288 = vsub.f32 %v1286, %v1287
        %v1289 = vand.u32 %v1288, 4294901760
        %1290 = vmatmul.mubr.f32.gmra.mrb[0].mxu0 %v1289
        %v1291 = vpop.f32.mrb[0].mxu0
        %v1292 = vadd.f32 0.0, %v1291
        %v1293 = vpop.f32.mrb[0].mxu0
        %1294 = vmatprep.mubr.f32.mxu0 0.0
        %v1295 = vand.u32 %v630, 4294901760
        %v1296 = vsub.f32 %v630, %v1295
        %v1297 = vand.u32 %v1296, 4294901760
        %v1298 = vsub.f32 %v1296, %v1297
        %v1299 = vand.u32 %v1298, 4294901760
        %1300 = vmatmul.mubr.f32.gmra.mrb[0].mxu0 %v1299
        %v1301 = vpop.f32.mrb[0].mxu0
        %v1302 = vadd.f32 0.0, %v1301
        %v1303 = vpop.f32.mrb[0].mxu0
        %1304 = vmatprep.mubr.f32.mxu0 0.0
        %v1305 = vand.u32 %v633, 4294901760
        %v1306 = vsub.f32 %v633, %v1305
        %v1307 = vand.u32 %v1306, 4294901760
        %v1308 = vsub.f32 %v1306, %v1307
        %v1309 = vand.u32 %v1308, 4294901760
        %1310 = vmatmul.mubr.f32.gmra.mrb[0].mxu0 %v1309
        %v1311 = vpop.f32.mrb[0].mxu0
        %v1312 = vadd.f32 0.0, %v1311
        %v1313 = vpop.f32.mrb[0].mxu0
        %1314 = vmatprep.mubr.f32.mxu0 0.0
        %v1315 = vand.u32 %v636, 4294901760
        %v1316 = vsub.f32 %v636, %v1315
        %v1317 = vand.u32 %v1316, 4294901760
        %v1318 = vsub.f32 %v1316, %v1317
        %v1319 = vand.u32 %v1318, 4294901760
        %1320 = vmatmul.mubr.f32.gmra.mrb[0].mxu0 %v1319
        %v1321 = vpop.f32.mrb[0].mxu0
        %v1322 = vadd.f32 0.0, %v1321
        %v1323 = vpop.f32.mrb[0].mxu0
        %1324 = vmatprep.mubr.f32.mxu0 0.0
        %v1325 = vand.u32 %v639, 4294901760
        %v1326 = vsub.f32 %v639, %v1325
        %v1327 = vand.u32 %v1326, 4294901760
        %v1328 = vsub.f32 %v1326, %v1327
        %v1329 = vand.u32 %v1328, 4294901760
        %1330 = vmatmul.mubr.f32.gmra.mrb[0].mxu0 %v1329
        %v1331 = vpop.f32.mrb[0].mxu0
        %v1332 = vadd.f32 0.0, %v1331
        %v1333 = vpop.f32.mrb[0].mxu0
        %1334 = vmatprep.mubr.f32.mxu0 0.0
        %v1335 = vand.u32 %v642, 4294901760
        %v1336 = vsub.f32 %v642, %v1335
        %v1337 = vand.u32 %v1336, 4294901760
        %v1338 = vsub.f32 %v1336, %v1337
        %v1339 = vand.u32 %v1338, 4294901760
        %1340 = vmatmul.mubr.f32.gmra.mrb[0].mxu0 %v1339
        %v1341 = vpop.f32.mrb[0].mxu0
        %v1342 = vadd.f32 0.0, %v1341
        %v1343 = vpop.f32.mrb[0].mxu0
        %1344 = vmatprep.mubr.f32.mxu0 0.0
        %v1345 = vand.u32 %v645, 4294901760
        %v1346 = vsub.f32 %v645, %v1345
        %v1347 = vand.u32 %v1346, 4294901760
        %v1348 = vsub.f32 %v1346, %v1347
        %v1349 = vand.u32 %v1348, 4294901760
        %1350 = vmatmul.mubr.f32.gmra.mrb[0].mxu0 %v1349
        %v1351 = vpop.f32.mrb[0].mxu0
        %v1352 = vadd.f32 0.0, %v1351
        %v1353 = vpop.f32.mrb[0].mxu0
        %1354 = vmatprep.mubr.f32.mxu0 0.0
        %v1355 = vand.u32 %v648, 4294901760
        %v1356 = vsub.f32 %v648, %v1355
        %v1357 = vand.u32 %v1356, 4294901760
        %v1358 = vsub.f32 %v1356, %v1357
        %v1359 = vand.u32 %v1358, 4294901760
        %1360 = vmatmul.mubr.f32.gmra.mrb[0].mxu0 %v1359
        %v1361 = vpop.f32.mrb[0].mxu0
        %v1362 = vadd.f32 0.0, %v1361
        %v1363 = vpop.f32.mrb[0].mxu0
        %1364 = vmatprep.mubr.f32.mxu0 0.0
        %v1365 = vand.u32 %v651, 4294901760
        %v1366 = vsub.f32 %v651, %v1365
        %v1367 = vand.u32 %v1366, 4294901760
        %v1368 = vsub.f32 %v1366, %v1367
        %v1369 = vand.u32 %v1368, 4294901760
        %1370 = vmatmul.mubr.f32.gmra.mrb[0].mxu0 %v1369
        %v1371 = vpop.f32.mrb[0].mxu0
        %v1372 = vadd.f32 0.0, %v1371
        %v1373 = vpop.f32.mrb[0].mxu0
        %1374 = vmatprep.mubr.f32.mxu0 0.0
        %v1375 = vand.u32 %v654, 4294901760
        %v1376 = vsub.f32 %v654, %v1375
        %v1377 = vand.u32 %v1376, 4294901760
        %v1378 = vsub.f32 %v1376, %v1377
        %v1379 = vand.u32 %v1378, 4294901760
        %1380 = vmatmul.mubr.f32.gmra.mrb[0].mxu0 %v1379
        %v1381 = vpop.f32.mrb[0].mxu0
        %v1382 = vadd.f32 0.0, %v1381
        %v1383 = vpop.f32.mrb[0].mxu0
        %1384 = vmatprep.mubr.f32.mxu0 0.0
        %v1385 = vand.u32 %v657, 4294901760
        %v1386 = vsub.f32 %v657, %v1385
        %v1387 = vand.u32 %v1386, 4294901760
        %v1388 = vsub.f32 %v1386, %v1387
        %v1389 = vand.u32 %v1388, 4294901760
        %1390 = vmatmul.mubr.f32.gmra.mrb[0].mxu0 %v1389
        %v1391 = vpop.f32.mrb[0].mxu0
        %v1392 = vadd.f32 0.0, %v1391
        %v1393 = vpop.f32.mrb[0].mxu0
        %1394 = vmatprep.mubr.f32.mxu0 0.0
        %v1395 = vand.u32 %v660, 4294901760
        %v1396 = vsub.f32 %v660, %v1395
        %v1397 = vand.u32 %v1396, 4294901760
        %v1398 = vsub.f32 %v1396, %v1397
        %v1399 = vand.u32 %v1398, 4294901760
        %1400 = vmatmul.mubr.f32.gmra.mrb[0].mxu0 %v1399
        %v1401 = vpop.f32.mrb[0].mxu0
        %v1402 = vadd.f32 0.0, %v1401
        %v1403 = vpop.f32.mrb[0].mxu0
        %1404 = vmatprep.mubr.f32.mxu0 0.0
        %v1405 = vand.u32 %v663, 4294901760
        %v1406 = vsub.f32 %v663, %v1405
        %v1407 = vand.u32 %v1406, 4294901760
        %v1408 = vsub.f32 %v1406, %v1407
        %v1409 = vand.u32 %v1408, 4294901760
        %1410 = vmatmul.mubr.f32.gmra.mrb[0].mxu0 %v1409
        %v1411 = vpop.f32.mrb[0].mxu0
        %v1412 = vadd.f32 0.0, %v1411
        %v1413 = vpop.f32.mrb[0].mxu0
        %1414 = vmatprep.mubr.f32.mxu0 0.0
        %v1415 = vand.u32 %v666, 4294901760
        %v1416 = vsub.f32 %v666, %v1415
        %v1417 = vand.u32 %v1416, 4294901760
        %v1418 = vsub.f32 %v1416, %v1417
        %v1419 = vand.u32 %v1418, 4294901760
        %1420 = vmatmul.mubr.f32.gmra.mrb[0].mxu0 %v1419
        %v1421 = vpop.f32.mrb[0].mxu0
        %v1422 = vadd.f32 0.0, %v1421
        %v1423 = vpop.f32.mrb[0].mxu0
        %1424 = vmatprep.mubr.f32.mxu0 0.0
        %v1425 = vand.u32 %v669, 4294901760
        %v1426 = vsub.f32 %v669, %v1425
        %v1427 = vand.u32 %v1426, 4294901760
        %v1428 = vsub.f32 %v1426, %v1427
        %v1429 = vand.u32 %v1428, 4294901760
        %1430 = vmatmul.mubr.f32.gmra.mrb[0].mxu0 %v1429
        %v1431 = vpop.f32.mrb[0].mxu0
        %v1432 = vadd.f32 0.0, %v1431
        %v1433 = vpop.f32.mrb[0].mxu0
        %1434 = vmatprep.mubr.f32.mxu0 0.0
        %v1435 = vand.u32 %v672, 4294901760
        %v1436 = vsub.f32 %v672, %v1435
        %v1437 = vand.u32 %v1436, 4294901760
        %v1438 = vsub.f32 %v1436, %v1437
        %v1439 = vand.u32 %v1438, 4294901760
        %1440 = vmatmul.mubr.f32.gmra.mrb[0].mxu0 %v1439
        %v1441 = vpop.f32.mrb[0].mxu0
        %v1442 = vadd.f32 0.0, %v1441
        %v1443 = vpop.f32.mrb[0].mxu0
        %1444 = vmatprep.mubr.f32.mxu0 0.0
        %v1445 = vand.u32 %v675, 4294901760
        %v1446 = vsub.f32 %v675, %v1445
        %v1447 = vand.u32 %v1446, 4294901760
        %v1448 = vsub.f32 %v1446, %v1447
        %v1449 = vand.u32 %v1448, 4294901760
        %1450 = vmatmul.mubr.f32.gmra.mrb[0].mxu0 %v1449
        %v1451 = vpop.f32.mrb[0].mxu0
        %v1452 = vadd.f32 0.0, %v1451
        %v1453 = vpop.f32.mrb[0].mxu0
        %1454 = vmatprep.mubr.f32.mxu0 0.0
        %v1455 = vand.u32 %v678, 4294901760
        %v1456 = vsub.f32 %v678, %v1455
        %v1457 = vand.u32 %v1456, 4294901760
        %v1458 = vsub.f32 %v1456, %v1457
        %v1459 = vand.u32 %v1458, 4294901760
        %1460 = vmatmul.mubr.f32.gmra.mrb[0].mxu0 %v1459
        %v1461 = vpop.f32.mrb[0].mxu0
        %v1462 = vadd.f32 0.0, %v1461
        %v1463 = vpop.f32.mrb[0].mxu0
        %1464 = vmatprep.mubr.f32.mxu0 0.0
        %v1465 = vand.u32 %v681, 4294901760
        %v1466 = vsub.f32 %v681, %v1465
        %v1467 = vand.u32 %v1466, 4294901760
        %v1468 = vsub.f32 %v1466, %v1467
        %v1469 = vand.u32 %v1468, 4294901760
        %1470 = vmatmul.mubr.f32.gmra.mrb[0].mxu0 %v1469
        %v1471 = vpop.f32.mrb[0].mxu0
        %v1472 = vadd.f32 0.0, %v1471
        %v1473 = vpop.f32.mrb[0].mxu0
        %1474 = vmatprep.mubr.f32.mxu0 0.0
        %v1475 = vand.u32 %v684, 4294901760
        %v1476 = vsub.f32 %v684, %v1475
        %v1477 = vand.u32 %v1476, 4294901760
        %v1478 = vsub.f32 %v1476, %v1477
        %v1479 = vand.u32 %v1478, 4294901760
        %1480 = vmatmul.mubr.f32.gmra.mrb[0].mxu0 %v1479
        %v1481 = vpop.f32.mrb[0].mxu0
        %v1482 = vadd.f32 0.0, %v1481
        %v1483 = vpop.f32.mrb[0].mxu0
        %1484 = vmatprep.mubr.f32.mxu0 0.0
        %v1485 = vand.u32 %v687, 4294901760
        %v1486 = vsub.f32 %v687, %v1485
        %v1487 = vand.u32 %v1486, 4294901760
        %v1488 = vsub.f32 %v1486, %v1487
        %v1489 = vand.u32 %v1488, 4294901760
        %1490 = vmatmul.mubr.f32.gmra.mrb[0].mxu0 %v1489
        %v1491 = vpop.f32.mrb[0].mxu0
        %v1492 = vadd.f32 0.0, %v1491
        %v1493 = vpop.f32.mrb[0].mxu0
        %1494 = vmatprep.mubr.f32.mxu0 0.0
        %v1495 = vand.u32 %v690, 4294901760
        %v1496 = vsub.f32 %v690, %v1495
        %v1497 = vand.u32 %v1496, 4294901760
        %v1498 = vsub.f32 %v1496, %v1497
        %v1499 = vand.u32 %v1498, 4294901760
        %1500 = vmatmul.mubr.f32.gmra.mrb[0].mxu0 %v1499
        %v1501 = vpop.f32.mrb[0].mxu0
        %v1502 = vadd.f32 0.0, %v1501
        %v1503 = vpop.f32.mrb[0].mxu0
        %1504 = vmatprep.mubr.f32.mxu0 0.0
        %v1505 = vand.u32 %v693, 4294901760
        %v1506 = vsub.f32 %v693, %v1505
        %v1507 = vand.u32 %v1506, 4294901760
        %v1508 = vsub.f32 %v1506, %v1507
        %v1509 = vand.u32 %v1508, 4294901760
        %1510 = vmatmul.mubr.f32.gmra.mrb[0].mxu0 %v1509
        %v1511 = vpop.f32.mrb[0].mxu0
        %v1512 = vadd.f32 0.0, %v1511
        %v1513 = vpop.f32.mrb[0].mxu0
        %1514 = vmatprep.mubr.f32.mxu0 0.0
        %v1515 = vand.u32 %v696, 4294901760
        %v1516 = vsub.f32 %v696, %v1515
        %v1517 = vand.u32 %v1516, 4294901760
        %v1518 = vsub.f32 %v1516, %v1517
        %v1519 = vand.u32 %v1518, 4294901760
        %1520 = vmatmul.mubr.f32.gmra.mrb[0].mxu0 %v1519
        %v1521 = vpop.f32.mrb[0].mxu0
        %v1522 = vadd.f32 0.0, %v1521
        %v1523 = vpop.f32.mrb[0].mxu0
        %1524 = vmatprep.mubr.f32.mxu0 0.0
        %v1525 = vand.u32 %v699, 4294901760
        %v1526 = vsub.f32 %v699, %v1525
        %v1527 = vand.u32 %v1526, 4294901760
        %v1528 = vsub.f32 %v1526, %v1527
        %v1529 = vand.u32 %v1528, 4294901760
        %1530 = vmatmul.mubr.f32.gmra.mrb[0].mxu0 %v1529
        %v1531 = vpop.f32.mrb[0].mxu0
        %v1532 = vadd.f32 0.0, %v1531
        %v1533 = vpop.f32.mrb[0].mxu0
        %1534 = vmatprep.mubr.f32.mxu0 0.0
        %v1535 = vand.u32 %v702, 4294901760
        %v1536 = vsub.f32 %v702, %v1535
        %v1537 = vand.u32 %v1536, 4294901760
        %v1538 = vsub.f32 %v1536, %v1537
        %v1539 = vand.u32 %v1538, 4294901760
        %1540 = vmatmul.mubr.f32.gmra.mrb[0].mxu0 %v1539
        %v1541 = vpop.f32.mrb[0].mxu0
        %v1542 = vadd.f32 0.0, %v1541
        %v1543 = vpop.f32.mrb[0].mxu0
        %1544 = vmatprep.mubr.f32.mxu0 0.0
        %v1545 = vand.u32 %v705, 4294901760
        %v1546 = vsub.f32 %v705, %v1545
        %v1547 = vand.u32 %v1546, 4294901760
        %v1548 = vsub.f32 %v1546, %v1547
        %v1549 = vand.u32 %v1548, 4294901760
        %1550 = vmatmul.mubr.f32.gmra.mrb[0].mxu0 %v1549
        %v1551 = vpop.f32.mrb[0].mxu0
        %v1552 = vadd.f32 0.0, %v1551
        %v1553 = vpop.f32.mrb[0].mxu0
        %1554 = vmatprep.mubr.f32.mxu0 0.0
        %v1555 = vand.u32 %v708, 4294901760
        %v1556 = vsub.f32 %v708, %v1555
        %v1557 = vand.u32 %v1556, 4294901760
        %v1558 = vsub.f32 %v1556, %v1557
        %v1559 = vand.u32 %v1558, 4294901760
        %1560 = vmatmul.mubr.f32.gmra.mrb[0].mxu0 %v1559
        %v1561 = vpop.f32.mrb[0].mxu0
        %v1562 = vadd.f32 0.0, %v1561
        %v1563 = vpop.f32.mrb[0].mxu0
        %1564 = vmatprep.mubr.f32.mxu0 0.0
        %v1565 = vand.u32 %v711, 4294901760
        %v1566 = vsub.f32 %v711, %v1565
        %v1567 = vand.u32 %v1566, 4294901760
        %v1568 = vsub.f32 %v1566, %v1567
        %v1569 = vand.u32 %v1568, 4294901760
        %1570 = vmatmul.mubr.f32.gmra.mrb[0].mxu0 %v1569
        %v1571 = vpop.f32.mrb[0].mxu0
        %v1572 = vadd.f32 0.0, %v1571
        %v1573 = vpop.f32.mrb[0].mxu0
        %1574 = vmatprep.mubr.f32.mxu0 0.0
        %v1575 = vand.u32 %v714, 4294901760
        %v1576 = vsub.f32 %v714, %v1575
        %v1577 = vand.u32 %v1576, 4294901760
        %v1578 = vsub.f32 %v1576, %v1577
        %v1579 = vand.u32 %v1578, 4294901760
        %1580 = vmatmul.mubr.f32.gmra.mrb[0].mxu0 %v1579
        %v1581 = vpop.f32.mrb[0].mxu0
        %v1582 = vadd.f32 0.0, %v1581
        %v1583 = vpop.f32.mrb[0].mxu0
        %1584 = vdwg.mxu0
        %1585 = vmatprep.subr.mxu0 0.0
        %v1586 = vand.u32 %v354, 4294901760
        %v1587 = vsub.f32 %v354, %v1586
        %v1588 = vand.u32 %v1587, 4294901760
        %v1589 = vsub.f32 %v1587, %v1588
        %v1590 = vand.u32 %v1589, 4294901760
        %1591 = vmatpush1.msra.mxu0 %v1590
        %1592 = vmatprep.subr.mxu0 0.0
        %v1593 = vand.u32 %v355, 4294901760
        %v1594 = vsub.f32 %v355, %v1593
        %v1595 = vand.u32 %v1594, 4294901760
        %v1596 = vsub.f32 %v1594, %v1595
        %v1597 = vand.u32 %v1596, 4294901760
        %1598 = vmatpush1.msra.mxu0 %v1597
        %1599 = vmatprep.subr.mxu0 0.0
        %v1600 = vand.u32 %v356, 4294901760
        %v1601 = vsub.f32 %v356, %v1600
        %v1602 = vand.u32 %v1601, 4294901760
        %v1603 = vsub.f32 %v1601, %v1602
        %v1604 = vand.u32 %v1603, 4294901760
        %1605 = vmatpush1.msra.mxu0 %v1604
        %1606 = vmatprep.subr.mxu0 0.0
        %v1607 = vand.u32 %v357, 4294901760
        %v1608 = vsub.f32 %v357, %v1607
        %v1609 = vand.u32 %v1608, 4294901760
        %v1610 = vsub.f32 %v1608, %v1609
        %v1611 = vand.u32 %v1610, 4294901760
        %1612 = vmatpush1.msra.mxu0 %v1611
        %1613 = vmatprep.subr.mxu0 0.0
        %1614 = vmatpush1.msra.mxu0 0.0
        %1615 = vmatprep.subr.mxu0 0.0
        %1616 = vmatpush1.msra.mxu0 0.0
        %1617 = vmatprep.subr.mxu0 0.0
        %1618 = vmatpush1.msra.mxu0 0.0
        %1619 = vmatprep.subr.mxu0 0.0
        %1620 = vmatpush1.msra.mxu0 0.0
        %1621 = vmatprep.subr.mxu0 0.0
        %1622 = vmatpush1.msra.mxu0 0.0
        %1623 = vmatprep.subr.mxu0 0.0
        %1624 = vmatpush1.msra.mxu0 0.0
        %1625 = vmatprep.subr.mxu0 0.0
        %1626 = vmatpush1.msra.mxu0 0.0
        %1627 = vmatprep.subr.mxu0 0.0
        %1628 = vmatpush1.msra.mxu0 0.0
        %1629 = vmatprep.subr.mxu0 0.0
        %1630 = vmatpush1.msra.mxu0 0.0
        %1631 = vmatprep.subr.mxu0 0.0
        %1632 = vmatpush1.msra.mxu0 0.0
        %1633 = vmatprep.subr.mxu0 0.0
        %1634 = vmatpush1.msra.mxu0 0.0
        %1635 = vmatprep.subr.mxu0 0.0
        %1636 = vmatpush1.msra.mxu0 0.0
        %1637 = vmatprep.subr.mxu0 0.0
        %1638 = vmatpush1.msra.mxu0 0.0
        %1639 = vmatprep.subr.mxu0 0.0
        %1640 = vmatpush1.msra.mxu0 0.0
        %1641 = vmatprep.subr.mxu0 0.0
        %1642 = vmatpush1.msra.mxu0 0.0
        %1643 = vmatprep.subr.mxu0 0.0
        %1644 = vmatpush1.msra.mxu0 0.0
        %1645 = vmatprep.subr.mxu0 0.0
        %1646 = vmatpush1.msra.mxu0 0.0
        %1647 = vmatprep.subr.mxu0 0.0
        %1648 = vmatpush1.msra.mxu0 0.0
        %1649 = vmatprep.subr.mxu0 0.0
        %1650 = vmatpush1.msra.mxu0 0.0
        %1651 = vmatprep.subr.mxu0 0.0
        %1652 = vmatpush1.msra.mxu0 0.0
        %1653 = vmatprep.subr.mxu0 0.0
        %1654 = vmatpush1.msra.mxu0 0.0
        %1655 = vmatprep.subr.mxu0 0.0
        %1656 = vmatpush1.msra.mxu0 0.0
        %1657 = vmatprep.subr.mxu0 0.0
        %1658 = vmatpush1.msra.mxu0 0.0
        %1659 = vmatprep.subr.mxu0 0.0
        %1660 = vmatpush1.msra.mxu0 0.0
        %1661 = vmatprep.subr.mxu0 0.0
        %1662 = vmatpush1.msra.mxu0 0.0
        %1663 = vmatprep.subr.mxu0 0.0
        %1664 = vmatpush1.msra.mxu0 0.0
        %1665 = vmatprep.subr.mxu0 0.0
        %1666 = vmatpush1.msra.mxu0 0.0
        %1667 = vmatprep.subr.mxu0 0.0
        %1668 = vmatpush1.msra.mxu0 0.0
        %1669 = vmatprep.mubr.f32.mxu0 0.0
        %v1670 = vand.u32 %v477, 4294901760
        %1671 = vmatmul.mubr.f32.gmra.mrb[0].mxu0 %v1670
        %v1672 = vpop.f32.mrb[0].mxu0
        %v1673 = vadd.f32 %v792, %v1672
        %v1674 = vpop.f32.mrb[0].mxu0
        %1675 = vmatprep.mubr.f32.mxu0 0.0
        %v1676 = vand.u32 %v480, 4294901760
        %1677 = vmatmul.mubr.f32.gmra.mrb[0].mxu0 %v1676
        %v1678 = vpop.f32.mrb[0].mxu0
        %v1679 = vadd.f32 %v802, %v1678
        %v1680 = vpop.f32.mrb[0].mxu0
        %1681 = vmatprep.mubr.f32.mxu0 0.0
        %v1682 = vand.u32 %v483, 4294901760
        %1683 = vmatmul.mubr.f32.gmra.mrb[0].mxu0 %v1682
        %v1684 = vpop.f32.mrb[0].mxu0
        %v1685 = vadd.f32 %v812, %v1684
        %v1686 = vpop.f32.mrb[0].mxu0
        %1687 = vmatprep.mubr.f32.mxu0 0.0
        %v1688 = vand.u32 %v486, 4294901760
        %1689 = vmatmul.mubr.f32.gmra.mrb[0].mxu0 %v1688
        %v1690 = vpop.f32.mrb[0].mxu0
        %v1691 = vadd.f32 %v822, %v1690
        %v1692 = vpop.f32.mrb[0].mxu0
        %1693 = vmatprep.mubr.f32.mxu0 0.0
        %v1694 = vand.u32 %v489, 4294901760
        %1695 = vmatmul.mubr.f32.gmra.mrb[0].mxu0 %v1694
        %v1696 = vpop.f32.mrb[0].mxu0
        %v1697 = vadd.f32 %v832, %v1696
        %v1698 = vpop.f32.mrb[0].mxu0
        %1699 = vmatprep.mubr.f32.mxu0 0.0
        %v1700 = vand.u32 %v492, 4294901760
        %1701 = vmatmul.mubr.f32.gmra.mrb[0].mxu0 %v1700
        %v1702 = vpop.f32.mrb[0].mxu0
        %v1703 = vadd.f32 %v842, %v1702
        %v1704 = vpop.f32.mrb[0].mxu0
        %1705 = vmatprep.mubr.f32.mxu0 0.0
        %v1706 = vand.u32 %v495, 4294901760
        %1707 = vmatmul.mubr.f32.gmra.mrb[0].mxu0 %v1706
        %v1708 = vpop.f32.mrb[0].mxu0
        %v1709 = vadd.f32 %v852, %v1708
        %v1710 = vpop.f32.mrb[0].mxu0
        %1711 = vmatprep.mubr.f32.mxu0 0.0
        %v1712 = vand.u32 %v498, 4294901760
        %1713 = vmatmul.mubr.f32.gmra.mrb[0].mxu0 %v1712
        %v1714 = vpop.f32.mrb[0].mxu0
        %v1715 = vadd.f32 %v862, %v1714
        %v1716 = vpop.f32.mrb[0].mxu0
        %1717 = vmatprep.mubr.f32.mxu0 0.0
        %v1718 = vand.u32 %v501, 4294901760
        %1719 = vmatmul.mubr.f32.gmra.mrb[0].mxu0 %v1718
        %v1720 = vpop.f32.mrb[0].mxu0
        %v1721 = vadd.f32 %v872, %v1720
        %v1722 = vpop.f32.mrb[0].mxu0
        %1723 = vmatprep.mubr.f32.mxu0 0.0
        %v1724 = vand.u32 %v504, 4294901760
        %1725 = vmatmul.mubr.f32.gmra.mrb[0].mxu0 %v1724
        %v1726 = vpop.f32.mrb[0].mxu0
        %v1727 = vadd.f32 %v882, %v1726
        %v1728 = vpop.f32.mrb[0].mxu0
        %1729 = vmatprep.mubr.f32.mxu0 0.0
        %v1730 = vand.u32 %v507, 4294901760
        %1731 = vmatmul.mubr.f32.gmra.mrb[0].mxu0 %v1730
        %v1732 = vpop.f32.mrb[0].mxu0
        %v1733 = vadd.f32 %v892, %v1732
        %v1734 = vpop.f32.mrb[0].mxu0
        %1735 = vmatprep.mubr.f32.mxu0 0.0
        %v1736 = vand.u32 %v510, 4294901760
        %1737 = vmatmul.mubr.f32.gmra.mrb[0].mxu0 %v1736
        %v1738 = vpop.f32.mrb[0].mxu0
        %v1739 = vadd.f32 %v902, %v1738
        %v1740 = vpop.f32.mrb[0].mxu0
        %1741 = vmatprep.mubr.f32.mxu0 0.0
        %v1742 = vand.u32 %v513, 4294901760
        %1743 = vmatmul.mubr.f32.gmra.mrb[0].mxu0 %v1742
        %v1744 = vpop.f32.mrb[0].mxu0
        %v1745 = vadd.f32 %v912, %v1744
        %v1746 = vpop.f32.mrb[0].mxu0
        %1747 = vmatprep.mubr.f32.mxu0 0.0
        %v1748 = vand.u32 %v516, 4294901760
        %1749 = vmatmul.mubr.f32.gmra.mrb[0].mxu0 %v1748
        %v1750 = vpop.f32.mrb[0].mxu0
        %v1751 = vadd.f32 %v922, %v1750
        %v1752 = vpop.f32.mrb[0].mxu0
        %1753 = vmatprep.mubr.f32.mxu0 0.0
        %v1754 = vand.u32 %v519, 4294901760
        %1755 = vmatmul.mubr.f32.gmra.mrb[0].mxu0 %v1754
        %v1756 = vpop.f32.mrb[0].mxu0
        %v1757 = vadd.f32 %v932, %v1756
        %v1758 = vpop.f32.mrb[0].mxu0
        %1759 = vmatprep.mubr.f32.mxu0 0.0
        %v1760 = vand.u32 %v522, 4294901760
        %1761 = vmatmul.mubr.f32.gmra.mrb[0].mxu0 %v1760
        %v1762 = vpop.f32.mrb[0].mxu0
        %v1763 = vadd.f32 %v942, %v1762
        %v1764 = vpop.f32.mrb[0].mxu0
        %1765 = vmatprep.mubr.f32.mxu0 0.0
        %v1766 = vand.u32 %v525, 4294901760
        %1767 = vmatmul.mubr.f32.gmra.mrb[0].mxu0 %v1766
        %v1768 = vpop.f32.mrb[0].mxu0
        %v1769 = vadd.f32 %v952, %v1768
        %v1770 = vpop.f32.mrb[0].mxu0
        %1771 = vmatprep.mubr.f32.mxu0 0.0
        %v1772 = vand.u32 %v528, 4294901760
        %1773 = vmatmul.mubr.f32.gmra.mrb[0].mxu0 %v1772
        %v1774 = vpop.f32.mrb[0].mxu0
        %v1775 = vadd.f32 %v962, %v1774
        %v1776 = vpop.f32.mrb[0].mxu0
        %1777 = vmatprep.mubr.f32.mxu0 0.0
        %v1778 = vand.u32 %v531, 4294901760
        %1779 = vmatmul.mubr.f32.gmra.mrb[0].mxu0 %v1778
        %v1780 = vpop.f32.mrb[0].mxu0
        %v1781 = vadd.f32 %v972, %v1780
        %v1782 = vpop.f32.mrb[0].mxu0
        %1783 = vmatprep.mubr.f32.mxu0 0.0
        %v1784 = vand.u32 %v534, 4294901760
        %1785 = vmatmul.mubr.f32.gmra.mrb[0].mxu0 %v1784
        %v1786 = vpop.f32.mrb[0].mxu0
        %v1787 = vadd.f32 %v982, %v1786
        %v1788 = vpop.f32.mrb[0].mxu0
        %1789 = vmatprep.mubr.f32.mxu0 0.0
        %v1790 = vand.u32 %v537, 4294901760
        %1791 = vmatmul.mubr.f32.gmra.mrb[0].mxu0 %v1790
        %v1792 = vpop.f32.mrb[0].mxu0
        %v1793 = vadd.f32 %v992, %v1792
        %v1794 = vpop.f32.mrb[0].mxu0
        %1795 = vmatprep.mubr.f32.mxu0 0.0
        %v1796 = vand.u32 %v540, 4294901760
        %1797 = vmatmul.mubr.f32.gmra.mrb[0].mxu0 %v1796
        %v1798 = vpop.f32.mrb[0].mxu0
        %v1799 = vadd.f32 %v1002, %v1798
        %v1800 = vpop.f32.mrb[0].mxu0
        %1801 = vmatprep.mubr.f32.mxu0 0.0
        %v1802 = vand.u32 %v543, 4294901760
        %1803 = vmatmul.mubr.f32.gmra.mrb[0].mxu0 %v1802
        %v1804 = vpop.f32.mrb[0].mxu0
        %v1805 = vadd.f32 %v1012, %v1804
        %v1806 = vpop.f32.mrb[0].mxu0
        %1807 = vmatprep.mubr.f32.mxu0 0.0
        %v1808 = vand.u32 %v546, 4294901760
        %1809 = vmatmul.mubr.f32.gmra.mrb[0].mxu0 %v1808
        %v1810 = vpop.f32.mrb[0].mxu0
        %v1811 = vadd.f32 %v1022, %v1810
        %v1812 = vpop.f32.mrb[0].mxu0
        %1813 = vmatprep.mubr.f32.mxu0 0.0
        %v1814 = vand.u32 %v549, 4294901760
        %1815 = vmatmul.mubr.f32.gmra.mrb[0].mxu0 %v1814
        %v1816 = vpop.f32.mrb[0].mxu0
        %v1817 = vadd.f32 %v1032, %v1816
        %v1818 = vpop.f32.mrb[0].mxu0
        %1819 = vmatprep.mubr.f32.mxu0 0.0
        %v1820 = vand.u32 %v552, 4294901760
        %1821 = vmatmul.mubr.f32.gmra.mrb[0].mxu0 %v1820
        %v1822 = vpop.f32.mrb[0].mxu0
        %v1823 = vadd.f32 %v1042, %v1822
        %v1824 = vpop.f32.mrb[0].mxu0
        %1825 = vmatprep.mubr.f32.mxu0 0.0
        %v1826 = vand.u32 %v555, 4294901760
        %1827 = vmatmul.mubr.f32.gmra.mrb[0].mxu0 %v1826
        %v1828 = vpop.f32.mrb[0].mxu0
        %v1829 = vadd.f32 %v1052, %v1828
        %v1830 = vpop.f32.mrb[0].mxu0
        %1831 = vmatprep.mubr.f32.mxu0 0.0
        %v1832 = vand.u32 %v558, 4294901760
        %1833 = vmatmul.mubr.f32.gmra.mrb[0].mxu0 %v1832
        %v1834 = vpop.f32.mrb[0].mxu0
        %v1835 = vadd.f32 %v1062, %v1834
        %v1836 = vpop.f32.mrb[0].mxu0
        %1837 = vmatprep.mubr.f32.mxu0 0.0
        %v1838 = vand.u32 %v561, 4294901760
        %1839 = vmatmul.mubr.f32.gmra.mrb[0].mxu0 %v1838
        %v1840 = vpop.f32.mrb[0].mxu0
        %v1841 = vadd.f32 %v1072, %v1840
        %v1842 = vpop.f32.mrb[0].mxu0
        %1843 = vmatprep.mubr.f32.mxu0 0.0
        %v1844 = vand.u32 %v564, 4294901760
        %1845 = vmatmul.mubr.f32.gmra.mrb[0].mxu0 %v1844
        %v1846 = vpop.f32.mrb[0].mxu0
        %v1847 = vadd.f32 %v1082, %v1846
        %v1848 = vpop.f32.mrb[0].mxu0
        %1849 = vmatprep.mubr.f32.mxu0 0.0
        %v1850 = vand.u32 %v567, 4294901760
        %1851 = vmatmul.mubr.f32.gmra.mrb[0].mxu0 %v1850
        %v1852 = vpop.f32.mrb[0].mxu0
        %v1853 = vadd.f32 %v1092, %v1852
        %v1854 = vpop.f32.mrb[0].mxu0
        %1855 = vmatprep.mubr.f32.mxu0 0.0
        %v1856 = vand.u32 %v570, 4294901760
        %1857 = vmatmul.mubr.f32.gmra.mrb[0].mxu0 %v1856
        %v1858 = vpop.f32.mrb[0].mxu0
        %v1859 = vadd.f32 %v1102, %v1858
        %v1860 = vpop.f32.mrb[0].mxu0
        %1861 = vmatprep.mubr.f32.mxu0 0.0
        %v1862 = vand.u32 %v573, 4294901760
        %1863 = vmatmul.mubr.f32.gmra.mrb[0].mxu0 %v1862
        %v1864 = vpop.f32.mrb[0].mxu0
        %v1865 = vadd.f32 %v1112, %v1864
        %v1866 = vpop.f32.mrb[0].mxu0
        %1867 = vmatprep.mubr.f32.mxu0 0.0
        %v1868 = vand.u32 %v576, 4294901760
        %1869 = vmatmul.mubr.f32.gmra.mrb[0].mxu0 %v1868
        %v1870 = vpop.f32.mrb[0].mxu0
        %v1871 = vadd.f32 %v1122, %v1870
        %v1872 = vpop.f32.mrb[0].mxu0
        %1873 = vmatprep.mubr.f32.mxu0 0.0
        %v1874 = vand.u32 %v579, 4294901760
        %1875 = vmatmul.mubr.f32.gmra.mrb[0].mxu0 %v1874
        %v1876 = vpop.f32.mrb[0].mxu0
        %v1877 = vadd.f32 %v1132, %v1876
        %v1878 = vpop.f32.mrb[0].mxu0
        %1879 = vmatprep.mubr.f32.mxu0 0.0
        %v1880 = vand.u32 %v582, 4294901760
        %1881 = vmatmul.mubr.f32.gmra.mrb[0].mxu0 %v1880
        %v1882 = vpop.f32.mrb[0].mxu0
        %v1883 = vadd.f32 %v1142, %v1882
        %v1884 = vpop.f32.mrb[0].mxu0
        %1885 = vmatprep.mubr.f32.mxu0 0.0
        %v1886 = vand.u32 %v585, 4294901760
        %1887 = vmatmul.mubr.f32.gmra.mrb[0].mxu0 %v1886
        %v1888 = vpop.f32.mrb[0].mxu0
        %v1889 = vadd.f32 %v1152, %v1888
        %v1890 = vpop.f32.mrb[0].mxu0
        %1891 = vmatprep.mubr.f32.mxu0 0.0
        %v1892 = vand.u32 %v588, 4294901760
        %1893 = vmatmul.mubr.f32.gmra.mrb[0].mxu0 %v1892
        %v1894 = vpop.f32.mrb[0].mxu0
        %v1895 = vadd.f32 %v1162, %v1894
        %v1896 = vpop.f32.mrb[0].mxu0
        %1897 = vmatprep.mubr.f32.mxu0 0.0
        %v1898 = vand.u32 %v591, 4294901760
        %1899 = vmatmul.mubr.f32.gmra.mrb[0].mxu0 %v1898
        %v1900 = vpop.f32.mrb[0].mxu0
        %v1901 = vadd.f32 %v1172, %v1900
        %v1902 = vpop.f32.mrb[0].mxu0
        %1903 = vmatprep.mubr.f32.mxu0 0.0
        %v1904 = vand.u32 %v594, 4294901760
        %1905 = vmatmul.mubr.f32.gmra.mrb[0].mxu0 %v1904
        %v1906 = vpop.f32.mrb[0].mxu0
        %v1907 = vadd.f32 %v1182, %v1906
        %v1908 = vpop.f32.mrb[0].mxu0
        %1909 = vmatprep.mubr.f32.mxu0 0.0
        %v1910 = vand.u32 %v597, 4294901760
        %1911 = vmatmul.mubr.f32.gmra.mrb[0].mxu0 %v1910
        %v1912 = vpop.f32.mrb[0].mxu0
        %v1913 = vadd.f32 %v1192, %v1912
        %v1914 = vpop.f32.mrb[0].mxu0
        %1915 = vmatprep.mubr.f32.mxu0 0.0
        %v1916 = vand.u32 %v600, 4294901760
        %1917 = vmatmul.mubr.f32.gmra.mrb[0].mxu0 %v1916
        %v1918 = vpop.f32.mrb[0].mxu0
        %v1919 = vadd.f32 %v1202, %v1918
        %v1920 = vpop.f32.mrb[0].mxu0
        %1921 = vmatprep.mubr.f32.mxu0 0.0
        %v1922 = vand.u32 %v603, 4294901760
        %1923 = vmatmul.mubr.f32.gmra.mrb[0].mxu0 %v1922
        %v1924 = vpop.f32.mrb[0].mxu0
        %v1925 = vadd.f32 %v1212, %v1924
        %v1926 = vpop.f32.mrb[0].mxu0
        %1927 = vmatprep.mubr.f32.mxu0 0.0
        %v1928 = vand.u32 %v606, 4294901760
        %1929 = vmatmul.mubr.f32.gmra.mrb[0].mxu0 %v1928
        %v1930 = vpop.f32.mrb[0].mxu0
        %v1931 = vadd.f32 %v1222, %v1930
        %v1932 = vpop.f32.mrb[0].mxu0
        %1933 = vmatprep.mubr.f32.mxu0 0.0
        %v1934 = vand.u32 %v609, 4294901760
        %1935 = vmatmul.mubr.f32.gmra.mrb[0].mxu0 %v1934
        %v1936 = vpop.f32.mrb[0].mxu0
        %v1937 = vadd.f32 %v1232, %v1936
        %v1938 = vpop.f32.mrb[0].mxu0
        %1939 = vmatprep.mubr.f32.mxu0 0.0
        %v1940 = vand.u32 %v612, 4294901760
        %1941 = vmatmul.mubr.f32.gmra.mrb[0].mxu0 %v1940
        %v1942 = vpop.f32.mrb[0].mxu0
        %v1943 = vadd.f32 %v1242, %v1942
        %v1944 = vpop.f32.mrb[0].mxu0
        %1945 = vmatprep.mubr.f32.mxu0 0.0
        %v1946 = vand.u32 %v615, 4294901760
        %1947 = vmatmul.mubr.f32.gmra.mrb[0].mxu0 %v1946
        %v1948 = vpop.f32.mrb[0].mxu0
        %v1949 = vadd.f32 %v1252, %v1948
        %v1950 = vpop.f32.mrb[0].mxu0
        %1951 = vmatprep.mubr.f32.mxu0 0.0
        %v1952 = vand.u32 %v618, 4294901760
        %1953 = vmatmul.mubr.f32.gmra.mrb[0].mxu0 %v1952
        %v1954 = vpop.f32.mrb[0].mxu0
        %v1955 = vadd.f32 %v1262, %v1954
        %v1956 = vpop.f32.mrb[0].mxu0
        %1957 = vmatprep.mubr.f32.mxu0 0.0
        %v1958 = vand.u32 %v621, 4294901760
        %1959 = vmatmul.mubr.f32.gmra.mrb[0].mxu0 %v1958
        %v1960 = vpop.f32.mrb[0].mxu0
        %v1961 = vadd.f32 %v1272, %v1960
        %v1962 = vpop.f32.mrb[0].mxu0
        %1963 = vmatprep.mubr.f32.mxu0 0.0
        %v1964 = vand.u32 %v624, 4294901760
        %1965 = vmatmul.mubr.f32.gmra.mrb[0].mxu0 %v1964
        %v1966 = vpop.f32.mrb[0].mxu0
        %v1967 = vadd.f32 %v1282, %v1966
        %v1968 = vpop.f32.mrb[0].mxu0
        %1969 = vmatprep.mubr.f32.mxu0 0.0
        %v1970 = vand.u32 %v627, 4294901760
        %1971 = vmatmul.mubr.f32.gmra.mrb[0].mxu0 %v1970
        %v1972 = vpop.f32.mrb[0].mxu0
        %v1973 = vadd.f32 %v1292, %v1972
        %v1974 = vpop.f32.mrb[0].mxu0
        %1975 = vmatprep.mubr.f32.mxu0 0.0
        %v1976 = vand.u32 %v630, 4294901760
        %1977 = vmatmul.mubr.f32.gmra.mrb[0].mxu0 %v1976
        %v1978 = vpop.f32.mrb[0].mxu0
        %v1979 = vadd.f32 %v1302, %v1978
        %v1980 = vpop.f32.mrb[0].mxu0
        %1981 = vmatprep.mubr.f32.mxu0 0.0
        %v1982 = vand.u32 %v633, 4294901760
        %1983 = vmatmul.mubr.f32.gmra.mrb[0].mxu0 %v1982
        %v1984 = vpop.f32.mrb[0].mxu0
        %v1985 = vadd.f32 %v1312, %v1984
        %v1986 = vpop.f32.mrb[0].mxu0
        %1987 = vmatprep.mubr.f32.mxu0 0.0
        %v1988 = vand.u32 %v636, 4294901760
        %1989 = vmatmul.mubr.f32.gmra.mrb[0].mxu0 %v1988
        %v1990 = vpop.f32.mrb[0].mxu0
        %v1991 = vadd.f32 %v1322, %v1990
        %v1992 = vpop.f32.mrb[0].mxu0
        %1993 = vmatprep.mubr.f32.mxu0 0.0
        %v1994 = vand.u32 %v639, 4294901760
        %1995 = vmatmul.mubr.f32.gmra.mrb[0].mxu0 %v1994
        %v1996 = vpop.f32.mrb[0].mxu0
        %v1997 = vadd.f32 %v1332, %v1996
        %v1998 = vpop.f32.mrb[0].mxu0
        %1999 = vmatprep.mubr.f32.mxu0 0.0
        %v2000 = vand.u32 %v642, 4294901760
        %2001 = vmatmul.mubr.f32.gmra.mrb[0].mxu0 %v2000
        %v2002 = vpop.f32.mrb[0].mxu0
        %v2003 = vadd.f32 %v1342, %v2002
        %v2004 = vpop.f32.mrb[0].mxu0
        %2005 = vmatprep.mubr.f32.mxu0 0.0
        %v2006 = vand.u32 %v645, 4294901760
        %2007 = vmatmul.mubr.f32.gmra.mrb[0].mxu0 %v2006
        %v2008 = vpop.f32.mrb[0].mxu0
        %v2009 = vadd.f32 %v1352, %v2008
        %v2010 = vpop.f32.mrb[0].mxu0
        %2011 = vmatprep.mubr.f32.mxu0 0.0
        %v2012 = vand.u32 %v648, 4294901760
        %2013 = vmatmul.mubr.f32.gmra.mrb[0].mxu0 %v2012
        %v2014 = vpop.f32.mrb[0].mxu0
        %v2015 = vadd.f32 %v1362, %v2014
        %v2016 = vpop.f32.mrb[0].mxu0
        %2017 = vmatprep.mubr.f32.mxu0 0.0
        %v2018 = vand.u32 %v651, 4294901760
        %2019 = vmatmul.mubr.f32.gmra.mrb[0].mxu0 %v2018
        %v2020 = vpop.f32.mrb[0].mxu0
        %v2021 = vadd.f32 %v1372, %v2020
        %v2022 = vpop.f32.mrb[0].mxu0
        %2023 = vmatprep.mubr.f32.mxu0 0.0
        %v2024 = vand.u32 %v654, 4294901760
        %2025 = vmatmul.mubr.f32.gmra.mrb[0].mxu0 %v2024
        %v2026 = vpop.f32.mrb[0].mxu0
        %v2027 = vadd.f32 %v1382, %v2026
        %v2028 = vpop.f32.mrb[0].mxu0
        %2029 = vmatprep.mubr.f32.mxu0 0.0
        %v2030 = vand.u32 %v657, 4294901760
        %2031 = vmatmul.mubr.f32.gmra.mrb[0].mxu0 %v2030
        %v2032 = vpop.f32.mrb[0].mxu0
        %v2033 = vadd.f32 %v1392, %v2032
        %v2034 = vpop.f32.mrb[0].mxu0
        %2035 = vmatprep.mubr.f32.mxu0 0.0
        %v2036 = vand.u32 %v660, 4294901760
        %2037 = vmatmul.mubr.f32.gmra.mrb[0].mxu0 %v2036
        %v2038 = vpop.f32.mrb[0].mxu0
        %v2039 = vadd.f32 %v1402, %v2038
        %v2040 = vpop.f32.mrb[0].mxu0
        %2041 = vmatprep.mubr.f32.mxu0 0.0
        %v2042 = vand.u32 %v663, 4294901760
        %2043 = vmatmul.mubr.f32.gmra.mrb[0].mxu0 %v2042
        %v2044 = vpop.f32.mrb[0].mxu0
        %v2045 = vadd.f32 %v1412, %v2044
        %v2046 = vpop.f32.mrb[0].mxu0
        %2047 = vmatprep.mubr.f32.mxu0 0.0
        %v2048 = vand.u32 %v666, 4294901760
        %2049 = vmatmul.mubr.f32.gmra.mrb[0].mxu0 %v2048
        %v2050 = vpop.f32.mrb[0].mxu0
        %v2051 = vadd.f32 %v1422, %v2050
        %v2052 = vpop.f32.mrb[0].mxu0
        %2053 = vmatprep.mubr.f32.mxu0 0.0
        %v2054 = vand.u32 %v669, 4294901760
        %2055 = vmatmul.mubr.f32.gmra.mrb[0].mxu0 %v2054
        %v2056 = vpop.f32.mrb[0].mxu0
        %v2057 = vadd.f32 %v1432, %v2056
        %v2058 = vpop.f32.mrb[0].mxu0
        %2059 = vmatprep.mubr.f32.mxu0 0.0
        %v2060 = vand.u32 %v672, 4294901760
        %2061 = vmatmul.mubr.f32.gmra.mrb[0].mxu0 %v2060
        %v2062 = vpop.f32.mrb[0].mxu0
        %v2063 = vadd.f32 %v1442, %v2062
        %v2064 = vpop.f32.mrb[0].mxu0
        %2065 = vmatprep.mubr.f32.mxu0 0.0
        %v2066 = vand.u32 %v675, 4294901760
        %2067 = vmatmul.mubr.f32.gmra.mrb[0].mxu0 %v2066
        %v2068 = vpop.f32.mrb[0].mxu0
        %v2069 = vadd.f32 %v1452, %v2068
        %v2070 = vpop.f32.mrb[0].mxu0
        %2071 = vmatprep.mubr.f32.mxu0 0.0
        %v2072 = vand.u32 %v678, 4294901760
        %2073 = vmatmul.mubr.f32.gmra.mrb[0].mxu0 %v2072
        %v2074 = vpop.f32.mrb[0].mxu0
        %v2075 = vadd.f32 %v1462, %v2074
        %v2076 = vpop.f32.mrb[0].mxu0
        %2077 = vmatprep.mubr.f32.mxu0 0.0
        %v2078 = vand.u32 %v681, 4294901760
        %2079 = vmatmul.mubr.f32.gmra.mrb[0].mxu0 %v2078
        %v2080 = vpop.f32.mrb[0].mxu0
        %v2081 = vadd.f32 %v1472, %v2080
        %v2082 = vpop.f32.mrb[0].mxu0
        %2083 = vmatprep.mubr.f32.mxu0 0.0
        %v2084 = vand.u32 %v684, 4294901760
        %2085 = vmatmul.mubr.f32.gmra.mrb[0].mxu0 %v2084
        %v2086 = vpop.f32.mrb[0].mxu0
        %v2087 = vadd.f32 %v1482, %v2086
        %v2088 = vpop.f32.mrb[0].mxu0
        %2089 = vmatprep.mubr.f32.mxu0 0.0
        %v2090 = vand.u32 %v687, 4294901760
        %2091 = vmatmul.mubr.f32.gmra.mrb[0].mxu0 %v2090
        %v2092 = vpop.f32.mrb[0].mxu0
        %v2093 = vadd.f32 %v1492, %v2092
        %v2094 = vpop.f32.mrb[0].mxu0
        %2095 = vmatprep.mubr.f32.mxu0 0.0
        %v2096 = vand.u32 %v690, 4294901760
        %2097 = vmatmul.mubr.f32.gmra.mrb[0].mxu0 %v2096
        %v2098 = vpop.f32.mrb[0].mxu0
        %v2099 = vadd.f32 %v1502, %v2098
        %v2100 = vpop.f32.mrb[0].mxu0
        %2101 = vmatprep.mubr.f32.mxu0 0.0
        %v2102 = vand.u32 %v693, 4294901760
        %2103 = vmatmul.mubr.f32.gmra.mrb[0].mxu0 %v2102
        %v2104 = vpop.f32.mrb[0].mxu0
        %v2105 = vadd.f32 %v1512, %v2104
        %v2106 = vpop.f32.mrb[0].mxu0
        %2107 = vmatprep.mubr.f32.mxu0 0.0
        %v2108 = vand.u32 %v696, 4294901760
        %2109 = vmatmul.mubr.f32.gmra.mrb[0].mxu0 %v2108
        %v2110 = vpop.f32.mrb[0].mxu0
        %v2111 = vadd.f32 %v1522, %v2110
        %v2112 = vpop.f32.mrb[0].mxu0
        %2113 = vmatprep.mubr.f32.mxu0 0.0
        %v2114 = vand.u32 %v699, 4294901760
        %2115 = vmatmul.mubr.f32.gmra.mrb[0].mxu0 %v2114
        %v2116 = vpop.f32.mrb[0].mxu0
        %v2117 = vadd.f32 %v1532, %v2116
        %v2118 = vpop.f32.mrb[0].mxu0
        %2119 = vmatprep.mubr.f32.mxu0 0.0
        %v2120 = vand.u32 %v702, 4294901760
        %2121 = vmatmul.mubr.f32.gmra.mrb[0].mxu0 %v2120
        %v2122 = vpop.f32.mrb[0].mxu0
        %v2123 = vadd.f32 %v1542, %v2122
        %v2124 = vpop.f32.mrb[0].mxu0
        %2125 = vmatprep.mubr.f32.mxu0 0.0
        %v2126 = vand.u32 %v705, 4294901760
        %2127 = vmatmul.mubr.f32.gmra.mrb[0].mxu0 %v2126
        %v2128 = vpop.f32.mrb[0].mxu0
        %v2129 = vadd.f32 %v1552, %v2128
        %v2130 = vpop.f32.mrb[0].mxu0
        %2131 = vmatprep.mubr.f32.mxu0 0.0
        %v2132 = vand.u32 %v708, 4294901760
        %2133 = vmatmul.mubr.f32.gmra.mrb[0].mxu0 %v2132
        %v2134 = vpop.f32.mrb[0].mxu0
        %v2135 = vadd.f32 %v1562, %v2134
        %v2136 = vpop.f32.mrb[0].mxu0
        %2137 = vmatprep.mubr.f32.mxu0 0.0
        %v2138 = vand.u32 %v711, 4294901760
        %2139 = vmatmul.mubr.f32.gmra.mrb[0].mxu0 %v2138
        %v2140 = vpop.f32.mrb[0].mxu0
        %v2141 = vadd.f32 %v1572, %v2140
        %v2142 = vpop.f32.mrb[0].mxu0
        %2143 = vmatprep.mubr.f32.mxu0 0.0
        %v2144 = vand.u32 %v714, 4294901760
        %2145 = vmatmul.mubr.f32.gmra.mrb[0].mxu0 %v2144
        %v2146 = vpop.f32.mrb[0].mxu0
        %v2147 = vadd.f32 %v1582, %v2146
        %v2148 = vpop.f32.mrb[0].mxu0
        %2149 = vdwg.mxu0
        %2150 = vmatprep.subr.mxu0 0.0
        %v2151 = vand.u32 %v354, 4294901760
        %v2152 = vsub.f32 %v354, %v2151
        %2153 = vmatpush1.msra.mxu0 %v2152
        %2154 = vmatprep.subr.mxu0 0.0
        %v2155 = vand.u32 %v355, 4294901760
        %v2156 = vsub.f32 %v355, %v2155
        %2157 = vmatpush1.msra.mxu0 %v2156
        %2158 = vmatprep.subr.mxu0 0.0
        %v2159 = vand.u32 %v356, 4294901760
        %v2160 = vsub.f32 %v356, %v2159
        %2161 = vmatpush1.msra.mxu0 %v2160
        %2162 = vmatprep.subr.mxu0 0.0
        %v2163 = vand.u32 %v357, 4294901760
        %v2164 = vsub.f32 %v357, %v2163
        %2165 = vmatpush1.msra.mxu0 %v2164
        %2166 = vmatprep.subr.mxu0 0.0
        %2167 = vmatpush1.msra.mxu0 0.0
        %2168 = vmatprep.subr.mxu0 0.0
        %2169 = vmatpush1.msra.mxu0 0.0
        %2170 = vmatprep.subr.mxu0 0.0
        %2171 = vmatpush1.msra.mxu0 0.0
        %2172 = vmatprep.subr.mxu0 0.0
        %2173 = vmatpush1.msra.mxu0 0.0
        %2174 = vmatprep.subr.mxu0 0.0
        %2175 = vmatpush1.msra.mxu0 0.0
        %2176 = vmatprep.subr.mxu0 0.0
        %2177 = vmatpush1.msra.mxu0 0.0
        %2178 = vmatprep.subr.mxu0 0.0
        %2179 = vmatpush1.msra.mxu0 0.0
        %2180 = vmatprep.subr.mxu0 0.0
        %2181 = vmatpush1.msra.mxu0 0.0
        %2182 = vmatprep.subr.mxu0 0.0
        %2183 = vmatpush1.msra.mxu0 0.0
        %2184 = vmatprep.subr.mxu0 0.0
        %2185 = vmatpush1.msra.mxu0 0.0
        %2186 = vmatprep.subr.mxu0 0.0
        %2187 = vmatpush1.msra.mxu0 0.0
        %2188 = vmatprep.subr.mxu0 0.0
        %2189 = vmatpush1.msra.mxu0 0.0
        %2190 = vmatprep.subr.mxu0 0.0
        %2191 = vmatpush1.msra.mxu0 0.0
        %2192 = vmatprep.subr.mxu0 0.0
        %2193 = vmatpush1.msra.mxu0 0.0
        %2194 = vmatprep.subr.mxu0 0.0
        %2195 = vmatpush1.msra.mxu0 0.0
        %2196 = vmatprep.subr.mxu0 0.0
        %2197 = vmatpush1.msra.mxu0 0.0
        %2198 = vmatprep.subr.mxu0 0.0
        %2199 = vmatpush1.msra.mxu0 0.0
        %2200 = vmatprep.subr.mxu0 0.0
        %2201 = vmatpush1.msra.mxu0 0.0
        %2202 = vmatprep.subr.mxu0 0.0
        %2203 = vmatpush1.msra.mxu0 0.0
        %2204 = vmatprep.subr.mxu0 0.0
        %2205 = vmatpush1.msra.mxu0 0.0
        %2206 = vmatprep.subr.mxu0 0.0
        %2207 = vmatpush1.msra.mxu0 0.0
        %2208 = vmatprep.subr.mxu0 0.0
        %2209 = vmatpush1.msra.mxu0 0.0
        %2210 = vmatprep.subr.mxu0 0.0
        %2211 = vmatpush1.msra.mxu0 0.0
        %2212 = vmatprep.subr.mxu0 0.0
        %2213 = vmatpush1.msra.mxu0 0.0
        %2214 = vmatprep.subr.mxu0 0.0
        %2215 = vmatpush1.msra.mxu0 0.0
        %2216 = vmatprep.subr.mxu0 0.0
        %2217 = vmatpush1.msra.mxu0 0.0
        %2218 = vmatprep.subr.mxu0 0.0
        %2219 = vmatpush1.msra.mxu0 0.0
        %2220 = vmatprep.subr.mxu0 0.0
        %2221 = vmatpush1.msra.mxu0 0.0
        %2222 = vmatprep.mubr.f32.mxu0 0.0
        %v2223 = vand.u32 %v477, 4294901760
        %v2224 = vsub.f32 %v477, %v2223
        %2225 = vmatmul.mubr.f32.gmra.mrb[0].mxu0 %v2224
        %v2226 = vpop.f32.mrb[0].mxu0
        %v2227 = vadd.f32 %v1673, %v2226
        %v2228 = vpop.f32.mrb[0].mxu0
        %2229 = vmatprep.mubr.f32.mxu0 0.0
        %v2230 = vand.u32 %v480, 4294901760
        %v2231 = vsub.f32 %v480, %v2230
        %2232 = vmatmul.mubr.f32.gmra.mrb[0].mxu0 %v2231
        %v2233 = vpop.f32.mrb[0].mxu0
        %v2234 = vadd.f32 %v1679, %v2233
        %v2235 = vpop.f32.mrb[0].mxu0
        %2236 = vmatprep.mubr.f32.mxu0 0.0
        %v2237 = vand.u32 %v483, 4294901760
        %v2238 = vsub.f32 %v483, %v2237
        %2239 = vmatmul.mubr.f32.gmra.mrb[0].mxu0 %v2238
        %v2240 = vpop.f32.mrb[0].mxu0
        %v2241 = vadd.f32 %v1685, %v2240
        %v2242 = vpop.f32.mrb[0].mxu0
        %2243 = vmatprep.mubr.f32.mxu0 0.0
        %v2244 = vand.u32 %v486, 4294901760
        %v2245 = vsub.f32 %v486, %v2244
        %2246 = vmatmul.mubr.f32.gmra.mrb[0].mxu0 %v2245
        %v2247 = vpop.f32.mrb[0].mxu0
        %v2248 = vadd.f32 %v1691, %v2247
        %v2249 = vpop.f32.mrb[0].mxu0
        %2250 = vmatprep.mubr.f32.mxu0 0.0
        %v2251 = vand.u32 %v489, 4294901760
        %v2252 = vsub.f32 %v489, %v2251
        %2253 = vmatmul.mubr.f32.gmra.mrb[0].mxu0 %v2252
        %v2254 = vpop.f32.mrb[0].mxu0
        %v2255 = vadd.f32 %v1697, %v2254
        %v2256 = vpop.f32.mrb[0].mxu0
        %2257 = vmatprep.mubr.f32.mxu0 0.0
        %v2258 = vand.u32 %v492, 4294901760
        %v2259 = vsub.f32 %v492, %v2258
        %2260 = vmatmul.mubr.f32.gmra.mrb[0].mxu0 %v2259
        %v2261 = vpop.f32.mrb[0].mxu0
        %v2262 = vadd.f32 %v1703, %v2261
        %v2263 = vpop.f32.mrb[0].mxu0
        %2264 = vmatprep.mubr.f32.mxu0 0.0
        %v2265 = vand.u32 %v495, 4294901760
        %v2266 = vsub.f32 %v495, %v2265
        %2267 = vmatmul.mubr.f32.gmra.mrb[0].mxu0 %v2266
        %v2268 = vpop.f32.mrb[0].mxu0
        %v2269 = vadd.f32 %v1709, %v2268
        %v2270 = vpop.f32.mrb[0].mxu0
        %2271 = vmatprep.mubr.f32.mxu0 0.0
        %v2272 = vand.u32 %v498, 4294901760
        %v2273 = vsub.f32 %v498, %v2272
        %2274 = vmatmul.mubr.f32.gmra.mrb[0].mxu0 %v2273
        %v2275 = vpop.f32.mrb[0].mxu0
        %v2276 = vadd.f32 %v1715, %v2275
        %v2277 = vpop.f32.mrb[0].mxu0
        %2278 = vmatprep.mubr.f32.mxu0 0.0
        %v2279 = vand.u32 %v501, 4294901760
        %v2280 = vsub.f32 %v501, %v2279
        %2281 = vmatmul.mubr.f32.gmra.mrb[0].mxu0 %v2280
        %v2282 = vpop.f32.mrb[0].mxu0
        %v2283 = vadd.f32 %v1721, %v2282
        %v2284 = vpop.f32.mrb[0].mxu0
        %2285 = vmatprep.mubr.f32.mxu0 0.0
        %v2286 = vand.u32 %v504, 4294901760
        %v2287 = vsub.f32 %v504, %v2286
        %2288 = vmatmul.mubr.f32.gmra.mrb[0].mxu0 %v2287
        %v2289 = vpop.f32.mrb[0].mxu0
        %v2290 = vadd.f32 %v1727, %v2289
        %v2291 = vpop.f32.mrb[0].mxu0
        %2292 = vmatprep.mubr.f32.mxu0 0.0
        %v2293 = vand.u32 %v507, 4294901760
        %v2294 = vsub.f32 %v507, %v2293
        %2295 = vmatmul.mubr.f32.gmra.mrb[0].mxu0 %v2294
        %v2296 = vpop.f32.mrb[0].mxu0
        %v2297 = vadd.f32 %v1733, %v2296
        %v2298 = vpop.f32.mrb[0].mxu0
        %2299 = vmatprep.mubr.f32.mxu0 0.0
        %v2300 = vand.u32 %v510, 4294901760
        %v2301 = vsub.f32 %v510, %v2300
        %2302 = vmatmul.mubr.f32.gmra.mrb[0].mxu0 %v2301
        %v2303 = vpop.f32.mrb[0].mxu0
        %v2304 = vadd.f32 %v1739, %v2303
        %v2305 = vpop.f32.mrb[0].mxu0
        %2306 = vmatprep.mubr.f32.mxu0 0.0
        %v2307 = vand.u32 %v513, 4294901760
        %v2308 = vsub.f32 %v513, %v2307
        %2309 = vmatmul.mubr.f32.gmra.mrb[0].mxu0 %v2308
        %v2310 = vpop.f32.mrb[0].mxu0
        %v2311 = vadd.f32 %v1745, %v2310
        %v2312 = vpop.f32.mrb[0].mxu0
        %2313 = vmatprep.mubr.f32.mxu0 0.0
        %v2314 = vand.u32 %v516, 4294901760
        %v2315 = vsub.f32 %v516, %v2314
        %2316 = vmatmul.mubr.f32.gmra.mrb[0].mxu0 %v2315
        %v2317 = vpop.f32.mrb[0].mxu0
        %v2318 = vadd.f32 %v1751, %v2317
        %v2319 = vpop.f32.mrb[0].mxu0
        %2320 = vmatprep.mubr.f32.mxu0 0.0
        %v2321 = vand.u32 %v519, 4294901760
        %v2322 = vsub.f32 %v519, %v2321
        %2323 = vmatmul.mubr.f32.gmra.mrb[0].mxu0 %v2322
        %v2324 = vpop.f32.mrb[0].mxu0
        %v2325 = vadd.f32 %v1757, %v2324
        %v2326 = vpop.f32.mrb[0].mxu0
        %2327 = vmatprep.mubr.f32.mxu0 0.0
        %v2328 = vand.u32 %v522, 4294901760
        %v2329 = vsub.f32 %v522, %v2328
        %2330 = vmatmul.mubr.f32.gmra.mrb[0].mxu0 %v2329
        %v2331 = vpop.f32.mrb[0].mxu0
        %v2332 = vadd.f32 %v1763, %v2331
        %v2333 = vpop.f32.mrb[0].mxu0
        %2334 = vmatprep.mubr.f32.mxu0 0.0
        %v2335 = vand.u32 %v525, 4294901760
        %v2336 = vsub.f32 %v525, %v2335
        %2337 = vmatmul.mubr.f32.gmra.mrb[0].mxu0 %v2336
        %v2338 = vpop.f32.mrb[0].mxu0
        %v2339 = vadd.f32 %v1769, %v2338
        %v2340 = vpop.f32.mrb[0].mxu0
        %2341 = vmatprep.mubr.f32.mxu0 0.0
        %v2342 = vand.u32 %v528, 4294901760
        %v2343 = vsub.f32 %v528, %v2342
        %2344 = vmatmul.mubr.f32.gmra.mrb[0].mxu0 %v2343
        %v2345 = vpop.f32.mrb[0].mxu0
        %v2346 = vadd.f32 %v1775, %v2345
        %v2347 = vpop.f32.mrb[0].mxu0
        %2348 = vmatprep.mubr.f32.mxu0 0.0
        %v2349 = vand.u32 %v531, 4294901760
        %v2350 = vsub.f32 %v531, %v2349
        %2351 = vmatmul.mubr.f32.gmra.mrb[0].mxu0 %v2350
        %v2352 = vpop.f32.mrb[0].mxu0
        %v2353 = vadd.f32 %v1781, %v2352
        %v2354 = vpop.f32.mrb[0].mxu0
        %2355 = vmatprep.mubr.f32.mxu0 0.0
        %v2356 = vand.u32 %v534, 4294901760
        %v2357 = vsub.f32 %v534, %v2356
        %2358 = vmatmul.mubr.f32.gmra.mrb[0].mxu0 %v2357
        %v2359 = vpop.f32.mrb[0].mxu0
        %v2360 = vadd.f32 %v1787, %v2359
        %v2361 = vpop.f32.mrb[0].mxu0
        %2362 = vmatprep.mubr.f32.mxu0 0.0
        %v2363 = vand.u32 %v537, 4294901760
        %v2364 = vsub.f32 %v537, %v2363
        %2365 = vmatmul.mubr.f32.gmra.mrb[0].mxu0 %v2364
        %v2366 = vpop.f32.mrb[0].mxu0
        %v2367 = vadd.f32 %v1793, %v2366
        %v2368 = vpop.f32.mrb[0].mxu0
        %2369 = vmatprep.mubr.f32.mxu0 0.0
        %v2370 = vand.u32 %v540, 4294901760
        %v2371 = vsub.f32 %v540, %v2370
        %2372 = vmatmul.mubr.f32.gmra.mrb[0].mxu0 %v2371
        %v2373 = vpop.f32.mrb[0].mxu0
        %v2374 = vadd.f32 %v1799, %v2373
        %v2375 = vpop.f32.mrb[0].mxu0
        %2376 = vmatprep.mubr.f32.mxu0 0.0
        %v2377 = vand.u32 %v543, 4294901760
        %v2378 = vsub.f32 %v543, %v2377
        %2379 = vmatmul.mubr.f32.gmra.mrb[0].mxu0 %v2378
        %v2380 = vpop.f32.mrb[0].mxu0
        %v2381 = vadd.f32 %v1805, %v2380
        %v2382 = vpop.f32.mrb[0].mxu0
        %2383 = vmatprep.mubr.f32.mxu0 0.0
        %v2384 = vand.u32 %v546, 4294901760
        %v2385 = vsub.f32 %v546, %v2384
        %2386 = vmatmul.mubr.f32.gmra.mrb[0].mxu0 %v2385
        %v2387 = vpop.f32.mrb[0].mxu0
        %v2388 = vadd.f32 %v1811, %v2387
        %v2389 = vpop.f32.mrb[0].mxu0
        %2390 = vmatprep.mubr.f32.mxu0 0.0
        %v2391 = vand.u32 %v549, 4294901760
        %v2392 = vsub.f32 %v549, %v2391
        %2393 = vmatmul.mubr.f32.gmra.mrb[0].mxu0 %v2392
        %v2394 = vpop.f32.mrb[0].mxu0
        %v2395 = vadd.f32 %v1817, %v2394
        %v2396 = vpop.f32.mrb[0].mxu0
        %2397 = vmatprep.mubr.f32.mxu0 0.0
        %v2398 = vand.u32 %v552, 4294901760
        %v2399 = vsub.f32 %v552, %v2398
        %2400 = vmatmul.mubr.f32.gmra.mrb[0].mxu0 %v2399
        %v2401 = vpop.f32.mrb[0].mxu0
        %v2402 = vadd.f32 %v1823, %v2401
        %v2403 = vpop.f32.mrb[0].mxu0
        %2404 = vmatprep.mubr.f32.mxu0 0.0
        %v2405 = vand.u32 %v555, 4294901760
        %v2406 = vsub.f32 %v555, %v2405
        %2407 = vmatmul.mubr.f32.gmra.mrb[0].mxu0 %v2406
        %v2408 = vpop.f32.mrb[0].mxu0
        %v2409 = vadd.f32 %v1829, %v2408
        %v2410 = vpop.f32.mrb[0].mxu0
        %2411 = vmatprep.mubr.f32.mxu0 0.0
        %v2412 = vand.u32 %v558, 4294901760
        %v2413 = vsub.f32 %v558, %v2412
        %2414 = vmatmul.mubr.f32.gmra.mrb[0].mxu0 %v2413
        %v2415 = vpop.f32.mrb[0].mxu0
        %v2416 = vadd.f32 %v1835, %v2415
        %v2417 = vpop.f32.mrb[0].mxu0
        %2418 = vmatprep.mubr.f32.mxu0 0.0
        %v2419 = vand.u32 %v561, 4294901760
        %v2420 = vsub.f32 %v561, %v2419
        %2421 = vmatmul.mubr.f32.gmra.mrb[0].mxu0 %v2420
        %v2422 = vpop.f32.mrb[0].mxu0
        %v2423 = vadd.f32 %v1841, %v2422
        %v2424 = vpop.f32.mrb[0].mxu0
        %2425 = vmatprep.mubr.f32.mxu0 0.0
        %v2426 = vand.u32 %v564, 4294901760
        %v2427 = vsub.f32 %v564, %v2426
        %2428 = vmatmul.mubr.f32.gmra.mrb[0].mxu0 %v2427
        %v2429 = vpop.f32.mrb[0].mxu0
        %v2430 = vadd.f32 %v1847, %v2429
        %v2431 = vpop.f32.mrb[0].mxu0
        %2432 = vmatprep.mubr.f32.mxu0 0.0
        %v2433 = vand.u32 %v567, 4294901760
        %v2434 = vsub.f32 %v567, %v2433
        %2435 = vmatmul.mubr.f32.gmra.mrb[0].mxu0 %v2434
        %v2436 = vpop.f32.mrb[0].mxu0
        %v2437 = vadd.f32 %v1853, %v2436
        %v2438 = vpop.f32.mrb[0].mxu0
        %2439 = vmatprep.mubr.f32.mxu0 0.0
        %v2440 = vand.u32 %v570, 4294901760
        %v2441 = vsub.f32 %v570, %v2440
        %2442 = vmatmul.mubr.f32.gmra.mrb[0].mxu0 %v2441
        %v2443 = vpop.f32.mrb[0].mxu0
        %v2444 = vadd.f32 %v1859, %v2443
        %v2445 = vpop.f32.mrb[0].mxu0
        %2446 = vmatprep.mubr.f32.mxu0 0.0
        %v2447 = vand.u32 %v573, 4294901760
        %v2448 = vsub.f32 %v573, %v2447
        %2449 = vmatmul.mubr.f32.gmra.mrb[0].mxu0 %v2448
        %v2450 = vpop.f32.mrb[0].mxu0
        %v2451 = vadd.f32 %v1865, %v2450
        %v2452 = vpop.f32.mrb[0].mxu0
        %2453 = vmatprep.mubr.f32.mxu0 0.0
        %v2454 = vand.u32 %v576, 4294901760
        %v2455 = vsub.f32 %v576, %v2454
        %2456 = vmatmul.mubr.f32.gmra.mrb[0].mxu0 %v2455
        %v2457 = vpop.f32.mrb[0].mxu0
        %v2458 = vadd.f32 %v1871, %v2457
        %v2459 = vpop.f32.mrb[0].mxu0
        %2460 = vmatprep.mubr.f32.mxu0 0.0
        %v2461 = vand.u32 %v579, 4294901760
        %v2462 = vsub.f32 %v579, %v2461
        %2463 = vmatmul.mubr.f32.gmra.mrb[0].mxu0 %v2462
        %v2464 = vpop.f32.mrb[0].mxu0
        %v2465 = vadd.f32 %v1877, %v2464
        %v2466 = vpop.f32.mrb[0].mxu0
        %2467 = vmatprep.mubr.f32.mxu0 0.0
        %v2468 = vand.u32 %v582, 4294901760
        %v2469 = vsub.f32 %v582, %v2468
        %2470 = vmatmul.mubr.f32.gmra.mrb[0].mxu0 %v2469
        %v2471 = vpop.f32.mrb[0].mxu0
        %v2472 = vadd.f32 %v1883, %v2471
        %v2473 = vpop.f32.mrb[0].mxu0
        %2474 = vmatprep.mubr.f32.mxu0 0.0
        %v2475 = vand.u32 %v585, 4294901760
        %v2476 = vsub.f32 %v585, %v2475
        %2477 = vmatmul.mubr.f32.gmra.mrb[0].mxu0 %v2476
        %v2478 = vpop.f32.mrb[0].mxu0
        %v2479 = vadd.f32 %v1889, %v2478
        %v2480 = vpop.f32.mrb[0].mxu0
        %2481 = vmatprep.mubr.f32.mxu0 0.0
        %v2482 = vand.u32 %v588, 4294901760
        %v2483 = vsub.f32 %v588, %v2482
        %2484 = vmatmul.mubr.f32.gmra.mrb[0].mxu0 %v2483
        %v2485 = vpop.f32.mrb[0].mxu0
        %v2486 = vadd.f32 %v1895, %v2485
        %v2487 = vpop.f32.mrb[0].mxu0
        %2488 = vmatprep.mubr.f32.mxu0 0.0
        %v2489 = vand.u32 %v591, 4294901760
        %v2490 = vsub.f32 %v591, %v2489
        %2491 = vmatmul.mubr.f32.gmra.mrb[0].mxu0 %v2490
        %v2492 = vpop.f32.mrb[0].mxu0
        %v2493 = vadd.f32 %v1901, %v2492
        %v2494 = vpop.f32.mrb[0].mxu0
        %2495 = vmatprep.mubr.f32.mxu0 0.0
        %v2496 = vand.u32 %v594, 4294901760
        %v2497 = vsub.f32 %v594, %v2496
        %2498 = vmatmul.mubr.f32.gmra.mrb[0].mxu0 %v2497
        %v2499 = vpop.f32.mrb[0].mxu0
        %v2500 = vadd.f32 %v1907, %v2499
        %v2501 = vpop.f32.mrb[0].mxu0
        %2502 = vmatprep.mubr.f32.mxu0 0.0
        %v2503 = vand.u32 %v597, 4294901760
        %v2504 = vsub.f32 %v597, %v2503
        %2505 = vmatmul.mubr.f32.gmra.mrb[0].mxu0 %v2504
        %v2506 = vpop.f32.mrb[0].mxu0
        %v2507 = vadd.f32 %v1913, %v2506
        %v2508 = vpop.f32.mrb[0].mxu0
        %2509 = vmatprep.mubr.f32.mxu0 0.0
        %v2510 = vand.u32 %v600, 4294901760
        %v2511 = vsub.f32 %v600, %v2510
        %2512 = vmatmul.mubr.f32.gmra.mrb[0].mxu0 %v2511
        %v2513 = vpop.f32.mrb[0].mxu0
        %v2514 = vadd.f32 %v1919, %v2513
        %v2515 = vpop.f32.mrb[0].mxu0
        %2516 = vmatprep.mubr.f32.mxu0 0.0
        %v2517 = vand.u32 %v603, 4294901760
        %v2518 = vsub.f32 %v603, %v2517
        %2519 = vmatmul.mubr.f32.gmra.mrb[0].mxu0 %v2518
        %v2520 = vpop.f32.mrb[0].mxu0
        %v2521 = vadd.f32 %v1925, %v2520
        %v2522 = vpop.f32.mrb[0].mxu0
        %2523 = vmatprep.mubr.f32.mxu0 0.0
        %v2524 = vand.u32 %v606, 4294901760
        %v2525 = vsub.f32 %v606, %v2524
        %2526 = vmatmul.mubr.f32.gmra.mrb[0].mxu0 %v2525
        %v2527 = vpop.f32.mrb[0].mxu0
        %v2528 = vadd.f32 %v1931, %v2527
        %v2529 = vpop.f32.mrb[0].mxu0
        %2530 = vmatprep.mubr.f32.mxu0 0.0
        %v2531 = vand.u32 %v609, 4294901760
        %v2532 = vsub.f32 %v609, %v2531
        %2533 = vmatmul.mubr.f32.gmra.mrb[0].mxu0 %v2532
        %v2534 = vpop.f32.mrb[0].mxu0
        %v2535 = vadd.f32 %v1937, %v2534
        %v2536 = vpop.f32.mrb[0].mxu0
        %2537 = vmatprep.mubr.f32.mxu0 0.0
        %v2538 = vand.u32 %v612, 4294901760
        %v2539 = vsub.f32 %v612, %v2538
        %2540 = vmatmul.mubr.f32.gmra.mrb[0].mxu0 %v2539
        %v2541 = vpop.f32.mrb[0].mxu0
        %v2542 = vadd.f32 %v1943, %v2541
        %v2543 = vpop.f32.mrb[0].mxu0
        %2544 = vmatprep.mubr.f32.mxu0 0.0
        %v2545 = vand.u32 %v615, 4294901760
        %v2546 = vsub.f32 %v615, %v2545
        %2547 = vmatmul.mubr.f32.gmra.mrb[0].mxu0 %v2546
        %v2548 = vpop.f32.mrb[0].mxu0
        %v2549 = vadd.f32 %v1949, %v2548
        %v2550 = vpop.f32.mrb[0].mxu0
        %2551 = vmatprep.mubr.f32.mxu0 0.0
        %v2552 = vand.u32 %v618, 4294901760
        %v2553 = vsub.f32 %v618, %v2552
        %2554 = vmatmul.mubr.f32.gmra.mrb[0].mxu0 %v2553
        %v2555 = vpop.f32.mrb[0].mxu0
        %v2556 = vadd.f32 %v1955, %v2555
        %v2557 = vpop.f32.mrb[0].mxu0
        %2558 = vmatprep.mubr.f32.mxu0 0.0
        %v2559 = vand.u32 %v621, 4294901760
        %v2560 = vsub.f32 %v621, %v2559
        %2561 = vmatmul.mubr.f32.gmra.mrb[0].mxu0 %v2560
        %v2562 = vpop.f32.mrb[0].mxu0
        %v2563 = vadd.f32 %v1961, %v2562
        %v2564 = vpop.f32.mrb[0].mxu0
        %2565 = vmatprep.mubr.f32.mxu0 0.0
        %v2566 = vand.u32 %v624, 4294901760
        %v2567 = vsub.f32 %v624, %v2566
        %2568 = vmatmul.mubr.f32.gmra.mrb[0].mxu0 %v2567
        %v2569 = vpop.f32.mrb[0].mxu0
        %v2570 = vadd.f32 %v1967, %v2569
        %v2571 = vpop.f32.mrb[0].mxu0
        %2572 = vmatprep.mubr.f32.mxu0 0.0
        %v2573 = vand.u32 %v627, 4294901760
        %v2574 = vsub.f32 %v627, %v2573
        %2575 = vmatmul.mubr.f32.gmra.mrb[0].mxu0 %v2574
        %v2576 = vpop.f32.mrb[0].mxu0
        %v2577 = vadd.f32 %v1973, %v2576
        %v2578 = vpop.f32.mrb[0].mxu0
        %2579 = vmatprep.mubr.f32.mxu0 0.0
        %v2580 = vand.u32 %v630, 4294901760
        %v2581 = vsub.f32 %v630, %v2580
        %2582 = vmatmul.mubr.f32.gmra.mrb[0].mxu0 %v2581
        %v2583 = vpop.f32.mrb[0].mxu0
        %v2584 = vadd.f32 %v1979, %v2583
        %v2585 = vpop.f32.mrb[0].mxu0
        %2586 = vmatprep.mubr.f32.mxu0 0.0
        %v2587 = vand.u32 %v633, 4294901760
        %v2588 = vsub.f32 %v633, %v2587
        %2589 = vmatmul.mubr.f32.gmra.mrb[0].mxu0 %v2588
        %v2590 = vpop.f32.mrb[0].mxu0
        %v2591 = vadd.f32 %v1985, %v2590
        %v2592 = vpop.f32.mrb[0].mxu0
        %2593 = vmatprep.mubr.f32.mxu0 0.0
        %v2594 = vand.u32 %v636, 4294901760
        %v2595 = vsub.f32 %v636, %v2594
        %2596 = vmatmul.mubr.f32.gmra.mrb[0].mxu0 %v2595
        %v2597 = vpop.f32.mrb[0].mxu0
        %v2598 = vadd.f32 %v1991, %v2597
        %v2599 = vpop.f32.mrb[0].mxu0
        %2600 = vmatprep.mubr.f32.mxu0 0.0
        %v2601 = vand.u32 %v639, 4294901760
        %v2602 = vsub.f32 %v639, %v2601
        %2603 = vmatmul.mubr.f32.gmra.mrb[0].mxu0 %v2602
        %v2604 = vpop.f32.mrb[0].mxu0
        %v2605 = vadd.f32 %v1997, %v2604
        %v2606 = vpop.f32.mrb[0].mxu0
        %2607 = vmatprep.mubr.f32.mxu0 0.0
        %v2608 = vand.u32 %v642, 4294901760
        %v2609 = vsub.f32 %v642, %v2608
        %2610 = vmatmul.mubr.f32.gmra.mrb[0].mxu0 %v2609
        %v2611 = vpop.f32.mrb[0].mxu0
        %v2612 = vadd.f32 %v2003, %v2611
        %v2613 = vpop.f32.mrb[0].mxu0
        %2614 = vmatprep.mubr.f32.mxu0 0.0
        %v2615 = vand.u32 %v645, 4294901760
        %v2616 = vsub.f32 %v645, %v2615
        %2617 = vmatmul.mubr.f32.gmra.mrb[0].mxu0 %v2616
        %v2618 = vpop.f32.mrb[0].mxu0
        %v2619 = vadd.f32 %v2009, %v2618
        %v2620 = vpop.f32.mrb[0].mxu0
        %2621 = vmatprep.mubr.f32.mxu0 0.0
        %v2622 = vand.u32 %v648, 4294901760
        %v2623 = vsub.f32 %v648, %v2622
        %2624 = vmatmul.mubr.f32.gmra.mrb[0].mxu0 %v2623
        %v2625 = vpop.f32.mrb[0].mxu0
        %v2626 = vadd.f32 %v2015, %v2625
        %v2627 = vpop.f32.mrb[0].mxu0
        %2628 = vmatprep.mubr.f32.mxu0 0.0
        %v2629 = vand.u32 %v651, 4294901760
        %v2630 = vsub.f32 %v651, %v2629
        %2631 = vmatmul.mubr.f32.gmra.mrb[0].mxu0 %v2630
        %v2632 = vpop.f32.mrb[0].mxu0
        %v2633 = vadd.f32 %v2021, %v2632
        %v2634 = vpop.f32.mrb[0].mxu0
        %2635 = vmatprep.mubr.f32.mxu0 0.0
        %v2636 = vand.u32 %v654, 4294901760
        %v2637 = vsub.f32 %v654, %v2636
        %2638 = vmatmul.mubr.f32.gmra.mrb[0].mxu0 %v2637
        %v2639 = vpop.f32.mrb[0].mxu0
        %v2640 = vadd.f32 %v2027, %v2639
        %v2641 = vpop.f32.mrb[0].mxu0
        %2642 = vmatprep.mubr.f32.mxu0 0.0
        %v2643 = vand.u32 %v657, 4294901760
        %v2644 = vsub.f32 %v657, %v2643
        %2645 = vmatmul.mubr.f32.gmra.mrb[0].mxu0 %v2644
        %v2646 = vpop.f32.mrb[0].mxu0
        %v2647 = vadd.f32 %v2033, %v2646
        %v2648 = vpop.f32.mrb[0].mxu0
        %2649 = vmatprep.mubr.f32.mxu0 0.0
        %v2650 = vand.u32 %v660, 4294901760
        %v2651 = vsub.f32 %v660, %v2650
        %2652 = vmatmul.mubr.f32.gmra.mrb[0].mxu0 %v2651
        %v2653 = vpop.f32.mrb[0].mxu0
        %v2654 = vadd.f32 %v2039, %v2653
        %v2655 = vpop.f32.mrb[0].mxu0
        %2656 = vmatprep.mubr.f32.mxu0 0.0
        %v2657 = vand.u32 %v663, 4294901760
        %v2658 = vsub.f32 %v663, %v2657
        %2659 = vmatmul.mubr.f32.gmra.mrb[0].mxu0 %v2658
        %v2660 = vpop.f32.mrb[0].mxu0
        %v2661 = vadd.f32 %v2045, %v2660
        %v2662 = vpop.f32.mrb[0].mxu0
        %2663 = vmatprep.mubr.f32.mxu0 0.0
        %v2664 = vand.u32 %v666, 4294901760
        %v2665 = vsub.f32 %v666, %v2664
        %2666 = vmatmul.mubr.f32.gmra.mrb[0].mxu0 %v2665
        %v2667 = vpop.f32.mrb[0].mxu0
        %v2668 = vadd.f32 %v2051, %v2667
        %v2669 = vpop.f32.mrb[0].mxu0
        %2670 = vmatprep.mubr.f32.mxu0 0.0
        %v2671 = vand.u32 %v669, 4294901760
        %v2672 = vsub.f32 %v669, %v2671
        %2673 = vmatmul.mubr.f32.gmra.mrb[0].mxu0 %v2672
        %v2674 = vpop.f32.mrb[0].mxu0
        %v2675 = vadd.f32 %v2057, %v2674
        %v2676 = vpop.f32.mrb[0].mxu0
        %2677 = vmatprep.mubr.f32.mxu0 0.0
        %v2678 = vand.u32 %v672, 4294901760
        %v2679 = vsub.f32 %v672, %v2678
        %2680 = vmatmul.mubr.f32.gmra.mrb[0].mxu0 %v2679
        %v2681 = vpop.f32.mrb[0].mxu0
        %v2682 = vadd.f32 %v2063, %v2681
        %v2683 = vpop.f32.mrb[0].mxu0
        %2684 = vmatprep.mubr.f32.mxu0 0.0
        %v2685 = vand.u32 %v675, 4294901760
        %v2686 = vsub.f32 %v675, %v2685
        %2687 = vmatmul.mubr.f32.gmra.mrb[0].mxu0 %v2686
        %v2688 = vpop.f32.mrb[0].mxu0
        %v2689 = vadd.f32 %v2069, %v2688
        %v2690 = vpop.f32.mrb[0].mxu0
        %2691 = vmatprep.mubr.f32.mxu0 0.0
        %v2692 = vand.u32 %v678, 4294901760
        %v2693 = vsub.f32 %v678, %v2692
        %2694 = vmatmul.mubr.f32.gmra.mrb[0].mxu0 %v2693
        %v2695 = vpop.f32.mrb[0].mxu0
        %v2696 = vadd.f32 %v2075, %v2695
        %v2697 = vpop.f32.mrb[0].mxu0
        %2698 = vmatprep.mubr.f32.mxu0 0.0
        %v2699 = vand.u32 %v681, 4294901760
        %v2700 = vsub.f32 %v681, %v2699
        %2701 = vmatmul.mubr.f32.gmra.mrb[0].mxu0 %v2700
        %v2702 = vpop.f32.mrb[0].mxu0
        %v2703 = vadd.f32 %v2081, %v2702
        %v2704 = vpop.f32.mrb[0].mxu0
        %2705 = vmatprep.mubr.f32.mxu0 0.0
        %v2706 = vand.u32 %v684, 4294901760
        %v2707 = vsub.f32 %v684, %v2706
        %2708 = vmatmul.mubr.f32.gmra.mrb[0].mxu0 %v2707
        %v2709 = vpop.f32.mrb[0].mxu0
        %v2710 = vadd.f32 %v2087, %v2709
        %v2711 = vpop.f32.mrb[0].mxu0
        %2712 = vmatprep.mubr.f32.mxu0 0.0
        %v2713 = vand.u32 %v687, 4294901760
        %v2714 = vsub.f32 %v687, %v2713
        %2715 = vmatmul.mubr.f32.gmra.mrb[0].mxu0 %v2714
        %v2716 = vpop.f32.mrb[0].mxu0
        %v2717 = vadd.f32 %v2093, %v2716
        %v2718 = vpop.f32.mrb[0].mxu0
        %2719 = vmatprep.mubr.f32.mxu0 0.0
        %v2720 = vand.u32 %v690, 4294901760
        %v2721 = vsub.f32 %v690, %v2720
        %2722 = vmatmul.mubr.f32.gmra.mrb[0].mxu0 %v2721
        %v2723 = vpop.f32.mrb[0].mxu0
        %v2724 = vadd.f32 %v2099, %v2723
        %v2725 = vpop.f32.mrb[0].mxu0
        %2726 = vmatprep.mubr.f32.mxu0 0.0
        %v2727 = vand.u32 %v693, 4294901760
        %v2728 = vsub.f32 %v693, %v2727
        %2729 = vmatmul.mubr.f32.gmra.mrb[0].mxu0 %v2728
        %v2730 = vpop.f32.mrb[0].mxu0
        %v2731 = vadd.f32 %v2105, %v2730
        %v2732 = vpop.f32.mrb[0].mxu0
        %2733 = vmatprep.mubr.f32.mxu0 0.0
        %v2734 = vand.u32 %v696, 4294901760
        %v2735 = vsub.f32 %v696, %v2734
        %2736 = vmatmul.mubr.f32.gmra.mrb[0].mxu0 %v2735
        %v2737 = vpop.f32.mrb[0].mxu0
        %v2738 = vadd.f32 %v2111, %v2737
        %v2739 = vpop.f32.mrb[0].mxu0
        %2740 = vmatprep.mubr.f32.mxu0 0.0
        %v2741 = vand.u32 %v699, 4294901760
        %v2742 = vsub.f32 %v699, %v2741
        %2743 = vmatmul.mubr.f32.gmra.mrb[0].mxu0 %v2742
        %v2744 = vpop.f32.mrb[0].mxu0
        %v2745 = vadd.f32 %v2117, %v2744
        %v2746 = vpop.f32.mrb[0].mxu0
        %2747 = vmatprep.mubr.f32.mxu0 0.0
        %v2748 = vand.u32 %v702, 4294901760
        %v2749 = vsub.f32 %v702, %v2748
        %2750 = vmatmul.mubr.f32.gmra.mrb[0].mxu0 %v2749
        %v2751 = vpop.f32.mrb[0].mxu0
        %v2752 = vadd.f32 %v2123, %v2751
        %v2753 = vpop.f32.mrb[0].mxu0
        %2754 = vmatprep.mubr.f32.mxu0 0.0
        %v2755 = vand.u32 %v705, 4294901760
        %v2756 = vsub.f32 %v705, %v2755
        %2757 = vmatmul.mubr.f32.gmra.mrb[0].mxu0 %v2756
        %v2758 = vpop.f32.mrb[0].mxu0
        %v2759 = vadd.f32 %v2129, %v2758
        %v2760 = vpop.f32.mrb[0].mxu0
        %2761 = vmatprep.mubr.f32.mxu0 0.0
        %v2762 = vand.u32 %v708, 4294901760
        %v2763 = vsub.f32 %v708, %v2762
        %2764 = vmatmul.mubr.f32.gmra.mrb[0].mxu0 %v2763
        %v2765 = vpop.f32.mrb[0].mxu0
        %v2766 = vadd.f32 %v2135, %v2765
        %v2767 = vpop.f32.mrb[0].mxu0
        %2768 = vmatprep.mubr.f32.mxu0 0.0
        %v2769 = vand.u32 %v711, 4294901760
        %v2770 = vsub.f32 %v711, %v2769
        %2771 = vmatmul.mubr.f32.gmra.mrb[0].mxu0 %v2770
        %v2772 = vpop.f32.mrb[0].mxu0
        %v2773 = vadd.f32 %v2141, %v2772
        %v2774 = vpop.f32.mrb[0].mxu0
        %2775 = vmatprep.mubr.f32.mxu0 0.0
        %v2776 = vand.u32 %v714, 4294901760
        %v2777 = vsub.f32 %v714, %v2776
        %2778 = vmatmul.mubr.f32.gmra.mrb[0].mxu0 %v2777
        %v2779 = vpop.f32.mrb[0].mxu0
        %v2780 = vadd.f32 %v2147, %v2779
        %v2781 = vpop.f32.mrb[0].mxu0
        %2782 = vdwg.mxu0
        %2783 = vmatprep.subr.mxu0 0.0
        %v2784 = vand.u32 %v354, 4294901760
        %2785 = vmatpush1.msra.mxu0 %v2784
        %2786 = vmatprep.subr.mxu0 0.0
        %v2787 = vand.u32 %v355, 4294901760
        %2788 = vmatpush1.msra.mxu0 %v2787
        %2789 = vmatprep.subr.mxu0 0.0
        %v2790 = vand.u32 %v356, 4294901760
        %2791 = vmatpush1.msra.mxu0 %v2790
        %2792 = vmatprep.subr.mxu0 0.0
        %v2793 = vand.u32 %v357, 4294901760
        %2794 = vmatpush1.msra.mxu0 %v2793
        %2795 = vmatprep.subr.mxu0 0.0
        %2796 = vmatpush1.msra.mxu0 0.0
        %2797 = vmatprep.subr.mxu0 0.0
        %2798 = vmatpush1.msra.mxu0 0.0
        %2799 = vmatprep.subr.mxu0 0.0
        %2800 = vmatpush1.msra.mxu0 0.0
        %2801 = vmatprep.subr.mxu0 0.0
        %2802 = vmatpush1.msra.mxu0 0.0
        %2803 = vmatprep.subr.mxu0 0.0
        %2804 = vmatpush1.msra.mxu0 0.0
        %2805 = vmatprep.subr.mxu0 0.0
        %2806 = vmatpush1.msra.mxu0 0.0
        %2807 = vmatprep.subr.mxu0 0.0
        %2808 = vmatpush1.msra.mxu0 0.0
        %2809 = vmatprep.subr.mxu0 0.0
        %2810 = vmatpush1.msra.mxu0 0.0
        %2811 = vmatprep.subr.mxu0 0.0
        %2812 = vmatpush1.msra.mxu0 0.0
        %2813 = vmatprep.subr.mxu0 0.0
        %2814 = vmatpush1.msra.mxu0 0.0
        %2815 = vmatprep.subr.mxu0 0.0
        %2816 = vmatpush1.msra.mxu0 0.0
        %2817 = vmatprep.subr.mxu0 0.0
        %2818 = vmatpush1.msra.mxu0 0.0
        %2819 = vmatprep.subr.mxu0 0.0
        %2820 = vmatpush1.msra.mxu0 0.0
        %2821 = vmatprep.subr.mxu0 0.0
        %2822 = vmatpush1.msra.mxu0 0.0
        %2823 = vmatprep.subr.mxu0 0.0
        %2824 = vmatpush1.msra.mxu0 0.0
        %2825 = vmatprep.subr.mxu0 0.0
        %2826 = vmatpush1.msra.mxu0 0.0
        %2827 = vmatprep.subr.mxu0 0.0
        %2828 = vmatpush1.msra.mxu0 0.0
        %2829 = vmatprep.subr.mxu0 0.0
        %2830 = vmatpush1.msra.mxu0 0.0
        %2831 = vmatprep.subr.mxu0 0.0
        %2832 = vmatpush1.msra.mxu0 0.0
        %2833 = vmatprep.subr.mxu0 0.0
        %2834 = vmatpush1.msra.mxu0 0.0
        %2835 = vmatprep.subr.mxu0 0.0
        %2836 = vmatpush1.msra.mxu0 0.0
        %2837 = vmatprep.subr.mxu0 0.0
        %2838 = vmatpush1.msra.mxu0 0.0
        %2839 = vmatprep.subr.mxu0 0.0
        %2840 = vmatpush1.msra.mxu0 0.0
        %2841 = vmatprep.subr.mxu0 0.0
        %2842 = vmatpush1.msra.mxu0 0.0
        %2843 = vmatprep.subr.mxu0 0.0
        %2844 = vmatpush1.msra.mxu0 0.0
        %2845 = vmatprep.subr.mxu0 0.0
        %2846 = vmatpush1.msra.mxu0 0.0
        %2847 = vmatprep.subr.mxu0 0.0
        %2848 = vmatpush1.msra.mxu0 0.0
        %2849 = vmatprep.subr.mxu0 0.0
        %2850 = vmatpush1.msra.mxu0 0.0
        %2851 = vmatprep.mubr.f32.mxu0 0.0
        %v2852 = vand.u32 %v477, 4294901760
        %v2853 = vsub.f32 %v477, %v2852
        %v2854 = vand.u32 %v2853, 4294901760
        %2855 = vmatmul.mubr.f32.gmra.mrb[0].mxu0 %v2854
        %v2856 = vpop.f32.mrb[0].mxu0
        %v2857 = vadd.f32 %v2227, %v2856
        %v2858 = vpop.f32.mrb[0].mxu0
        %2859 = vmatprep.mubr.f32.mxu0 0.0
        %v2860 = vand.u32 %v480, 4294901760
        %v2861 = vsub.f32 %v480, %v2860
        %v2862 = vand.u32 %v2861, 4294901760
        %2863 = vmatmul.mubr.f32.gmra.mrb[0].mxu0 %v2862
        %v2864 = vpop.f32.mrb[0].mxu0
        %v2865 = vadd.f32 %v2234, %v2864
        %v2866 = vpop.f32.mrb[0].mxu0
        %2867 = vmatprep.mubr.f32.mxu0 0.0
        %v2868 = vand.u32 %v483, 4294901760
        %v2869 = vsub.f32 %v483, %v2868
        %v2870 = vand.u32 %v2869, 4294901760
        %2871 = vmatmul.mubr.f32.gmra.mrb[0].mxu0 %v2870
        %v2872 = vpop.f32.mrb[0].mxu0
        %v2873 = vadd.f32 %v2241, %v2872
        %v2874 = vpop.f32.mrb[0].mxu0
        %2875 = vmatprep.mubr.f32.mxu0 0.0
        %v2876 = vand.u32 %v486, 4294901760
        %v2877 = vsub.f32 %v486, %v2876
        %v2878 = vand.u32 %v2877, 4294901760
        %2879 = vmatmul.mubr.f32.gmra.mrb[0].mxu0 %v2878
        %v2880 = vpop.f32.mrb[0].mxu0
        %v2881 = vadd.f32 %v2248, %v2880
        %v2882 = vpop.f32.mrb[0].mxu0
        %2883 = vmatprep.mubr.f32.mxu0 0.0
        %v2884 = vand.u32 %v489, 4294901760
        %v2885 = vsub.f32 %v489, %v2884
        %v2886 = vand.u32 %v2885, 4294901760
        %2887 = vmatmul.mubr.f32.gmra.mrb[0].mxu0 %v2886
        %v2888 = vpop.f32.mrb[0].mxu0
        %v2889 = vadd.f32 %v2255, %v2888
        %v2890 = vpop.f32.mrb[0].mxu0
        %2891 = vmatprep.mubr.f32.mxu0 0.0
        %v2892 = vand.u32 %v492, 4294901760
        %v2893 = vsub.f32 %v492, %v2892
        %v2894 = vand.u32 %v2893, 4294901760
        %2895 = vmatmul.mubr.f32.gmra.mrb[0].mxu0 %v2894
        %v2896 = vpop.f32.mrb[0].mxu0
        %v2897 = vadd.f32 %v2262, %v2896
        %v2898 = vpop.f32.mrb[0].mxu0
        %2899 = vmatprep.mubr.f32.mxu0 0.0
        %v2900 = vand.u32 %v495, 4294901760
        %v2901 = vsub.f32 %v495, %v2900
        %v2902 = vand.u32 %v2901, 4294901760
        %2903 = vmatmul.mubr.f32.gmra.mrb[0].mxu0 %v2902
        %v2904 = vpop.f32.mrb[0].mxu0
        %v2905 = vadd.f32 %v2269, %v2904
        %v2906 = vpop.f32.mrb[0].mxu0
        %2907 = vmatprep.mubr.f32.mxu0 0.0
        %v2908 = vand.u32 %v498, 4294901760
        %v2909 = vsub.f32 %v498, %v2908
        %v2910 = vand.u32 %v2909, 4294901760
        %2911 = vmatmul.mubr.f32.gmra.mrb[0].mxu0 %v2910
        %v2912 = vpop.f32.mrb[0].mxu0
        %v2913 = vadd.f32 %v2276, %v2912
        %v2914 = vpop.f32.mrb[0].mxu0
        %2915 = vmatprep.mubr.f32.mxu0 0.0
        %v2916 = vand.u32 %v501, 4294901760
        %v2917 = vsub.f32 %v501, %v2916
        %v2918 = vand.u32 %v2917, 4294901760
        %2919 = vmatmul.mubr.f32.gmra.mrb[0].mxu0 %v2918
        %v2920 = vpop.f32.mrb[0].mxu0
        %v2921 = vadd.f32 %v2283, %v2920
        %v2922 = vpop.f32.mrb[0].mxu0
        %2923 = vmatprep.mubr.f32.mxu0 0.0
        %v2924 = vand.u32 %v504, 4294901760
        %v2925 = vsub.f32 %v504, %v2924
        %v2926 = vand.u32 %v2925, 4294901760
        %2927 = vmatmul.mubr.f32.gmra.mrb[0].mxu0 %v2926
        %v2928 = vpop.f32.mrb[0].mxu0
        %v2929 = vadd.f32 %v2290, %v2928
        %v2930 = vpop.f32.mrb[0].mxu0
        %2931 = vmatprep.mubr.f32.mxu0 0.0
        %v2932 = vand.u32 %v507, 4294901760
        %v2933 = vsub.f32 %v507, %v2932
        %v2934 = vand.u32 %v2933, 4294901760
        %2935 = vmatmul.mubr.f32.gmra.mrb[0].mxu0 %v2934
        %v2936 = vpop.f32.mrb[0].mxu0
        %v2937 = vadd.f32 %v2297, %v2936
        %v2938 = vpop.f32.mrb[0].mxu0
        %2939 = vmatprep.mubr.f32.mxu0 0.0
        %v2940 = vand.u32 %v510, 4294901760
        %v2941 = vsub.f32 %v510, %v2940
        %v2942 = vand.u32 %v2941, 4294901760
        %2943 = vmatmul.mubr.f32.gmra.mrb[0].mxu0 %v2942
        %v2944 = vpop.f32.mrb[0].mxu0
        %v2945 = vadd.f32 %v2304, %v2944
        %v2946 = vpop.f32.mrb[0].mxu0
        %2947 = vmatprep.mubr.f32.mxu0 0.0
        %v2948 = vand.u32 %v513, 4294901760
        %v2949 = vsub.f32 %v513, %v2948
        %v2950 = vand.u32 %v2949, 4294901760
        %2951 = vmatmul.mubr.f32.gmra.mrb[0].mxu0 %v2950
        %v2952 = vpop.f32.mrb[0].mxu0
        %v2953 = vadd.f32 %v2311, %v2952
        %v2954 = vpop.f32.mrb[0].mxu0
        %2955 = vmatprep.mubr.f32.mxu0 0.0
        %v2956 = vand.u32 %v516, 4294901760
        %v2957 = vsub.f32 %v516, %v2956
        %v2958 = vand.u32 %v2957, 4294901760
        %2959 = vmatmul.mubr.f32.gmra.mrb[0].mxu0 %v2958
        %v2960 = vpop.f32.mrb[0].mxu0
        %v2961 = vadd.f32 %v2318, %v2960
        %v2962 = vpop.f32.mrb[0].mxu0
        %2963 = vmatprep.mubr.f32.mxu0 0.0
        %v2964 = vand.u32 %v519, 4294901760
        %v2965 = vsub.f32 %v519, %v2964
        %v2966 = vand.u32 %v2965, 4294901760
        %2967 = vmatmul.mubr.f32.gmra.mrb[0].mxu0 %v2966
        %v2968 = vpop.f32.mrb[0].mxu0
        %v2969 = vadd.f32 %v2325, %v2968
        %v2970 = vpop.f32.mrb[0].mxu0
        %2971 = vmatprep.mubr.f32.mxu0 0.0
        %v2972 = vand.u32 %v522, 4294901760
        %v2973 = vsub.f32 %v522, %v2972
        %v2974 = vand.u32 %v2973, 4294901760
        %2975 = vmatmul.mubr.f32.gmra.mrb[0].mxu0 %v2974
        %v2976 = vpop.f32.mrb[0].mxu0
        %v2977 = vadd.f32 %v2332, %v2976
        %v2978 = vpop.f32.mrb[0].mxu0
        %2979 = vmatprep.mubr.f32.mxu0 0.0
        %v2980 = vand.u32 %v525, 4294901760
        %v2981 = vsub.f32 %v525, %v2980
        %v2982 = vand.u32 %v2981, 4294901760
        %2983 = vmatmul.mubr.f32.gmra.mrb[0].mxu0 %v2982
        %v2984 = vpop.f32.mrb[0].mxu0
        %v2985 = vadd.f32 %v2339, %v2984
        %v2986 = vpop.f32.mrb[0].mxu0
        %2987 = vmatprep.mubr.f32.mxu0 0.0
        %v2988 = vand.u32 %v528, 4294901760
        %v2989 = vsub.f32 %v528, %v2988
        %v2990 = vand.u32 %v2989, 4294901760
        %2991 = vmatmul.mubr.f32.gmra.mrb[0].mxu0 %v2990
        %v2992 = vpop.f32.mrb[0].mxu0
        %v2993 = vadd.f32 %v2346, %v2992
        %v2994 = vpop.f32.mrb[0].mxu0
        %2995 = vmatprep.mubr.f32.mxu0 0.0
        %v2996 = vand.u32 %v531, 4294901760
        %v2997 = vsub.f32 %v531, %v2996
        %v2998 = vand.u32 %v2997, 4294901760
        %2999 = vmatmul.mubr.f32.gmra.mrb[0].mxu0 %v2998
        %v3000 = vpop.f32.mrb[0].mxu0
        %v3001 = vadd.f32 %v2353, %v3000
        %v3002 = vpop.f32.mrb[0].mxu0
        %3003 = vmatprep.mubr.f32.mxu0 0.0
        %v3004 = vand.u32 %v534, 4294901760
        %v3005 = vsub.f32 %v534, %v3004
        %v3006 = vand.u32 %v3005, 4294901760
        %3007 = vmatmul.mubr.f32.gmra.mrb[0].mxu0 %v3006
        %v3008 = vpop.f32.mrb[0].mxu0
        %v3009 = vadd.f32 %v2360, %v3008
        %v3010 = vpop.f32.mrb[0].mxu0
        %3011 = vmatprep.mubr.f32.mxu0 0.0
        %v3012 = vand.u32 %v537, 4294901760
        %v3013 = vsub.f32 %v537, %v3012
        %v3014 = vand.u32 %v3013, 4294901760
        %3015 = vmatmul.mubr.f32.gmra.mrb[0].mxu0 %v3014
        %v3016 = vpop.f32.mrb[0].mxu0
        %v3017 = vadd.f32 %v2367, %v3016
        %v3018 = vpop.f32.mrb[0].mxu0
        %3019 = vmatprep.mubr.f32.mxu0 0.0
        %v3020 = vand.u32 %v540, 4294901760
        %v3021 = vsub.f32 %v540, %v3020
        %v3022 = vand.u32 %v3021, 4294901760
        %3023 = vmatmul.mubr.f32.gmra.mrb[0].mxu0 %v3022
        %v3024 = vpop.f32.mrb[0].mxu0
        %v3025 = vadd.f32 %v2374, %v3024
        %v3026 = vpop.f32.mrb[0].mxu0
        %3027 = vmatprep.mubr.f32.mxu0 0.0
        %v3028 = vand.u32 %v543, 4294901760
        %v3029 = vsub.f32 %v543, %v3028
        %v3030 = vand.u32 %v3029, 4294901760
        %3031 = vmatmul.mubr.f32.gmra.mrb[0].mxu0 %v3030
        %v3032 = vpop.f32.mrb[0].mxu0
        %v3033 = vadd.f32 %v2381, %v3032
        %v3034 = vpop.f32.mrb[0].mxu0
        %3035 = vmatprep.mubr.f32.mxu0 0.0
        %v3036 = vand.u32 %v546, 4294901760
        %v3037 = vsub.f32 %v546, %v3036
        %v3038 = vand.u32 %v3037, 4294901760
        %3039 = vmatmul.mubr.f32.gmra.mrb[0].mxu0 %v3038
        %v3040 = vpop.f32.mrb[0].mxu0
        %v3041 = vadd.f32 %v2388, %v3040
        %v3042 = vpop.f32.mrb[0].mxu0
        %3043 = vmatprep.mubr.f32.mxu0 0.0
        %v3044 = vand.u32 %v549, 4294901760
        %v3045 = vsub.f32 %v549, %v3044
        %v3046 = vand.u32 %v3045, 4294901760
        %3047 = vmatmul.mubr.f32.gmra.mrb[0].mxu0 %v3046
        %v3048 = vpop.f32.mrb[0].mxu0
        %v3049 = vadd.f32 %v2395, %v3048
        %v3050 = vpop.f32.mrb[0].mxu0
        %3051 = vmatprep.mubr.f32.mxu0 0.0
        %v3052 = vand.u32 %v552, 4294901760
        %v3053 = vsub.f32 %v552, %v3052
        %v3054 = vand.u32 %v3053, 4294901760
        %3055 = vmatmul.mubr.f32.gmra.mrb[0].mxu0 %v3054
        %v3056 = vpop.f32.mrb[0].mxu0
        %v3057 = vadd.f32 %v2402, %v3056
        %v3058 = vpop.f32.mrb[0].mxu0
        %3059 = vmatprep.mubr.f32.mxu0 0.0
        %v3060 = vand.u32 %v555, 4294901760
        %v3061 = vsub.f32 %v555, %v3060
        %v3062 = vand.u32 %v3061, 4294901760
        %3063 = vmatmul.mubr.f32.gmra.mrb[0].mxu0 %v3062
        %v3064 = vpop.f32.mrb[0].mxu0
        %v3065 = vadd.f32 %v2409, %v3064
        %v3066 = vpop.f32.mrb[0].mxu0
        %3067 = vmatprep.mubr.f32.mxu0 0.0
        %v3068 = vand.u32 %v558, 4294901760
        %v3069 = vsub.f32 %v558, %v3068
        %v3070 = vand.u32 %v3069, 4294901760
        %3071 = vmatmul.mubr.f32.gmra.mrb[0].mxu0 %v3070
        %v3072 = vpop.f32.mrb[0].mxu0
        %v3073 = vadd.f32 %v2416, %v3072
        %v3074 = vpop.f32.mrb[0].mxu0
        %3075 = vmatprep.mubr.f32.mxu0 0.0
        %v3076 = vand.u32 %v561, 4294901760
        %v3077 = vsub.f32 %v561, %v3076
        %v3078 = vand.u32 %v3077, 4294901760
        %3079 = vmatmul.mubr.f32.gmra.mrb[0].mxu0 %v3078
        %v3080 = vpop.f32.mrb[0].mxu0
        %v3081 = vadd.f32 %v2423, %v3080
        %v3082 = vpop.f32.mrb[0].mxu0
        %3083 = vmatprep.mubr.f32.mxu0 0.0
        %v3084 = vand.u32 %v564, 4294901760
        %v3085 = vsub.f32 %v564, %v3084
        %v3086 = vand.u32 %v3085, 4294901760
        %3087 = vmatmul.mubr.f32.gmra.mrb[0].mxu0 %v3086
        %v3088 = vpop.f32.mrb[0].mxu0
        %v3089 = vadd.f32 %v2430, %v3088
        %v3090 = vpop.f32.mrb[0].mxu0
        %3091 = vmatprep.mubr.f32.mxu0 0.0
        %v3092 = vand.u32 %v567, 4294901760
        %v3093 = vsub.f32 %v567, %v3092
        %v3094 = vand.u32 %v3093, 4294901760
        %3095 = vmatmul.mubr.f32.gmra.mrb[0].mxu0 %v3094
        %v3096 = vpop.f32.mrb[0].mxu0
        %v3097 = vadd.f32 %v2437, %v3096
        %v3098 = vpop.f32.mrb[0].mxu0
        %3099 = vmatprep.mubr.f32.mxu0 0.0
        %v3100 = vand.u32 %v570, 4294901760
        %v3101 = vsub.f32 %v570, %v3100
        %v3102 = vand.u32 %v3101, 4294901760
        %3103 = vmatmul.mubr.f32.gmra.mrb[0].mxu0 %v3102
        %v3104 = vpop.f32.mrb[0].mxu0
        %v3105 = vadd.f32 %v2444, %v3104
        %v3106 = vpop.f32.mrb[0].mxu0
        %3107 = vmatprep.mubr.f32.mxu0 0.0
        %v3108 = vand.u32 %v573, 4294901760
        %v3109 = vsub.f32 %v573, %v3108
        %v3110 = vand.u32 %v3109, 4294901760
        %3111 = vmatmul.mubr.f32.gmra.mrb[0].mxu0 %v3110
        %v3112 = vpop.f32.mrb[0].mxu0
        %v3113 = vadd.f32 %v2451, %v3112
        %v3114 = vpop.f32.mrb[0].mxu0
        %3115 = vmatprep.mubr.f32.mxu0 0.0
        %v3116 = vand.u32 %v576, 4294901760
        %v3117 = vsub.f32 %v576, %v3116
        %v3118 = vand.u32 %v3117, 4294901760
        %3119 = vmatmul.mubr.f32.gmra.mrb[0].mxu0 %v3118
        %v3120 = vpop.f32.mrb[0].mxu0
        %v3121 = vadd.f32 %v2458, %v3120
        %v3122 = vpop.f32.mrb[0].mxu0
        %3123 = vmatprep.mubr.f32.mxu0 0.0
        %v3124 = vand.u32 %v579, 4294901760
        %v3125 = vsub.f32 %v579, %v3124
        %v3126 = vand.u32 %v3125, 4294901760
        %3127 = vmatmul.mubr.f32.gmra.mrb[0].mxu0 %v3126
        %v3128 = vpop.f32.mrb[0].mxu0
        %v3129 = vadd.f32 %v2465, %v3128
        %v3130 = vpop.f32.mrb[0].mxu0
        %3131 = vmatprep.mubr.f32.mxu0 0.0
        %v3132 = vand.u32 %v582, 4294901760
        %v3133 = vsub.f32 %v582, %v3132
        %v3134 = vand.u32 %v3133, 4294901760
        %3135 = vmatmul.mubr.f32.gmra.mrb[0].mxu0 %v3134
        %v3136 = vpop.f32.mrb[0].mxu0
        %v3137 = vadd.f32 %v2472, %v3136
        %v3138 = vpop.f32.mrb[0].mxu0
        %3139 = vmatprep.mubr.f32.mxu0 0.0
        %v3140 = vand.u32 %v585, 4294901760
        %v3141 = vsub.f32 %v585, %v3140
        %v3142 = vand.u32 %v3141, 4294901760
        %3143 = vmatmul.mubr.f32.gmra.mrb[0].mxu0 %v3142
        %v3144 = vpop.f32.mrb[0].mxu0
        %v3145 = vadd.f32 %v2479, %v3144
        %v3146 = vpop.f32.mrb[0].mxu0
        %3147 = vmatprep.mubr.f32.mxu0 0.0
        %v3148 = vand.u32 %v588, 4294901760
        %v3149 = vsub.f32 %v588, %v3148
        %v3150 = vand.u32 %v3149, 4294901760
        %3151 = vmatmul.mubr.f32.gmra.mrb[0].mxu0 %v3150
        %v3152 = vpop.f32.mrb[0].mxu0
        %v3153 = vadd.f32 %v2486, %v3152
        %v3154 = vpop.f32.mrb[0].mxu0
        %3155 = vmatprep.mubr.f32.mxu0 0.0
        %v3156 = vand.u32 %v591, 4294901760
        %v3157 = vsub.f32 %v591, %v3156
        %v3158 = vand.u32 %v3157, 4294901760
        %3159 = vmatmul.mubr.f32.gmra.mrb[0].mxu0 %v3158
        %v3160 = vpop.f32.mrb[0].mxu0
        %v3161 = vadd.f32 %v2493, %v3160
        %v3162 = vpop.f32.mrb[0].mxu0
        %3163 = vmatprep.mubr.f32.mxu0 0.0
        %v3164 = vand.u32 %v594, 4294901760
        %v3165 = vsub.f32 %v594, %v3164
        %v3166 = vand.u32 %v3165, 4294901760
        %3167 = vmatmul.mubr.f32.gmra.mrb[0].mxu0 %v3166
        %v3168 = vpop.f32.mrb[0].mxu0
        %v3169 = vadd.f32 %v2500, %v3168
        %v3170 = vpop.f32.mrb[0].mxu0
        %3171 = vmatprep.mubr.f32.mxu0 0.0
        %v3172 = vand.u32 %v597, 4294901760
        %v3173 = vsub.f32 %v597, %v3172
        %v3174 = vand.u32 %v3173, 4294901760
        %3175 = vmatmul.mubr.f32.gmra.mrb[0].mxu0 %v3174
        %v3176 = vpop.f32.mrb[0].mxu0
        %v3177 = vadd.f32 %v2507, %v3176
        %v3178 = vpop.f32.mrb[0].mxu0
        %3179 = vmatprep.mubr.f32.mxu0 0.0
        %v3180 = vand.u32 %v600, 4294901760
        %v3181 = vsub.f32 %v600, %v3180
        %v3182 = vand.u32 %v3181, 4294901760
        %3183 = vmatmul.mubr.f32.gmra.mrb[0].mxu0 %v3182
        %v3184 = vpop.f32.mrb[0].mxu0
        %v3185 = vadd.f32 %v2514, %v3184
        %v3186 = vpop.f32.mrb[0].mxu0
        %3187 = vmatprep.mubr.f32.mxu0 0.0
        %v3188 = vand.u32 %v603, 4294901760
        %v3189 = vsub.f32 %v603, %v3188
        %v3190 = vand.u32 %v3189, 4294901760
        %3191 = vmatmul.mubr.f32.gmra.mrb[0].mxu0 %v3190
        %v3192 = vpop.f32.mrb[0].mxu0
        %v3193 = vadd.f32 %v2521, %v3192
        %v3194 = vpop.f32.mrb[0].mxu0
        %3195 = vmatprep.mubr.f32.mxu0 0.0
        %v3196 = vand.u32 %v606, 4294901760
        %v3197 = vsub.f32 %v606, %v3196
        %v3198 = vand.u32 %v3197, 4294901760
        %3199 = vmatmul.mubr.f32.gmra.mrb[0].mxu0 %v3198
        %v3200 = vpop.f32.mrb[0].mxu0
        %v3201 = vadd.f32 %v2528, %v3200
        %v3202 = vpop.f32.mrb[0].mxu0
        %3203 = vmatprep.mubr.f32.mxu0 0.0
        %v3204 = vand.u32 %v609, 4294901760
        %v3205 = vsub.f32 %v609, %v3204
        %v3206 = vand.u32 %v3205, 4294901760
        %3207 = vmatmul.mubr.f32.gmra.mrb[0].mxu0 %v3206
        %v3208 = vpop.f32.mrb[0].mxu0
        %v3209 = vadd.f32 %v2535, %v3208
        %v3210 = vpop.f32.mrb[0].mxu0
        %3211 = vmatprep.mubr.f32.mxu0 0.0
        %v3212 = vand.u32 %v612, 4294901760
        %v3213 = vsub.f32 %v612, %v3212
        %v3214 = vand.u32 %v3213, 4294901760
        %3215 = vmatmul.mubr.f32.gmra.mrb[0].mxu0 %v3214
        %v3216 = vpop.f32.mrb[0].mxu0
        %v3217 = vadd.f32 %v2542, %v3216
        %v3218 = vpop.f32.mrb[0].mxu0
        %3219 = vmatprep.mubr.f32.mxu0 0.0
        %v3220 = vand.u32 %v615, 4294901760
        %v3221 = vsub.f32 %v615, %v3220
        %v3222 = vand.u32 %v3221, 4294901760
        %3223 = vmatmul.mubr.f32.gmra.mrb[0].mxu0 %v3222
        %v3224 = vpop.f32.mrb[0].mxu0
        %v3225 = vadd.f32 %v2549, %v3224
        %v3226 = vpop.f32.mrb[0].mxu0
        %3227 = vmatprep.mubr.f32.mxu0 0.0
        %v3228 = vand.u32 %v618, 4294901760
        %v3229 = vsub.f32 %v618, %v3228
        %v3230 = vand.u32 %v3229, 4294901760
        %3231 = vmatmul.mubr.f32.gmra.mrb[0].mxu0 %v3230
        %v3232 = vpop.f32.mrb[0].mxu0
        %v3233 = vadd.f32 %v2556, %v3232
        %v3234 = vpop.f32.mrb[0].mxu0
        %3235 = vmatprep.mubr.f32.mxu0 0.0
        %v3236 = vand.u32 %v621, 4294901760
        %v3237 = vsub.f32 %v621, %v3236
        %v3238 = vand.u32 %v3237, 4294901760
        %3239 = vmatmul.mubr.f32.gmra.mrb[0].mxu0 %v3238
        %v3240 = vpop.f32.mrb[0].mxu0
        %v3241 = vadd.f32 %v2563, %v3240
        %v3242 = vpop.f32.mrb[0].mxu0
        %3243 = vmatprep.mubr.f32.mxu0 0.0
        %v3244 = vand.u32 %v624, 4294901760
        %v3245 = vsub.f32 %v624, %v3244
        %v3246 = vand.u32 %v3245, 4294901760
        %3247 = vmatmul.mubr.f32.gmra.mrb[0].mxu0 %v3246
        %v3248 = vpop.f32.mrb[0].mxu0
        %v3249 = vadd.f32 %v2570, %v3248
        %v3250 = vpop.f32.mrb[0].mxu0
        %3251 = vmatprep.mubr.f32.mxu0 0.0
        %v3252 = vand.u32 %v627, 4294901760
        %v3253 = vsub.f32 %v627, %v3252
        %v3254 = vand.u32 %v3253, 4294901760
        %3255 = vmatmul.mubr.f32.gmra.mrb[0].mxu0 %v3254
        %v3256 = vpop.f32.mrb[0].mxu0
        %v3257 = vadd.f32 %v2577, %v3256
        %v3258 = vpop.f32.mrb[0].mxu0
        %3259 = vmatprep.mubr.f32.mxu0 0.0
        %v3260 = vand.u32 %v630, 4294901760
        %v3261 = vsub.f32 %v630, %v3260
        %v3262 = vand.u32 %v3261, 4294901760
        %3263 = vmatmul.mubr.f32.gmra.mrb[0].mxu0 %v3262
        %v3264 = vpop.f32.mrb[0].mxu0
        %v3265 = vadd.f32 %v2584, %v3264
        %v3266 = vpop.f32.mrb[0].mxu0
        %3267 = vmatprep.mubr.f32.mxu0 0.0
        %v3268 = vand.u32 %v633, 4294901760
        %v3269 = vsub.f32 %v633, %v3268
        %v3270 = vand.u32 %v3269, 4294901760
        %3271 = vmatmul.mubr.f32.gmra.mrb[0].mxu0 %v3270
        %v3272 = vpop.f32.mrb[0].mxu0
        %v3273 = vadd.f32 %v2591, %v3272
        %v3274 = vpop.f32.mrb[0].mxu0
        %3275 = vmatprep.mubr.f32.mxu0 0.0
        %v3276 = vand.u32 %v636, 4294901760
        %v3277 = vsub.f32 %v636, %v3276
        %v3278 = vand.u32 %v3277, 4294901760
        %3279 = vmatmul.mubr.f32.gmra.mrb[0].mxu0 %v3278
        %v3280 = vpop.f32.mrb[0].mxu0
        %v3281 = vadd.f32 %v2598, %v3280
        %v3282 = vpop.f32.mrb[0].mxu0
        %3283 = vmatprep.mubr.f32.mxu0 0.0
        %v3284 = vand.u32 %v639, 4294901760
        %v3285 = vsub.f32 %v639, %v3284
        %v3286 = vand.u32 %v3285, 4294901760
        %3287 = vmatmul.mubr.f32.gmra.mrb[0].mxu0 %v3286
        %v3288 = vpop.f32.mrb[0].mxu0
        %v3289 = vadd.f32 %v2605, %v3288
        %v3290 = vpop.f32.mrb[0].mxu0
        %3291 = vmatprep.mubr.f32.mxu0 0.0
        %v3292 = vand.u32 %v642, 4294901760
        %v3293 = vsub.f32 %v642, %v3292
        %v3294 = vand.u32 %v3293, 4294901760
        %3295 = vmatmul.mubr.f32.gmra.mrb[0].mxu0 %v3294
        %v3296 = vpop.f32.mrb[0].mxu0
        %v3297 = vadd.f32 %v2612, %v3296
        %v3298 = vpop.f32.mrb[0].mxu0
        %3299 = vmatprep.mubr.f32.mxu0 0.0
        %v3300 = vand.u32 %v645, 4294901760
        %v3301 = vsub.f32 %v645, %v3300
        %v3302 = vand.u32 %v3301, 4294901760
        %3303 = vmatmul.mubr.f32.gmra.mrb[0].mxu0 %v3302
        %v3304 = vpop.f32.mrb[0].mxu0
        %v3305 = vadd.f32 %v2619, %v3304
        %v3306 = vpop.f32.mrb[0].mxu0
        %3307 = vmatprep.mubr.f32.mxu0 0.0
        %v3308 = vand.u32 %v648, 4294901760
        %v3309 = vsub.f32 %v648, %v3308
        %v3310 = vand.u32 %v3309, 4294901760
        %3311 = vmatmul.mubr.f32.gmra.mrb[0].mxu0 %v3310
        %v3312 = vpop.f32.mrb[0].mxu0
        %v3313 = vadd.f32 %v2626, %v3312
        %v3314 = vpop.f32.mrb[0].mxu0
        %3315 = vmatprep.mubr.f32.mxu0 0.0
        %v3316 = vand.u32 %v651, 4294901760
        %v3317 = vsub.f32 %v651, %v3316
        %v3318 = vand.u32 %v3317, 4294901760
        %3319 = vmatmul.mubr.f32.gmra.mrb[0].mxu0 %v3318
        %v3320 = vpop.f32.mrb[0].mxu0
        %v3321 = vadd.f32 %v2633, %v3320
        %v3322 = vpop.f32.mrb[0].mxu0
        %3323 = vmatprep.mubr.f32.mxu0 0.0
        %v3324 = vand.u32 %v654, 4294901760
        %v3325 = vsub.f32 %v654, %v3324
        %v3326 = vand.u32 %v3325, 4294901760
        %3327 = vmatmul.mubr.f32.gmra.mrb[0].mxu0 %v3326
        %v3328 = vpop.f32.mrb[0].mxu0
        %v3329 = vadd.f32 %v2640, %v3328
        %v3330 = vpop.f32.mrb[0].mxu0
        %3331 = vmatprep.mubr.f32.mxu0 0.0
        %v3332 = vand.u32 %v657, 4294901760
        %v3333 = vsub.f32 %v657, %v3332
        %v3334 = vand.u32 %v3333, 4294901760
        %3335 = vmatmul.mubr.f32.gmra.mrb[0].mxu0 %v3334
        %v3336 = vpop.f32.mrb[0].mxu0
        %v3337 = vadd.f32 %v2647, %v3336
        %v3338 = vpop.f32.mrb[0].mxu0
        %3339 = vmatprep.mubr.f32.mxu0 0.0
        %v3340 = vand.u32 %v660, 4294901760
        %v3341 = vsub.f32 %v660, %v3340
        %v3342 = vand.u32 %v3341, 4294901760
        %3343 = vmatmul.mubr.f32.gmra.mrb[0].mxu0 %v3342
        %v3344 = vpop.f32.mrb[0].mxu0
        %v3345 = vadd.f32 %v2654, %v3344
        %v3346 = vpop.f32.mrb[0].mxu0
        %3347 = vmatprep.mubr.f32.mxu0 0.0
        %v3348 = vand.u32 %v663, 4294901760
        %v3349 = vsub.f32 %v663, %v3348
        %v3350 = vand.u32 %v3349, 4294901760
        %3351 = vmatmul.mubr.f32.gmra.mrb[0].mxu0 %v3350
        %v3352 = vpop.f32.mrb[0].mxu0
        %v3353 = vadd.f32 %v2661, %v3352
        %v3354 = vpop.f32.mrb[0].mxu0
        %3355 = vmatprep.mubr.f32.mxu0 0.0
        %v3356 = vand.u32 %v666, 4294901760
        %v3357 = vsub.f32 %v666, %v3356
        %v3358 = vand.u32 %v3357, 4294901760
        %3359 = vmatmul.mubr.f32.gmra.mrb[0].mxu0 %v3358
        %v3360 = vpop.f32.mrb[0].mxu0
        %v3361 = vadd.f32 %v2668, %v3360
        %v3362 = vpop.f32.mrb[0].mxu0
        %3363 = vmatprep.mubr.f32.mxu0 0.0
        %v3364 = vand.u32 %v669, 4294901760
        %v3365 = vsub.f32 %v669, %v3364
        %v3366 = vand.u32 %v3365, 4294901760
        %3367 = vmatmul.mubr.f32.gmra.mrb[0].mxu0 %v3366
        %v3368 = vpop.f32.mrb[0].mxu0
        %v3369 = vadd.f32 %v2675, %v3368
        %v3370 = vpop.f32.mrb[0].mxu0
        %3371 = vmatprep.mubr.f32.mxu0 0.0
        %v3372 = vand.u32 %v672, 4294901760
        %v3373 = vsub.f32 %v672, %v3372
        %v3374 = vand.u32 %v3373, 4294901760
        %3375 = vmatmul.mubr.f32.gmra.mrb[0].mxu0 %v3374
        %v3376 = vpop.f32.mrb[0].mxu0
        %v3377 = vadd.f32 %v2682, %v3376
        %v3378 = vpop.f32.mrb[0].mxu0
        %3379 = vmatprep.mubr.f32.mxu0 0.0
        %v3380 = vand.u32 %v675, 4294901760
        %v3381 = vsub.f32 %v675, %v3380
        %v3382 = vand.u32 %v3381, 4294901760
        %3383 = vmatmul.mubr.f32.gmra.mrb[0].mxu0 %v3382
        %v3384 = vpop.f32.mrb[0].mxu0
        %v3385 = vadd.f32 %v2689, %v3384
        %v3386 = vpop.f32.mrb[0].mxu0
        %3387 = vmatprep.mubr.f32.mxu0 0.0
        %v3388 = vand.u32 %v678, 4294901760
        %v3389 = vsub.f32 %v678, %v3388
        %v3390 = vand.u32 %v3389, 4294901760
        %3391 = vmatmul.mubr.f32.gmra.mrb[0].mxu0 %v3390
        %v3392 = vpop.f32.mrb[0].mxu0
        %v3393 = vadd.f32 %v2696, %v3392
        %v3394 = vpop.f32.mrb[0].mxu0
        %3395 = vmatprep.mubr.f32.mxu0 0.0
        %v3396 = vand.u32 %v681, 4294901760
        %v3397 = vsub.f32 %v681, %v3396
        %v3398 = vand.u32 %v3397, 4294901760
        %3399 = vmatmul.mubr.f32.gmra.mrb[0].mxu0 %v3398
        %v3400 = vpop.f32.mrb[0].mxu0
        %v3401 = vadd.f32 %v2703, %v3400
        %v3402 = vpop.f32.mrb[0].mxu0
        %3403 = vmatprep.mubr.f32.mxu0 0.0
        %v3404 = vand.u32 %v684, 4294901760
        %v3405 = vsub.f32 %v684, %v3404
        %v3406 = vand.u32 %v3405, 4294901760
        %3407 = vmatmul.mubr.f32.gmra.mrb[0].mxu0 %v3406
        %v3408 = vpop.f32.mrb[0].mxu0
        %v3409 = vadd.f32 %v2710, %v3408
        %v3410 = vpop.f32.mrb[0].mxu0
        %3411 = vmatprep.mubr.f32.mxu0 0.0
        %v3412 = vand.u32 %v687, 4294901760
        %v3413 = vsub.f32 %v687, %v3412
        %v3414 = vand.u32 %v3413, 4294901760
        %3415 = vmatmul.mubr.f32.gmra.mrb[0].mxu0 %v3414
        %v3416 = vpop.f32.mrb[0].mxu0
        %v3417 = vadd.f32 %v2717, %v3416
        %v3418 = vpop.f32.mrb[0].mxu0
        %3419 = vmatprep.mubr.f32.mxu0 0.0
        %v3420 = vand.u32 %v690, 4294901760
        %v3421 = vsub.f32 %v690, %v3420
        %v3422 = vand.u32 %v3421, 4294901760
        %3423 = vmatmul.mubr.f32.gmra.mrb[0].mxu0 %v3422
        %v3424 = vpop.f32.mrb[0].mxu0
        %v3425 = vadd.f32 %v2724, %v3424
        %v3426 = vpop.f32.mrb[0].mxu0
        %3427 = vmatprep.mubr.f32.mxu0 0.0
        %v3428 = vand.u32 %v693, 4294901760
        %v3429 = vsub.f32 %v693, %v3428
        %v3430 = vand.u32 %v3429, 4294901760
        %3431 = vmatmul.mubr.f32.gmra.mrb[0].mxu0 %v3430
        %v3432 = vpop.f32.mrb[0].mxu0
        %v3433 = vadd.f32 %v2731, %v3432
        %v3434 = vpop.f32.mrb[0].mxu0
        %3435 = vmatprep.mubr.f32.mxu0 0.0
        %v3436 = vand.u32 %v696, 4294901760
        %v3437 = vsub.f32 %v696, %v3436
        %v3438 = vand.u32 %v3437, 4294901760
        %3439 = vmatmul.mubr.f32.gmra.mrb[0].mxu0 %v3438
        %v3440 = vpop.f32.mrb[0].mxu0
        %v3441 = vadd.f32 %v2738, %v3440
        %v3442 = vpop.f32.mrb[0].mxu0
        %3443 = vmatprep.mubr.f32.mxu0 0.0
        %v3444 = vand.u32 %v699, 4294901760
        %v3445 = vsub.f32 %v699, %v3444
        %v3446 = vand.u32 %v3445, 4294901760
        %3447 = vmatmul.mubr.f32.gmra.mrb[0].mxu0 %v3446
        %v3448 = vpop.f32.mrb[0].mxu0
        %v3449 = vadd.f32 %v2745, %v3448
        %v3450 = vpop.f32.mrb[0].mxu0
        %3451 = vmatprep.mubr.f32.mxu0 0.0
        %v3452 = vand.u32 %v702, 4294901760
        %v3453 = vsub.f32 %v702, %v3452
        %v3454 = vand.u32 %v3453, 4294901760
        %3455 = vmatmul.mubr.f32.gmra.mrb[0].mxu0 %v3454
        %v3456 = vpop.f32.mrb[0].mxu0
        %v3457 = vadd.f32 %v2752, %v3456
        %v3458 = vpop.f32.mrb[0].mxu0
        %3459 = vmatprep.mubr.f32.mxu0 0.0
        %v3460 = vand.u32 %v705, 4294901760
        %v3461 = vsub.f32 %v705, %v3460
        %v3462 = vand.u32 %v3461, 4294901760
        %3463 = vmatmul.mubr.f32.gmra.mrb[0].mxu0 %v3462
        %v3464 = vpop.f32.mrb[0].mxu0
        %v3465 = vadd.f32 %v2759, %v3464
        %v3466 = vpop.f32.mrb[0].mxu0
        %3467 = vmatprep.mubr.f32.mxu0 0.0
        %v3468 = vand.u32 %v708, 4294901760
        %v3469 = vsub.f32 %v708, %v3468
        %v3470 = vand.u32 %v3469, 4294901760
        %3471 = vmatmul.mubr.f32.gmra.mrb[0].mxu0 %v3470
        %v3472 = vpop.f32.mrb[0].mxu0
        %v3473 = vadd.f32 %v2766, %v3472
        %v3474 = vpop.f32.mrb[0].mxu0
        %3475 = vmatprep.mubr.f32.mxu0 0.0
        %v3476 = vand.u32 %v711, 4294901760
        %v3477 = vsub.f32 %v711, %v3476
        %v3478 = vand.u32 %v3477, 4294901760
        %3479 = vmatmul.mubr.f32.gmra.mrb[0].mxu0 %v3478
        %v3480 = vpop.f32.mrb[0].mxu0
        %v3481 = vadd.f32 %v2773, %v3480
        %v3482 = vpop.f32.mrb[0].mxu0
        %3483 = vmatprep.mubr.f32.mxu0 0.0
        %v3484 = vand.u32 %v714, 4294901760
        %v3485 = vsub.f32 %v714, %v3484
        %v3486 = vand.u32 %v3485, 4294901760
        %3487 = vmatmul.mubr.f32.gmra.mrb[0].mxu0 %v3486
        %v3488 = vpop.f32.mrb[0].mxu0
        %v3489 = vadd.f32 %v2780, %v3488
        %v3490 = vpop.f32.mrb[0].mxu0
        %3491 = vdwg.mxu0
        %3492 = vmatprep.subr.mxu0 0.0
        %v3493 = vand.u32 %v354, 4294901760
        %v3494 = vsub.f32 %v354, %v3493
        %v3495 = vand.u32 %v3494, 4294901760
        %3496 = vmatpush1.msra.mxu0 %v3495
        %3497 = vmatprep.subr.mxu0 0.0
        %v3498 = vand.u32 %v355, 4294901760
        %v3499 = vsub.f32 %v355, %v3498
        %v3500 = vand.u32 %v3499, 4294901760
        %3501 = vmatpush1.msra.mxu0 %v3500
        %3502 = vmatprep.subr.mxu0 0.0
        %v3503 = vand.u32 %v356, 4294901760
        %v3504 = vsub.f32 %v356, %v3503
        %v3505 = vand.u32 %v3504, 4294901760
        %3506 = vmatpush1.msra.mxu0 %v3505
        %3507 = vmatprep.subr.mxu0 0.0
        %v3508 = vand.u32 %v357, 4294901760
        %v3509 = vsub.f32 %v357, %v3508
        %v3510 = vand.u32 %v3509, 4294901760
        %3511 = vmatpush1.msra.mxu0 %v3510
        %3512 = vmatprep.subr.mxu0 0.0
        %3513 = vmatpush1.msra.mxu0 0.0
        %3514 = vmatprep.subr.mxu0 0.0
        %3515 = vmatpush1.msra.mxu0 0.0
        %3516 = vmatprep.subr.mxu0 0.0
        %3517 = vmatpush1.msra.mxu0 0.0
        %3518 = vmatprep.subr.mxu0 0.0
        %3519 = vmatpush1.msra.mxu0 0.0
        %3520 = vmatprep.subr.mxu0 0.0
        %3521 = vmatpush1.msra.mxu0 0.0
        %3522 = vmatprep.subr.mxu0 0.0
        %3523 = vmatpush1.msra.mxu0 0.0
        %3524 = vmatprep.subr.mxu0 0.0
        %3525 = vmatpush1.msra.mxu0 0.0
        %3526 = vmatprep.subr.mxu0 0.0
        %3527 = vmatpush1.msra.mxu0 0.0
        %3528 = vmatprep.subr.mxu0 0.0
        %3529 = vmatpush1.msra.mxu0 0.0
        %3530 = vmatprep.subr.mxu0 0.0
        %3531 = vmatpush1.msra.mxu0 0.0
        %3532 = vmatprep.subr.mxu0 0.0
        %3533 = vmatpush1.msra.mxu0 0.0
        %3534 = vmatprep.subr.mxu0 0.0
        %3535 = vmatpush1.msra.mxu0 0.0
        %3536 = vmatprep.subr.mxu0 0.0
        %3537 = vmatpush1.msra.mxu0 0.0
        %3538 = vmatprep.subr.mxu0 0.0
        %3539 = vmatpush1.msra.mxu0 0.0
        %3540 = vmatprep.subr.mxu0 0.0
        %3541 = vmatpush1.msra.mxu0 0.0
        %3542 = vmatprep.subr.mxu0 0.0
        %3543 = vmatpush1.msra.mxu0 0.0
        %3544 = vmatprep.subr.mxu0 0.0
        %3545 = vmatpush1.msra.mxu0 0.0
        %3546 = vmatprep.subr.mxu0 0.0
        %3547 = vmatpush1.msra.mxu0 0.0
        %3548 = vmatprep.subr.mxu0 0.0
        %3549 = vmatpush1.msra.mxu0 0.0
        %3550 = vmatprep.subr.mxu0 0.0
        %3551 = vmatpush1.msra.mxu0 0.0
        %3552 = vmatprep.subr.mxu0 0.0
        %3553 = vmatpush1.msra.mxu0 0.0
        %3554 = vmatprep.subr.mxu0 0.0
        %3555 = vmatpush1.msra.mxu0 0.0
        %3556 = vmatprep.subr.mxu0 0.0
        %3557 = vmatpush1.msra.mxu0 0.0
        %3558 = vmatprep.subr.mxu0 0.0
        %3559 = vmatpush1.msra.mxu0 0.0
        %3560 = vmatprep.subr.mxu0 0.0
        %3561 = vmatpush1.msra.mxu0 0.0
        %3562 = vmatprep.subr.mxu0 0.0
        %3563 = vmatpush1.msra.mxu0 0.0
        %3564 = vmatprep.subr.mxu0 0.0
        %3565 = vmatpush1.msra.mxu0 0.0
        %3566 = vmatprep.subr.mxu0 0.0
        %3567 = vmatpush1.msra.mxu0 0.0
        %3568 = vmatprep.mubr.f32.mxu0 0.0
        %v3569 = vand.u32 %v477, 4294901760
        %3570 = vmatmul.mubr.f32.gmra.mrb[0].mxu0 %v3569
        %v3571 = vpop.f32.mrb[0].mxu0
        %v3572 = vadd.f32 %v2857, %v3571
        %v3573 = vpop.f32.mrb[0].mxu0
        %3574 = vmatprep.mubr.f32.mxu0 0.0
        %v3575 = vand.u32 %v480, 4294901760
        %3576 = vmatmul.mubr.f32.gmra.mrb[0].mxu0 %v3575
        %v3577 = vpop.f32.mrb[0].mxu0
        %v3578 = vadd.f32 %v2865, %v3577
        %v3579 = vpop.f32.mrb[0].mxu0
        %3580 = vmatprep.mubr.f32.mxu0 0.0
        %v3581 = vand.u32 %v483, 4294901760
        %3582 = vmatmul.mubr.f32.gmra.mrb[0].mxu0 %v3581
        %v3583 = vpop.f32.mrb[0].mxu0
        %v3584 = vadd.f32 %v2873, %v3583
        %v3585 = vpop.f32.mrb[0].mxu0
        %3586 = vmatprep.mubr.f32.mxu0 0.0
        %v3587 = vand.u32 %v486, 4294901760
        %3588 = vmatmul.mubr.f32.gmra.mrb[0].mxu0 %v3587
        %v3589 = vpop.f32.mrb[0].mxu0
        %v3590 = vadd.f32 %v2881, %v3589
        %v3591 = vpop.f32.mrb[0].mxu0
        %3592 = vmatprep.mubr.f32.mxu0 0.0
        %v3593 = vand.u32 %v489, 4294901760
        %3594 = vmatmul.mubr.f32.gmra.mrb[0].mxu0 %v3593
        %v3595 = vpop.f32.mrb[0].mxu0
        %v3596 = vadd.f32 %v2889, %v3595
        %v3597 = vpop.f32.mrb[0].mxu0
        %3598 = vmatprep.mubr.f32.mxu0 0.0
        %v3599 = vand.u32 %v492, 4294901760
        %3600 = vmatmul.mubr.f32.gmra.mrb[0].mxu0 %v3599
        %v3601 = vpop.f32.mrb[0].mxu0
        %v3602 = vadd.f32 %v2897, %v3601
        %v3603 = vpop.f32.mrb[0].mxu0
        %3604 = vmatprep.mubr.f32.mxu0 0.0
        %v3605 = vand.u32 %v495, 4294901760
        %3606 = vmatmul.mubr.f32.gmra.mrb[0].mxu0 %v3605
        %v3607 = vpop.f32.mrb[0].mxu0
        %v3608 = vadd.f32 %v2905, %v3607
        %v3609 = vpop.f32.mrb[0].mxu0
        %3610 = vmatprep.mubr.f32.mxu0 0.0
        %v3611 = vand.u32 %v498, 4294901760
        %3612 = vmatmul.mubr.f32.gmra.mrb[0].mxu0 %v3611
        %v3613 = vpop.f32.mrb[0].mxu0
        %v3614 = vadd.f32 %v2913, %v3613
        %v3615 = vpop.f32.mrb[0].mxu0
        %3616 = vmatprep.mubr.f32.mxu0 0.0
        %v3617 = vand.u32 %v501, 4294901760
        %3618 = vmatmul.mubr.f32.gmra.mrb[0].mxu0 %v3617
        %v3619 = vpop.f32.mrb[0].mxu0
        %v3620 = vadd.f32 %v2921, %v3619
        %v3621 = vpop.f32.mrb[0].mxu0
        %3622 = vmatprep.mubr.f32.mxu0 0.0
        %v3623 = vand.u32 %v504, 4294901760
        %3624 = vmatmul.mubr.f32.gmra.mrb[0].mxu0 %v3623
        %v3625 = vpop.f32.mrb[0].mxu0
        %v3626 = vadd.f32 %v2929, %v3625
        %v3627 = vpop.f32.mrb[0].mxu0
        %3628 = vmatprep.mubr.f32.mxu0 0.0
        %v3629 = vand.u32 %v507, 4294901760
        %3630 = vmatmul.mubr.f32.gmra.mrb[0].mxu0 %v3629
        %v3631 = vpop.f32.mrb[0].mxu0
        %v3632 = vadd.f32 %v2937, %v3631
        %v3633 = vpop.f32.mrb[0].mxu0
        %3634 = vmatprep.mubr.f32.mxu0 0.0
        %v3635 = vand.u32 %v510, 4294901760
        %3636 = vmatmul.mubr.f32.gmra.mrb[0].mxu0 %v3635
        %v3637 = vpop.f32.mrb[0].mxu0
        %v3638 = vadd.f32 %v2945, %v3637
        %v3639 = vpop.f32.mrb[0].mxu0
        %3640 = vmatprep.mubr.f32.mxu0 0.0
        %v3641 = vand.u32 %v513, 4294901760
        %3642 = vmatmul.mubr.f32.gmra.mrb[0].mxu0 %v3641
        %v3643 = vpop.f32.mrb[0].mxu0
        %v3644 = vadd.f32 %v2953, %v3643
        %v3645 = vpop.f32.mrb[0].mxu0
        %3646 = vmatprep.mubr.f32.mxu0 0.0
        %v3647 = vand.u32 %v516, 4294901760
        %3648 = vmatmul.mubr.f32.gmra.mrb[0].mxu0 %v3647
        %v3649 = vpop.f32.mrb[0].mxu0
        %v3650 = vadd.f32 %v2961, %v3649
        %v3651 = vpop.f32.mrb[0].mxu0
        %3652 = vmatprep.mubr.f32.mxu0 0.0
        %v3653 = vand.u32 %v519, 4294901760
        %3654 = vmatmul.mubr.f32.gmra.mrb[0].mxu0 %v3653
        %v3655 = vpop.f32.mrb[0].mxu0
        %v3656 = vadd.f32 %v2969, %v3655
        %v3657 = vpop.f32.mrb[0].mxu0
        %3658 = vmatprep.mubr.f32.mxu0 0.0
        %v3659 = vand.u32 %v522, 4294901760
        %3660 = vmatmul.mubr.f32.gmra.mrb[0].mxu0 %v3659
        %v3661 = vpop.f32.mrb[0].mxu0
        %v3662 = vadd.f32 %v2977, %v3661
        %v3663 = vpop.f32.mrb[0].mxu0
        %3664 = vmatprep.mubr.f32.mxu0 0.0
        %v3665 = vand.u32 %v525, 4294901760
        %3666 = vmatmul.mubr.f32.gmra.mrb[0].mxu0 %v3665
        %v3667 = vpop.f32.mrb[0].mxu0
        %v3668 = vadd.f32 %v2985, %v3667
        %v3669 = vpop.f32.mrb[0].mxu0
        %3670 = vmatprep.mubr.f32.mxu0 0.0
        %v3671 = vand.u32 %v528, 4294901760
        %3672 = vmatmul.mubr.f32.gmra.mrb[0].mxu0 %v3671
        %v3673 = vpop.f32.mrb[0].mxu0
        %v3674 = vadd.f32 %v2993, %v3673
        %v3675 = vpop.f32.mrb[0].mxu0
        %3676 = vmatprep.mubr.f32.mxu0 0.0
        %v3677 = vand.u32 %v531, 4294901760
        %3678 = vmatmul.mubr.f32.gmra.mrb[0].mxu0 %v3677
        %v3679 = vpop.f32.mrb[0].mxu0
        %v3680 = vadd.f32 %v3001, %v3679
        %v3681 = vpop.f32.mrb[0].mxu0
        %3682 = vmatprep.mubr.f32.mxu0 0.0
        %v3683 = vand.u32 %v534, 4294901760
        %3684 = vmatmul.mubr.f32.gmra.mrb[0].mxu0 %v3683
        %v3685 = vpop.f32.mrb[0].mxu0
        %v3686 = vadd.f32 %v3009, %v3685
        %v3687 = vpop.f32.mrb[0].mxu0
        %3688 = vmatprep.mubr.f32.mxu0 0.0
        %v3689 = vand.u32 %v537, 4294901760
        %3690 = vmatmul.mubr.f32.gmra.mrb[0].mxu0 %v3689
        %v3691 = vpop.f32.mrb[0].mxu0
        %v3692 = vadd.f32 %v3017, %v3691
        %v3693 = vpop.f32.mrb[0].mxu0
        %3694 = vmatprep.mubr.f32.mxu0 0.0
        %v3695 = vand.u32 %v540, 4294901760
        %3696 = vmatmul.mubr.f32.gmra.mrb[0].mxu0 %v3695
        %v3697 = vpop.f32.mrb[0].mxu0
        %v3698 = vadd.f32 %v3025, %v3697
        %v3699 = vpop.f32.mrb[0].mxu0
        %3700 = vmatprep.mubr.f32.mxu0 0.0
        %v3701 = vand.u32 %v543, 4294901760
        %3702 = vmatmul.mubr.f32.gmra.mrb[0].mxu0 %v3701
        %v3703 = vpop.f32.mrb[0].mxu0
        %v3704 = vadd.f32 %v3033, %v3703
        %v3705 = vpop.f32.mrb[0].mxu0
        %3706 = vmatprep.mubr.f32.mxu0 0.0
        %v3707 = vand.u32 %v546, 4294901760
        %3708 = vmatmul.mubr.f32.gmra.mrb[0].mxu0 %v3707
        %v3709 = vpop.f32.mrb[0].mxu0
        %v3710 = vadd.f32 %v3041, %v3709
        %v3711 = vpop.f32.mrb[0].mxu0
        %3712 = vmatprep.mubr.f32.mxu0 0.0
        %v3713 = vand.u32 %v549, 4294901760
        %3714 = vmatmul.mubr.f32.gmra.mrb[0].mxu0 %v3713
        %v3715 = vpop.f32.mrb[0].mxu0
        %v3716 = vadd.f32 %v3049, %v3715
        %v3717 = vpop.f32.mrb[0].mxu0
        %3718 = vmatprep.mubr.f32.mxu0 0.0
        %v3719 = vand.u32 %v552, 4294901760
        %3720 = vmatmul.mubr.f32.gmra.mrb[0].mxu0 %v3719
        %v3721 = vpop.f32.mrb[0].mxu0
        %v3722 = vadd.f32 %v3057, %v3721
        %v3723 = vpop.f32.mrb[0].mxu0
        %3724 = vmatprep.mubr.f32.mxu0 0.0
        %v3725 = vand.u32 %v555, 4294901760
        %3726 = vmatmul.mubr.f32.gmra.mrb[0].mxu0 %v3725
        %v3727 = vpop.f32.mrb[0].mxu0
        %v3728 = vadd.f32 %v3065, %v3727
        %v3729 = vpop.f32.mrb[0].mxu0
        %3730 = vmatprep.mubr.f32.mxu0 0.0
        %v3731 = vand.u32 %v558, 4294901760
        %3732 = vmatmul.mubr.f32.gmra.mrb[0].mxu0 %v3731
        %v3733 = vpop.f32.mrb[0].mxu0
        %v3734 = vadd.f32 %v3073, %v3733
        %v3735 = vpop.f32.mrb[0].mxu0
        %3736 = vmatprep.mubr.f32.mxu0 0.0
        %v3737 = vand.u32 %v561, 4294901760
        %3738 = vmatmul.mubr.f32.gmra.mrb[0].mxu0 %v3737
        %v3739 = vpop.f32.mrb[0].mxu0
        %v3740 = vadd.f32 %v3081, %v3739
        %v3741 = vpop.f32.mrb[0].mxu0
        %3742 = vmatprep.mubr.f32.mxu0 0.0
        %v3743 = vand.u32 %v564, 4294901760
        %3744 = vmatmul.mubr.f32.gmra.mrb[0].mxu0 %v3743
        %v3745 = vpop.f32.mrb[0].mxu0
        %v3746 = vadd.f32 %v3089, %v3745
        %v3747 = vpop.f32.mrb[0].mxu0
        %3748 = vmatprep.mubr.f32.mxu0 0.0
        %v3749 = vand.u32 %v567, 4294901760
        %3750 = vmatmul.mubr.f32.gmra.mrb[0].mxu0 %v3749
        %v3751 = vpop.f32.mrb[0].mxu0
        %v3752 = vadd.f32 %v3097, %v3751
        %v3753 = vpop.f32.mrb[0].mxu0
        %3754 = vmatprep.mubr.f32.mxu0 0.0
        %v3755 = vand.u32 %v570, 4294901760
        %3756 = vmatmul.mubr.f32.gmra.mrb[0].mxu0 %v3755
        %v3757 = vpop.f32.mrb[0].mxu0
        %v3758 = vadd.f32 %v3105, %v3757
        %v3759 = vpop.f32.mrb[0].mxu0
        %3760 = vmatprep.mubr.f32.mxu0 0.0
        %v3761 = vand.u32 %v573, 4294901760
        %3762 = vmatmul.mubr.f32.gmra.mrb[0].mxu0 %v3761
        %v3763 = vpop.f32.mrb[0].mxu0
        %v3764 = vadd.f32 %v3113, %v3763
        %v3765 = vpop.f32.mrb[0].mxu0
        %3766 = vmatprep.mubr.f32.mxu0 0.0
        %v3767 = vand.u32 %v576, 4294901760
        %3768 = vmatmul.mubr.f32.gmra.mrb[0].mxu0 %v3767
        %v3769 = vpop.f32.mrb[0].mxu0
        %v3770 = vadd.f32 %v3121, %v3769
        %v3771 = vpop.f32.mrb[0].mxu0
        %3772 = vmatprep.mubr.f32.mxu0 0.0
        %v3773 = vand.u32 %v579, 4294901760
        %3774 = vmatmul.mubr.f32.gmra.mrb[0].mxu0 %v3773
        %v3775 = vpop.f32.mrb[0].mxu0
        %v3776 = vadd.f32 %v3129, %v3775
        %v3777 = vpop.f32.mrb[0].mxu0
        %3778 = vmatprep.mubr.f32.mxu0 0.0
        %v3779 = vand.u32 %v582, 4294901760
        %3780 = vmatmul.mubr.f32.gmra.mrb[0].mxu0 %v3779
        %v3781 = vpop.f32.mrb[0].mxu0
        %v3782 = vadd.f32 %v3137, %v3781
        %v3783 = vpop.f32.mrb[0].mxu0
        %3784 = vmatprep.mubr.f32.mxu0 0.0
        %v3785 = vand.u32 %v585, 4294901760
        %3786 = vmatmul.mubr.f32.gmra.mrb[0].mxu0 %v3785
        %v3787 = vpop.f32.mrb[0].mxu0
        %v3788 = vadd.f32 %v3145, %v3787
        %v3789 = vpop.f32.mrb[0].mxu0
        %3790 = vmatprep.mubr.f32.mxu0 0.0
        %v3791 = vand.u32 %v588, 4294901760
        %3792 = vmatmul.mubr.f32.gmra.mrb[0].mxu0 %v3791
        %v3793 = vpop.f32.mrb[0].mxu0
        %v3794 = vadd.f32 %v3153, %v3793
        %v3795 = vpop.f32.mrb[0].mxu0
        %3796 = vmatprep.mubr.f32.mxu0 0.0
        %v3797 = vand.u32 %v591, 4294901760
        %3798 = vmatmul.mubr.f32.gmra.mrb[0].mxu0 %v3797
        %v3799 = vpop.f32.mrb[0].mxu0
        %v3800 = vadd.f32 %v3161, %v3799
        %v3801 = vpop.f32.mrb[0].mxu0
        %3802 = vmatprep.mubr.f32.mxu0 0.0
        %v3803 = vand.u32 %v594, 4294901760
        %3804 = vmatmul.mubr.f32.gmra.mrb[0].mxu0 %v3803
        %v3805 = vpop.f32.mrb[0].mxu0
        %v3806 = vadd.f32 %v3169, %v3805
        %v3807 = vpop.f32.mrb[0].mxu0
        %3808 = vmatprep.mubr.f32.mxu0 0.0
        %v3809 = vand.u32 %v597, 4294901760
        %3810 = vmatmul.mubr.f32.gmra.mrb[0].mxu0 %v3809
        %v3811 = vpop.f32.mrb[0].mxu0
        %v3812 = vadd.f32 %v3177, %v3811
        %v3813 = vpop.f32.mrb[0].mxu0
        %3814 = vmatprep.mubr.f32.mxu0 0.0
        %v3815 = vand.u32 %v600, 4294901760
        %3816 = vmatmul.mubr.f32.gmra.mrb[0].mxu0 %v3815
        %v3817 = vpop.f32.mrb[0].mxu0
        %v3818 = vadd.f32 %v3185, %v3817
        %v3819 = vpop.f32.mrb[0].mxu0
        %3820 = vmatprep.mubr.f32.mxu0 0.0
        %v3821 = vand.u32 %v603, 4294901760
        %3822 = vmatmul.mubr.f32.gmra.mrb[0].mxu0 %v3821
        %v3823 = vpop.f32.mrb[0].mxu0
        %v3824 = vadd.f32 %v3193, %v3823
        %v3825 = vpop.f32.mrb[0].mxu0
        %3826 = vmatprep.mubr.f32.mxu0 0.0
        %v3827 = vand.u32 %v606, 4294901760
        %3828 = vmatmul.mubr.f32.gmra.mrb[0].mxu0 %v3827
        %v3829 = vpop.f32.mrb[0].mxu0
        %v3830 = vadd.f32 %v3201, %v3829
        %v3831 = vpop.f32.mrb[0].mxu0
        %3832 = vmatprep.mubr.f32.mxu0 0.0
        %v3833 = vand.u32 %v609, 4294901760
        %3834 = vmatmul.mubr.f32.gmra.mrb[0].mxu0 %v3833
        %v3835 = vpop.f32.mrb[0].mxu0
        %v3836 = vadd.f32 %v3209, %v3835
        %v3837 = vpop.f32.mrb[0].mxu0
        %3838 = vmatprep.mubr.f32.mxu0 0.0
        %v3839 = vand.u32 %v612, 4294901760
        %3840 = vmatmul.mubr.f32.gmra.mrb[0].mxu0 %v3839
        %v3841 = vpop.f32.mrb[0].mxu0
        %v3842 = vadd.f32 %v3217, %v3841
        %v3843 = vpop.f32.mrb[0].mxu0
        %3844 = vmatprep.mubr.f32.mxu0 0.0
        %v3845 = vand.u32 %v615, 4294901760
        %3846 = vmatmul.mubr.f32.gmra.mrb[0].mxu0 %v3845
        %v3847 = vpop.f32.mrb[0].mxu0
        %v3848 = vadd.f32 %v3225, %v3847
        %v3849 = vpop.f32.mrb[0].mxu0
        %3850 = vmatprep.mubr.f32.mxu0 0.0
        %v3851 = vand.u32 %v618, 4294901760
        %3852 = vmatmul.mubr.f32.gmra.mrb[0].mxu0 %v3851
        %v3853 = vpop.f32.mrb[0].mxu0
        %v3854 = vadd.f32 %v3233, %v3853
        %v3855 = vpop.f32.mrb[0].mxu0
        %3856 = vmatprep.mubr.f32.mxu0 0.0
        %v3857 = vand.u32 %v621, 4294901760
        %3858 = vmatmul.mubr.f32.gmra.mrb[0].mxu0 %v3857
        %v3859 = vpop.f32.mrb[0].mxu0
        %v3860 = vadd.f32 %v3241, %v3859
        %v3861 = vpop.f32.mrb[0].mxu0
        %3862 = vmatprep.mubr.f32.mxu0 0.0
        %v3863 = vand.u32 %v624, 4294901760
        %3864 = vmatmul.mubr.f32.gmra.mrb[0].mxu0 %v3863
        %v3865 = vpop.f32.mrb[0].mxu0
        %v3866 = vadd.f32 %v3249, %v3865
        %v3867 = vpop.f32.mrb[0].mxu0
        %3868 = vmatprep.mubr.f32.mxu0 0.0
        %v3869 = vand.u32 %v627, 4294901760
        %3870 = vmatmul.mubr.f32.gmra.mrb[0].mxu0 %v3869
        %v3871 = vpop.f32.mrb[0].mxu0
        %v3872 = vadd.f32 %v3257, %v3871
        %v3873 = vpop.f32.mrb[0].mxu0
        %3874 = vmatprep.mubr.f32.mxu0 0.0
        %v3875 = vand.u32 %v630, 4294901760
        %3876 = vmatmul.mubr.f32.gmra.mrb[0].mxu0 %v3875
        %v3877 = vpop.f32.mrb[0].mxu0
        %v3878 = vadd.f32 %v3265, %v3877
        %v3879 = vpop.f32.mrb[0].mxu0
        %3880 = vmatprep.mubr.f32.mxu0 0.0
        %v3881 = vand.u32 %v633, 4294901760
        %3882 = vmatmul.mubr.f32.gmra.mrb[0].mxu0 %v3881
        %v3883 = vpop.f32.mrb[0].mxu0
        %v3884 = vadd.f32 %v3273, %v3883
        %v3885 = vpop.f32.mrb[0].mxu0
        %3886 = vmatprep.mubr.f32.mxu0 0.0
        %v3887 = vand.u32 %v636, 4294901760
        %3888 = vmatmul.mubr.f32.gmra.mrb[0].mxu0 %v3887
        %v3889 = vpop.f32.mrb[0].mxu0
        %v3890 = vadd.f32 %v3281, %v3889
        %v3891 = vpop.f32.mrb[0].mxu0
        %3892 = vmatprep.mubr.f32.mxu0 0.0
        %v3893 = vand.u32 %v639, 4294901760
        %3894 = vmatmul.mubr.f32.gmra.mrb[0].mxu0 %v3893
        %v3895 = vpop.f32.mrb[0].mxu0
        %v3896 = vadd.f32 %v3289, %v3895
        %v3897 = vpop.f32.mrb[0].mxu0
        %3898 = vmatprep.mubr.f32.mxu0 0.0
        %v3899 = vand.u32 %v642, 4294901760
        %3900 = vmatmul.mubr.f32.gmra.mrb[0].mxu0 %v3899
        %v3901 = vpop.f32.mrb[0].mxu0
        %v3902 = vadd.f32 %v3297, %v3901
        %v3903 = vpop.f32.mrb[0].mxu0
        %3904 = vmatprep.mubr.f32.mxu0 0.0
        %v3905 = vand.u32 %v645, 4294901760
        %3906 = vmatmul.mubr.f32.gmra.mrb[0].mxu0 %v3905
        %v3907 = vpop.f32.mrb[0].mxu0
        %v3908 = vadd.f32 %v3305, %v3907
        %v3909 = vpop.f32.mrb[0].mxu0
        %3910 = vmatprep.mubr.f32.mxu0 0.0
        %v3911 = vand.u32 %v648, 4294901760
        %3912 = vmatmul.mubr.f32.gmra.mrb[0].mxu0 %v3911
        %v3913 = vpop.f32.mrb[0].mxu0
        %v3914 = vadd.f32 %v3313, %v3913
        %v3915 = vpop.f32.mrb[0].mxu0
        %3916 = vmatprep.mubr.f32.mxu0 0.0
        %v3917 = vand.u32 %v651, 4294901760
        %3918 = vmatmul.mubr.f32.gmra.mrb[0].mxu0 %v3917
        %v3919 = vpop.f32.mrb[0].mxu0
        %v3920 = vadd.f32 %v3321, %v3919
        %v3921 = vpop.f32.mrb[0].mxu0
        %3922 = vmatprep.mubr.f32.mxu0 0.0
        %v3923 = vand.u32 %v654, 4294901760
        %3924 = vmatmul.mubr.f32.gmra.mrb[0].mxu0 %v3923
        %v3925 = vpop.f32.mrb[0].mxu0
        %v3926 = vadd.f32 %v3329, %v3925
        %v3927 = vpop.f32.mrb[0].mxu0
        %3928 = vmatprep.mubr.f32.mxu0 0.0
        %v3929 = vand.u32 %v657, 4294901760
        %3930 = vmatmul.mubr.f32.gmra.mrb[0].mxu0 %v3929
        %v3931 = vpop.f32.mrb[0].mxu0
        %v3932 = vadd.f32 %v3337, %v3931
        %v3933 = vpop.f32.mrb[0].mxu0
        %3934 = vmatprep.mubr.f32.mxu0 0.0
        %v3935 = vand.u32 %v660, 4294901760
        %3936 = vmatmul.mubr.f32.gmra.mrb[0].mxu0 %v3935
        %v3937 = vpop.f32.mrb[0].mxu0
        %v3938 = vadd.f32 %v3345, %v3937
        %v3939 = vpop.f32.mrb[0].mxu0
        %3940 = vmatprep.mubr.f32.mxu0 0.0
        %v3941 = vand.u32 %v663, 4294901760
        %3942 = vmatmul.mubr.f32.gmra.mrb[0].mxu0 %v3941
        %v3943 = vpop.f32.mrb[0].mxu0
        %v3944 = vadd.f32 %v3353, %v3943
        %v3945 = vpop.f32.mrb[0].mxu0
        %3946 = vmatprep.mubr.f32.mxu0 0.0
        %v3947 = vand.u32 %v666, 4294901760
        %3948 = vmatmul.mubr.f32.gmra.mrb[0].mxu0 %v3947
        %v3949 = vpop.f32.mrb[0].mxu0
        %v3950 = vadd.f32 %v3361, %v3949
        %v3951 = vpop.f32.mrb[0].mxu0
        %3952 = vmatprep.mubr.f32.mxu0 0.0
        %v3953 = vand.u32 %v669, 4294901760
        %3954 = vmatmul.mubr.f32.gmra.mrb[0].mxu0 %v3953
        %v3955 = vpop.f32.mrb[0].mxu0
        %v3956 = vadd.f32 %v3369, %v3955
        %v3957 = vpop.f32.mrb[0].mxu0
        %3958 = vmatprep.mubr.f32.mxu0 0.0
        %v3959 = vand.u32 %v672, 4294901760
        %3960 = vmatmul.mubr.f32.gmra.mrb[0].mxu0 %v3959
        %v3961 = vpop.f32.mrb[0].mxu0
        %v3962 = vadd.f32 %v3377, %v3961
        %v3963 = vpop.f32.mrb[0].mxu0
        %3964 = vmatprep.mubr.f32.mxu0 0.0
        %v3965 = vand.u32 %v675, 4294901760
        %3966 = vmatmul.mubr.f32.gmra.mrb[0].mxu0 %v3965
        %v3967 = vpop.f32.mrb[0].mxu0
        %v3968 = vadd.f32 %v3385, %v3967
        %v3969 = vpop.f32.mrb[0].mxu0
        %3970 = vmatprep.mubr.f32.mxu0 0.0
        %v3971 = vand.u32 %v678, 4294901760
        %3972 = vmatmul.mubr.f32.gmra.mrb[0].mxu0 %v3971
        %v3973 = vpop.f32.mrb[0].mxu0
        %v3974 = vadd.f32 %v3393, %v3973
        %v3975 = vpop.f32.mrb[0].mxu0
        %3976 = vmatprep.mubr.f32.mxu0 0.0
        %v3977 = vand.u32 %v681, 4294901760
        %3978 = vmatmul.mubr.f32.gmra.mrb[0].mxu0 %v3977
        %v3979 = vpop.f32.mrb[0].mxu0
        %v3980 = vadd.f32 %v3401, %v3979
        %v3981 = vpop.f32.mrb[0].mxu0
        %3982 = vmatprep.mubr.f32.mxu0 0.0
        %v3983 = vand.u32 %v684, 4294901760
        %3984 = vmatmul.mubr.f32.gmra.mrb[0].mxu0 %v3983
        %v3985 = vpop.f32.mrb[0].mxu0
        %v3986 = vadd.f32 %v3409, %v3985
        %v3987 = vpop.f32.mrb[0].mxu0
        %3988 = vmatprep.mubr.f32.mxu0 0.0
        %v3989 = vand.u32 %v687, 4294901760
        %3990 = vmatmul.mubr.f32.gmra.mrb[0].mxu0 %v3989
        %v3991 = vpop.f32.mrb[0].mxu0
        %v3992 = vadd.f32 %v3417, %v3991
        %v3993 = vpop.f32.mrb[0].mxu0
        %3994 = vmatprep.mubr.f32.mxu0 0.0
        %v3995 = vand.u32 %v690, 4294901760
        %3996 = vmatmul.mubr.f32.gmra.mrb[0].mxu0 %v3995
        %v3997 = vpop.f32.mrb[0].mxu0
        %v3998 = vadd.f32 %v3425, %v3997
        %v3999 = vpop.f32.mrb[0].mxu0
        %4000 = vmatprep.mubr.f32.mxu0 0.0
        %v4001 = vand.u32 %v693, 4294901760
        %4002 = vmatmul.mubr.f32.gmra.mrb[0].mxu0 %v4001
        %v4003 = vpop.f32.mrb[0].mxu0
        %v4004 = vadd.f32 %v3433, %v4003
        %v4005 = vpop.f32.mrb[0].mxu0
        %4006 = vmatprep.mubr.f32.mxu0 0.0
        %v4007 = vand.u32 %v696, 4294901760
        %4008 = vmatmul.mubr.f32.gmra.mrb[0].mxu0 %v4007
        %v4009 = vpop.f32.mrb[0].mxu0
        %v4010 = vadd.f32 %v3441, %v4009
        %v4011 = vpop.f32.mrb[0].mxu0
        %4012 = vmatprep.mubr.f32.mxu0 0.0
        %v4013 = vand.u32 %v699, 4294901760
        %4014 = vmatmul.mubr.f32.gmra.mrb[0].mxu0 %v4013
        %v4015 = vpop.f32.mrb[0].mxu0
        %v4016 = vadd.f32 %v3449, %v4015
        %v4017 = vpop.f32.mrb[0].mxu0
        %4018 = vmatprep.mubr.f32.mxu0 0.0
        %v4019 = vand.u32 %v702, 4294901760
        %4020 = vmatmul.mubr.f32.gmra.mrb[0].mxu0 %v4019
        %v4021 = vpop.f32.mrb[0].mxu0
        %v4022 = vadd.f32 %v3457, %v4021
        %v4023 = vpop.f32.mrb[0].mxu0
        %4024 = vmatprep.mubr.f32.mxu0 0.0
        %v4025 = vand.u32 %v705, 4294901760
        %4026 = vmatmul.mubr.f32.gmra.mrb[0].mxu0 %v4025
        %v4027 = vpop.f32.mrb[0].mxu0
        %v4028 = vadd.f32 %v3465, %v4027
        %v4029 = vpop.f32.mrb[0].mxu0
        %4030 = vmatprep.mubr.f32.mxu0 0.0
        %v4031 = vand.u32 %v708, 4294901760
        %4032 = vmatmul.mubr.f32.gmra.mrb[0].mxu0 %v4031
        %v4033 = vpop.f32.mrb[0].mxu0
        %v4034 = vadd.f32 %v3473, %v4033
        %v4035 = vpop.f32.mrb[0].mxu0
        %4036 = vmatprep.mubr.f32.mxu0 0.0
        %v4037 = vand.u32 %v711, 4294901760
        %4038 = vmatmul.mubr.f32.gmra.mrb[0].mxu0 %v4037
        %v4039 = vpop.f32.mrb[0].mxu0
        %v4040 = vadd.f32 %v3481, %v4039
        %v4041 = vpop.f32.mrb[0].mxu0
        %4042 = vmatprep.mubr.f32.mxu0 0.0
        %v4043 = vand.u32 %v714, 4294901760
        %4044 = vmatmul.mubr.f32.gmra.mrb[0].mxu0 %v4043
        %v4045 = vpop.f32.mrb[0].mxu0
        %v4046 = vadd.f32 %v3489, %v4045
        %v4047 = vpop.f32.mrb[0].mxu0
        %4048 = vdwg.mxu0
        %4049 = vmatprep.subr.mxu0 0.0
        %v4050 = vand.u32 %v354, 4294901760
        %4051 = vmatpush1.msra.mxu0 %v4050
        %4052 = vmatprep.subr.mxu0 0.0
        %v4053 = vand.u32 %v355, 4294901760
        %4054 = vmatpush1.msra.mxu0 %v4053
        %4055 = vmatprep.subr.mxu0 0.0
        %v4056 = vand.u32 %v356, 4294901760
        %4057 = vmatpush1.msra.mxu0 %v4056
        %4058 = vmatprep.subr.mxu0 0.0
        %v4059 = vand.u32 %v357, 4294901760
        %4060 = vmatpush1.msra.mxu0 %v4059
        %4061 = vmatprep.subr.mxu0 0.0
        %4062 = vmatpush1.msra.mxu0 0.0
        %4063 = vmatprep.subr.mxu0 0.0
        %4064 = vmatpush1.msra.mxu0 0.0
        %4065 = vmatprep.subr.mxu0 0.0
        %4066 = vmatpush1.msra.mxu0 0.0
        %4067 = vmatprep.subr.mxu0 0.0
        %4068 = vmatpush1.msra.mxu0 0.0
        %4069 = vmatprep.subr.mxu0 0.0
        %4070 = vmatpush1.msra.mxu0 0.0
        %4071 = vmatprep.subr.mxu0 0.0
        %4072 = vmatpush1.msra.mxu0 0.0
        %4073 = vmatprep.subr.mxu0 0.0
        %4074 = vmatpush1.msra.mxu0 0.0
        %4075 = vmatprep.subr.mxu0 0.0
        %4076 = vmatpush1.msra.mxu0 0.0
        %4077 = vmatprep.subr.mxu0 0.0
        %4078 = vmatpush1.msra.mxu0 0.0
        %4079 = vmatprep.subr.mxu0 0.0
        %4080 = vmatpush1.msra.mxu0 0.0
        %4081 = vmatprep.subr.mxu0 0.0
        %4082 = vmatpush1.msra.mxu0 0.0
        %4083 = vmatprep.subr.mxu0 0.0
        %4084 = vmatpush1.msra.mxu0 0.0
        %4085 = vmatprep.subr.mxu0 0.0
        %4086 = vmatpush1.msra.mxu0 0.0
        %4087 = vmatprep.subr.mxu0 0.0
        %4088 = vmatpush1.msra.mxu0 0.0
        %4089 = vmatprep.subr.mxu0 0.0
        %4090 = vmatpush1.msra.mxu0 0.0
        %4091 = vmatprep.subr.mxu0 0.0
        %4092 = vmatpush1.msra.mxu0 0.0
        %4093 = vmatprep.subr.mxu0 0.0
        %4094 = vmatpush1.msra.mxu0 0.0
        %4095 = vmatprep.subr.mxu0 0.0
        %4096 = vmatpush1.msra.mxu0 0.0
        %4097 = vmatprep.subr.mxu0 0.0
        %4098 = vmatpush1.msra.mxu0 0.0
        %4099 = vmatprep.subr.mxu0 0.0
        %4100 = vmatpush1.msra.mxu0 0.0
        %4101 = vmatprep.subr.mxu0 0.0
        %4102 = vmatpush1.msra.mxu0 0.0
        %4103 = vmatprep.subr.mxu0 0.0
        %4104 = vmatpush1.msra.mxu0 0.0
        %4105 = vmatprep.subr.mxu0 0.0
        %4106 = vmatpush1.msra.mxu0 0.0
        %4107 = vmatprep.subr.mxu0 0.0
        %4108 = vmatpush1.msra.mxu0 0.0
        %4109 = vmatprep.subr.mxu0 0.0
        %4110 = vmatpush1.msra.mxu0 0.0
        %4111 = vmatprep.subr.mxu0 0.0
        %4112 = vmatpush1.msra.mxu0 0.0
        %4113 = vmatprep.subr.mxu0 0.0
        %4114 = vmatpush1.msra.mxu0 0.0
        %4115 = vmatprep.subr.mxu0 0.0
        %4116 = vmatpush1.msra.mxu0 0.0
        %4117 = vmatprep.mubr.f32.mxu0 0.0
        %v4118 = vand.u32 %v477, 4294901760
        %4119 = vmatmul.mubr.f32.gmra.mrb[0].mxu0 %v4118
        %v4120 = vpop.f32.mrb[0].mxu0
        %v4121 = vadd.f32 %v3572, %v4120
        %v4122 = vpop.f32.mrb[0].mxu0
        %4123 = vmatprep.mubr.f32.mxu0 0.0
        %v4124 = vand.u32 %v480, 4294901760
        %4125 = vmatmul.mubr.f32.gmra.mrb[0].mxu0 %v4124
        %v4126 = vpop.f32.mrb[0].mxu0
        %v4127 = vadd.f32 %v3578, %v4126
        %v4128 = vpop.f32.mrb[0].mxu0
        %4129 = vmatprep.mubr.f32.mxu0 0.0
        %v4130 = vand.u32 %v483, 4294901760
        %4131 = vmatmul.mubr.f32.gmra.mrb[0].mxu0 %v4130
        %v4132 = vpop.f32.mrb[0].mxu0
        %v4133 = vadd.f32 %v3584, %v4132
        %v4134 = vpop.f32.mrb[0].mxu0
        %4135 = vmatprep.mubr.f32.mxu0 0.0
        %v4136 = vand.u32 %v486, 4294901760
        %4137 = vmatmul.mubr.f32.gmra.mrb[0].mxu0 %v4136
        %v4138 = vpop.f32.mrb[0].mxu0
        %v4139 = vadd.f32 %v3590, %v4138
        %v4140 = vpop.f32.mrb[0].mxu0
        %4141 = vmatprep.mubr.f32.mxu0 0.0
        %v4142 = vand.u32 %v489, 4294901760
        %4143 = vmatmul.mubr.f32.gmra.mrb[0].mxu0 %v4142
        %v4144 = vpop.f32.mrb[0].mxu0
        %v4145 = vadd.f32 %v3596, %v4144
        %v4146 = vpop.f32.mrb[0].mxu0
        %4147 = vmatprep.mubr.f32.mxu0 0.0
        %v4148 = vand.u32 %v492, 4294901760
        %4149 = vmatmul.mubr.f32.gmra.mrb[0].mxu0 %v4148
        %v4150 = vpop.f32.mrb[0].mxu0
        %v4151 = vadd.f32 %v3602, %v4150
        %v4152 = vpop.f32.mrb[0].mxu0
        %4153 = vmatprep.mubr.f32.mxu0 0.0
        %v4154 = vand.u32 %v495, 4294901760
        %4155 = vmatmul.mubr.f32.gmra.mrb[0].mxu0 %v4154
        %v4156 = vpop.f32.mrb[0].mxu0
        %v4157 = vadd.f32 %v3608, %v4156
        %v4158 = vpop.f32.mrb[0].mxu0
        %4159 = vmatprep.mubr.f32.mxu0 0.0
        %v4160 = vand.u32 %v498, 4294901760
        %4161 = vmatmul.mubr.f32.gmra.mrb[0].mxu0 %v4160
        %v4162 = vpop.f32.mrb[0].mxu0
        %v4163 = vadd.f32 %v3614, %v4162
        %v4164 = vpop.f32.mrb[0].mxu0
        %4165 = vmatprep.mubr.f32.mxu0 0.0
        %v4166 = vand.u32 %v501, 4294901760
        %4167 = vmatmul.mubr.f32.gmra.mrb[0].mxu0 %v4166
        %v4168 = vpop.f32.mrb[0].mxu0
        %v4169 = vadd.f32 %v3620, %v4168
        %v4170 = vpop.f32.mrb[0].mxu0
        %4171 = vmatprep.mubr.f32.mxu0 0.0
        %v4172 = vand.u32 %v504, 4294901760
        %4173 = vmatmul.mubr.f32.gmra.mrb[0].mxu0 %v4172
        %v4174 = vpop.f32.mrb[0].mxu0
        %v4175 = vadd.f32 %v3626, %v4174
        %v4176 = vpop.f32.mrb[0].mxu0
        %4177 = vmatprep.mubr.f32.mxu0 0.0
        %v4178 = vand.u32 %v507, 4294901760
        %4179 = vmatmul.mubr.f32.gmra.mrb[0].mxu0 %v4178
        %v4180 = vpop.f32.mrb[0].mxu0
        %v4181 = vadd.f32 %v3632, %v4180
        %v4182 = vpop.f32.mrb[0].mxu0
        %4183 = vmatprep.mubr.f32.mxu0 0.0
        %v4184 = vand.u32 %v510, 4294901760
        %4185 = vmatmul.mubr.f32.gmra.mrb[0].mxu0 %v4184
        %v4186 = vpop.f32.mrb[0].mxu0
        %v4187 = vadd.f32 %v3638, %v4186
        %v4188 = vpop.f32.mrb[0].mxu0
        %4189 = vmatprep.mubr.f32.mxu0 0.0
        %v4190 = vand.u32 %v513, 4294901760
        %4191 = vmatmul.mubr.f32.gmra.mrb[0].mxu0 %v4190
        %v4192 = vpop.f32.mrb[0].mxu0
        %v4193 = vadd.f32 %v3644, %v4192
        %v4194 = vpop.f32.mrb[0].mxu0
        %4195 = vmatprep.mubr.f32.mxu0 0.0
        %v4196 = vand.u32 %v516, 4294901760
        %4197 = vmatmul.mubr.f32.gmra.mrb[0].mxu0 %v4196
        %v4198 = vpop.f32.mrb[0].mxu0
        %v4199 = vadd.f32 %v3650, %v4198
        %v4200 = vpop.f32.mrb[0].mxu0
        %4201 = vmatprep.mubr.f32.mxu0 0.0
        %v4202 = vand.u32 %v519, 4294901760
        %4203 = vmatmul.mubr.f32.gmra.mrb[0].mxu0 %v4202
        %v4204 = vpop.f32.mrb[0].mxu0
        %v4205 = vadd.f32 %v3656, %v4204
        %v4206 = vpop.f32.mrb[0].mxu0
        %4207 = vmatprep.mubr.f32.mxu0 0.0
        %v4208 = vand.u32 %v522, 4294901760
        %4209 = vmatmul.mubr.f32.gmra.mrb[0].mxu0 %v4208
        %v4210 = vpop.f32.mrb[0].mxu0
        %v4211 = vadd.f32 %v3662, %v4210
        %v4212 = vpop.f32.mrb[0].mxu0
        %4213 = vmatprep.mubr.f32.mxu0 0.0
        %v4214 = vand.u32 %v525, 4294901760
        %4215 = vmatmul.mubr.f32.gmra.mrb[0].mxu0 %v4214
        %v4216 = vpop.f32.mrb[0].mxu0
        %v4217 = vadd.f32 %v3668, %v4216
        %v4218 = vpop.f32.mrb[0].mxu0
        %4219 = vmatprep.mubr.f32.mxu0 0.0
        %v4220 = vand.u32 %v528, 4294901760
        %4221 = vmatmul.mubr.f32.gmra.mrb[0].mxu0 %v4220
        %v4222 = vpop.f32.mrb[0].mxu0
        %v4223 = vadd.f32 %v3674, %v4222
        %v4224 = vpop.f32.mrb[0].mxu0
        %4225 = vmatprep.mubr.f32.mxu0 0.0
        %v4226 = vand.u32 %v531, 4294901760
        %4227 = vmatmul.mubr.f32.gmra.mrb[0].mxu0 %v4226
        %v4228 = vpop.f32.mrb[0].mxu0
        %v4229 = vadd.f32 %v3680, %v4228
        %v4230 = vpop.f32.mrb[0].mxu0
        %4231 = vmatprep.mubr.f32.mxu0 0.0
        %v4232 = vand.u32 %v534, 4294901760
        %4233 = vmatmul.mubr.f32.gmra.mrb[0].mxu0 %v4232
        %v4234 = vpop.f32.mrb[0].mxu0
        %v4235 = vadd.f32 %v3686, %v4234
        %v4236 = vpop.f32.mrb[0].mxu0
        %4237 = vmatprep.mubr.f32.mxu0 0.0
        %v4238 = vand.u32 %v537, 4294901760
        %4239 = vmatmul.mubr.f32.gmra.mrb[0].mxu0 %v4238
        %v4240 = vpop.f32.mrb[0].mxu0
        %v4241 = vadd.f32 %v3692, %v4240
        %v4242 = vpop.f32.mrb[0].mxu0
        %4243 = vmatprep.mubr.f32.mxu0 0.0
        %v4244 = vand.u32 %v540, 4294901760
        %4245 = vmatmul.mubr.f32.gmra.mrb[0].mxu0 %v4244
        %v4246 = vpop.f32.mrb[0].mxu0
        %v4247 = vadd.f32 %v3698, %v4246
        %v4248 = vpop.f32.mrb[0].mxu0
        %4249 = vmatprep.mubr.f32.mxu0 0.0
        %v4250 = vand.u32 %v543, 4294901760
        %4251 = vmatmul.mubr.f32.gmra.mrb[0].mxu0 %v4250
        %v4252 = vpop.f32.mrb[0].mxu0
        %v4253 = vadd.f32 %v3704, %v4252
        %v4254 = vpop.f32.mrb[0].mxu0
        %4255 = vmatprep.mubr.f32.mxu0 0.0
        %v4256 = vand.u32 %v546, 4294901760
        %4257 = vmatmul.mubr.f32.gmra.mrb[0].mxu0 %v4256
        %v4258 = vpop.f32.mrb[0].mxu0
        %v4259 = vadd.f32 %v3710, %v4258
        %v4260 = vpop.f32.mrb[0].mxu0
        %4261 = vmatprep.mubr.f32.mxu0 0.0
        %v4262 = vand.u32 %v549, 4294901760
        %4263 = vmatmul.mubr.f32.gmra.mrb[0].mxu0 %v4262
        %v4264 = vpop.f32.mrb[0].mxu0
        %v4265 = vadd.f32 %v3716, %v4264
        %v4266 = vpop.f32.mrb[0].mxu0
        %4267 = vmatprep.mubr.f32.mxu0 0.0
        %v4268 = vand.u32 %v552, 4294901760
        %4269 = vmatmul.mubr.f32.gmra.mrb[0].mxu0 %v4268
        %v4270 = vpop.f32.mrb[0].mxu0
        %v4271 = vadd.f32 %v3722, %v4270
        %v4272 = vpop.f32.mrb[0].mxu0
        %4273 = vmatprep.mubr.f32.mxu0 0.0
        %v4274 = vand.u32 %v555, 4294901760
        %4275 = vmatmul.mubr.f32.gmra.mrb[0].mxu0 %v4274
        %v4276 = vpop.f32.mrb[0].mxu0
        %v4277 = vadd.f32 %v3728, %v4276
        %v4278 = vpop.f32.mrb[0].mxu0
        %4279 = vmatprep.mubr.f32.mxu0 0.0
        %v4280 = vand.u32 %v558, 4294901760
        %4281 = vmatmul.mubr.f32.gmra.mrb[0].mxu0 %v4280
        %v4282 = vpop.f32.mrb[0].mxu0
        %v4283 = vadd.f32 %v3734, %v4282
        %v4284 = vpop.f32.mrb[0].mxu0
        %4285 = vmatprep.mubr.f32.mxu0 0.0
        %v4286 = vand.u32 %v561, 4294901760
        %4287 = vmatmul.mubr.f32.gmra.mrb[0].mxu0 %v4286
        %v4288 = vpop.f32.mrb[0].mxu0
        %v4289 = vadd.f32 %v3740, %v4288
        %v4290 = vpop.f32.mrb[0].mxu0
        %4291 = vmatprep.mubr.f32.mxu0 0.0
        %v4292 = vand.u32 %v564, 4294901760
        %4293 = vmatmul.mubr.f32.gmra.mrb[0].mxu0 %v4292
        %v4294 = vpop.f32.mrb[0].mxu0
        %v4295 = vadd.f32 %v3746, %v4294
        %v4296 = vpop.f32.mrb[0].mxu0
        %4297 = vmatprep.mubr.f32.mxu0 0.0
        %v4298 = vand.u32 %v567, 4294901760
        %4299 = vmatmul.mubr.f32.gmra.mrb[0].mxu0 %v4298
        %v4300 = vpop.f32.mrb[0].mxu0
        %v4301 = vadd.f32 %v3752, %v4300
        %v4302 = vpop.f32.mrb[0].mxu0
        %4303 = vmatprep.mubr.f32.mxu0 0.0
        %v4304 = vand.u32 %v570, 4294901760
        %4305 = vmatmul.mubr.f32.gmra.mrb[0].mxu0 %v4304
        %v4306 = vpop.f32.mrb[0].mxu0
        %v4307 = vadd.f32 %v3758, %v4306
        %v4308 = vpop.f32.mrb[0].mxu0
        %4309 = vmatprep.mubr.f32.mxu0 0.0
        %v4310 = vand.u32 %v573, 4294901760
        %4311 = vmatmul.mubr.f32.gmra.mrb[0].mxu0 %v4310
        %v4312 = vpop.f32.mrb[0].mxu0
        %v4313 = vadd.f32 %v3764, %v4312
        %v4314 = vpop.f32.mrb[0].mxu0
        %4315 = vmatprep.mubr.f32.mxu0 0.0
        %v4316 = vand.u32 %v576, 4294901760
        %4317 = vmatmul.mubr.f32.gmra.mrb[0].mxu0 %v4316
        %v4318 = vpop.f32.mrb[0].mxu0
        %v4319 = vadd.f32 %v3770, %v4318
        %v4320 = vpop.f32.mrb[0].mxu0
        %4321 = vmatprep.mubr.f32.mxu0 0.0
        %v4322 = vand.u32 %v579, 4294901760
        %4323 = vmatmul.mubr.f32.gmra.mrb[0].mxu0 %v4322
        %v4324 = vpop.f32.mrb[0].mxu0
        %v4325 = vadd.f32 %v3776, %v4324
        %v4326 = vpop.f32.mrb[0].mxu0
        %4327 = vmatprep.mubr.f32.mxu0 0.0
        %v4328 = vand.u32 %v582, 4294901760
        %4329 = vmatmul.mubr.f32.gmra.mrb[0].mxu0 %v4328
        %v4330 = vpop.f32.mrb[0].mxu0
        %v4331 = vadd.f32 %v3782, %v4330
        %v4332 = vpop.f32.mrb[0].mxu0
        %4333 = vmatprep.mubr.f32.mxu0 0.0
        %v4334 = vand.u32 %v585, 4294901760
        %4335 = vmatmul.mubr.f32.gmra.mrb[0].mxu0 %v4334
        %v4336 = vpop.f32.mrb[0].mxu0
        %v4337 = vadd.f32 %v3788, %v4336
        %v4338 = vpop.f32.mrb[0].mxu0
        %4339 = vmatprep.mubr.f32.mxu0 0.0
        %v4340 = vand.u32 %v588, 4294901760
        %4341 = vmatmul.mubr.f32.gmra.mrb[0].mxu0 %v4340
        %v4342 = vpop.f32.mrb[0].mxu0
        %v4343 = vadd.f32 %v3794, %v4342
        %v4344 = vpop.f32.mrb[0].mxu0
        %4345 = vmatprep.mubr.f32.mxu0 0.0
        %v4346 = vand.u32 %v591, 4294901760
        %4347 = vmatmul.mubr.f32.gmra.mrb[0].mxu0 %v4346
        %v4348 = vpop.f32.mrb[0].mxu0
        %v4349 = vadd.f32 %v3800, %v4348
        %v4350 = vpop.f32.mrb[0].mxu0
        %4351 = vmatprep.mubr.f32.mxu0 0.0
        %v4352 = vand.u32 %v594, 4294901760
        %4353 = vmatmul.mubr.f32.gmra.mrb[0].mxu0 %v4352
        %v4354 = vpop.f32.mrb[0].mxu0
        %v4355 = vadd.f32 %v3806, %v4354
        %v4356 = vpop.f32.mrb[0].mxu0
        %4357 = vmatprep.mubr.f32.mxu0 0.0
        %v4358 = vand.u32 %v597, 4294901760
        %4359 = vmatmul.mubr.f32.gmra.mrb[0].mxu0 %v4358
        %v4360 = vpop.f32.mrb[0].mxu0
        %v4361 = vadd.f32 %v3812, %v4360
        %v4362 = vpop.f32.mrb[0].mxu0
        %4363 = vmatprep.mubr.f32.mxu0 0.0
        %v4364 = vand.u32 %v600, 4294901760
        %4365 = vmatmul.mubr.f32.gmra.mrb[0].mxu0 %v4364
        %v4366 = vpop.f32.mrb[0].mxu0
        %v4367 = vadd.f32 %v3818, %v4366
        %v4368 = vpop.f32.mrb[0].mxu0
        %4369 = vmatprep.mubr.f32.mxu0 0.0
        %v4370 = vand.u32 %v603, 4294901760
        %4371 = vmatmul.mubr.f32.gmra.mrb[0].mxu0 %v4370
        %v4372 = vpop.f32.mrb[0].mxu0
        %v4373 = vadd.f32 %v3824, %v4372
        %v4374 = vpop.f32.mrb[0].mxu0
        %4375 = vmatprep.mubr.f32.mxu0 0.0
        %v4376 = vand.u32 %v606, 4294901760
        %4377 = vmatmul.mubr.f32.gmra.mrb[0].mxu0 %v4376
        %v4378 = vpop.f32.mrb[0].mxu0
        %v4379 = vadd.f32 %v3830, %v4378
        %v4380 = vpop.f32.mrb[0].mxu0
        %4381 = vmatprep.mubr.f32.mxu0 0.0
        %v4382 = vand.u32 %v609, 4294901760
        %4383 = vmatmul.mubr.f32.gmra.mrb[0].mxu0 %v4382
        %v4384 = vpop.f32.mrb[0].mxu0
        %v4385 = vadd.f32 %v3836, %v4384
        %v4386 = vpop.f32.mrb[0].mxu0
        %4387 = vmatprep.mubr.f32.mxu0 0.0
        %v4388 = vand.u32 %v612, 4294901760
        %4389 = vmatmul.mubr.f32.gmra.mrb[0].mxu0 %v4388
        %v4390 = vpop.f32.mrb[0].mxu0
        %v4391 = vadd.f32 %v3842, %v4390
        %v4392 = vpop.f32.mrb[0].mxu0
        %4393 = vmatprep.mubr.f32.mxu0 0.0
        %v4394 = vand.u32 %v615, 4294901760
        %4395 = vmatmul.mubr.f32.gmra.mrb[0].mxu0 %v4394
        %v4396 = vpop.f32.mrb[0].mxu0
        %v4397 = vadd.f32 %v3848, %v4396
        %v4398 = vpop.f32.mrb[0].mxu0
        %4399 = vmatprep.mubr.f32.mxu0 0.0
        %v4400 = vand.u32 %v618, 4294901760
        %4401 = vmatmul.mubr.f32.gmra.mrb[0].mxu0 %v4400
        %v4402 = vpop.f32.mrb[0].mxu0
        %v4403 = vadd.f32 %v3854, %v4402
        %v4404 = vpop.f32.mrb[0].mxu0
        %4405 = vmatprep.mubr.f32.mxu0 0.0
        %v4406 = vand.u32 %v621, 4294901760
        %4407 = vmatmul.mubr.f32.gmra.mrb[0].mxu0 %v4406
        %v4408 = vpop.f32.mrb[0].mxu0
        %v4409 = vadd.f32 %v3860, %v4408
        %v4410 = vpop.f32.mrb[0].mxu0
        %4411 = vmatprep.mubr.f32.mxu0 0.0
        %v4412 = vand.u32 %v624, 4294901760
        %4413 = vmatmul.mubr.f32.gmra.mrb[0].mxu0 %v4412
        %v4414 = vpop.f32.mrb[0].mxu0
        %v4415 = vadd.f32 %v3866, %v4414
        %v4416 = vpop.f32.mrb[0].mxu0
        %4417 = vmatprep.mubr.f32.mxu0 0.0
        %v4418 = vand.u32 %v627, 4294901760
        %4419 = vmatmul.mubr.f32.gmra.mrb[0].mxu0 %v4418
        %v4420 = vpop.f32.mrb[0].mxu0
        %v4421 = vadd.f32 %v3872, %v4420
        %v4422 = vpop.f32.mrb[0].mxu0
        %4423 = vmatprep.mubr.f32.mxu0 0.0
        %v4424 = vand.u32 %v630, 4294901760
        %4425 = vmatmul.mubr.f32.gmra.mrb[0].mxu0 %v4424
        %v4426 = vpop.f32.mrb[0].mxu0
        %v4427 = vadd.f32 %v3878, %v4426
        %v4428 = vpop.f32.mrb[0].mxu0
        %4429 = vmatprep.mubr.f32.mxu0 0.0
        %v4430 = vand.u32 %v633, 4294901760
        %4431 = vmatmul.mubr.f32.gmra.mrb[0].mxu0 %v4430
        %v4432 = vpop.f32.mrb[0].mxu0
        %v4433 = vadd.f32 %v3884, %v4432
        %v4434 = vpop.f32.mrb[0].mxu0
        %4435 = vmatprep.mubr.f32.mxu0 0.0
        %v4436 = vand.u32 %v636, 4294901760
        %4437 = vmatmul.mubr.f32.gmra.mrb[0].mxu0 %v4436
        %v4438 = vpop.f32.mrb[0].mxu0
        %v4439 = vadd.f32 %v3890, %v4438
        %v4440 = vpop.f32.mrb[0].mxu0
        %4441 = vmatprep.mubr.f32.mxu0 0.0
        %v4442 = vand.u32 %v639, 4294901760
        %4443 = vmatmul.mubr.f32.gmra.mrb[0].mxu0 %v4442
        %v4444 = vpop.f32.mrb[0].mxu0
        %v4445 = vadd.f32 %v3896, %v4444
        %v4446 = vpop.f32.mrb[0].mxu0
        %4447 = vmatprep.mubr.f32.mxu0 0.0
        %v4448 = vand.u32 %v642, 4294901760
        %4449 = vmatmul.mubr.f32.gmra.mrb[0].mxu0 %v4448
        %v4450 = vpop.f32.mrb[0].mxu0
        %v4451 = vadd.f32 %v3902, %v4450
        %v4452 = vpop.f32.mrb[0].mxu0
        %4453 = vmatprep.mubr.f32.mxu0 0.0
        %v4454 = vand.u32 %v645, 4294901760
        %4455 = vmatmul.mubr.f32.gmra.mrb[0].mxu0 %v4454
        %v4456 = vpop.f32.mrb[0].mxu0
        %v4457 = vadd.f32 %v3908, %v4456
        %v4458 = vpop.f32.mrb[0].mxu0
        %4459 = vmatprep.mubr.f32.mxu0 0.0
        %v4460 = vand.u32 %v648, 4294901760
        %4461 = vmatmul.mubr.f32.gmra.mrb[0].mxu0 %v4460
        %v4462 = vpop.f32.mrb[0].mxu0
        %v4463 = vadd.f32 %v3914, %v4462
        %v4464 = vpop.f32.mrb[0].mxu0
        %4465 = vmatprep.mubr.f32.mxu0 0.0
        %v4466 = vand.u32 %v651, 4294901760
        %4467 = vmatmul.mubr.f32.gmra.mrb[0].mxu0 %v4466
        %v4468 = vpop.f32.mrb[0].mxu0
        %v4469 = vadd.f32 %v3920, %v4468
        %v4470 = vpop.f32.mrb[0].mxu0
        %4471 = vmatprep.mubr.f32.mxu0 0.0
        %v4472 = vand.u32 %v654, 4294901760
        %4473 = vmatmul.mubr.f32.gmra.mrb[0].mxu0 %v4472
        %v4474 = vpop.f32.mrb[0].mxu0
        %v4475 = vadd.f32 %v3926, %v4474
        %v4476 = vpop.f32.mrb[0].mxu0
        %4477 = vmatprep.mubr.f32.mxu0 0.0
        %v4478 = vand.u32 %v657, 4294901760
        %4479 = vmatmul.mubr.f32.gmra.mrb[0].mxu0 %v4478
        %v4480 = vpop.f32.mrb[0].mxu0
        %v4481 = vadd.f32 %v3932, %v4480
        %v4482 = vpop.f32.mrb[0].mxu0
        %4483 = vmatprep.mubr.f32.mxu0 0.0
        %v4484 = vand.u32 %v660, 4294901760
        %4485 = vmatmul.mubr.f32.gmra.mrb[0].mxu0 %v4484
        %v4486 = vpop.f32.mrb[0].mxu0
        %v4487 = vadd.f32 %v3938, %v4486
        %v4488 = vpop.f32.mrb[0].mxu0
        %4489 = vmatprep.mubr.f32.mxu0 0.0
        %v4490 = vand.u32 %v663, 4294901760
        %4491 = vmatmul.mubr.f32.gmra.mrb[0].mxu0 %v4490
        %v4492 = vpop.f32.mrb[0].mxu0
        %v4493 = vadd.f32 %v3944, %v4492
        %v4494 = vpop.f32.mrb[0].mxu0
        %4495 = vmatprep.mubr.f32.mxu0 0.0
        %v4496 = vand.u32 %v666, 4294901760
        %4497 = vmatmul.mubr.f32.gmra.mrb[0].mxu0 %v4496
        %v4498 = vpop.f32.mrb[0].mxu0
        %v4499 = vadd.f32 %v3950, %v4498
        %v4500 = vpop.f32.mrb[0].mxu0
        %4501 = vmatprep.mubr.f32.mxu0 0.0
        %v4502 = vand.u32 %v669, 4294901760
        %4503 = vmatmul.mubr.f32.gmra.mrb[0].mxu0 %v4502
        %v4504 = vpop.f32.mrb[0].mxu0
        %v4505 = vadd.f32 %v3956, %v4504
        %v4506 = vpop.f32.mrb[0].mxu0
        %4507 = vmatprep.mubr.f32.mxu0 0.0
        %v4508 = vand.u32 %v672, 4294901760
        %4509 = vmatmul.mubr.f32.gmra.mrb[0].mxu0 %v4508
        %v4510 = vpop.f32.mrb[0].mxu0
        %v4511 = vadd.f32 %v3962, %v4510
        %v4512 = vpop.f32.mrb[0].mxu0
        %4513 = vmatprep.mubr.f32.mxu0 0.0
        %v4514 = vand.u32 %v675, 4294901760
        %4515 = vmatmul.mubr.f32.gmra.mrb[0].mxu0 %v4514
        %v4516 = vpop.f32.mrb[0].mxu0
        %v4517 = vadd.f32 %v3968, %v4516
        %v4518 = vpop.f32.mrb[0].mxu0
        %4519 = vmatprep.mubr.f32.mxu0 0.0
        %v4520 = vand.u32 %v678, 4294901760
        %4521 = vmatmul.mubr.f32.gmra.mrb[0].mxu0 %v4520
        %v4522 = vpop.f32.mrb[0].mxu0
        %v4523 = vadd.f32 %v3974, %v4522
        %v4524 = vpop.f32.mrb[0].mxu0
        %4525 = vmatprep.mubr.f32.mxu0 0.0
        %v4526 = vand.u32 %v681, 4294901760
        %4527 = vmatmul.mubr.f32.gmra.mrb[0].mxu0 %v4526
        %v4528 = vpop.f32.mrb[0].mxu0
        %v4529 = vadd.f32 %v3980, %v4528
        %v4530 = vpop.f32.mrb[0].mxu0
        %4531 = vmatprep.mubr.f32.mxu0 0.0
        %v4532 = vand.u32 %v684, 4294901760
        %4533 = vmatmul.mubr.f32.gmra.mrb[0].mxu0 %v4532
        %v4534 = vpop.f32.mrb[0].mxu0
        %v4535 = vadd.f32 %v3986, %v4534
        %v4536 = vpop.f32.mrb[0].mxu0
        %4537 = vmatprep.mubr.f32.mxu0 0.0
        %v4538 = vand.u32 %v687, 4294901760
        %4539 = vmatmul.mubr.f32.gmra.mrb[0].mxu0 %v4538
        %v4540 = vpop.f32.mrb[0].mxu0
        %v4541 = vadd.f32 %v3992, %v4540
        %v4542 = vpop.f32.mrb[0].mxu0
        %4543 = vmatprep.mubr.f32.mxu0 0.0
        %v4544 = vand.u32 %v690, 4294901760
        %4545 = vmatmul.mubr.f32.gmra.mrb[0].mxu0 %v4544
        %v4546 = vpop.f32.mrb[0].mxu0
        %v4547 = vadd.f32 %v3998, %v4546
        %v4548 = vpop.f32.mrb[0].mxu0
        %4549 = vmatprep.mubr.f32.mxu0 0.0
        %v4550 = vand.u32 %v693, 4294901760
        %4551 = vmatmul.mubr.f32.gmra.mrb[0].mxu0 %v4550
        %v4552 = vpop.f32.mrb[0].mxu0
        %v4553 = vadd.f32 %v4004, %v4552
        %v4554 = vpop.f32.mrb[0].mxu0
        %4555 = vmatprep.mubr.f32.mxu0 0.0
        %v4556 = vand.u32 %v696, 4294901760
        %4557 = vmatmul.mubr.f32.gmra.mrb[0].mxu0 %v4556
        %v4558 = vpop.f32.mrb[0].mxu0
        %v4559 = vadd.f32 %v4010, %v4558
        %v4560 = vpop.f32.mrb[0].mxu0
        %4561 = vmatprep.mubr.f32.mxu0 0.0
        %v4562 = vand.u32 %v699, 4294901760
        %4563 = vmatmul.mubr.f32.gmra.mrb[0].mxu0 %v4562
        %v4564 = vpop.f32.mrb[0].mxu0
        %v4565 = vadd.f32 %v4016, %v4564
        %v4566 = vpop.f32.mrb[0].mxu0
        %4567 = vmatprep.mubr.f32.mxu0 0.0
        %v4568 = vand.u32 %v702, 4294901760
        %4569 = vmatmul.mubr.f32.gmra.mrb[0].mxu0 %v4568
        %v4570 = vpop.f32.mrb[0].mxu0
        %v4571 = vadd.f32 %v4022, %v4570
        %v4572 = vpop.f32.mrb[0].mxu0
        %4573 = vmatprep.mubr.f32.mxu0 0.0
        %v4574 = vand.u32 %v705, 4294901760
        %4575 = vmatmul.mubr.f32.gmra.mrb[0].mxu0 %v4574
        %v4576 = vpop.f32.mrb[0].mxu0
        %v4577 = vadd.f32 %v4028, %v4576
        %v4578 = vpop.f32.mrb[0].mxu0
        %4579 = vmatprep.mubr.f32.mxu0 0.0
        %v4580 = vand.u32 %v708, 4294901760
        %4581 = vmatmul.mubr.f32.gmra.mrb[0].mxu0 %v4580
        %v4582 = vpop.f32.mrb[0].mxu0
        %v4583 = vadd.f32 %v4034, %v4582
        %v4584 = vpop.f32.mrb[0].mxu0
        %4585 = vmatprep.mubr.f32.mxu0 0.0
        %v4586 = vand.u32 %v711, 4294901760
        %4587 = vmatmul.mubr.f32.gmra.mrb[0].mxu0 %v4586
        %v4588 = vpop.f32.mrb[0].mxu0
        %v4589 = vadd.f32 %v4040, %v4588
        %v4590 = vpop.f32.mrb[0].mxu0
        %4591 = vmatprep.mubr.f32.mxu0 0.0
        %v4592 = vand.u32 %v714, 4294901760
        %4593 = vmatmul.mubr.f32.gmra.mrb[0].mxu0 %v4592
        %v4594 = vpop.f32.mrb[0].mxu0
        %v4595 = vadd.f32 %v4046, %v4594
        %v4596 = vpop.f32.mrb[0].mxu0
        %4597 = vdwg.mxu0
        %4602 = vrot.lane.b32.xlu0 %v4145, 22
        %v4603 = vpop.permute.xlu0 %4602
        %4604 = vrot.lane.b32.xlu0 %v4151, 22
        %v4605 = vpop.permute.xlu0 %4604
        %4606 = vrot.lane.b32.xlu0 %v4157, 22
        %v4607 = vpop.permute.xlu0 %4606
        %4608 = vrot.lane.b32.xlu0 %v4163, 22
        %v4609 = vpop.permute.xlu0 %4608
        %4618 = vrot.lane.b32.xlu0 %v4169, 44
        %v4619 = vpop.permute.xlu0 %4618
        %4620 = vrot.lane.b32.xlu0 %v4175, 44
        %v4621 = vpop.permute.xlu0 %4620
        %4622 = vrot.lane.b32.xlu0 %v4181, 44
        %v4623 = vpop.permute.xlu0 %4622
        %4624 = vrot.lane.b32.xlu0 %v4187, 44
        %v4625 = vpop.permute.xlu0 %4624
        %4634 = vrot.lane.b32.xlu0 %v4193, 66
        %v4635 = vpop.permute.xlu0 %4634
        %4636 = vrot.lane.b32.xlu0 %v4199, 66
        %v4637 = vpop.permute.xlu0 %4636
        %4638 = vrot.lane.b32.xlu0 %v4205, 66
        %v4639 = vpop.permute.xlu0 %4638
        %4640 = vrot.lane.b32.xlu0 %v4211, 66
        %v4641 = vpop.permute.xlu0 %4640
        %4650 = vrot.lane.b32.xlu0 %v4217, 88
        %v4651 = vpop.permute.xlu0 %4650
        %4652 = vrot.lane.b32.xlu0 %v4223, 88
        %v4653 = vpop.permute.xlu0 %4652
        %4654 = vrot.lane.b32.xlu0 %v4229, 88
        %v4655 = vpop.permute.xlu0 %4654
        %4656 = vrot.lane.b32.xlu0 %v4235, 88
        %v4657 = vpop.permute.xlu0 %4656
        %4666 = vrot.lane.b32.xlu0 %v4241, 110
        %v4667 = vpop.permute.xlu0 %4666
        %4668 = vrot.lane.b32.xlu0 %v4247, 110
        %v4669 = vpop.permute.xlu0 %4668
        %4670 = vrot.lane.b32.xlu0 %v4253, 110
        %v4671 = vpop.permute.xlu0 %4670
        %4672 = vrot.lane.b32.xlu0 %v4259, 110
        %v4673 = vpop.permute.xlu0 %4672
        %4682 = vrot.lane.b32.xlu0 %v4265, 4
        %v4683 = vpop.permute.xlu0 %4682
        %4684 = vrot.lane.b32.xlu0 %v4271, 4
        %v4685 = vpop.permute.xlu0 %4684
        %4686 = vrot.lane.b32.xlu0 %v4277, 4
        %v4687 = vpop.permute.xlu0 %4686
        %4688 = vrot.lane.b32.xlu0 %v4283, 4
        %v4689 = vpop.permute.xlu0 %4688
        %4698 = vrot.lane.b32.xlu0 %v4289, 26
        %v4699 = vpop.permute.xlu0 %4698
        %4700 = vrot.lane.b32.xlu0 %v4295, 26
        %v4701 = vpop.permute.xlu0 %4700
        %4702 = vrot.lane.b32.xlu0 %v4301, 26
        %v4703 = vpop.permute.xlu0 %4702
        %4704 = vrot.lane.b32.xlu0 %v4307, 26
        %v4705 = vpop.permute.xlu0 %4704
        %4714 = vrot.lane.b32.xlu0 %v4313, 48
        %v4715 = vpop.permute.xlu0 %4714
        %4716 = vrot.lane.b32.xlu0 %v4319, 48
        %v4717 = vpop.permute.xlu0 %4716
        %4718 = vrot.lane.b32.xlu0 %v4325, 48
        %v4719 = vpop.permute.xlu0 %4718
        %4720 = vrot.lane.b32.xlu0 %v4331, 48
        %v4721 = vpop.permute.xlu0 %4720
        %4730 = vrot.lane.b32.xlu0 %v4337, 70
        %v4731 = vpop.permute.xlu0 %4730
        %4732 = vrot.lane.b32.xlu0 %v4343, 70
        %v4733 = vpop.permute.xlu0 %4732
        %4734 = vrot.lane.b32.xlu0 %v4349, 70
        %v4735 = vpop.permute.xlu0 %4734
        %4736 = vrot.lane.b32.xlu0 %v4355, 70
        %v4737 = vpop.permute.xlu0 %4736
        %4746 = vrot.lane.b32.xlu0 %v4361, 92
        %v4747 = vpop.permute.xlu0 %4746
        %4748 = vrot.lane.b32.xlu0 %v4367, 92
        %v4749 = vpop.permute.xlu0 %4748
        %4750 = vrot.lane.b32.xlu0 %v4373, 92
        %v4751 = vpop.permute.xlu0 %4750
        %4752 = vrot.lane.b32.xlu0 %v4379, 92
        %v4753 = vpop.permute.xlu0 %4752
        %4762 = vrot.lane.b32.xlu0 %v4385, 114
        %v4763 = vpop.permute.xlu0 %4762
        %4764 = vrot.lane.b32.xlu0 %v4391, 114
        %v4765 = vpop.permute.xlu0 %4764
        %4766 = vrot.lane.b32.xlu0 %v4397, 114
        %v4767 = vpop.permute.xlu0 %4766
        %4768 = vrot.lane.b32.xlu0 %v4403, 114
        %v4769 = vpop.permute.xlu0 %4768
        %4778 = vrot.lane.b32.xlu0 %v4409, 8
        %v4779 = vpop.permute.xlu0 %4778
        %4780 = vrot.lane.b32.xlu0 %v4415, 8
        %v4781 = vpop.permute.xlu0 %4780
        %4782 = vrot.lane.b32.xlu0 %v4421, 8
        %v4783 = vpop.permute.xlu0 %4782
        %4784 = vrot.lane.b32.xlu0 %v4427, 8
        %v4785 = vpop.permute.xlu0 %4784
        %4794 = vrot.lane.b32.xlu0 %v4433, 30
        %v4795 = vpop.permute.xlu0 %4794
        %4796 = vrot.lane.b32.xlu0 %v4439, 30
        %v4797 = vpop.permute.xlu0 %4796
        %4798 = vrot.lane.b32.xlu0 %v4445, 30
        %v4799 = vpop.permute.xlu0 %4798
        %4800 = vrot.lane.b32.xlu0 %v4451, 30
        %v4801 = vpop.permute.xlu0 %4800
        %4810 = vrot.lane.b32.xlu0 %v4457, 52
        %v4811 = vpop.permute.xlu0 %4810
        %4812 = vrot.lane.b32.xlu0 %v4463, 52
        %v4813 = vpop.permute.xlu0 %4812
        %4814 = vrot.lane.b32.xlu0 %v4469, 52
        %v4815 = vpop.permute.xlu0 %4814
        %4816 = vrot.lane.b32.xlu0 %v4475, 52
        %v4817 = vpop.permute.xlu0 %4816
        %4826 = vrot.lane.b32.xlu0 %v4481, 74
        %v4827 = vpop.permute.xlu0 %4826
        %4828 = vrot.lane.b32.xlu0 %v4487, 74
        %v4829 = vpop.permute.xlu0 %4828
        %4830 = vrot.lane.b32.xlu0 %v4493, 74
        %v4831 = vpop.permute.xlu0 %4830
        %4832 = vrot.lane.b32.xlu0 %v4499, 74
        %v4833 = vpop.permute.xlu0 %4832
        %vm4838 = vcmask 179200
        %v4839 = vsel %vm4838, %v4121, %v4603
        %v4840 = vsel %vm4838, %v4127, %v4605
        %v4841 = vsel %vm4838, %v4133, %v4607
        %v4842 = vsel %vm4838, %v4139, %v4609
        %vm4843 = vcmask 359424
        %v4844 = vsel %vm4843, %v4839, %v4619
        %v4845 = vsel %vm4843, %v4840, %v4621
        %v4846 = vsel %vm4843, %v4841, %v4623
        %v4847 = vsel %vm4843, %v4842, %v4625
        %vm4848 = vcmask 539648
        %v4849 = vsel %vm4848, %v4844, %v4635
        %v4850 = vsel %vm4848, %v4845, %v4637
        %v4851 = vsel %vm4848, %v4846, %v4639
        %v4852 = vsel %vm4848, %v4847, %v4641
        %vm4853 = vcmask 719872
        %v4854 = vsel %vm4853, %v4849, %v4651
        %v4855 = vsel %vm4853, %v4850, %v4653
        %v4856 = vsel %vm4853, %v4851, %v4655
        %v4857 = vsel %vm4853, %v4852, %v4657
        %vm4858 = vcmask 900096
        %v4859 = vsel %vm4858, %v4854, %v4667
        %v4860 = vsel %vm4858, %v4855, %v4669
        %v4861 = vsel %vm4858, %v4856, %v4671
        %v4862 = vsel %vm4858, %v4857, %v4673
        %vm4863 = vcmask 31744
        %v4864 = vsel %vm4863, %v4667, %v4683
        %v4865 = vsel %vm4863, %v4669, %v4685
        %v4866 = vsel %vm4863, %v4671, %v4687
        %v4867 = vsel %vm4863, %v4673, %v4689
        %vm4868 = vcmask 211968
        %v4869 = vsel %vm4868, %v4864, %v4699
        %v4870 = vsel %vm4868, %v4865, %v4701
        %v4871 = vsel %vm4868, %v4866, %v4703
        %v4872 = vsel %vm4868, %v4867, %v4705
        %vm4873 = vcmask 392192
        %v4874 = vsel %vm4873, %v4869, %v4715
        %v4875 = vsel %vm4873, %v4870, %v4717
        %v4876 = vsel %vm4873, %v4871, %v4719
        %v4877 = vsel %vm4873, %v4872, %v4721
        %vm4878 = vcmask 572416
        %v4879 = vsel %vm4878, %v4874, %v4731
        %v4880 = vsel %vm4878, %v4875, %v4733
        %v4881 = vsel %vm4878, %v4876, %v4735
        %v4882 = vsel %vm4878, %v4877, %v4737
        %vm4883 = vcmask 752640
        %v4884 = vsel %vm4883, %v4879, %v4747
        %v4885 = vsel %vm4883, %v4880, %v4749
        %v4886 = vsel %vm4883, %v4881, %v4751
        %v4887 = vsel %vm4883, %v4882, %v4753
        %vm4888 = vcmask 932864
        %v4889 = vsel %vm4888, %v4884, %v4763
        %v4890 = vsel %vm4888, %v4885, %v4765
        %v4891 = vsel %vm4888, %v4886, %v4767
        %v4892 = vsel %vm4888, %v4887, %v4769
        %vm4893 = vcmask 64512
        %v4894 = vsel %vm4893, %v4763, %v4779
        %v4895 = vsel %vm4893, %v4765, %v4781
        %v4896 = vsel %vm4893, %v4767, %v4783
        %v4897 = vsel %vm4893, %v4769, %v4785
        %vm4898 = vcmask 244736
        %v4899 = vsel %vm4898, %v4894, %v4795
        %v4900 = vsel %vm4898, %v4895, %v4797
        %v4901 = vsel %vm4898, %v4896, %v4799
        %v4902 = vsel %vm4898, %v4897, %v4801
        %vm4903 = vcmask 424960
        %v4904 = vsel %vm4903, %v4899, %v4811
        %v4905 = vsel %vm4903, %v4900, %v4813
        %v4906 = vsel %vm4903, %v4901, %v4815
        %v4907 = vsel %vm4903, %v4902, %v4817
        %vm4908 = vcmask 605184
        %v4909 = vsel %vm4908, %v4904, %v4827
        %v4910 = vsel %vm4908, %v4905, %v4829
        %v4911 = vsel %vm4908, %v4906, %v4831
        %v4912 = vsel %vm4908, %v4907, %v4833
        %4917 = vrot.lane.b32.xlu0 %v4529, 22
        %v4918 = vpop.permute.xlu0 %4917
        %4919 = vrot.lane.b32.xlu0 %v4535, 22
        %v4920 = vpop.permute.xlu0 %4919
        %4921 = vrot.lane.b32.xlu0 %v4541, 22
        %v4922 = vpop.permute.xlu0 %4921
        %4923 = vrot.lane.b32.xlu0 %v4547, 22
        %v4924 = vpop.permute.xlu0 %4923
        %4933 = vrot.lane.b32.xlu0 %v4553, 44
        %v4934 = vpop.permute.xlu0 %4933
        %4935 = vrot.lane.b32.xlu0 %v4559, 44
        %v4936 = vpop.permute.xlu0 %4935
        %4937 = vrot.lane.b32.xlu0 %v4565, 44
        %v4938 = vpop.permute.xlu0 %4937
        %4939 = vrot.lane.b32.xlu0 %v4571, 44
        %v4940 = vpop.permute.xlu0 %4939
        %4949 = vrot.lane.b32.xlu0 %v4577, 66
        %v4950 = vpop.permute.xlu0 %4949
        %4951 = vrot.lane.b32.xlu0 %v4583, 66
        %v4952 = vpop.permute.xlu0 %4951
        %4953 = vrot.lane.b32.xlu0 %v4589, 66
        %v4954 = vpop.permute.xlu0 %4953
        %4955 = vrot.lane.b32.xlu0 %v4595, 66
        %v4956 = vpop.permute.xlu0 %4955
        %v4961 = vsel %vm4838, %v4505, %v4918
        %v4962 = vsel %vm4838, %v4511, %v4920
        %v4963 = vsel %vm4838, %v4517, %v4922
        %v4964 = vsel %vm4838, %v4523, %v4924
        %v4965 = vsel %vm4843, %v4961, %v4934
        %v4966 = vsel %vm4843, %v4962, %v4936
        %v4967 = vsel %vm4843, %v4963, %v4938
        %v4968 = vsel %vm4843, %v4964, %v4940
        %v4969 = vsel %vm4848, %v4965, %v4950
        %v4970 = vsel %vm4848, %v4966, %v4952
        %v4971 = vsel %vm4848, %v4967, %v4954
        %v4972 = vsel %vm4848, %v4968, %v4956
        %4977 = vrot.lane.b32.xlu0 %v4969, 96
        %v4978 = vpop.permute.xlu0 %4977
        %4979 = vrot.lane.b32.xlu0 %v4970, 96
        %v4980 = vpop.permute.xlu0 %4979
        %4981 = vrot.lane.b32.xlu0 %v4971, 96
        %v4982 = vpop.permute.xlu0 %4981
        %4983 = vrot.lane.b32.xlu0 %v4972, 96
        %v4984 = vpop.permute.xlu0 %4983
        %vm4989 = vcmask 785408
        %v4990 = vsel %vm4989, %v4909, %v4978
        %v4991 = vsel %vm4989, %v4910, %v4980
        %v4992 = vsel %vm4989, %v4911, %v4982
        %v4993 = vsel %vm4989, %v4912, %v4984
        %v4995 = vsel %vm475, %v424, 0
        %v4998 = vsel %vm475, %v425, 0
        %v5001 = vsel %vm475, %v426, 0
        %v5003 = vand.u32 %v4889, 4294901760
        %5004 = vmatprep.subr.mxu0 %v5003
        %v5005 = vand.u32 %v4859, 4294901760
        %5006 = vmatpush1.msra.mxu0 %v5005
        %v5007 = vand.u32 %v4890, 4294901760
        %5008 = vmatprep.subr.mxu0 %v5007
        %v5009 = vand.u32 %v4860, 4294901760
        %5010 = vmatpush1.msra.mxu0 %v5009
        %v5011 = vand.u32 %v4891, 4294901760
        %5012 = vmatprep.subr.mxu0 %v5011
        %v5013 = vand.u32 %v4861, 4294901760
        %5014 = vmatpush1.msra.mxu0 %v5013
        %v5015 = vand.u32 %v4892, 4294901760
        %5016 = vmatprep.subr.mxu0 %v5015
        %v5017 = vand.u32 %v4862, 4294901760
        %5018 = vmatpush1.msra.mxu0 %v5017
        %5019 = vmatprep.subr.mxu0 0.0
        %5020 = vmatpush1.msra.mxu0 0.0
        %5021 = vmatprep.subr.mxu0 0.0
        %5022 = vmatpush1.msra.mxu0 0.0
        %5023 = vmatprep.subr.mxu0 0.0
        %5024 = vmatpush1.msra.mxu0 0.0
        %5025 = vmatprep.subr.mxu0 0.0
        %5026 = vmatpush1.msra.mxu0 0.0
        %5027 = vmatprep.subr.mxu0 0.0
        %5028 = vmatpush1.msra.mxu0 0.0
        %5029 = vmatprep.subr.mxu0 0.0
        %5030 = vmatpush1.msra.mxu0 0.0
        %5031 = vmatprep.subr.mxu0 0.0
        %5032 = vmatpush1.msra.mxu0 0.0
        %5033 = vmatprep.subr.mxu0 0.0
        %5034 = vmatpush1.msra.mxu0 0.0
        %5035 = vmatprep.subr.mxu0 0.0
        %5036 = vmatpush1.msra.mxu0 0.0
        %5037 = vmatprep.subr.mxu0 0.0
        %5038 = vmatpush1.msra.mxu0 0.0
        %5039 = vmatprep.subr.mxu0 0.0
        %5040 = vmatpush1.msra.mxu0 0.0
        %5041 = vmatprep.subr.mxu0 0.0
        %5042 = vmatpush1.msra.mxu0 0.0
        %5043 = vmatprep.subr.mxu0 0.0
        %5044 = vmatpush1.msra.mxu0 0.0
        %5045 = vmatprep.subr.mxu0 0.0
        %5046 = vmatpush1.msra.mxu0 0.0
        %5047 = vmatprep.subr.mxu0 0.0
        %5048 = vmatpush1.msra.mxu0 0.0
        %5049 = vmatprep.subr.mxu0 0.0
        %5050 = vmatpush1.msra.mxu0 0.0
        %5051 = vmatprep.subr.mxu0 0.0
        %5052 = vmatpush1.msra.mxu0 0.0
        %5053 = vmatprep.subr.mxu0 0.0
        %5054 = vmatpush1.msra.mxu0 0.0
        %5055 = vmatprep.subr.mxu0 0.0
        %5056 = vmatpush1.msra.mxu0 0.0
        %5057 = vmatprep.subr.mxu0 0.0
        %5058 = vmatpush1.msra.mxu0 0.0
        %5059 = vmatprep.subr.mxu0 0.0
        %5060 = vmatpush1.msra.mxu0 0.0
        %5061 = vmatprep.subr.mxu0 0.0
        %5062 = vmatpush1.msra.mxu0 0.0
        %5063 = vmatprep.subr.mxu0 0.0
        %5064 = vmatpush1.msra.mxu0 0.0
        %5065 = vmatprep.subr.mxu0 0.0
        %5066 = vmatpush1.msra.mxu0 0.0
        %5067 = vmatprep.subr.mxu0 0.0
        %5068 = vmatpush1.msra.mxu0 0.0
        %5069 = vmatprep.subr.mxu0 0.0
        %5070 = vmatpush1.msra.mxu0 0.0
        %5071 = vmatprep.subr.mxu0 0.0
        %5072 = vmatpush1.msra.mxu0 0.0
        %5073 = vmatprep.subr.mxu0 0.0
        %5074 = vmatpush1.msra.mxu0 0.0
        %5075 = vmatprep.mubr.f32.mxu0 0.0
        %v5076 = vand.u32 %v4995, 4294901760
        %v5077 = vsub.f32 %v4995, %v5076
        %v5078 = vand.u32 %v5077, 4294901760
        %v5079 = vsub.f32 %v5077, %v5078
        %v5080 = vand.u32 %v5079, 4294901760
        %5081 = vmatmul.mubr.f32.gmra.mrb[0].mxu0 %v5080
        %v5082 = vpop.f32.mrb[0].mxu0
        %v5083 = vadd.f32 0.0, %v5082
        %v5084 = vpop.f32.mrb[0].mxu0
        %v5085 = vadd.f32 0.0, %v5084
        %5086 = vmatprep.mubr.f32.mxu0 0.0
        %v5087 = vand.u32 %v4998, 4294901760
        %v5088 = vsub.f32 %v4998, %v5087
        %v5089 = vand.u32 %v5088, 4294901760
        %v5090 = vsub.f32 %v5088, %v5089
        %v5091 = vand.u32 %v5090, 4294901760
        %5092 = vmatmul.mubr.f32.gmra.mrb[0].mxu0 %v5091
        %v5093 = vpop.f32.mrb[0].mxu0
        %v5094 = vadd.f32 0.0, %v5093
        %v5095 = vpop.f32.mrb[0].mxu0
        %v5096 = vadd.f32 0.0, %v5095
        %5097 = vmatprep.mubr.f32.mxu0 0.0
        %v5098 = vand.u32 %v5001, 4294901760
        %v5099 = vsub.f32 %v5001, %v5098
        %v5100 = vand.u32 %v5099, 4294901760
        %v5101 = vsub.f32 %v5099, %v5100
        %v5102 = vand.u32 %v5101, 4294901760
        %5103 = vmatmul.mubr.f32.gmra.mrb[0].mxu0 %v5102
        %v5104 = vpop.f32.mrb[0].mxu0
        %v5105 = vadd.f32 0.0, %v5104
        %v5106 = vpop.f32.mrb[0].mxu0
        %v5107 = vadd.f32 0.0, %v5106
        %5108 = vdwg.mxu0
        %v5109 = vand.u32 %v4889, 4294901760
        %v5110 = vsub.f32 %v4889, %v5109
        %v5111 = vand.u32 %v5110, 4294901760
        %v5112 = vsub.f32 %v5110, %v5111
        %v5113 = vand.u32 %v5112, 4294901760
        %5114 = vmatprep.subr.mxu0 %v5113
        %v5115 = vand.u32 %v4859, 4294901760
        %v5116 = vsub.f32 %v4859, %v5115
        %v5117 = vand.u32 %v5116, 4294901760
        %v5118 = vsub.f32 %v5116, %v5117
        %v5119 = vand.u32 %v5118, 4294901760
        %5120 = vmatpush1.msra.mxu0 %v5119
        %v5121 = vand.u32 %v4890, 4294901760
        %v5122 = vsub.f32 %v4890, %v5121
        %v5123 = vand.u32 %v5122, 4294901760
        %v5124 = vsub.f32 %v5122, %v5123
        %v5125 = vand.u32 %v5124, 4294901760
        %5126 = vmatprep.subr.mxu0 %v5125
        %v5127 = vand.u32 %v4860, 4294901760
        %v5128 = vsub.f32 %v4860, %v5127
        %v5129 = vand.u32 %v5128, 4294901760
        %v5130 = vsub.f32 %v5128, %v5129
        %v5131 = vand.u32 %v5130, 4294901760
        %5132 = vmatpush1.msra.mxu0 %v5131
        %v5133 = vand.u32 %v4891, 4294901760
        %v5134 = vsub.f32 %v4891, %v5133
        %v5135 = vand.u32 %v5134, 4294901760
        %v5136 = vsub.f32 %v5134, %v5135
        %v5137 = vand.u32 %v5136, 4294901760
        %5138 = vmatprep.subr.mxu0 %v5137
        %v5139 = vand.u32 %v4861, 4294901760
        %v5140 = vsub.f32 %v4861, %v5139
        %v5141 = vand.u32 %v5140, 4294901760
        %v5142 = vsub.f32 %v5140, %v5141
        %v5143 = vand.u32 %v5142, 4294901760
        %5144 = vmatpush1.msra.mxu0 %v5143
        %v5145 = vand.u32 %v4892, 4294901760
        %v5146 = vsub.f32 %v4892, %v5145
        %v5147 = vand.u32 %v5146, 4294901760
        %v5148 = vsub.f32 %v5146, %v5147
        %v5149 = vand.u32 %v5148, 4294901760
        %5150 = vmatprep.subr.mxu0 %v5149
        %v5151 = vand.u32 %v4862, 4294901760
        %v5152 = vsub.f32 %v4862, %v5151
        %v5153 = vand.u32 %v5152, 4294901760
        %v5154 = vsub.f32 %v5152, %v5153
        %v5155 = vand.u32 %v5154, 4294901760
        %5156 = vmatpush1.msra.mxu0 %v5155
        %5157 = vmatprep.subr.mxu0 0.0
        %5158 = vmatpush1.msra.mxu0 0.0
        %5159 = vmatprep.subr.mxu0 0.0
        %5160 = vmatpush1.msra.mxu0 0.0
        %5161 = vmatprep.subr.mxu0 0.0
        %5162 = vmatpush1.msra.mxu0 0.0
        %5163 = vmatprep.subr.mxu0 0.0
        %5164 = vmatpush1.msra.mxu0 0.0
        %5165 = vmatprep.subr.mxu0 0.0
        %5166 = vmatpush1.msra.mxu0 0.0
        %5167 = vmatprep.subr.mxu0 0.0
        %5168 = vmatpush1.msra.mxu0 0.0
        %5169 = vmatprep.subr.mxu0 0.0
        %5170 = vmatpush1.msra.mxu0 0.0
        %5171 = vmatprep.subr.mxu0 0.0
        %5172 = vmatpush1.msra.mxu0 0.0
        %5173 = vmatprep.subr.mxu0 0.0
        %5174 = vmatpush1.msra.mxu0 0.0
        %5175 = vmatprep.subr.mxu0 0.0
        %5176 = vmatpush1.msra.mxu0 0.0
        %5177 = vmatprep.subr.mxu0 0.0
        %5178 = vmatpush1.msra.mxu0 0.0
        %5179 = vmatprep.subr.mxu0 0.0
        %5180 = vmatpush1.msra.mxu0 0.0
        %5181 = vmatprep.subr.mxu0 0.0
        %5182 = vmatpush1.msra.mxu0 0.0
        %5183 = vmatprep.subr.mxu0 0.0
        %5184 = vmatpush1.msra.mxu0 0.0
        %5185 = vmatprep.subr.mxu0 0.0
        %5186 = vmatpush1.msra.mxu0 0.0
        %5187 = vmatprep.subr.mxu0 0.0
        %5188 = vmatpush1.msra.mxu0 0.0
        %5189 = vmatprep.subr.mxu0 0.0
        %5190 = vmatpush1.msra.mxu0 0.0
        %5191 = vmatprep.subr.mxu0 0.0
        %5192 = vmatpush1.msra.mxu0 0.0
        %5193 = vmatprep.subr.mxu0 0.0
        %5194 = vmatpush1.msra.mxu0 0.0
        %5195 = vmatprep.subr.mxu0 0.0
        %5196 = vmatpush1.msra.mxu0 0.0
        %5197 = vmatprep.subr.mxu0 0.0
        %5198 = vmatpush1.msra.mxu0 0.0
        %5199 = vmatprep.subr.mxu0 0.0
        %5200 = vmatpush1.msra.mxu0 0.0
        %5201 = vmatprep.subr.mxu0 0.0
        %5202 = vmatpush1.msra.mxu0 0.0
        %5203 = vmatprep.subr.mxu0 0.0
        %5204 = vmatpush1.msra.mxu0 0.0
        %5205 = vmatprep.subr.mxu0 0.0
        %5206 = vmatpush1.msra.mxu0 0.0
        %5207 = vmatprep.subr.mxu0 0.0
        %5208 = vmatpush1.msra.mxu0 0.0
        %5209 = vmatprep.subr.mxu0 0.0
        %5210 = vmatpush1.msra.mxu0 0.0
        %5211 = vmatprep.subr.mxu0 0.0
        %5212 = vmatpush1.msra.mxu0 0.0
        %5213 = vmatprep.mubr.f32.mxu0 0.0
        %v5214 = vand.u32 %v4995, 4294901760
        %5215 = vmatmul.mubr.f32.gmra.mrb[0].mxu0 %v5214
        %v5216 = vpop.f32.mrb[0].mxu0
        %v5217 = vadd.f32 %v5083, %v5216
        %v5218 = vpop.f32.mrb[0].mxu0
        %v5219 = vadd.f32 %v5085, %v5218
        %5220 = vmatprep.mubr.f32.mxu0 0.0
        %v5221 = vand.u32 %v4998, 4294901760
        %5222 = vmatmul.mubr.f32.gmra.mrb[0].mxu0 %v5221
        %v5223 = vpop.f32.mrb[0].mxu0
        %v5224 = vadd.f32 %v5094, %v5223
        %v5225 = vpop.f32.mrb[0].mxu0
        %v5226 = vadd.f32 %v5096, %v5225
        %5227 = vmatprep.mubr.f32.mxu0 0.0
        %v5228 = vand.u32 %v5001, 4294901760
        %5229 = vmatmul.mubr.f32.gmra.mrb[0].mxu0 %v5228
        %v5230 = vpop.f32.mrb[0].mxu0
        %v5231 = vadd.f32 %v5105, %v5230
        %v5232 = vpop.f32.mrb[0].mxu0
        %v5233 = vadd.f32 %v5107, %v5232
        %5234 = vdwg.mxu0
        %v5235 = vand.u32 %v4889, 4294901760
        %v5236 = vsub.f32 %v4889, %v5235
        %5237 = vmatprep.subr.mxu0 %v5236
        %v5238 = vand.u32 %v4859, 4294901760
        %v5239 = vsub.f32 %v4859, %v5238
        %5240 = vmatpush1.msra.mxu0 %v5239
        %v5241 = vand.u32 %v4890, 4294901760
        %v5242 = vsub.f32 %v4890, %v5241
        %5243 = vmatprep.subr.mxu0 %v5242
        %v5244 = vand.u32 %v4860, 4294901760
        %v5245 = vsub.f32 %v4860, %v5244
        %5246 = vmatpush1.msra.mxu0 %v5245
        %v5247 = vand.u32 %v4891, 4294901760
        %v5248 = vsub.f32 %v4891, %v5247
        %5249 = vmatprep.subr.mxu0 %v5248
        %v5250 = vand.u32 %v4861, 4294901760
        %v5251 = vsub.f32 %v4861, %v5250
        %5252 = vmatpush1.msra.mxu0 %v5251
        %v5253 = vand.u32 %v4892, 4294901760
        %v5254 = vsub.f32 %v4892, %v5253
        %5255 = vmatprep.subr.mxu0 %v5254
        %v5256 = vand.u32 %v4862, 4294901760
        %v5257 = vsub.f32 %v4862, %v5256
        %5258 = vmatpush1.msra.mxu0 %v5257
        %5259 = vmatprep.subr.mxu0 0.0
        %5260 = vmatpush1.msra.mxu0 0.0
        %5261 = vmatprep.subr.mxu0 0.0
        %5262 = vmatpush1.msra.mxu0 0.0
        %5263 = vmatprep.subr.mxu0 0.0
        %5264 = vmatpush1.msra.mxu0 0.0
        %5265 = vmatprep.subr.mxu0 0.0
        %5266 = vmatpush1.msra.mxu0 0.0
        %5267 = vmatprep.subr.mxu0 0.0
        %5268 = vmatpush1.msra.mxu0 0.0
        %5269 = vmatprep.subr.mxu0 0.0
        %5270 = vmatpush1.msra.mxu0 0.0
        %5271 = vmatprep.subr.mxu0 0.0
        %5272 = vmatpush1.msra.mxu0 0.0
        %5273 = vmatprep.subr.mxu0 0.0
        %5274 = vmatpush1.msra.mxu0 0.0
        %5275 = vmatprep.subr.mxu0 0.0
        %5276 = vmatpush1.msra.mxu0 0.0
        %5277 = vmatprep.subr.mxu0 0.0
        %5278 = vmatpush1.msra.mxu0 0.0
        %5279 = vmatprep.subr.mxu0 0.0
        %5280 = vmatpush1.msra.mxu0 0.0
        %5281 = vmatprep.subr.mxu0 0.0
        %5282 = vmatpush1.msra.mxu0 0.0
        %5283 = vmatprep.subr.mxu0 0.0
        %5284 = vmatpush1.msra.mxu0 0.0
        %5285 = vmatprep.subr.mxu0 0.0
        %5286 = vmatpush1.msra.mxu0 0.0
        %5287 = vmatprep.subr.mxu0 0.0
        %5288 = vmatpush1.msra.mxu0 0.0
        %5289 = vmatprep.subr.mxu0 0.0
        %5290 = vmatpush1.msra.mxu0 0.0
        %5291 = vmatprep.subr.mxu0 0.0
        %5292 = vmatpush1.msra.mxu0 0.0
        %5293 = vmatprep.subr.mxu0 0.0
        %5294 = vmatpush1.msra.mxu0 0.0
        %5295 = vmatprep.subr.mxu0 0.0
        %5296 = vmatpush1.msra.mxu0 0.0
        %5297 = vmatprep.subr.mxu0 0.0
        %5298 = vmatpush1.msra.mxu0 0.0
        %5299 = vmatprep.subr.mxu0 0.0
        %5300 = vmatpush1.msra.mxu0 0.0
        %5301 = vmatprep.subr.mxu0 0.0
        %5302 = vmatpush1.msra.mxu0 0.0
        %5303 = vmatprep.subr.mxu0 0.0
        %5304 = vmatpush1.msra.mxu0 0.0
        %5305 = vmatprep.subr.mxu0 0.0
        %5306 = vmatpush1.msra.mxu0 0.0
        %5307 = vmatprep.subr.mxu0 0.0
        %5308 = vmatpush1.msra.mxu0 0.0
        %5309 = vmatprep.subr.mxu0 0.0
        %5310 = vmatpush1.msra.mxu0 0.0
        %5311 = vmatprep.subr.mxu0 0.0
        %5312 = vmatpush1.msra.mxu0 0.0
        %5313 = vmatprep.subr.mxu0 0.0
        %5314 = vmatpush1.msra.mxu0 0.0
        %5315 = vmatprep.mubr.f32.mxu0 0.0
        %v5316 = vand.u32 %v4995, 4294901760
        %v5317 = vsub.f32 %v4995, %v5316
        %5318 = vmatmul.mubr.f32.gmra.mrb[0].mxu0 %v5317
        %v5319 = vpop.f32.mrb[0].mxu0
        %v5320 = vadd.f32 %v5217, %v5319
        %v5321 = vpop.f32.mrb[0].mxu0
        %v5322 = vadd.f32 %v5219, %v5321
        %5323 = vmatprep.mubr.f32.mxu0 0.0
        %v5324 = vand.u32 %v4998, 4294901760
        %v5325 = vsub.f32 %v4998, %v5324
        %5326 = vmatmul.mubr.f32.gmra.mrb[0].mxu0 %v5325
        %v5327 = vpop.f32.mrb[0].mxu0
        %v5328 = vadd.f32 %v5224, %v5327
        %v5329 = vpop.f32.mrb[0].mxu0
        %v5330 = vadd.f32 %v5226, %v5329
        %5331 = vmatprep.mubr.f32.mxu0 0.0
        %v5332 = vand.u32 %v5001, 4294901760
        %v5333 = vsub.f32 %v5001, %v5332
        %5334 = vmatmul.mubr.f32.gmra.mrb[0].mxu0 %v5333
        %v5335 = vpop.f32.mrb[0].mxu0
        %v5336 = vadd.f32 %v5231, %v5335
        %v5337 = vpop.f32.mrb[0].mxu0
        %v5338 = vadd.f32 %v5233, %v5337
        %5339 = vdwg.mxu0
        %v5340 = vand.u32 %v4889, 4294901760
        %5341 = vmatprep.subr.mxu0 %v5340
        %v5342 = vand.u32 %v4859, 4294901760
        %5343 = vmatpush1.msra.mxu0 %v5342
        %v5344 = vand.u32 %v4890, 4294901760
        %5345 = vmatprep.subr.mxu0 %v5344
        %v5346 = vand.u32 %v4860, 4294901760
        %5347 = vmatpush1.msra.mxu0 %v5346
        %v5348 = vand.u32 %v4891, 4294901760
        %5349 = vmatprep.subr.mxu0 %v5348
        %v5350 = vand.u32 %v4861, 4294901760
        %5351 = vmatpush1.msra.mxu0 %v5350
        %v5352 = vand.u32 %v4892, 4294901760
        %5353 = vmatprep.subr.mxu0 %v5352
        %v5354 = vand.u32 %v4862, 4294901760
        %5355 = vmatpush1.msra.mxu0 %v5354
        %5356 = vmatprep.subr.mxu0 0.0
        %5357 = vmatpush1.msra.mxu0 0.0
        %5358 = vmatprep.subr.mxu0 0.0
        %5359 = vmatpush1.msra.mxu0 0.0
        %5360 = vmatprep.subr.mxu0 0.0
        %5361 = vmatpush1.msra.mxu0 0.0
        %5362 = vmatprep.subr.mxu0 0.0
        %5363 = vmatpush1.msra.mxu0 0.0
        %5364 = vmatprep.subr.mxu0 0.0
        %5365 = vmatpush1.msra.mxu0 0.0
        %5366 = vmatprep.subr.mxu0 0.0
        %5367 = vmatpush1.msra.mxu0 0.0
        %5368 = vmatprep.subr.mxu0 0.0
        %5369 = vmatpush1.msra.mxu0 0.0
        %5370 = vmatprep.subr.mxu0 0.0
        %5371 = vmatpush1.msra.mxu0 0.0
        %5372 = vmatprep.subr.mxu0 0.0
        %5373 = vmatpush1.msra.mxu0 0.0
        %5374 = vmatprep.subr.mxu0 0.0
        %5375 = vmatpush1.msra.mxu0 0.0
        %5376 = vmatprep.subr.mxu0 0.0
        %5377 = vmatpush1.msra.mxu0 0.0
        %5378 = vmatprep.subr.mxu0 0.0
        %5379 = vmatpush1.msra.mxu0 0.0
        %5380 = vmatprep.subr.mxu0 0.0
        %5381 = vmatpush1.msra.mxu0 0.0
        %5382 = vmatprep.subr.mxu0 0.0
        %5383 = vmatpush1.msra.mxu0 0.0
        %5384 = vmatprep.subr.mxu0 0.0
        %5385 = vmatpush1.msra.mxu0 0.0
        %5386 = vmatprep.subr.mxu0 0.0
        %5387 = vmatpush1.msra.mxu0 0.0
        %5388 = vmatprep.subr.mxu0 0.0
        %5389 = vmatpush1.msra.mxu0 0.0
        %5390 = vmatprep.subr.mxu0 0.0
        %5391 = vmatpush1.msra.mxu0 0.0
        %5392 = vmatprep.subr.mxu0 0.0
        %5393 = vmatpush1.msra.mxu0 0.0
        %5394 = vmatprep.subr.mxu0 0.0
        %5395 = vmatpush1.msra.mxu0 0.0
        %5396 = vmatprep.subr.mxu0 0.0
        %5397 = vmatpush1.msra.mxu0 0.0
        %5398 = vmatprep.subr.mxu0 0.0
        %5399 = vmatpush1.msra.mxu0 0.0
        %5400 = vmatprep.subr.mxu0 0.0
        %5401 = vmatpush1.msra.mxu0 0.0
        %5402 = vmatprep.subr.mxu0 0.0
        %5403 = vmatpush1.msra.mxu0 0.0
        %5404 = vmatprep.subr.mxu0 0.0
        %5405 = vmatpush1.msra.mxu0 0.0
        %5406 = vmatprep.subr.mxu0 0.0
        %5407 = vmatpush1.msra.mxu0 0.0
        %5408 = vmatprep.subr.mxu0 0.0
        %5409 = vmatpush1.msra.mxu0 0.0
        %5410 = vmatprep.subr.mxu0 0.0
        %5411 = vmatpush1.msra.mxu0 0.0
        %5412 = vmatprep.mubr.f32.mxu0 0.0
        %v5413 = vand.u32 %v4995, 4294901760
        %v5414 = vsub.f32 %v4995, %v5413
        %v5415 = vand.u32 %v5414, 4294901760
        %5416 = vmatmul.mubr.f32.gmra.mrb[0].mxu0 %v5415
        %v5417 = vpop.f32.mrb[0].mxu0
        %v5418 = vadd.f32 %v5320, %v5417
        %v5419 = vpop.f32.mrb[0].mxu0
        %v5420 = vadd.f32 %v5322, %v5419
        %5421 = vmatprep.mubr.f32.mxu0 0.0
        %v5422 = vand.u32 %v4998, 4294901760
        %v5423 = vsub.f32 %v4998, %v5422
        %v5424 = vand.u32 %v5423, 4294901760
        %5425 = vmatmul.mubr.f32.gmra.mrb[0].mxu0 %v5424
        %v5426 = vpop.f32.mrb[0].mxu0
        %v5427 = vadd.f32 %v5328, %v5426
        %v5428 = vpop.f32.mrb[0].mxu0
        %v5429 = vadd.f32 %v5330, %v5428
        %5430 = vmatprep.mubr.f32.mxu0 0.0
        %v5431 = vand.u32 %v5001, 4294901760
        %v5432 = vsub.f32 %v5001, %v5431
        %v5433 = vand.u32 %v5432, 4294901760
        %5434 = vmatmul.mubr.f32.gmra.mrb[0].mxu0 %v5433
        %v5435 = vpop.f32.mrb[0].mxu0
        %v5436 = vadd.f32 %v5336, %v5435
        %v5437 = vpop.f32.mrb[0].mxu0
        %v5438 = vadd.f32 %v5338, %v5437
        %5439 = vdwg.mxu0
        %v5440 = vand.u32 %v4889, 4294901760
        %v5441 = vsub.f32 %v4889, %v5440
        %v5442 = vand.u32 %v5441, 4294901760
        %5443 = vmatprep.subr.mxu0 %v5442
        %v5444 = vand.u32 %v4859, 4294901760
        %v5445 = vsub.f32 %v4859, %v5444
        %v5446 = vand.u32 %v5445, 4294901760
        %5447 = vmatpush1.msra.mxu0 %v5446
        %v5448 = vand.u32 %v4890, 4294901760
        %v5449 = vsub.f32 %v4890, %v5448
        %v5450 = vand.u32 %v5449, 4294901760
        %5451 = vmatprep.subr.mxu0 %v5450
        %v5452 = vand.u32 %v4860, 4294901760
        %v5453 = vsub.f32 %v4860, %v5452
        %v5454 = vand.u32 %v5453, 4294901760
        %5455 = vmatpush1.msra.mxu0 %v5454
        %v5456 = vand.u32 %v4891, 4294901760
        %v5457 = vsub.f32 %v4891, %v5456
        %v5458 = vand.u32 %v5457, 4294901760
        %5459 = vmatprep.subr.mxu0 %v5458
        %v5460 = vand.u32 %v4861, 4294901760
        %v5461 = vsub.f32 %v4861, %v5460
        %v5462 = vand.u32 %v5461, 4294901760
        %5463 = vmatpush1.msra.mxu0 %v5462
        %v5464 = vand.u32 %v4892, 4294901760
        %v5465 = vsub.f32 %v4892, %v5464
        %v5466 = vand.u32 %v5465, 4294901760
        %5467 = vmatprep.subr.mxu0 %v5466
        %v5468 = vand.u32 %v4862, 4294901760
        %v5469 = vsub.f32 %v4862, %v5468
        %v5470 = vand.u32 %v5469, 4294901760
        %5471 = vmatpush1.msra.mxu0 %v5470
        %5472 = vmatprep.subr.mxu0 0.0
        %5473 = vmatpush1.msra.mxu0 0.0
        %5474 = vmatprep.subr.mxu0 0.0
        %5475 = vmatpush1.msra.mxu0 0.0
        %5476 = vmatprep.subr.mxu0 0.0
        %5477 = vmatpush1.msra.mxu0 0.0
        %5478 = vmatprep.subr.mxu0 0.0
        %5479 = vmatpush1.msra.mxu0 0.0
        %5480 = vmatprep.subr.mxu0 0.0
        %5481 = vmatpush1.msra.mxu0 0.0
        %5482 = vmatprep.subr.mxu0 0.0
        %5483 = vmatpush1.msra.mxu0 0.0
        %5484 = vmatprep.subr.mxu0 0.0
        %5485 = vmatpush1.msra.mxu0 0.0
        %5486 = vmatprep.subr.mxu0 0.0
        %5487 = vmatpush1.msra.mxu0 0.0
        %5488 = vmatprep.subr.mxu0 0.0
        %5489 = vmatpush1.msra.mxu0 0.0
        %5490 = vmatprep.subr.mxu0 0.0
        %5491 = vmatpush1.msra.mxu0 0.0
        %5492 = vmatprep.subr.mxu0 0.0
        %5493 = vmatpush1.msra.mxu0 0.0
        %5494 = vmatprep.subr.mxu0 0.0
        %5495 = vmatpush1.msra.mxu0 0.0
        %5496 = vmatprep.subr.mxu0 0.0
        %5497 = vmatpush1.msra.mxu0 0.0
        %5498 = vmatprep.subr.mxu0 0.0
        %5499 = vmatpush1.msra.mxu0 0.0
        %5500 = vmatprep.subr.mxu0 0.0
        %5501 = vmatpush1.msra.mxu0 0.0
        %5502 = vmatprep.subr.mxu0 0.0
        %5503 = vmatpush1.msra.mxu0 0.0
        %5504 = vmatprep.subr.mxu0 0.0
        %5505 = vmatpush1.msra.mxu0 0.0
        %5506 = vmatprep.subr.mxu0 0.0
        %5507 = vmatpush1.msra.mxu0 0.0
        %5508 = vmatprep.subr.mxu0 0.0
        %5509 = vmatpush1.msra.mxu0 0.0
        %5510 = vmatprep.subr.mxu0 0.0
        %5511 = vmatpush1.msra.mxu0 0.0
        %5512 = vmatprep.subr.mxu0 0.0
        %5513 = vmatpush1.msra.mxu0 0.0
        %5514 = vmatprep.subr.mxu0 0.0
        %5515 = vmatpush1.msra.mxu0 0.0
        %5516 = vmatprep.subr.mxu0 0.0
        %5517 = vmatpush1.msra.mxu0 0.0
        %5518 = vmatprep.subr.mxu0 0.0
        %5519 = vmatpush1.msra.mxu0 0.0
        %5520 = vmatprep.subr.mxu0 0.0
        %5521 = vmatpush1.msra.mxu0 0.0
        %5522 = vmatprep.subr.mxu0 0.0
        %5523 = vmatpush1.msra.mxu0 0.0
        %5524 = vmatprep.subr.mxu0 0.0
        %5525 = vmatpush1.msra.mxu0 0.0
        %5526 = vmatprep.subr.mxu0 0.0
        %5527 = vmatpush1.msra.mxu0 0.0
        %5528 = vmatprep.mubr.f32.mxu0 0.0
        %v5529 = vand.u32 %v4995, 4294901760
        %5530 = vmatmul.mubr.f32.gmra.mrb[0].mxu0 %v5529
        %v5531 = vpop.f32.mrb[0].mxu0
        %v5532 = vadd.f32 %v5418, %v5531
        %v5533 = vpop.f32.mrb[0].mxu0
        %v5534 = vadd.f32 %v5420, %v5533
        %5535 = vmatprep.mubr.f32.mxu0 0.0
        %v5536 = vand.u32 %v4998, 4294901760
        %5537 = vmatmul.mubr.f32.gmra.mrb[0].mxu0 %v5536
        %v5538 = vpop.f32.mrb[0].mxu0
        %v5539 = vadd.f32 %v5427, %v5538
        %v5540 = vpop.f32.mrb[0].mxu0
        %v5541 = vadd.f32 %v5429, %v5540
        %5542 = vmatprep.mubr.f32.mxu0 0.0
        %v5543 = vand.u32 %v5001, 4294901760
        %5544 = vmatmul.mubr.f32.gmra.mrb[0].mxu0 %v5543
        %v5545 = vpop.f32.mrb[0].mxu0
        %v5546 = vadd.f32 %v5436, %v5545
        %v5547 = vpop.f32.mrb[0].mxu0
        %v5548 = vadd.f32 %v5438, %v5547
        %5549 = vdwg.mxu0
        %v5550 = vand.u32 %v4889, 4294901760
        %5551 = vmatprep.subr.mxu0 %v5550
        %v5552 = vand.u32 %v4859, 4294901760
        %5553 = vmatpush1.msra.mxu0 %v5552
        %v5554 = vand.u32 %v4890, 4294901760
        %5555 = vmatprep.subr.mxu0 %v5554
        %v5556 = vand.u32 %v4860, 4294901760
        %5557 = vmatpush1.msra.mxu0 %v5556
        %v5558 = vand.u32 %v4891, 4294901760
        %5559 = vmatprep.subr.mxu0 %v5558
        %v5560 = vand.u32 %v4861, 4294901760
        %5561 = vmatpush1.msra.mxu0 %v5560
        %v5562 = vand.u32 %v4892, 4294901760
        %5563 = vmatprep.subr.mxu0 %v5562
        %v5564 = vand.u32 %v4862, 4294901760
        %5565 = vmatpush1.msra.mxu0 %v5564
        %5566 = vmatprep.subr.mxu0 0.0
        %5567 = vmatpush1.msra.mxu0 0.0
        %5568 = vmatprep.subr.mxu0 0.0
        %5569 = vmatpush1.msra.mxu0 0.0
        %5570 = vmatprep.subr.mxu0 0.0
        %5571 = vmatpush1.msra.mxu0 0.0
        %5572 = vmatprep.subr.mxu0 0.0
        %5573 = vmatpush1.msra.mxu0 0.0
        %5574 = vmatprep.subr.mxu0 0.0
        %5575 = vmatpush1.msra.mxu0 0.0
        %5576 = vmatprep.subr.mxu0 0.0
        %5577 = vmatpush1.msra.mxu0 0.0
        %5578 = vmatprep.subr.mxu0 0.0
        %5579 = vmatpush1.msra.mxu0 0.0
        %5580 = vmatprep.subr.mxu0 0.0
        %5581 = vmatpush1.msra.mxu0 0.0
        %5582 = vmatprep.subr.mxu0 0.0
        %5583 = vmatpush1.msra.mxu0 0.0
        %5584 = vmatprep.subr.mxu0 0.0
        %5585 = vmatpush1.msra.mxu0 0.0
        %5586 = vmatprep.subr.mxu0 0.0
        %5587 = vmatpush1.msra.mxu0 0.0
        %5588 = vmatprep.subr.mxu0 0.0
        %5589 = vmatpush1.msra.mxu0 0.0
        %5590 = vmatprep.subr.mxu0 0.0
        %5591 = vmatpush1.msra.mxu0 0.0
        %5592 = vmatprep.subr.mxu0 0.0
        %5593 = vmatpush1.msra.mxu0 0.0
        %5594 = vmatprep.subr.mxu0 0.0
        %5595 = vmatpush1.msra.mxu0 0.0
        %5596 = vmatprep.subr.mxu0 0.0
        %5597 = vmatpush1.msra.mxu0 0.0
        %5598 = vmatprep.subr.mxu0 0.0
        %5599 = vmatpush1.msra.mxu0 0.0
        %5600 = vmatprep.subr.mxu0 0.0
        %5601 = vmatpush1.msra.mxu0 0.0
        %5602 = vmatprep.subr.mxu0 0.0
        %5603 = vmatpush1.msra.mxu0 0.0
        %5604 = vmatprep.subr.mxu0 0.0
        %5605 = vmatpush1.msra.mxu0 0.0
        %5606 = vmatprep.subr.mxu0 0.0
        %5607 = vmatpush1.msra.mxu0 0.0
        %5608 = vmatprep.subr.mxu0 0.0
        %5609 = vmatpush1.msra.mxu0 0.0
        %5610 = vmatprep.subr.mxu0 0.0
        %5611 = vmatpush1.msra.mxu0 0.0
        %5612 = vmatprep.subr.mxu0 0.0
        %5613 = vmatpush1.msra.mxu0 0.0
        %5614 = vmatprep.subr.mxu0 0.0
        %5615 = vmatpush1.msra.mxu0 0.0
        %5616 = vmatprep.subr.mxu0 0.0
        %5617 = vmatpush1.msra.mxu0 0.0
        %5618 = vmatprep.subr.mxu0 0.0
        %5619 = vmatpush1.msra.mxu0 0.0
        %5620 = vmatprep.subr.mxu0 0.0
        %5621 = vmatpush1.msra.mxu0 0.0
        %5622 = vmatprep.mubr.f32.mxu0 0.0
        %v5623 = vand.u32 %v4995, 4294901760
        %5624 = vmatmul.mubr.f32.gmra.mrb[0].mxu0 %v5623
        %v5625 = vpop.f32.mrb[0].mxu0
        %v5626 = vadd.f32 %v5532, %v5625
        %v5627 = vpop.f32.mrb[0].mxu0
        %v5628 = vadd.f32 %v5534, %v5627
        %5629 = vmatprep.mubr.f32.mxu0 0.0
        %v5630 = vand.u32 %v4998, 4294901760
        %5631 = vmatmul.mubr.f32.gmra.mrb[0].mxu0 %v5630
        %v5632 = vpop.f32.mrb[0].mxu0
        %v5633 = vadd.f32 %v5539, %v5632
        %v5634 = vpop.f32.mrb[0].mxu0
        %v5635 = vadd.f32 %v5541, %v5634
        %5636 = vmatprep.mubr.f32.mxu0 0.0
        %v5637 = vand.u32 %v5001, 4294901760
        %5638 = vmatmul.mubr.f32.gmra.mrb[0].mxu0 %v5637
        %v5639 = vpop.f32.mrb[0].mxu0
        %v5640 = vadd.f32 %v5546, %v5639
        %v5641 = vpop.f32.mrb[0].mxu0
        %v5642 = vadd.f32 %v5548, %v5641
        %5643 = vdwg.mxu0
        %v5644 = vand.u32 %v4978, 4294901760
        %5645 = vmatprep.subr.mxu0 %v5644
        %v5646 = vand.u32 %v4990, 4294901760
        %5647 = vmatpush1.msra.mxu0 %v5646
        %v5648 = vand.u32 %v4980, 4294901760
        %5649 = vmatprep.subr.mxu0 %v5648
        %v5650 = vand.u32 %v4991, 4294901760
        %5651 = vmatpush1.msra.mxu0 %v5650
        %v5652 = vand.u32 %v4982, 4294901760
        %5653 = vmatprep.subr.mxu0 %v5652
        %v5654 = vand.u32 %v4992, 4294901760
        %5655 = vmatpush1.msra.mxu0 %v5654
        %v5656 = vand.u32 %v4984, 4294901760
        %5657 = vmatprep.subr.mxu0 %v5656
        %v5658 = vand.u32 %v4993, 4294901760
        %5659 = vmatpush1.msra.mxu0 %v5658
        %5660 = vmatprep.subr.mxu0 0.0
        %5661 = vmatpush1.msra.mxu0 0.0
        %5662 = vmatprep.subr.mxu0 0.0
        %5663 = vmatpush1.msra.mxu0 0.0
        %5664 = vmatprep.subr.mxu0 0.0
        %5665 = vmatpush1.msra.mxu0 0.0
        %5666 = vmatprep.subr.mxu0 0.0
        %5667 = vmatpush1.msra.mxu0 0.0
        %5668 = vmatprep.subr.mxu0 0.0
        %5669 = vmatpush1.msra.mxu0 0.0
        %5670 = vmatprep.subr.mxu0 0.0
        %5671 = vmatpush1.msra.mxu0 0.0
        %5672 = vmatprep.subr.mxu0 0.0
        %5673 = vmatpush1.msra.mxu0 0.0
        %5674 = vmatprep.subr.mxu0 0.0
        %5675 = vmatpush1.msra.mxu0 0.0
        %5676 = vmatprep.subr.mxu0 0.0
        %5677 = vmatpush1.msra.mxu0 0.0
        %5678 = vmatprep.subr.mxu0 0.0
        %5679 = vmatpush1.msra.mxu0 0.0
        %5680 = vmatprep.subr.mxu0 0.0
        %5681 = vmatpush1.msra.mxu0 0.0
        %5682 = vmatprep.subr.mxu0 0.0
        %5683 = vmatpush1.msra.mxu0 0.0
        %5684 = vmatprep.subr.mxu0 0.0
        %5685 = vmatpush1.msra.mxu0 0.0
        %5686 = vmatprep.subr.mxu0 0.0
        %5687 = vmatpush1.msra.mxu0 0.0
        %5688 = vmatprep.subr.mxu0 0.0
        %5689 = vmatpush1.msra.mxu0 0.0
        %5690 = vmatprep.subr.mxu0 0.0
        %5691 = vmatpush1.msra.mxu0 0.0
        %5692 = vmatprep.subr.mxu0 0.0
        %5693 = vmatpush1.msra.mxu0 0.0
        %5694 = vmatprep.subr.mxu0 0.0
        %5695 = vmatpush1.msra.mxu0 0.0
        %5696 = vmatprep.subr.mxu0 0.0
        %5697 = vmatpush1.msra.mxu0 0.0
        %5698 = vmatprep.subr.mxu0 0.0
        %5699 = vmatpush1.msra.mxu0 0.0
        %5700 = vmatprep.subr.mxu0 0.0
        %5701 = vmatpush1.msra.mxu0 0.0
        %5702 = vmatprep.subr.mxu0 0.0
        %5703 = vmatpush1.msra.mxu0 0.0
        %5704 = vmatprep.subr.mxu0 0.0
        %5705 = vmatpush1.msra.mxu0 0.0
        %5706 = vmatprep.subr.mxu0 0.0
        %5707 = vmatpush1.msra.mxu0 0.0
        %5708 = vmatprep.subr.mxu0 0.0
        %5709 = vmatpush1.msra.mxu0 0.0
        %5710 = vmatprep.subr.mxu0 0.0
        %5711 = vmatpush1.msra.mxu0 0.0
        %5712 = vmatprep.subr.mxu0 0.0
        %5713 = vmatpush1.msra.mxu0 0.0
        %5714 = vmatprep.subr.mxu0 0.0
        %5715 = vmatpush1.msra.mxu0 0.0
        %5716 = vmatprep.mubr.f32.mxu0 0.0
        %v5717 = vand.u32 %v4995, 4294901760
        %v5718 = vsub.f32 %v4995, %v5717
        %v5719 = vand.u32 %v5718, 4294901760
        %v5720 = vsub.f32 %v5718, %v5719
        %v5721 = vand.u32 %v5720, 4294901760
        %5722 = vmatmul.mubr.f32.gmra.mrb[0].mxu0 %v5721
        %v5723 = vpop.f32.mrb[0].mxu0
        %v5724 = vadd.f32 0.0, %v5723
        %v5725 = vpop.f32.mrb[0].mxu0
        %v5726 = vadd.f32 0.0, %v5725
        %5727 = vmatprep.mubr.f32.mxu0 0.0
        %v5728 = vand.u32 %v4998, 4294901760
        %v5729 = vsub.f32 %v4998, %v5728
        %v5730 = vand.u32 %v5729, 4294901760
        %v5731 = vsub.f32 %v5729, %v5730
        %v5732 = vand.u32 %v5731, 4294901760
        %5733 = vmatmul.mubr.f32.gmra.mrb[0].mxu0 %v5732
        %v5734 = vpop.f32.mrb[0].mxu0
        %v5735 = vadd.f32 0.0, %v5734
        %v5736 = vpop.f32.mrb[0].mxu0
        %v5737 = vadd.f32 0.0, %v5736
        %5738 = vmatprep.mubr.f32.mxu0 0.0
        %v5739 = vand.u32 %v5001, 4294901760
        %v5740 = vsub.f32 %v5001, %v5739
        %v5741 = vand.u32 %v5740, 4294901760
        %v5742 = vsub.f32 %v5740, %v5741
        %v5743 = vand.u32 %v5742, 4294901760
        %5744 = vmatmul.mubr.f32.gmra.mrb[0].mxu0 %v5743
        %v5745 = vpop.f32.mrb[0].mxu0
        %v5746 = vadd.f32 0.0, %v5745
        %v5747 = vpop.f32.mrb[0].mxu0
        %v5748 = vadd.f32 0.0, %v5747
        %5749 = vdwg.mxu0
        %v5750 = vand.u32 %v4978, 4294901760
        %v5751 = vsub.f32 %v4978, %v5750
        %v5752 = vand.u32 %v5751, 4294901760
        %v5753 = vsub.f32 %v5751, %v5752
        %v5754 = vand.u32 %v5753, 4294901760
        %5755 = vmatprep.subr.mxu0 %v5754
        %v5756 = vand.u32 %v4990, 4294901760
        %v5757 = vsub.f32 %v4990, %v5756
        %v5758 = vand.u32 %v5757, 4294901760
        %v5759 = vsub.f32 %v5757, %v5758
        %v5760 = vand.u32 %v5759, 4294901760
        %5761 = vmatpush1.msra.mxu0 %v5760
        %v5762 = vand.u32 %v4980, 4294901760
        %v5763 = vsub.f32 %v4980, %v5762
        %v5764 = vand.u32 %v5763, 4294901760
        %v5765 = vsub.f32 %v5763, %v5764
        %v5766 = vand.u32 %v5765, 4294901760
        %5767 = vmatprep.subr.mxu0 %v5766
        %v5768 = vand.u32 %v4991, 4294901760
        %v5769 = vsub.f32 %v4991, %v5768
        %v5770 = vand.u32 %v5769, 4294901760
        %v5771 = vsub.f32 %v5769, %v5770
        %v5772 = vand.u32 %v5771, 4294901760
        %5773 = vmatpush1.msra.mxu0 %v5772
        %v5774 = vand.u32 %v4982, 4294901760
        %v5775 = vsub.f32 %v4982, %v5774
        %v5776 = vand.u32 %v5775, 4294901760
        %v5777 = vsub.f32 %v5775, %v5776
        %v5778 = vand.u32 %v5777, 4294901760
        %5779 = vmatprep.subr.mxu0 %v5778
        %v5780 = vand.u32 %v4992, 4294901760
        %v5781 = vsub.f32 %v4992, %v5780
        %v5782 = vand.u32 %v5781, 4294901760
        %v5783 = vsub.f32 %v5781, %v5782
        %v5784 = vand.u32 %v5783, 4294901760
        %5785 = vmatpush1.msra.mxu0 %v5784
        %v5786 = vand.u32 %v4984, 4294901760
        %v5787 = vsub.f32 %v4984, %v5786
        %v5788 = vand.u32 %v5787, 4294901760
        %v5789 = vsub.f32 %v5787, %v5788
        %v5790 = vand.u32 %v5789, 4294901760
        %5791 = vmatprep.subr.mxu0 %v5790
        %v5792 = vand.u32 %v4993, 4294901760
        %v5793 = vsub.f32 %v4993, %v5792
        %v5794 = vand.u32 %v5793, 4294901760
        %v5795 = vsub.f32 %v5793, %v5794
        %v5796 = vand.u32 %v5795, 4294901760
        %5797 = vmatpush1.msra.mxu0 %v5796
        %5798 = vmatprep.subr.mxu0 0.0
        %5799 = vmatpush1.msra.mxu0 0.0
        %5800 = vmatprep.subr.mxu0 0.0
        %5801 = vmatpush1.msra.mxu0 0.0
        %5802 = vmatprep.subr.mxu0 0.0
        %5803 = vmatpush1.msra.mxu0 0.0
        %5804 = vmatprep.subr.mxu0 0.0
        %5805 = vmatpush1.msra.mxu0 0.0
        %5806 = vmatprep.subr.mxu0 0.0
        %5807 = vmatpush1.msra.mxu0 0.0
        %5808 = vmatprep.subr.mxu0 0.0
        %5809 = vmatpush1.msra.mxu0 0.0
        %5810 = vmatprep.subr.mxu0 0.0
        %5811 = vmatpush1.msra.mxu0 0.0
        %5812 = vmatprep.subr.mxu0 0.0
        %5813 = vmatpush1.msra.mxu0 0.0
        %5814 = vmatprep.subr.mxu0 0.0
        %5815 = vmatpush1.msra.mxu0 0.0
        %5816 = vmatprep.subr.mxu0 0.0
        %5817 = vmatpush1.msra.mxu0 0.0
        %5818 = vmatprep.subr.mxu0 0.0
        %5819 = vmatpush1.msra.mxu0 0.0
        %5820 = vmatprep.subr.mxu0 0.0
        %5821 = vmatpush1.msra.mxu0 0.0
        %5822 = vmatprep.subr.mxu0 0.0
        %5823 = vmatpush1.msra.mxu0 0.0
        %5824 = vmatprep.subr.mxu0 0.0
        %5825 = vmatpush1.msra.mxu0 0.0
        %5826 = vmatprep.subr.mxu0 0.0
        %5827 = vmatpush1.msra.mxu0 0.0
        %5828 = vmatprep.subr.mxu0 0.0
        %5829 = vmatpush1.msra.mxu0 0.0
        %5830 = vmatprep.subr.mxu0 0.0
        %5831 = vmatpush1.msra.mxu0 0.0
        %5832 = vmatprep.subr.mxu0 0.0
        %5833 = vmatpush1.msra.mxu0 0.0
        %5834 = vmatprep.subr.mxu0 0.0
        %5835 = vmatpush1.msra.mxu0 0.0
        %5836 = vmatprep.subr.mxu0 0.0
        %5837 = vmatpush1.msra.mxu0 0.0
        %5838 = vmatprep.subr.mxu0 0.0
        %5839 = vmatpush1.msra.mxu0 0.0
        %5840 = vmatprep.subr.mxu0 0.0
        %5841 = vmatpush1.msra.mxu0 0.0
        %5842 = vmatprep.subr.mxu0 0.0
        %5843 = vmatpush1.msra.mxu0 0.0
        %5844 = vmatprep.subr.mxu0 0.0
        %5845 = vmatpush1.msra.mxu0 0.0
        %5846 = vmatprep.subr.mxu0 0.0
        %5847 = vmatpush1.msra.mxu0 0.0
        %5848 = vmatprep.subr.mxu0 0.0
        %5849 = vmatpush1.msra.mxu0 0.0
        %5850 = vmatprep.subr.mxu0 0.0
        %5851 = vmatpush1.msra.mxu0 0.0
        %5852 = vmatprep.subr.mxu0 0.0
        %5853 = vmatpush1.msra.mxu0 0.0
        %5854 = vmatprep.mubr.f32.mxu0 0.0
        %v5855 = vand.u32 %v4995, 4294901760
        %5856 = vmatmul.mubr.f32.gmra.mrb[0].mxu0 %v5855
        %v5857 = vpop.f32.mrb[0].mxu0
        %v5858 = vadd.f32 %v5724, %v5857
        %v5859 = vpop.f32.mrb[0].mxu0
        %v5860 = vadd.f32 %v5726, %v5859
        %5861 = vmatprep.mubr.f32.mxu0 0.0
        %v5862 = vand.u32 %v4998, 4294901760
        %5863 = vmatmul.mubr.f32.gmra.mrb[0].mxu0 %v5862
        %v5864 = vpop.f32.mrb[0].mxu0
        %v5865 = vadd.f32 %v5735, %v5864
        %v5866 = vpop.f32.mrb[0].mxu0
        %v5867 = vadd.f32 %v5737, %v5866
        %5868 = vmatprep.mubr.f32.mxu0 0.0
        %v5869 = vand.u32 %v5001, 4294901760
        %5870 = vmatmul.mubr.f32.gmra.mrb[0].mxu0 %v5869
        %v5871 = vpop.f32.mrb[0].mxu0
        %v5872 = vadd.f32 %v5746, %v5871
        %v5873 = vpop.f32.mrb[0].mxu0
        %v5874 = vadd.f32 %v5748, %v5873
        %5875 = vdwg.mxu0
        %v5876 = vand.u32 %v4978, 4294901760
        %v5877 = vsub.f32 %v4978, %v5876
        %5878 = vmatprep.subr.mxu0 %v5877
        %v5879 = vand.u32 %v4990, 4294901760
        %v5880 = vsub.f32 %v4990, %v5879
        %5881 = vmatpush1.msra.mxu0 %v5880
        %v5882 = vand.u32 %v4980, 4294901760
        %v5883 = vsub.f32 %v4980, %v5882
        %5884 = vmatprep.subr.mxu0 %v5883
        %v5885 = vand.u32 %v4991, 4294901760
        %v5886 = vsub.f32 %v4991, %v5885
        %5887 = vmatpush1.msra.mxu0 %v5886
        %v5888 = vand.u32 %v4982, 4294901760
        %v5889 = vsub.f32 %v4982, %v5888
        %5890 = vmatprep.subr.mxu0 %v5889
        %v5891 = vand.u32 %v4992, 4294901760
        %v5892 = vsub.f32 %v4992, %v5891
        %5893 = vmatpush1.msra.mxu0 %v5892
        %v5894 = vand.u32 %v4984, 4294901760
        %v5895 = vsub.f32 %v4984, %v5894
        %5896 = vmatprep.subr.mxu0 %v5895
        %v5897 = vand.u32 %v4993, 4294901760
        %v5898 = vsub.f32 %v4993, %v5897
        %5899 = vmatpush1.msra.mxu0 %v5898
        %5900 = vmatprep.subr.mxu0 0.0
        %5901 = vmatpush1.msra.mxu0 0.0
        %5902 = vmatprep.subr.mxu0 0.0
        %5903 = vmatpush1.msra.mxu0 0.0
        %5904 = vmatprep.subr.mxu0 0.0
        %5905 = vmatpush1.msra.mxu0 0.0
        %5906 = vmatprep.subr.mxu0 0.0
        %5907 = vmatpush1.msra.mxu0 0.0
        %5908 = vmatprep.subr.mxu0 0.0
        %5909 = vmatpush1.msra.mxu0 0.0
        %5910 = vmatprep.subr.mxu0 0.0
        %5911 = vmatpush1.msra.mxu0 0.0
        %5912 = vmatprep.subr.mxu0 0.0
        %5913 = vmatpush1.msra.mxu0 0.0
        %5914 = vmatprep.subr.mxu0 0.0
        %5915 = vmatpush1.msra.mxu0 0.0
        %5916 = vmatprep.subr.mxu0 0.0
        %5917 = vmatpush1.msra.mxu0 0.0
        %5918 = vmatprep.subr.mxu0 0.0
        %5919 = vmatpush1.msra.mxu0 0.0
        %5920 = vmatprep.subr.mxu0 0.0
        %5921 = vmatpush1.msra.mxu0 0.0
        %5922 = vmatprep.subr.mxu0 0.0
        %5923 = vmatpush1.msra.mxu0 0.0
        %5924 = vmatprep.subr.mxu0 0.0
        %5925 = vmatpush1.msra.mxu0 0.0
        %5926 = vmatprep.subr.mxu0 0.0
        %5927 = vmatpush1.msra.mxu0 0.0
        %5928 = vmatprep.subr.mxu0 0.0
        %5929 = vmatpush1.msra.mxu0 0.0
        %5930 = vmatprep.subr.mxu0 0.0
        %5931 = vmatpush1.msra.mxu0 0.0
        %5932 = vmatprep.subr.mxu0 0.0
        %5933 = vmatpush1.msra.mxu0 0.0
        %5934 = vmatprep.subr.mxu0 0.0
        %5935 = vmatpush1.msra.mxu0 0.0
        %5936 = vmatprep.subr.mxu0 0.0
        %5937 = vmatpush1.msra.mxu0 0.0
        %5938 = vmatprep.subr.mxu0 0.0
        %5939 = vmatpush1.msra.mxu0 0.0
        %5940 = vmatprep.subr.mxu0 0.0
        %5941 = vmatpush1.msra.mxu0 0.0
        %5942 = vmatprep.subr.mxu0 0.0
        %5943 = vmatpush1.msra.mxu0 0.0
        %5944 = vmatprep.subr.mxu0 0.0
        %5945 = vmatpush1.msra.mxu0 0.0
        %5946 = vmatprep.subr.mxu0 0.0
        %5947 = vmatpush1.msra.mxu0 0.0
        %5948 = vmatprep.subr.mxu0 0.0
        %5949 = vmatpush1.msra.mxu0 0.0
        %5950 = vmatprep.subr.mxu0 0.0
        %5951 = vmatpush1.msra.mxu0 0.0
        %5952 = vmatprep.subr.mxu0 0.0
        %5953 = vmatpush1.msra.mxu0 0.0
        %5954 = vmatprep.subr.mxu0 0.0
        %5955 = vmatpush1.msra.mxu0 0.0
        %5956 = vmatprep.mubr.f32.mxu0 0.0
        %v5957 = vand.u32 %v4995, 4294901760
        %v5958 = vsub.f32 %v4995, %v5957
        %5959 = vmatmul.mubr.f32.gmra.mrb[0].mxu0 %v5958
        %v5960 = vpop.f32.mrb[0].mxu0
        %v5961 = vadd.f32 %v5858, %v5960
        %v5962 = vpop.f32.mrb[0].mxu0
        %v5963 = vadd.f32 %v5860, %v5962
        %5964 = vmatprep.mubr.f32.mxu0 0.0
        %v5965 = vand.u32 %v4998, 4294901760
        %v5966 = vsub.f32 %v4998, %v5965
        %5967 = vmatmul.mubr.f32.gmra.mrb[0].mxu0 %v5966
        %v5968 = vpop.f32.mrb[0].mxu0
        %v5969 = vadd.f32 %v5865, %v5968
        %v5970 = vpop.f32.mrb[0].mxu0
        %v5971 = vadd.f32 %v5867, %v5970
        %5972 = vmatprep.mubr.f32.mxu0 0.0
        %v5973 = vand.u32 %v5001, 4294901760
        %v5974 = vsub.f32 %v5001, %v5973
        %5975 = vmatmul.mubr.f32.gmra.mrb[0].mxu0 %v5974
        %v5976 = vpop.f32.mrb[0].mxu0
        %v5977 = vadd.f32 %v5872, %v5976
        %v5978 = vpop.f32.mrb[0].mxu0
        %v5979 = vadd.f32 %v5874, %v5978
        %5980 = vdwg.mxu0
        %v5981 = vand.u32 %v4978, 4294901760
        %5982 = vmatprep.subr.mxu0 %v5981
        %v5983 = vand.u32 %v4990, 4294901760
        %5984 = vmatpush1.msra.mxu0 %v5983
        %v5985 = vand.u32 %v4980, 4294901760
        %5986 = vmatprep.subr.mxu0 %v5985
        %v5987 = vand.u32 %v4991, 4294901760
        %5988 = vmatpush1.msra.mxu0 %v5987
        %v5989 = vand.u32 %v4982, 4294901760
        %5990 = vmatprep.subr.mxu0 %v5989
        %v5991 = vand.u32 %v4992, 4294901760
        %5992 = vmatpush1.msra.mxu0 %v5991
        %v5993 = vand.u32 %v4984, 4294901760
        %5994 = vmatprep.subr.mxu0 %v5993
        %v5995 = vand.u32 %v4993, 4294901760
        %5996 = vmatpush1.msra.mxu0 %v5995
        %5997 = vmatprep.subr.mxu0 0.0
        %5998 = vmatpush1.msra.mxu0 0.0
        %5999 = vmatprep.subr.mxu0 0.0
        %6000 = vmatpush1.msra.mxu0 0.0
        %6001 = vmatprep.subr.mxu0 0.0
        %6002 = vmatpush1.msra.mxu0 0.0
        %6003 = vmatprep.subr.mxu0 0.0
        %6004 = vmatpush1.msra.mxu0 0.0
        %6005 = vmatprep.subr.mxu0 0.0
        %6006 = vmatpush1.msra.mxu0 0.0
        %6007 = vmatprep.subr.mxu0 0.0
        %6008 = vmatpush1.msra.mxu0 0.0
        %6009 = vmatprep.subr.mxu0 0.0
        %6010 = vmatpush1.msra.mxu0 0.0
        %6011 = vmatprep.subr.mxu0 0.0
        %6012 = vmatpush1.msra.mxu0 0.0
        %6013 = vmatprep.subr.mxu0 0.0
        %6014 = vmatpush1.msra.mxu0 0.0
        %6015 = vmatprep.subr.mxu0 0.0
        %6016 = vmatpush1.msra.mxu0 0.0
        %6017 = vmatprep.subr.mxu0 0.0
        %6018 = vmatpush1.msra.mxu0 0.0
        %6019 = vmatprep.subr.mxu0 0.0
        %6020 = vmatpush1.msra.mxu0 0.0
        %6021 = vmatprep.subr.mxu0 0.0
        %6022 = vmatpush1.msra.mxu0 0.0
        %6023 = vmatprep.subr.mxu0 0.0
        %6024 = vmatpush1.msra.mxu0 0.0
        %6025 = vmatprep.subr.mxu0 0.0
        %6026 = vmatpush1.msra.mxu0 0.0
        %6027 = vmatprep.subr.mxu0 0.0
        %6028 = vmatpush1.msra.mxu0 0.0
        %6029 = vmatprep.subr.mxu0 0.0
        %6030 = vmatpush1.msra.mxu0 0.0
        %6031 = vmatprep.subr.mxu0 0.0
        %6032 = vmatpush1.msra.mxu0 0.0
        %6033 = vmatprep.subr.mxu0 0.0
        %6034 = vmatpush1.msra.mxu0 0.0
        %6035 = vmatprep.subr.mxu0 0.0
        %6036 = vmatpush1.msra.mxu0 0.0
        %6037 = vmatprep.subr.mxu0 0.0
        %6038 = vmatpush1.msra.mxu0 0.0
        %6039 = vmatprep.subr.mxu0 0.0
        %6040 = vmatpush1.msra.mxu0 0.0
        %6041 = vmatprep.subr.mxu0 0.0
        %6042 = vmatpush1.msra.mxu0 0.0
        %6043 = vmatprep.subr.mxu0 0.0
        %6044 = vmatpush1.msra.mxu0 0.0
        %6045 = vmatprep.subr.mxu0 0.0
        %6046 = vmatpush1.msra.mxu0 0.0
        %6047 = vmatprep.subr.mxu0 0.0
        %6048 = vmatpush1.msra.mxu0 0.0
        %6049 = vmatprep.subr.mxu0 0.0
        %6050 = vmatpush1.msra.mxu0 0.0
        %6051 = vmatprep.subr.mxu0 0.0
        %6052 = vmatpush1.msra.mxu0 0.0
        %6053 = vmatprep.mubr.f32.mxu0 0.0
        %v6054 = vand.u32 %v4995, 4294901760
        %v6055 = vsub.f32 %v4995, %v6054
        %v6056 = vand.u32 %v6055, 4294901760
        %6057 = vmatmul.mubr.f32.gmra.mrb[0].mxu0 %v6056
        %v6058 = vpop.f32.mrb[0].mxu0
        %v6059 = vadd.f32 %v5961, %v6058
        %v6060 = vpop.f32.mrb[0].mxu0
        %v6061 = vadd.f32 %v5963, %v6060
        %6062 = vmatprep.mubr.f32.mxu0 0.0
        %v6063 = vand.u32 %v4998, 4294901760
        %v6064 = vsub.f32 %v4998, %v6063
        %v6065 = vand.u32 %v6064, 4294901760
        %6066 = vmatmul.mubr.f32.gmra.mrb[0].mxu0 %v6065
        %v6067 = vpop.f32.mrb[0].mxu0
        %v6068 = vadd.f32 %v5969, %v6067
        %v6069 = vpop.f32.mrb[0].mxu0
        %v6070 = vadd.f32 %v5971, %v6069
        %6071 = vmatprep.mubr.f32.mxu0 0.0
        %v6072 = vand.u32 %v5001, 4294901760
        %v6073 = vsub.f32 %v5001, %v6072
        %v6074 = vand.u32 %v6073, 4294901760
        %6075 = vmatmul.mubr.f32.gmra.mrb[0].mxu0 %v6074
        %v6076 = vpop.f32.mrb[0].mxu0
        %v6077 = vadd.f32 %v5977, %v6076
        %v6078 = vpop.f32.mrb[0].mxu0
        %v6079 = vadd.f32 %v5979, %v6078
        %6080 = vdwg.mxu0
        %v6081 = vand.u32 %v4978, 4294901760
        %v6082 = vsub.f32 %v4978, %v6081
        %v6083 = vand.u32 %v6082, 4294901760
        %6084 = vmatprep.subr.mxu0 %v6083
        %v6085 = vand.u32 %v4990, 4294901760
        %v6086 = vsub.f32 %v4990, %v6085
        %v6087 = vand.u32 %v6086, 4294901760
        %6088 = vmatpush1.msra.mxu0 %v6087
        %v6089 = vand.u32 %v4980, 4294901760
        %v6090 = vsub.f32 %v4980, %v6089
        %v6091 = vand.u32 %v6090, 4294901760
        %6092 = vmatprep.subr.mxu0 %v6091
        %v6093 = vand.u32 %v4991, 4294901760
        %v6094 = vsub.f32 %v4991, %v6093
        %v6095 = vand.u32 %v6094, 4294901760
        %6096 = vmatpush1.msra.mxu0 %v6095
        %v6097 = vand.u32 %v4982, 4294901760
        %v6098 = vsub.f32 %v4982, %v6097
        %v6099 = vand.u32 %v6098, 4294901760
        %6100 = vmatprep.subr.mxu0 %v6099
        %v6101 = vand.u32 %v4992, 4294901760
        %v6102 = vsub.f32 %v4992, %v6101
        %v6103 = vand.u32 %v6102, 4294901760
        %6104 = vmatpush1.msra.mxu0 %v6103
        %v6105 = vand.u32 %v4984, 4294901760
        %v6106 = vsub.f32 %v4984, %v6105
        %v6107 = vand.u32 %v6106, 4294901760
        %6108 = vmatprep.subr.mxu0 %v6107
        %v6109 = vand.u32 %v4993, 4294901760
        %v6110 = vsub.f32 %v4993, %v6109
        %v6111 = vand.u32 %v6110, 4294901760
        %6112 = vmatpush1.msra.mxu0 %v6111
        %6113 = vmatprep.subr.mxu0 0.0
        %6114 = vmatpush1.msra.mxu0 0.0
        %6115 = vmatprep.subr.mxu0 0.0
        %6116 = vmatpush1.msra.mxu0 0.0
        %6117 = vmatprep.subr.mxu0 0.0
        %6118 = vmatpush1.msra.mxu0 0.0
        %6119 = vmatprep.subr.mxu0 0.0
        %6120 = vmatpush1.msra.mxu0 0.0
        %6121 = vmatprep.subr.mxu0 0.0
        %6122 = vmatpush1.msra.mxu0 0.0
        %6123 = vmatprep.subr.mxu0 0.0
        %6124 = vmatpush1.msra.mxu0 0.0
        %6125 = vmatprep.subr.mxu0 0.0
        %6126 = vmatpush1.msra.mxu0 0.0
        %6127 = vmatprep.subr.mxu0 0.0
        %6128 = vmatpush1.msra.mxu0 0.0
        %6129 = vmatprep.subr.mxu0 0.0
        %6130 = vmatpush1.msra.mxu0 0.0
        %6131 = vmatprep.subr.mxu0 0.0
        %6132 = vmatpush1.msra.mxu0 0.0
        %6133 = vmatprep.subr.mxu0 0.0
        %6134 = vmatpush1.msra.mxu0 0.0
        %6135 = vmatprep.subr.mxu0 0.0
        %6136 = vmatpush1.msra.mxu0 0.0
        %6137 = vmatprep.subr.mxu0 0.0
        %6138 = vmatpush1.msra.mxu0 0.0
        %6139 = vmatprep.subr.mxu0 0.0
        %6140 = vmatpush1.msra.mxu0 0.0
        %6141 = vmatprep.subr.mxu0 0.0
        %6142 = vmatpush1.msra.mxu0 0.0
        %6143 = vmatprep.subr.mxu0 0.0
        %6144 = vmatpush1.msra.mxu0 0.0
        %6145 = vmatprep.subr.mxu0 0.0
        %6146 = vmatpush1.msra.mxu0 0.0
        %6147 = vmatprep.subr.mxu0 0.0
        %6148 = vmatpush1.msra.mxu0 0.0
        %6149 = vmatprep.subr.mxu0 0.0
        %6150 = vmatpush1.msra.mxu0 0.0
        %6151 = vmatprep.subr.mxu0 0.0
        %6152 = vmatpush1.msra.mxu0 0.0
        %6153 = vmatprep.subr.mxu0 0.0
        %6154 = vmatpush1.msra.mxu0 0.0
        %6155 = vmatprep.subr.mxu0 0.0
        %6156 = vmatpush1.msra.mxu0 0.0
        %6157 = vmatprep.subr.mxu0 0.0
        %6158 = vmatpush1.msra.mxu0 0.0
        %6159 = vmatprep.subr.mxu0 0.0
        %6160 = vmatpush1.msra.mxu0 0.0
        %6161 = vmatprep.subr.mxu0 0.0
        %6162 = vmatpush1.msra.mxu0 0.0
        %6163 = vmatprep.subr.mxu0 0.0
        %6164 = vmatpush1.msra.mxu0 0.0
        %6165 = vmatprep.subr.mxu0 0.0
        %6166 = vmatpush1.msra.mxu0 0.0
        %6167 = vmatprep.subr.mxu0 0.0
        %6168 = vmatpush1.msra.mxu0 0.0
        %6169 = vmatprep.mubr.f32.mxu0 0.0
        %v6170 = vand.u32 %v4995, 4294901760
        %6171 = vmatmul.mubr.f32.gmra.mrb[0].mxu0 %v6170
        %v6172 = vpop.f32.mrb[0].mxu0
        %v6173 = vadd.f32 %v6059, %v6172
        %v6174 = vpop.f32.mrb[0].mxu0
        %v6175 = vadd.f32 %v6061, %v6174
        %6176 = vmatprep.mubr.f32.mxu0 0.0
        %v6177 = vand.u32 %v4998, 4294901760
        %6178 = vmatmul.mubr.f32.gmra.mrb[0].mxu0 %v6177
        %v6179 = vpop.f32.mrb[0].mxu0
        %v6180 = vadd.f32 %v6068, %v6179
        %v6181 = vpop.f32.mrb[0].mxu0
        %v6182 = vadd.f32 %v6070, %v6181
        %6183 = vmatprep.mubr.f32.mxu0 0.0
        %v6184 = vand.u32 %v5001, 4294901760
        %6185 = vmatmul.mubr.f32.gmra.mrb[0].mxu0 %v6184
        %v6186 = vpop.f32.mrb[0].mxu0
        %v6187 = vadd.f32 %v6077, %v6186
        %v6188 = vpop.f32.mrb[0].mxu0
        %v6189 = vadd.f32 %v6079, %v6188
        %6190 = vdwg.mxu0
        %v6191 = vand.u32 %v4978, 4294901760
        %6192 = vmatprep.subr.mxu0 %v6191
        %v6193 = vand.u32 %v4990, 4294901760
        %6194 = vmatpush1.msra.mxu0 %v6193
        %v6195 = vand.u32 %v4980, 4294901760
        %6196 = vmatprep.subr.mxu0 %v6195
        %v6197 = vand.u32 %v4991, 4294901760
        %6198 = vmatpush1.msra.mxu0 %v6197
        %v6199 = vand.u32 %v4982, 4294901760
        %6200 = vmatprep.subr.mxu0 %v6199
        %v6201 = vand.u32 %v4992, 4294901760
        %6202 = vmatpush1.msra.mxu0 %v6201
        %v6203 = vand.u32 %v4984, 4294901760
        %6204 = vmatprep.subr.mxu0 %v6203
        %v6205 = vand.u32 %v4993, 4294901760
        %6206 = vmatpush1.msra.mxu0 %v6205
        %6207 = vmatprep.subr.mxu0 0.0
        %6208 = vmatpush1.msra.mxu0 0.0
        %6209 = vmatprep.subr.mxu0 0.0
        %6210 = vmatpush1.msra.mxu0 0.0
        %6211 = vmatprep.subr.mxu0 0.0
        %6212 = vmatpush1.msra.mxu0 0.0
        %6213 = vmatprep.subr.mxu0 0.0
        %6214 = vmatpush1.msra.mxu0 0.0
        %6215 = vmatprep.subr.mxu0 0.0
        %6216 = vmatpush1.msra.mxu0 0.0
        %6217 = vmatprep.subr.mxu0 0.0
        %6218 = vmatpush1.msra.mxu0 0.0
        %6219 = vmatprep.subr.mxu0 0.0
        %6220 = vmatpush1.msra.mxu0 0.0
        %6221 = vmatprep.subr.mxu0 0.0
        %6222 = vmatpush1.msra.mxu0 0.0
        %6223 = vmatprep.subr.mxu0 0.0
        %6224 = vmatpush1.msra.mxu0 0.0
        %6225 = vmatprep.subr.mxu0 0.0
        %6226 = vmatpush1.msra.mxu0 0.0
        %6227 = vmatprep.subr.mxu0 0.0
        %6228 = vmatpush1.msra.mxu0 0.0
        %6229 = vmatprep.subr.mxu0 0.0
        %6230 = vmatpush1.msra.mxu0 0.0
        %6231 = vmatprep.subr.mxu0 0.0
        %6232 = vmatpush1.msra.mxu0 0.0
        %6233 = vmatprep.subr.mxu0 0.0
        %6234 = vmatpush1.msra.mxu0 0.0
        %6235 = vmatprep.subr.mxu0 0.0
        %6236 = vmatpush1.msra.mxu0 0.0
        %6237 = vmatprep.subr.mxu0 0.0
        %6238 = vmatpush1.msra.mxu0 0.0
        %6239 = vmatprep.subr.mxu0 0.0
        %6240 = vmatpush1.msra.mxu0 0.0
        %6241 = vmatprep.subr.mxu0 0.0
        %6242 = vmatpush1.msra.mxu0 0.0
        %6243 = vmatprep.subr.mxu0 0.0
        %6244 = vmatpush1.msra.mxu0 0.0
        %6245 = vmatprep.subr.mxu0 0.0
        %6246 = vmatpush1.msra.mxu0 0.0
        %6247 = vmatprep.subr.mxu0 0.0
        %6248 = vmatpush1.msra.mxu0 0.0
        %6249 = vmatprep.subr.mxu0 0.0
        %6250 = vmatpush1.msra.mxu0 0.0
        %6251 = vmatprep.subr.mxu0 0.0
        %6252 = vmatpush1.msra.mxu0 0.0
        %6253 = vmatprep.subr.mxu0 0.0
        %6254 = vmatpush1.msra.mxu0 0.0
        %6255 = vmatprep.subr.mxu0 0.0
        %6256 = vmatpush1.msra.mxu0 0.0
        %6257 = vmatprep.subr.mxu0 0.0
        %6258 = vmatpush1.msra.mxu0 0.0
        %6259 = vmatprep.subr.mxu0 0.0
        %6260 = vmatpush1.msra.mxu0 0.0
        %6261 = vmatprep.subr.mxu0 0.0
        %6262 = vmatpush1.msra.mxu0 0.0
        %6263 = vmatprep.mubr.f32.mxu0 0.0
        %v6264 = vand.u32 %v4995, 4294901760
        %6265 = vmatmul.mubr.f32.gmra.mrb[0].mxu0 %v6264
        %v6266 = vpop.f32.mrb[0].mxu0
        %v6267 = vadd.f32 %v6173, %v6266
        %v6268 = vpop.f32.mrb[0].mxu0
        %v6269 = vadd.f32 %v6175, %v6268
        %6270 = vmatprep.mubr.f32.mxu0 0.0
        %v6271 = vand.u32 %v4998, 4294901760
        %6272 = vmatmul.mubr.f32.gmra.mrb[0].mxu0 %v6271
        %v6273 = vpop.f32.mrb[0].mxu0
        %v6274 = vadd.f32 %v6180, %v6273
        %v6275 = vpop.f32.mrb[0].mxu0
        %v6276 = vadd.f32 %v6182, %v6275
        %6277 = vmatprep.mubr.f32.mxu0 0.0
        %v6278 = vand.u32 %v5001, 4294901760
        %6279 = vmatmul.mubr.f32.gmra.mrb[0].mxu0 %v6278
        %v6280 = vpop.f32.mrb[0].mxu0
        %v6281 = vadd.f32 %v6187, %v6280
        %v6282 = vpop.f32.mrb[0].mxu0
        %v6283 = vadd.f32 %v6189, %v6282
        %6284 = vdwg.mxu0
        %v6285 = vmul.f32 %v5626, %v5626
        %v6286 = vmul.f32 %v5633, %v5633
        %v6287 = vmul.f32 %v5640, %v5640
        %v6288 = vmul.f32 %v5628, %v5628
        %v6289 = vmul.f32 %v5635, %v5635
        %v6290 = vmul.f32 %v5642, %v5642
        %6297 = vrot.lane.b32.xlu0 %v5626, 40
        %v6298 = vpop.permute.xlu0 %6297
        %6299 = vrot.lane.b32.xlu0 %v5628, 40
        %v6300 = vpop.permute.xlu0 %6299
        %6301 = vrot.lane.b32.xlu0 %v5633, 40
        %v6302 = vpop.permute.xlu0 %6301
        %6303 = vrot.lane.b32.xlu0 %v5635, 40
        %v6304 = vpop.permute.xlu0 %6303
        %6305 = vrot.lane.b32.xlu0 %v5640, 40
        %v6306 = vpop.permute.xlu0 %6305
        %6307 = vrot.lane.b32.xlu0 %v5642, 40
        %v6308 = vpop.permute.xlu0 %6307
        %vm6309 = vcmask 326656
        %v6310 = vsel %vm6309, %v6298, %v6300
        %v6311 = vsel %vm6309, %v6302, %v6304
        %v6312 = vsel %vm6309, %v6306, %v6308
        %v6316 = vmul.f32 %v5626, %v6310
        %v6317 = vmul.f32 %v5633, %v6311
        %v6318 = vmul.f32 %v5640, %v6312
        %6322 = vrot.lane.b32.xlu0 %v6285, 48
        %v6323 = vpop.permute.xlu0 %6322
        %6324 = vrot.lane.b32.xlu0 %v6286, 48
        %v6325 = vpop.permute.xlu0 %6324
        %6326 = vrot.lane.b32.xlu0 %v6287, 48
        %v6327 = vpop.permute.xlu0 %6326
        %v6331 = vsub.f32 %v5628, %v6323
        %v6332 = vsub.f32 %v6267, %v6323
        %v6333 = vsub.f32 %v5635, %v6325
        %v6334 = vsub.f32 %v6274, %v6325
        %v6335 = vsub.f32 %v5642, %v6327
        %v6336 = vsub.f32 %v6281, %v6327
        %6340 = vrot.lane.b32.xlu0 %v6288, 48
        %v6341 = vpop.permute.xlu0 %6340
        %6342 = vrot.lane.b32.xlu0 %v6289, 48
        %v6343 = vpop.permute.xlu0 %6342
        %6344 = vrot.lane.b32.xlu0 %v6290, 48
        %v6345 = vpop.permute.xlu0 %6344
        %v6346 = vsel %vm4873, %v6323, %v6341
        %v6347 = vsel %vm4873, %v6325, %v6343
        %v6348 = vsel %vm4873, %v6327, %v6345
        %v6352 = vsub.f32 %v6267, %v6346
        %v6353 = vsub.f32 %v6274, %v6347
        %v6354 = vsub.f32 %v6281, %v6348
        %6358 = vrot.lane.b32.xlu0 %v6316, 96
        %v6359 = vpop.permute.xlu0 %6358
        %6360 = vrot.lane.b32.xlu0 %v6317, 96
        %v6361 = vpop.permute.xlu0 %6360
        %6362 = vrot.lane.b32.xlu0 %v6318, 96
        %v6363 = vpop.permute.xlu0 %6362
        %v6367 = vsub.f32 %v6267, %v6359
        %v6368 = vsub.f32 %v6269, %v6359
        %v6369 = vsub.f32 %v6274, %v6361
        %v6370 = vsub.f32 %v6276, %v6361
        %v6371 = vsub.f32 %v6281, %v6363
        %v6372 = vsub.f32 %v6283, %v6363
        %v6373 = vmul.f32 %v6316, 2.0
        %v6374 = vmul.f32 %v6317, 2.0
        %v6375 = vmul.f32 %v6318, 2.0
        %v6376 = vadd.f32 %v6373, 6.5025
        %v6377 = vadd.f32 %v6374, 6.5025
        %v6378 = vadd.f32 %v6375, 6.5025
        %v6379 = vmul.f32 %v6367, 2.0
        %v6380 = vmul.f32 %v6368, 2.0
        %v6381 = vmul.f32 %v6369, 2.0
        %v6382 = vmul.f32 %v6370, 2.0
        %v6383 = vmul.f32 %v6371, 2.0
        %v6384 = vmul.f32 %v6372, 2.0
        %v6385 = vadd.f32 %v6379, 58.5225
        %v6386 = vadd.f32 %v6380, 58.5225
        %v6387 = vadd.f32 %v6381, 58.5225
        %v6388 = vadd.f32 %v6382, 58.5225
        %v6389 = vadd.f32 %v6383, 58.5225
        %v6390 = vadd.f32 %v6384, 58.5225
        %6397 = vrot.lane.b32.xlu0 %v6385, 32
        %v6398 = vpop.permute.xlu0 %6397
        %6399 = vrot.lane.b32.xlu0 %v6386, 32
        %v6400 = vpop.permute.xlu0 %6399
        %6401 = vrot.lane.b32.xlu0 %v6387, 32
        %v6402 = vpop.permute.xlu0 %6401
        %6403 = vrot.lane.b32.xlu0 %v6388, 32
        %v6404 = vpop.permute.xlu0 %6403
        %6405 = vrot.lane.b32.xlu0 %v6389, 32
        %v6406 = vpop.permute.xlu0 %6405
        %6407 = vrot.lane.b32.xlu0 %v6390, 32
        %v6408 = vpop.permute.xlu0 %6407
        %v6409 = vsel %vm475, %v6398, %v6400
        %v6410 = vsel %vm475, %v6402, %v6404
        %v6411 = vsel %vm475, %v6406, %v6408
        %v6415 = vmul.f32 %v6376, %v6409
        %v6416 = vmul.f32 %v6377, %v6410
        %v6417 = vmul.f32 %v6378, %v6411
        %6418 = vrot.lane.b32.xlu0 %v6285, 40
        %v6419 = vpop.permute.xlu0 %6418
        %6420 = vrot.lane.b32.xlu0 %v6288, 40
        %v6421 = vpop.permute.xlu0 %6420
        %6422 = vrot.lane.b32.xlu0 %v6286, 40
        %v6423 = vpop.permute.xlu0 %6422
        %6424 = vrot.lane.b32.xlu0 %v6289, 40
        %v6425 = vpop.permute.xlu0 %6424
        %6426 = vrot.lane.b32.xlu0 %v6287, 40
        %v6427 = vpop.permute.xlu0 %6426
        %6428 = vrot.lane.b32.xlu0 %v6290, 40
        %v6429 = vpop.permute.xlu0 %6428
        %v6430 = vsel %vm6309, %v6419, %v6421
        %v6431 = vsel %vm6309, %v6423, %v6425
        %v6432 = vsel %vm6309, %v6427, %v6429
        %v6436 = vadd.f32 %v6285, %v6430
        %v6437 = vadd.f32 %v6286, %v6431
        %v6438 = vadd.f32 %v6287, %v6432
        %v6439 = vadd.f32 %v6436, 6.5025
        %v6440 = vadd.f32 %v6437, 6.5025
        %v6441 = vadd.f32 %v6438, 6.5025
        %6445 = vrot.lane.b32.xlu0 %v6352, 40
        %v6446 = vpop.permute.xlu0 %6445
        %6447 = vrot.lane.b32.xlu0 %v6353, 40
        %v6448 = vpop.permute.xlu0 %6447
        %6449 = vrot.lane.b32.xlu0 %v6354, 40
        %v6450 = vpop.permute.xlu0 %6449
        %v6454 = vadd.f32 %v6331, %v6446
        %v6455 = vadd.f32 %v6332, %v6446
        %v6456 = vadd.f32 %v6333, %v6448
        %v6457 = vadd.f32 %v6334, %v6448
        %v6458 = vadd.f32 %v6335, %v6450
        %v6459 = vadd.f32 %v6336, %v6450
        %v6460 = vadd.f32 %v6454, 58.5225
        %v6461 = vadd.f32 %v6455, 58.5225
        %v6462 = vadd.f32 %v6456, 58.5225
        %v6463 = vadd.f32 %v6457, 58.5225
        %v6464 = vadd.f32 %v6458, 58.5225
        %v6465 = vadd.f32 %v6459, 58.5225
        %6472 = vrot.lane.b32.xlu0 %v6460, 80
        %v6473 = vpop.permute.xlu0 %6472
        %6474 = vrot.lane.b32.xlu0 %v6461, 80
        %v6475 = vpop.permute.xlu0 %6474
        %6476 = vrot.lane.b32.xlu0 %v6462, 80
        %v6477 = vpop.permute.xlu0 %6476
        %6478 = vrot.lane.b32.xlu0 %v6463, 80
        %v6479 = vpop.permute.xlu0 %6478
        %6480 = vrot.lane.b32.xlu0 %v6464, 80
        %v6481 = vpop.permute.xlu0 %6480
        %6482 = vrot.lane.b32.xlu0 %v6465, 80
        %v6483 = vpop.permute.xlu0 %6482
        %vm6484 = vcmask 654336
        %v6485 = vsel %vm6484, %v6473, %v6475
        %v6486 = vsel %vm6484, %v6477, %v6479
        %v6487 = vsel %vm6484, %v6481, %v6483
        %v6491 = vmul.f32 %v6439, %v6485
        %v6492 = vmul.f32 %v6440, %v6486
        %v6493 = vmul.f32 %v6441, %v6487
        %v6494 = vrcp.pop %v6491
        %v6495 = vmul.f32 %v6415, %v6494
        %v6496 = vrcp.pop %v6492
        %v6497 = vmul.f32 %v6416, %v6496
        %v6498 = vrcp.pop %v6493
        %v6499 = vmul.f32 %v6417, %v6498
        %v6500 = vsel %vm4853, %v6495, 0.0
        %v6501 = vsel %vm4853, %v6497, 0.0
        %v6502 = vadd.f32 %v6500, %v6501
        %vm6503 = vcmask 717824
        %v6504 = vsel %vm6503, %v6499, 0.0
        %v6505 = vadd.f32 %v6502, %v6504
        %v6506 = vrot.slane %v6505, 4
        %v6507 = vadd.f32 %v6505, %v6506
        %v6508 = vrot.slane %v6507, 2
        %v6509 = vadd.f32 %v6507, %v6508
        %v6510 = vrot.slane %v6509, 1
        %v6511 = vadd.f32 %v6509, %v6510
        %v6512 = vsel %vm4838, %v6511, 0.0
        %6513 = vadd.xlane.f32.xlu0 %v6512
        %v6514 = vpop.xlane.xlu0 %6513
        %6516 = vrot.lane.b32.xlu0 %v6511, 106
        %v6517 = vpop.permute.xlu0 %6516
        %v6519 = vsel %vm4838, %v6517, 0.0
        %6520 = vadd.xlane.f32.xlu0 %v6519
        %v6521 = vpop.xlane.xlu0 %6520
        %6522 = vrot.lane.b32.xlu0 %v6511, 84
        %v6523 = vpop.permute.xlu0 %6522
        %v6525 = vsel %vm4838, %v6523, 0.0
        %6526 = vadd.xlane.f32.xlu0 %v6525
        %v6527 = vpop.xlane.xlu0 %6526
        %6528 = vrot.lane.b32.xlu0 %v6511, 62
        %v6529 = vpop.permute.xlu0 %6528
        %v6531 = vsel %vm4838, %v6529, 0.0
        %6532 = vadd.xlane.f32.xlu0 %v6531
        %v6533 = vpop.xlane.xlu0 %6532
        %vm6534 = vcmask 7168
        %v6535 = vsel %vm6534, %v6514, %v6521
        %vm6536 = vcmask 15360
        %v6537 = vsel %vm6536, %v6535, %v6527
        %vm6538 = vcmask 23552
        %v6539 = vsel %vm6538, %v6537, %v6533
        %v6540 = vmul.f32 %v6539, 0.0020661156
        %vm6541 = vcmask 24576
        %6542 = vst.msk [vmem:[%s224] sm:$0x1] %vm6541, %v6540
        %s6543 = sand.u32 %s100, 1
        %s6544 = scalar_lea.sflag [#allocation4], %s6543
        %s6545 = sand.u32 %s100, 1
        %s6546 = scalar_lea.vmem [#allocation7], %s6545
        // Predicated region
        $region37: #{tpu_custom_call.1} parent=27 // pred_check
          %p6547 = pneg %p110
        $region38: #{tpu_custom_call.1} parent=27 // pred_check_branch
          %6549 = sbr.rel (%p6547) target = $region40
        $region39: #{tpu_custom_call.1} parent=27 // pred_region
          %s6551 = ssub.s32 16, 16
          %6552 = vsyncadd %s6544, %s6551
          %s6553 = sadd.s32 %s27, %s26
          %s6554 = smul.addr %s6553, 16
          %s6555 = scalar_lea.hbm %s2, %s6554
          %s6557 = sshll.u32 %s6546, 4
          %s6558 = int_to_ptr.vmem [resolvable:$true] %s6557
          %6560 = dma.vmem_to_hbm [thread:$0]  %s6558, 16, %s6555, %s6544
        $region40: #{tpu_custom_call.1} parent=27 // pred_fallthru
          _
      $region28: #{tpu_custom_call.1} parent=5 // pred_fallthru
        _
      %p6561 = scmp.le.s32.totalorder 2, %s17
      // Predicated region
      $region41: #{tpu_custom_call.1} parent=5 // pred_check
        %p6562 = pneg %p6561
      $region42: #{tpu_custom_call.1} parent=5 // pred_check_branch
        %6564 = sbr.rel (%p6562) target = $region44
      $region43: #{tpu_custom_call.1} parent=5 // pred_region
        %s6565 = ssub.s32 %s17, 2
        // Predicated region
        $region45: #{tpu_custom_call.1} parent=43 // pred_check
          %p6566 = pneg %p116
        $region46: #{tpu_custom_call.1} parent=43 // pred_check_branch
          %6568 = sbr.rel (%p6566) target = $region48
        $region47: #{tpu_custom_call.1} parent=43 // pred_region
          %s6569 = sand.u32 %s101, 1
          %s6570 = scalar_lea.sflag [#allocation4], %s6569
          %s6571 = sand.u32 %s101, 1
          %s6572 = scalar_lea.vmem [#allocation7], %s6571
          %6573 = dma.done %s6570, 16
        $region48: #{tpu_custom_call.1} parent=43 // pred_fallthru
          _
      $region44: #{tpu_custom_call.1} parent=5 // pred_fallthru
        _
    $region6: #{tpu_custom_call.1} parent=1 // loop_footer
      %s21 = sadd.s32 1, %s17
    $region7: #{tpu_custom_call.1} parent=1 // loop_footer_branch
      %16 = sbr.rel target = $region3
    $region8: #{tpu_custom_call.1} parent=1 // loop_exit
      _
    %6574 = vsyncpa [#allocation3], 1
    %s6575 = scalar_lea.sflag [#allocation3], 1
    %6576 = vsyncpa %s6575, 1
    %6577 = vsyncpa [#allocation6], 1
    %s6578 = scalar_lea.sflag [#allocation6], 1
    %6579 = vsyncpa %s6578, 1
    %6580 = vsyncpa [#allocation4], 1
    %s6581 = scalar_lea.sflag [#allocation4], 1
    %6582 = vsyncpa %s6581, 1

</llo_original>
